<compile_context>
chip_gen: v7x
topology: tpu7x:2x2x1
jax: 0.10.0
libtpu: 0.0.40
codegen_flags: <defaults>
</compile_context>

<pallas_src>
import functools

import jax
import jax.numpy as jnp
from jax.experimental import pallas as pl
from jax.experimental.pallas import tpu as pltpu

D_IN = 768       # GRU input size
H = 256          # GRU hidden size
D_OUT = 2 * H    # bidirectional concat = 512
HEAD_PAD = 128   # lane-padded fused head output width
COEF_LANE = 2    # lane index of the soft-masking coefficient
CHUNK_ROWS = 512  # target number of (t, b) rows resident per chunk


def _round_up(n, m):
    return ((n + m - 1) // m) * m


# -----------------------------------------------------------------------------
# Kernel 1: bidirectional GRU.  grid=(nC,) over T-chunks ("arbitrary": hidden
# carries persist in VMEM scratch across chunk steps).  Forward and backward
# chains are interleaved inside the same timestep loop.
# -----------------------------------------------------------------------------
def bigru_kernel(xf_ref, xb_ref, wih_ref, whh_ref, bfold_ref, bhn_ref,
                 hf_out_ref, hb_out_ref,
                 hf_scr, hb_scr, gif_scr, gib_scr, *, t_real):
    c = pl.program_id(0)
    nC = pl.num_programs(0)
    Tc, Bp, Hh = hf_out_ref.shape

    @pl.when(c == 0)
    def _():
        hf_scr[...] = jnp.zeros_like(hf_scr)
        hb_scr[...] = jnp.zeros_like(hb_scr)

    # Hoisted per-chunk input projection: one big bf16 MXU matmul per direction.
    # bih and the r/z slices of bhh are pre-folded into bfold.  The f32 -> bf16
    # cast happens here so the wrapper needs no extra HBM cast pass.
    gif_scr[...] = (jnp.dot(xf_ref[...].astype(jnp.bfloat16), wih_ref[0],
                            preferred_element_type=jnp.float32) + bfold_ref[0])
    gib_scr[...] = (jnp.dot(xb_ref[...].astype(jnp.bfloat16), wih_ref[1],
                            preferred_element_type=jnp.float32) + bfold_ref[1])

    whh_f = whh_ref[0]
    whh_b = whh_ref[1]
    bhn_f = jnp.broadcast_to(bhn_ref[0], (Bp, Hh))
    bhn_b = jnp.broadcast_to(bhn_ref[1], (Bp, Hh))

    cb = nC - 1 - c          # backward direction walks chunks in reverse
    t0_b = cb * Tc           # global time of this backward chunk's first row

    def gates(gi, gh, h, bhn):
        r = jax.nn.sigmoid(gi[:, :Hh] + gh[:, :Hh])
        z = jax.nn.sigmoid(gi[:, Hh:2 * Hh] + gh[:, Hh:2 * Hh])
        n = jnp.tanh(gi[:, 2 * Hh:] + r * (gh[:, 2 * Hh:] + bhn))
        return (1.0 - z) * n + z * h

    def step(s, carry):
        hf, hb = carry

        # Forward chain: local time s.
        rf = pl.multiple_of(s * Bp, 8)
        ghf = jnp.dot(hf.astype(jnp.bfloat16), whh_f,
                      preferred_element_type=jnp.float32)
        hf_new = gates(gif_scr[pl.ds(rf, Bp), :], ghf, hf, bhn_f)
        hf_out_ref[pl.ds(s, 1), :, :] = hf_new[None].astype(hf_out_ref.dtype)

        # Backward chain: local time Tc-1-s.  Independent of the forward chain,
        # so its MXU latency overlaps the forward chain's gate math.
        tb = Tc - 1 - s
        rb = pl.multiple_of(tb * Bp, 8)
        ghb = jnp.dot(hb.astype(jnp.bfloat16), whh_b,
                      preferred_element_type=jnp.float32)
        hb_cand = gates(gib_scr[pl.ds(rb, Bp), :], ghb, hb, bhn_b)
        # Padded timesteps (t >= t_real) are traversed FIRST by the reverse
        # direction; keep the carry unchanged so padding cannot corrupt it.
        hb_new = jnp.where(t0_b + tb < t_real, hb_cand, hb)
        hb_out_ref[pl.ds(tb, 1), :, :] = hb_new[None].astype(hb_out_ref.dtype)

        return hf_new, hb_new

    h0 = (hf_scr[...], hb_scr[...])
    unroll = True if Tc <= 16 else 4
    hf_fin, hb_fin = jax.lax.fori_loop(0, Tc, step, h0, unroll=unroll)
    hf_scr[...] = hf_fin
    hb_scr[...] = hb_fin


# -----------------------------------------------------------------------------
# Kernel 2: fused heads.  det (2 lanes) + sigmoid(coef) (1 lane) in one
# lane-dense 128-wide matmul with split fwd/bwd weights; row tile = one chunk
# of rows, so the grid size is exact (no divisor-search degeneracy).
# -----------------------------------------------------------------------------
def heads_kernel(hf_ref, hb_ref, w_ref, b_ref, out_ref):
    y = (jnp.dot(hf_ref[...], w_ref[0], preferred_element_type=jnp.float32)
         + jnp.dot(hb_ref[...], w_ref[1], preferred_element_type=jnp.float32)
         + b_ref[...])
    lane = jax.lax.broadcasted_iota(jnp.int32, y.shape, 1)
    out_ref[...] = jnp.where(lane == COEF_LANE, jax.nn.sigmoid(y), y)


# -----------------------------------------------------------------------------
# Wrapper
# -----------------------------------------------------------------------------
@functools.partial(jax.jit, static_argnames=("chunk_rows",))
def detection_network_forward(x, params, *, chunk_rows=CHUNK_ROWS):
    """x: (T, B, 768) float32 (seq-major) -> ((B, T, 2), (B, T, 1))."""
    T, B, D = x.shape
    Bp = _round_up(B, 8)

    # T-chunking: VMEM residency is O(chunk), not O(T).
    Tc = max(1, min(T, chunk_rows // Bp))
    if (Tc * Bp) % 16 != 0:       # keep bf16 hidden blocks 16-row packed
        Tc += 1
    T_pad = _round_up(T, Tc)
    nC = T_pad // Tc
    rows = Tc * Bp

    x_pad = jnp.pad(x, ((0, T_pad - T), (0, Bp - B), (0, 0)))
    x_flat = x_pad.reshape(T_pad * Bp, D)          # contiguous merge, no copy

    # Scoped-VMEM budget: chunk blocks (double-buffered) + scratch + weights,
    # clamped to stay inside v7x's 64 MiB physical VMEM while lifting the
    # 16/32 MiB default scoped limits on v5e/v6e.
    vmem_est = (2 * 2 * rows * D * 4             # two x chunks, f32, 2x buffered
                + 2 * rows * 3 * H * 4           # gi scratches, f32
                + 2 * 2 * rows * H * 2           # two hidden-out chunks, bf16, 2x
                + 2 * 2 * (D + H) * 3 * H * 2    # wih + whh, bf16, 2x buffered
                + (1 << 20))                     # biases / slack
    vmem_limit = int(min(56 * 2 ** 20, max(32 * 2 ** 20, int(1.5 * vmem_est))))

    kernel = functools.partial(bigru_kernel, t_real=T)
    h_fwd, h_bwd = pl.pallas_call(
        kernel,
        out_shape=(jax.ShapeDtypeStruct((T_pad, Bp, H), jnp.bfloat16),
                   jax.ShapeDtypeStruct((T_pad, Bp, H), jnp.bfloat16)),
        grid_spec=pltpu.PrefetchScalarGridSpec(
            num_scalar_prefetch=0,
            grid=(nC,),
            in_specs=[
                pl.BlockSpec((rows, D), lambda c: (c, 0)),           # x, fwd chunk
                pl.BlockSpec((rows, D), lambda c: (nC - 1 - c, 0)),  # x, bwd chunk
                pl.BlockSpec((2, D, 3 * H), lambda c: (0, 0, 0)),    # wih_t
                pl.BlockSpec((2, H, 3 * H), lambda c: (0, 0, 0)),    # whh_t
                pl.BlockSpec((2, 1, 3 * H), lambda c: (0, 0, 0)),    # b_fold
                pl.BlockSpec((2, 1, H), lambda c: (0, 0, 0)),        # bhh_n
            ],
            out_specs=(
                pl.BlockSpec((Tc, Bp, H), lambda c: (c, 0, 0)),          # h fwd
                pl.BlockSpec((Tc, Bp, H), lambda c: (nC - 1 - c, 0, 0)),  # h bwd
            ),
            scratch_shapes=[
                pltpu.VMEM((Bp, H), jnp.float32),         # fwd hidden carry
                pltpu.VMEM((Bp, H), jnp.float32),         # bwd hidden carry
                pltpu.VMEM((rows, 3 * H), jnp.float32),   # fwd gi chunk
                pltpu.VMEM((rows, 3 * H), jnp.float32),   # bwd gi chunk
            ],
        ),
        compiler_params=pltpu.CompilerParams(
            dimension_semantics=("arbitrary",),
            vmem_limit_bytes=vmem_limit),
    )(x_flat, x_flat, params["wih_t"], params["whh_t"],
      params["b_fold"], params["bhh_n"])

    NTp = T_pad * Bp
    hf_flat = h_fwd.reshape(NTp, H)
    hb_flat = h_bwd.reshape(NTp, H)

    heads_out = pl.pallas_call(
        heads_kernel,
        out_shape=jax.ShapeDtypeStruct((NTp, HEAD_PAD), jnp.float32),
        grid_spec=pltpu.PrefetchScalarGridSpec(
            num_scalar_prefetch=0,
            grid=(nC,),
            in_specs=[
                pl.BlockSpec((rows, H), lambda i: (i, 0)),
                pl.BlockSpec((rows, H), lambda i: (i, 0)),
                pl.BlockSpec((2, H, HEAD_PAD), lambda i: (0, 0, 0)),
                pl.BlockSpec((1, HEAD_PAD), lambda i: (0, 0)),
            ],
            out_specs=pl.BlockSpec((rows, HEAD_PAD), lambda i: (i, 0)),
        ),
        compiler_params=pltpu.CompilerParams(
            dimension_semantics=("parallel",)),
    )(hf_flat, hb_flat, params["w_head"], params["b_head"])

    y = heads_out.reshape(T_pad, Bp, HEAD_PAD)[:T, :B, :3]   # drop T/B padding
    y = jnp.transpose(y, (1, 0, 2))                          # (B, T, 3)
    det = y[..., :2]
    coef = y[..., COEF_LANE:COEF_LANE + 1]
    return det, coef


# -----------------------------------------------------------------------------
# Deterministic parameter init (PyTorch-style uniform(-1/sqrt(H), 1/sqrt(H))).
# -----------------------------------------------------------------------------
def init_params(key):
    ks = jax.random.split(key, 12)
    k_gru = 1.0 / jnp.sqrt(jnp.float32(H))

    def u(k, shape, bound):
        return jax.random.uniform(k, shape, jnp.float32, -bound, bound)

    # Raw PyTorch layouts: weight_ih (3H, D_IN), weight_hh (3H, H), biases (3H,)
    wih = jnp.stack([u(ks[0], (3 * H, D_IN), k_gru),
                     u(ks[1], (3 * H, D_IN), k_gru)])           # (2,3H,D)
    whh = jnp.stack([u(ks[2], (3 * H, H), k_gru),
                     u(ks[3], (3 * H, H), k_gru)])              # (2,3H,H)
    bih = jnp.stack([u(ks[4], (3 * H,), k_gru),
                     u(ks[5], (3 * H,), k_gru)])                # (2,3H)
    bhh = jnp.stack([u(ks[6], (3 * H,), k_gru),
                     u(ks[7], (3 * H,), k_gru)])                # (2,3H)

    k_lin = 1.0 / jnp.sqrt(jnp.float32(D_OUT))
    w_det = u(ks[8], (2, D_OUT), k_lin)                         # (2,512)
    b_det = u(ks[9], (2,), k_lin)
    w_coef = u(ks[10], (1, D_OUT), k_lin)                       # (1,512)
    b_coef = u(ks[11], (1,), k_lin)

    # Folded GRU biases: gi gets bih everywhere plus bhh on the r/z slices.
    b_fold = bih + jnp.concatenate(
        [bhh[:, :2 * H], jnp.zeros((2, H), jnp.float32)], axis=1)  # (2,3H)
    bhh_n = bhh[:, 2 * H:]                                         # (2,H)

    # Fused head weight: lanes 0-1 = det, lane 2 = coef, rest zero.
    w_comb = (jnp.zeros((D_OUT, HEAD_PAD), jnp.float32)
              .at[:, :2].set(w_det.T).at[:, COEF_LANE].set(w_coef[0]))
    w_head = jnp.stack([w_comb[:H], w_comb[H:]]).astype(jnp.bfloat16)  # (2,H,128)
    b_head = (jnp.zeros((1, HEAD_PAD), jnp.float32)
              .at[0, :2].set(b_det).at[0, COEF_LANE].set(b_coef[0]))

    return {
        # kernel-friendly (pre-transposed, bf16, bias-folded) copies
        "wih_t": jnp.transpose(wih, (0, 2, 1)).astype(jnp.bfloat16),  # (2,D,3H)
        "whh_t": jnp.transpose(whh, (0, 2, 1)).astype(jnp.bfloat16),  # (2,H,3H)
        "b_fold": b_fold[:, None, :],                                 # (2,1,3H)
        "bhh_n": bhh_n[:, None, :],                                   # (2,1,H)
        "w_head": w_head,                                             # (2,H,128)
        "b_head": b_head,                                             # (1,128)
        # raw f32 copies for the pure-JAX reference
        "_raw": (wih, whh, bih, bhh, w_det, b_det, w_coef, b_coef),
    }


# -----------------------------------------------------------------------------
# Pure-JAX f32 reference (for correctness check)
# -----------------------------------------------------------------------------
def reference_forward(x, params):
    wih, whh, bih, bhh, w_det, b_det, w_coef, b_coef = params["_raw"]

    def gru_dir(xseq, w_ih, w_hh, b_ih, b_hh, reverse):
        def step(h, x_t):
            gi = x_t @ w_ih.T + b_ih
            gh = h @ w_hh.T + b_hh
            r = jax.nn.sigmoid(gi[:, :H] + gh[:, :H])
            z = jax.nn.sigmoid(gi[:, H:2 * H] + gh[:, H:2 * H])
            n = jnp.tanh(gi[:, 2 * H:] + r * gh[:, 2 * H:])
            h_new = (1.0 - z) * n + z * h
            return h_new, h_new
        h0 = jnp.zeros((xseq.shape[1], H), jnp.float32)
        xs = xseq[::-1] if reverse else xseq
        _, hs = jax.lax.scan(step, h0, xs)
        return hs[::-1] if reverse else hs

    h_f = gru_dir(x, wih[0], whh[0], bih[0], bhh[0], False)
    h_b = gru_dir(x, wih[1], whh[1], bih[1], bhh[1], True)
    h = jnp.transpose(jnp.concatenate([h_f, h_b], -1), (1, 0, 2))  # (B,T,512)
    det = h @ w_det.T + b_det
    coef = jax.nn.sigmoid(h @ w_coef.T + b_coef)
    return det, coef


if __name__ == "__main__":
    key = jax.random.PRNGKey(0)
    k_x, k_p, k_x2 = jax.random.split(key, 3)
    params = init_params(k_p)

    # Small case (single chunk).
    T, B = 8, 2
    x = jax.random.normal(k_x, (T, B, D_IN), jnp.float32)
    det, coef = jax.block_until_ready(detection_network_forward(x, params))
    det_ref, coef_ref = reference_forward(x, params)
    assert det.shape == (B, T, 2) and coef.shape == (B, T, 1)
    # bf16 MXU operands vs f32 reference -> slightly looser tolerance.
    assert jnp.allclose(det, det_ref, atol=3e-2, rtol=3e-2)
    assert jnp.allclose(coef, coef_ref, atol=3e-2, rtol=3e-2)

    # Multi-chunk case: exercises the streamed T-chunk path (reverse-chunk
    # index maps + padded-timestep masking for the backward direction).
    T2, B2 = 40, 2
    x2 = jax.random.normal(k_x2, (T2, B2, D_IN), jnp.float32)
    det2, coef2 = jax.block_until_ready(
        detection_network_forward(x2, params, chunk_rows=128))
    det2_ref, coef2_ref = reference_forward(x2, params)
    assert det2.shape == (B2, T2, 2) and coef2.shape == (B2, T2, 1)
    assert jnp.allclose(det2, det2_ref, atol=5e-2, rtol=5e-2)
    assert jnp.allclose(coef2, coef2_ref, atol=5e-2, rtol=5e-2)

    print("KERNEL_OK")
</pallas_src>

<mosaic_0001>
module attributes {stable_mosaic.version = 11 : i64} {
  func.func @heads_kernel(%arg0: i32, %arg1: memref<64x256xbf16, #tpu.memory_space<vmem>>, %arg2: memref<64x256xbf16, #tpu.memory_space<vmem>>, %arg3: memref<2x256x128xbf16, #tpu.memory_space<vmem>>, %arg4: memref<1x128xf32, #tpu.memory_space<vmem>>, %arg5: memref<64x128xf32, #tpu.memory_space<vmem>>) attributes {dimension_semantics = [#tpu.dimension_semantics<parallel>], iteration_bounds = array<i64: 1>, scalar_prefetch = 0 : i64, scratch_operands = 0 : i64, tpu.core_type = #tpu.core_type<tc>, window_params = [{transform_indices = @transform_0, window_bounds = array<i64: 64, 256>}, {transform_indices = @transform_1, window_bounds = array<i64: 64, 256>}, {pipeline_mode = #tpu.pipeline_mode<synchronous>, transform_indices = @transform_2, window_bounds = array<i64: 2, 256, 128>}, {pipeline_mode = #tpu.pipeline_mode<synchronous>, transform_indices = @transform_3, window_bounds = array<i64: 1, 128>}, {transform_indices = @transform_4, window_bounds = array<i64: 64, 128>}]} {
    %c0 = arith.constant 0 : index
    %c0_0 = arith.constant 0 : index
    %0 = vector.load %arg1[%c0, %c0_0] : memref<64x256xbf16, #tpu.memory_space<vmem>>, vector<64x256xbf16>
    %c0_1 = arith.constant 0 : index
    %c0_2 = arith.constant 0 : index
    %c0_3 = arith.constant 0 : index
    %1 = vector.load %arg3[%c0_1, %c0_2, %c0_3] : memref<2x256x128xbf16, #tpu.memory_space<vmem>>, vector<1x256x128xbf16>
    %2 = vector.shape_cast %1 : vector<1x256x128xbf16> to vector<256x128xbf16>
    %cst = arith.constant dense<0.000000e+00> : vector<64x128xf32>
    %3 = tpu.matmul %0, %2, %cst {dimension_numbers = #tpu.dot_dimension_numbers<[1], [0], [0], [1], [0, 0, 1, 1], [], []>} : vector<64x256xbf16>, vector<256x128xbf16>, vector<64x128xf32> -> vector<64x128xf32>
    %c0_4 = arith.constant 0 : index
    %c0_5 = arith.constant 0 : index
    %4 = vector.load %arg2[%c0_4, %c0_5] : memref<64x256xbf16, #tpu.memory_space<vmem>>, vector<64x256xbf16>
    %c1 = arith.constant 1 : index
    %c0_6 = arith.constant 0 : index
    %c0_7 = arith.constant 0 : index
    %5 = vector.load %arg3[%c1, %c0_6, %c0_7] : memref<2x256x128xbf16, #tpu.memory_space<vmem>>, vector<1x256x128xbf16>
    %6 = vector.shape_cast %5 : vector<1x256x128xbf16> to vector<256x128xbf16>
    %cst_8 = arith.constant dense<0.000000e+00> : vector<64x128xf32>
    %7 = tpu.matmul %4, %6, %cst_8 {dimension_numbers = #tpu.dot_dimension_numbers<[1], [0], [0], [1], [0, 0, 1, 1], [], []>} : vector<64x256xbf16>, vector<256x128xbf16>, vector<64x128xf32> -> vector<64x128xf32>
    %8 = arith.addf %3, %7 : vector<64x128xf32>
    %c0_9 = arith.constant 0 : index
    %c0_10 = arith.constant 0 : index
    %9 = vector.load %arg4[%c0_9, %c0_10] : memref<1x128xf32, #tpu.memory_space<vmem>>, vector<1x128xf32>
    %10 = vector.broadcast %9 : vector<1x128xf32> to vector<64x128xf32>
    %11 = arith.addf %8, %10 : vector<64x128xf32>
    %12 = tpu.iota {dimensions = array<i32: 1>} : vector<64x128xi32>
    %c2_i32 = arith.constant 2 : i32
    %13 = vector.broadcast %c2_i32 : i32 to vector<64x128xi32>
    %14 = arith.cmpi eq, %12, %13 : vector<64x128xi32>
    %15 = arith.negf %11 : vector<64x128xf32>
    %16 = math.exp %15 : vector<64x128xf32>
    %cst_11 = arith.constant 1.000000e+00 : f32
    %17 = vector.broadcast %cst_11 : f32 to vector<64x128xf32>
    %18 = arith.addf %17, %16 : vector<64x128xf32>
    %19 = arith.divf %17, %18 : vector<64x128xf32>
    %20 = arith.select %14, %19, %11 : vector<64x128xi1>, vector<64x128xf32>
    %c0_12 = arith.constant 0 : index
    %c0_13 = arith.constant 0 : index
    %21 = vector.load %arg5[%c0_12, %c0_13] : memref<64x128xf32, #tpu.memory_space<vmem>>, vector<64x128xf32>
    tpu.vector_store %arg5[%c0_12, %c0_13], %20 {strides = array<i32>} : memref<64x128xf32, #tpu.memory_space<vmem>>, vector<64x128xf32>,
    return
  }
  func.func @transform_0(%arg0: i32) -> (i32, i32) {
    %c0_i32 = arith.constant 0 : i32
    %c0_i32_0 = arith.constant 0 : i32
    return %arg0, %c0_i32 : i32, i32
  }
  func.func @transform_1(%arg0: i32) -> (i32, i32) {
    %c0_i32 = arith.constant 0 : i32
    %c0_i32_0 = arith.constant 0 : i32
    return %arg0, %c0_i32 : i32, i32
  }
  func.func @transform_2(%arg0: i32) -> (i32, i32, i32) {
    %c0_i32 = arith.constant 0 : i32
    %c0_i32_0 = arith.constant 0 : i32
    %c0_i32_1 = arith.constant 0 : i32
    %c0_i32_2 = arith.constant 0 : i32
    return %c0_i32, %c0_i32_0, %c0_i32_1 : i32, i32, i32
  }
  func.func @transform_3(%arg0: i32) -> (i32, i32) {
    %c0_i32 = arith.constant 0 : i32
    %c0_i32_0 = arith.constant 0 : i32
    %c0_i32_1 = arith.constant 0 : i32
    return %c0_i32, %c0_i32_0 : i32, i32
  }
  func.func @transform_4(%arg0: i32) -> (i32, i32) {
    %c0_i32 = arith.constant 0 : i32
    %c0_i32_0 = arith.constant 0 : i32
    return %arg0, %c0_i32 : i32, i32
  }
}

module attributes {stable_mosaic.version = 11 : i64} {
  func.func @bigru_kernel(%arg0: i32, %arg1: memref<64x768xf32, #tpu.memory_space<vmem>>, %arg2: memref<64x768xf32, #tpu.memory_space<vmem>>, %arg3: memref<2x768x768xbf16, #tpu.memory_space<vmem>>, %arg4: memref<2x256x768xbf16, #tpu.memory_space<vmem>>, %arg5: memref<2x1x768xf32, #tpu.memory_space<vmem>>, %arg6: memref<2x1x256xf32, #tpu.memory_space<vmem>>, %arg7: memref<8x8x256xbf16, #tpu.memory_space<vmem>>, %arg8: memref<8x8x256xbf16, #tpu.memory_space<vmem>>, %arg9: memref<8x256xf32, #tpu.memory_space<vmem>>, %arg10: memref<8x256xf32, #tpu.memory_space<vmem>>, %arg11: memref<64x768xf32, #tpu.memory_space<vmem>>, %arg12: memref<64x768xf32, #tpu.memory_space<vmem>>) attributes {dimension_semantics = [#tpu.dimension_semantics<arbitrary>], iteration_bounds = array<i64: 1>, scalar_prefetch = 0 : i64, scratch_operands = 4 : i64, tpu.core_type = #tpu.core_type<tc>, window_params = [{transform_indices = @transform_0, window_bounds = array<i64: 64, 768>}, {transform_indices = @transform_1, window_bounds = array<i64: 64, 768>}, {pipeline_mode = #tpu.pipeline_mode<synchronous>, transform_indices = @transform_2, window_bounds = array<i64: 2, 768, 768>}, {pipeline_mode = #tpu.pipeline_mode<synchronous>, transform_indices = @transform_3, window_bounds = array<i64: 2, 256, 768>}, {pipeline_mode = #tpu.pipeline_mode<synchronous>, transform_indices = @transform_4, window_bounds = array<i64: 2, 1, 768>}, {pipeline_mode = #tpu.pipeline_mode<synchronous>, transform_indices = @transform_5, window_bounds = array<i64: 2, 1, 256>}, {transform_indices = @transform_6, window_bounds = array<i64: 8, 8, 256>}, {transform_indices = @transform_7, window_bounds = array<i64: 8, 8, 256>}]} {
    %c0_i32 = arith.constant 0 : i32
    %0 = arith.cmpi eq, %arg0, %c0_i32 : i32
    %1 = arith.extui %0 : i1 to i32
    %c0_i32_0 = arith.constant 0 : i32
    %2 = arith.cmpi ne, %1, %c0_i32_0 : i32
    scf.if %2 {
      %cst_187 = arith.constant 0.000000e+00 : f32
      %665 = vector.broadcast %cst_187 : f32 to vector<8x256xf32>
      %c0_188 = arith.constant 0 : index
      %c0_189 = arith.constant 0 : index
      %666 = vector.load %arg9[%c0_188, %c0_189] : memref<8x256xf32, #tpu.memory_space<vmem>>, vector<8x256xf32>
      tpu.vector_store %arg9[%c0_188, %c0_189], %665 {strides = array<i32>} : memref<8x256xf32, #tpu.memory_space<vmem>>, vector<8x256xf32>,
      %cst_190 = arith.constant 0.000000e+00 : f32
      %667 = vector.broadcast %cst_190 : f32 to vector<8x256xf32>
      %c0_191 = arith.constant 0 : index
      %c0_192 = arith.constant 0 : index
      %668 = vector.load %arg10[%c0_191, %c0_192] : memref<8x256xf32, #tpu.memory_space<vmem>>, vector<8x256xf32>
      tpu.vector_store %arg10[%c0_191, %c0_192], %667 {strides = array<i32>} : memref<8x256xf32, #tpu.memory_space<vmem>>, vector<8x256xf32>,
    } else {
    }
    %c0 = arith.constant 0 : index
    %c0_1 = arith.constant 0 : index
    %3 = vector.load %arg1[%c0, %c0_1] : memref<64x768xf32, #tpu.memory_space<vmem>>, vector<64x768xf32>
    %4 = arith.truncf %3 : vector<64x768xf32> to vector<64x768xbf16>
    %c0_2 = arith.constant 0 : index
    %c0_3 = arith.constant 0 : index
    %c0_4 = arith.constant 0 : index
    %5 = vector.load %arg3[%c0_2, %c0_3, %c0_4] : memref<2x768x768xbf16, #tpu.memory_space<vmem>>, vector<1x768x768xbf16>
    %6 = vector.shape_cast %5 : vector<1x768x768xbf16> to vector<768x768xbf16>
    %cst = arith.constant dense<0.000000e+00> : vector<64x768xf32>
    %7 = tpu.matmul %4, %6, %cst {dimension_numbers = #tpu.dot_dimension_numbers<[1], [0], [0], [1], [0, 0, 1, 1], [], []>} : vector<64x768xbf16>, vector<768x768xbf16>, vector<64x768xf32> -> vector<64x768xf32>
    %c0_5 = arith.constant 0 : index
    %c0_6 = arith.constant 0 : index
    %c0_7 = arith.constant 0 : index
    %8 = vector.load %arg5[%c0_5, %c0_6, %c0_7] : memref<2x1x768xf32, #tpu.memory_space<vmem>>, vector<1x1x768xf32>
    %9 = vector.shape_cast %8 : vector<1x1x768xf32> to vector<1x768xf32>
    %10 = vector.broadcast %9 : vector<1x768xf32> to vector<64x768xf32>
    %11 = arith.addf %7, %10 : vector<64x768xf32>
    %c0_8 = arith.constant 0 : index
    %c0_9 = arith.constant 0 : index
    %12 = vector.load %arg11[%c0_8, %c0_9] : memref<64x768xf32, #tpu.memory_space<vmem>>, vector<64x768xf32>
    tpu.vector_store %arg11[%c0_8, %c0_9], %11 {strides = array<i32>} : memref<64x768xf32, #tpu.memory_space<vmem>>, vector<64x768xf32>,
    %c0_10 = arith.constant 0 : index
    %c0_11 = arith.constant 0 : index
    %13 = vector.load %arg2[%c0_10, %c0_11] : memref<64x768xf32, #tpu.memory_space<vmem>>, vector<64x768xf32>
    %14 = arith.truncf %13 : vector<64x768xf32> to vector<64x768xbf16>
    %c1 = arith.constant 1 : index
    %c0_12 = arith.constant 0 : index
    %c0_13 = arith.constant 0 : index
    %15 = vector.load %arg3[%c1, %c0_12, %c0_13] : memref<2x768x768xbf16, #tpu.memory_space<vmem>>, vector<1x768x768xbf16>
    %16 = vector.shape_cast %15 : vector<1x768x768xbf16> to vector<768x768xbf16>
    %cst_14 = arith.constant dense<0.000000e+00> : vector<64x768xf32>
    %17 = tpu.matmul %14, %16, %cst_14 {dimension_numbers = #tpu.dot_dimension_numbers<[1], [0], [0], [1], [0, 0, 1, 1], [], []>} : vector<64x768xbf16>, vector<768x768xbf16>, vector<64x768xf32> -> vector<64x768xf32>
    %c1_15 = arith.constant 1 : index
    %c0_16 = arith.constant 0 : index
    %c0_17 = arith.constant 0 : index
    %18 = vector.load %arg5[%c1_15, %c0_16, %c0_17] : memref<2x1x768xf32, #tpu.memory_space<vmem>>, vector<1x1x768xf32>
    %19 = vector.shape_cast %18 : vector<1x1x768xf32> to vector<1x768xf32>
    %20 = vector.broadcast %19 : vector<1x768xf32> to vector<64x768xf32>
    %21 = arith.addf %17, %20 : vector<64x768xf32>
    %c0_18 = arith.constant 0 : index
    %c0_19 = arith.constant 0 : index
    %22 = vector.load %arg12[%c0_18, %c0_19] : memref<64x768xf32, #tpu.memory_space<vmem>>, vector<64x768xf32>
    tpu.vector_store %arg12[%c0_18, %c0_19], %21 {strides = array<i32>} : memref<64x768xf32, #tpu.memory_space<vmem>>, vector<64x768xf32>,
    %c0_20 = arith.constant 0 : index
    %c0_21 = arith.constant 0 : index
    %c0_22 = arith.constant 0 : index
    %23 = vector.load %arg4[%c0_20, %c0_21, %c0_22] : memref<2x256x768xbf16, #tpu.memory_space<vmem>>, vector<1x256x768xbf16>
    %24 = vector.shape_cast %23 : vector<1x256x768xbf16> to vector<256x768xbf16>
    %c1_23 = arith.constant 1 : index
    %c0_24 = arith.constant 0 : index
    %c0_25 = arith.constant 0 : index
    %25 = vector.load %arg4[%c1_23, %c0_24, %c0_25] : memref<2x256x768xbf16, #tpu.memory_space<vmem>>, vector<1x256x768xbf16>
    %26 = vector.shape_cast %25 : vector<1x256x768xbf16> to vector<256x768xbf16>
    %c0_26 = arith.constant 0 : index
    %c0_27 = arith.constant 0 : index
    %c0_28 = arith.constant 0 : index
    %27 = vector.load %arg6[%c0_26, %c0_27, %c0_28] : memref<2x1x256xf32, #tpu.memory_space<vmem>>, vector<1x1x256xf32>
    %28 = vector.shape_cast %27 : vector<1x1x256xf32> to vector<1x256xf32>
    %29 = vector.shape_cast %28 : vector<1x256xf32> to vector<1x256xf32>
    %30 = vector.broadcast %29 : vector<1x256xf32> to vector<8x256xf32>
    %c1_29 = arith.constant 1 : index
    %c0_30 = arith.constant 0 : index
    %c0_31 = arith.constant 0 : index
    %31 = vector.load %arg6[%c1_29, %c0_30, %c0_31] : memref<2x1x256xf32, #tpu.memory_space<vmem>>, vector<1x1x256xf32>
    %32 = vector.shape_cast %31 : vector<1x1x256xf32> to vector<1x256xf32>
    %33 = vector.shape_cast %32 : vector<1x256xf32> to vector<1x256xf32>
    %34 = vector.broadcast %33 : vector<1x256xf32> to vector<8x256xf32>
    %c0_i32_32 = arith.constant 0 : i32
    %35 = arith.subi %c0_i32_32, %arg0 : i32
    %c8_i32 = arith.constant 8 : i32
    %36 = arith.muli %35, %c8_i32 : i32
    %c0_33 = arith.constant 0 : index
    %c0_34 = arith.constant 0 : index
    %37 = vector.load %arg9[%c0_33, %c0_34] : memref<8x256xf32, #tpu.memory_space<vmem>>, vector<8x256xf32>
    %c0_35 = arith.constant 0 : index
    %c0_36 = arith.constant 0 : index
    %38 = vector.load %arg10[%c0_35, %c0_36] : memref<8x256xf32, #tpu.memory_space<vmem>>, vector<8x256xf32>
    %c0_i32_37 = arith.constant 0 : i32
    %c8_i32_38 = arith.constant 8 : i32
    %39 = arith.muli %c0_i32_37, %c8_i32_38 : i32
    %40 = tpu.assume_multiple %39, 8 : i32
    %41 = arith.truncf %37 : vector<8x256xf32> to vector<8x256xbf16>
    %cst_39 = arith.constant dense<0.000000e+00> : vector<8x768xf32>
    %42 = tpu.matmul %41, %24, %cst_39 {dimension_numbers = #tpu.dot_dimension_numbers<[1], [0], [0], [1], [0, 0, 1, 1], [], []>} : vector<8x256xbf16>, vector<256x768xbf16>, vector<8x768xf32> -> vector<8x768xf32>
    %43 = arith.index_cast %40 : i32 to index
    %c0_40 = arith.constant 0 : index
    %44 = vector.load %arg11[%43, %c0_40] : memref<64x768xf32, #tpu.memory_space<vmem>>, vector<8x768xf32>
    %45 = vector.extract_strided_slice %44 {offsets = [0, 0], sizes = [8, 256], strides = [1, 1]} : vector<8x768xf32> to vector<8x256xf32>
    %46 = vector.extract_strided_slice %42 {offsets = [0, 0], sizes = [8, 256], strides = [1, 1]} : vector<8x768xf32> to vector<8x256xf32>
    %47 = arith.addf %45, %46 : vector<8x256xf32>
    %48 = arith.negf %47 : vector<8x256xf32>
    %49 = math.exp %48 : vector<8x256xf32>
    %cst_41 = arith.constant 1.000000e+00 : f32
    %50 = vector.broadcast %cst_41 : f32 to vector<8x256xf32>
    %51 = arith.addf %50, %49 : vector<8x256xf32>
    %52 = arith.divf %50, %51 : vector<8x256xf32>
    %53 = vector.extract_strided_slice %44 {offsets = [0, 256], sizes = [8, 256], strides = [1, 1]} : vector<8x768xf32> to vector<8x256xf32>
    %54 = vector.extract_strided_slice %42 {offsets = [0, 256], sizes = [8, 256], strides = [1, 1]} : vector<8x768xf32> to vector<8x256xf32>
    %55 = arith.addf %53, %54 : vector<8x256xf32>
    %56 = arith.negf %55 : vector<8x256xf32>
    %57 = math.exp %56 : vector<8x256xf32>
    %cst_42 = arith.constant 1.000000e+00 : f32
    %58 = vector.broadcast %cst_42 : f32 to vector<8x256xf32>
    %59 = arith.addf %58, %57 : vector<8x256xf32>
    %60 = arith.divf %58, %59 : vector<8x256xf32>
    %61 = vector.extract_strided_slice %44 {offsets = [0, 512], sizes = [8, 256], strides = [1, 1]} : vector<8x768xf32> to vector<8x256xf32>
    %62 = vector.extract_strided_slice %42 {offsets = [0, 512], sizes = [8, 256], strides = [1, 1]} : vector<8x768xf32> to vector<8x256xf32>
    %63 = arith.addf %62, %30 : vector<8x256xf32>
    %64 = arith.mulf %52, %63 : vector<8x256xf32>
    %65 = arith.addf %61, %64 : vector<8x256xf32>
    %66 = math.tanh %65 : vector<8x256xf32>
    %cst_43 = arith.constant 1.000000e+00 : f32
    %67 = vector.broadcast %cst_43 : f32 to vector<8x256xf32>
    %68 = arith.subf %67, %60 : vector<8x256xf32>
    %69 = arith.mulf %68, %66 : vector<8x256xf32>
    %70 = arith.mulf %60, %37 : vector<8x256xf32>
    %71 = arith.addf %69, %70 : vector<8x256xf32>
    %72 = vector.shape_cast %71 : vector<8x256xf32> to vector<1x8x256xf32>
    %73 = arith.truncf %72 : vector<1x8x256xf32> to vector<1x8x256xbf16>
    %74 = arith.index_cast %c0_i32_37 : i32 to index
    %c0_44 = arith.constant 0 : index
    %c0_45 = arith.constant 0 : index
    %75 = vector.load %arg7[%74, %c0_44, %c0_45] : memref<8x8x256xbf16, #tpu.memory_space<vmem>>, vector<1x8x256xbf16>
    tpu.vector_store %arg7[%74, %c0_44, %c0_45], %73 {strides = array<i32>} : memref<8x8x256xbf16, #tpu.memory_space<vmem>>, vector<1x8x256xbf16>,
    %c7_i32 = arith.constant 7 : i32
    %76 = arith.subi %c7_i32, %c0_i32_37 : i32
    %c8_i32_46 = arith.constant 8 : i32
    %77 = arith.muli %76, %c8_i32_46 : i32
    %78 = tpu.assume_multiple %77, 8 : i32
    %79 = arith.truncf %38 : vector<8x256xf32> to vector<8x256xbf16>
    %cst_47 = arith.constant dense<0.000000e+00> : vector<8x768xf32>
    %80 = tpu.matmul %79, %26, %cst_47 {dimension_numbers = #tpu.dot_dimension_numbers<[1], [0], [0], [1], [0, 0, 1, 1], [], []>} : vector<8x256xbf16>, vector<256x768xbf16>, vector<8x768xf32> -> vector<8x768xf32>
    %81 = arith.index_cast %78 : i32 to index
    %c0_48 = arith.constant 0 : index
    %82 = vector.load %arg12[%81, %c0_48] : memref<64x768xf32, #tpu.memory_space<vmem>>, vector<8x768xf32>
    %83 = vector.extract_strided_slice %82 {offsets = [0, 0], sizes = [8, 256], strides = [1, 1]} : vector<8x768xf32> to vector<8x256xf32>
    %84 = vector.extract_strided_slice %80 {offsets = [0, 0], sizes = [8, 256], strides = [1, 1]} : vector<8x768xf32> to vector<8x256xf32>
    %85 = arith.addf %83, %84 : vector<8x256xf32>
    %86 = arith.negf %85 : vector<8x256xf32>
    %87 = math.exp %86 : vector<8x256xf32>
    %cst_49 = arith.constant 1.000000e+00 : f32
    %88 = vector.broadcast %cst_49 : f32 to vector<8x256xf32>
    %89 = arith.addf %88, %87 : vector<8x256xf32>
    %90 = arith.divf %88, %89 : vector<8x256xf32>
    %91 = vector.extract_strided_slice %82 {offsets = [0, 256], sizes = [8, 256], strides = [1, 1]} : vector<8x768xf32> to vector<8x256xf32>
    %92 = vector.extract_strided_slice %80 {offsets = [0, 256], sizes = [8, 256], strides = [1, 1]} : vector<8x768xf32> to vector<8x256xf32>
    %93 = arith.addf %91, %92 : vector<8x256xf32>
    %94 = arith.negf %93 : vector<8x256xf32>
    %95 = math.exp %94 : vector<8x256xf32>
    %cst_50 = arith.constant 1.000000e+00 : f32
    %96 = vector.broadcast %cst_50 : f32 to vector<8x256xf32>
    %97 = arith.addf %96, %95 : vector<8x256xf32>
    %98 = arith.divf %96, %97 : vector<8x256xf32>
    %99 = vector.extract_strided_slice %82 {offsets = [0, 512], sizes = [8, 256], strides = [1, 1]} : vector<8x768xf32> to vector<8x256xf32>
    %100 = vector.extract_strided_slice %80 {offsets = [0, 512], sizes = [8, 256], strides = [1, 1]} : vector<8x768xf32> to vector<8x256xf32>
    %101 = arith.addf %100, %34 : vector<8x256xf32>
    %102 = arith.mulf %90, %101 : vector<8x256xf32>
    %103 = arith.addf %99, %102 : vector<8x256xf32>
    %104 = math.tanh %103 : vector<8x256xf32>
    %cst_51 = arith.constant 1.000000e+00 : f32
    %105 = vector.broadcast %cst_51 : f32 to vector<8x256xf32>
    %106 = arith.subf %105, %98 : vector<8x256xf32>
    %107 = arith.mulf %106, %104 : vector<8x256xf32>
    %108 = arith.mulf %98, %38 : vector<8x256xf32>
    %109 = arith.addf %107, %108 : vector<8x256xf32>
    %110 = arith.addi %36, %76 : i32
    %c8_i32_52 = arith.constant 8 : i32
    %111 = arith.cmpi slt, %110, %c8_i32_52 : i32
    %112 = arith.select %111, %109, %38 : vector<8x256xf32>
    %113 = vector.shape_cast %112 : vector<8x256xf32> to vector<1x8x256xf32>
    %114 = arith.truncf %113 : vector<1x8x256xf32> to vector<1x8x256xbf16>
    %115 = arith.index_cast %76 : i32 to index
    %c0_53 = arith.constant 0 : index
    %c0_54 = arith.constant 0 : index
    %116 = vector.load %arg8[%115, %c0_53, %c0_54] : memref<8x8x256xbf16, #tpu.memory_space<vmem>>, vector<1x8x256xbf16>
    tpu.vector_store %arg8[%115, %c0_53, %c0_54], %114 {strides = array<i32>} : memref<8x8x256xbf16, #tpu.memory_space<vmem>>, vector<1x8x256xbf16>,
    %c1_i32 = arith.constant 1 : i32
    %c8_i32_55 = arith.constant 8 : i32
    %117 = arith.muli %c1_i32, %c8_i32_55 : i32
    %118 = tpu.assume_multiple %117, 8 : i32
    %119 = arith.truncf %71 : vector<8x256xf32> to vector<8x256xbf16>
    %cst_56 = arith.constant dense<0.000000e+00> : vector<8x768xf32>
    %120 = tpu.matmul %119, %24, %cst_56 {dimension_numbers = #tpu.dot_dimension_numbers<[1], [0], [0], [1], [0, 0, 1, 1], [], []>} : vector<8x256xbf16>, vector<256x768xbf16>, vector<8x768xf32> -> vector<8x768xf32>
    %121 = arith.index_cast %118 : i32 to index
    %c0_57 = arith.constant 0 : index
    %122 = vector.load %arg11[%121, %c0_57] : memref<64x768xf32, #tpu.memory_space<vmem>>, vector<8x768xf32>
    %123 = vector.extract_strided_slice %122 {offsets = [0, 0], sizes = [8, 256], strides = [1, 1]} : vector<8x768xf32> to vector<8x256xf32>
    %124 = vector.extract_strided_slice %120 {offsets = [0, 0], sizes = [8, 256], strides = [1, 1]} : vector<8x768xf32> to vector<8x256xf32>
    %125 = arith.addf %123, %124 : vector<8x256xf32>
    %126 = arith.negf %125 : vector<8x256xf32>
    %127 = math.exp %126 : vector<8x256xf32>
    %cst_58 = arith.constant 1.000000e+00 : f32
    %128 = vector.broadcast %cst_58 : f32 to vector<8x256xf32>
    %129 = arith.addf %128, %127 : vector<8x256xf32>
    %130 = arith.divf %128, %129 : vector<8x256xf32>
    %131 = vector.extract_strided_slice %122 {offsets = [0, 256], sizes = [8, 256], strides = [1, 1]} : vector<8x768xf32> to vector<8x256xf32>
    %132 = vector.extract_strided_slice %120 {offsets = [0, 256], sizes = [8, 256], strides = [1, 1]} : vector<8x768xf32> to vector<8x256xf32>
    %133 = arith.addf %131, %132 : vector<8x256xf32>
    %134 = arith.negf %133 : vector<8x256xf32>
    %135 = math.exp %134 : vector<8x256xf32>
    %cst_59 = arith.constant 1.000000e+00 : f32
    %136 = vector.broadcast %cst_59 : f32 to vector<8x256xf32>
    %137 = arith.addf %136, %135 : vector<8x256xf32>
    %138 = arith.divf %136, %137 : vector<8x256xf32>
    %139 = vector.extract_strided_slice %122 {offsets = [0, 512], sizes = [8, 256], strides = [1, 1]} : vector<8x768xf32> to vector<8x256xf32>
    %140 = vector.extract_strided_slice %120 {offsets = [0, 512], sizes = [8, 256], strides = [1, 1]} : vector<8x768xf32> to vector<8x256xf32>
    %141 = arith.addf %140, %30 : vector<8x256xf32>
    %142 = arith.mulf %130, %141 : vector<8x256xf32>
    %143 = arith.addf %139, %142 : vector<8x256xf32>
    %144 = math.tanh %143 : vector<8x256xf32>
    %cst_60 = arith.constant 1.000000e+00 : f32
    %145 = vector.broadcast %cst_60 : f32 to vector<8x256xf32>
    %146 = arith.subf %145, %138 : vector<8x256xf32>
    %147 = arith.mulf %146, %144 : vector<8x256xf32>
    %148 = arith.mulf %138, %71 : vector<8x256xf32>
    %149 = arith.addf %147, %148 : vector<8x256xf32>
    %150 = vector.shape_cast %149 : vector<8x256xf32> to vector<1x8x256xf32>
    %151 = arith.truncf %150 : vector<1x8x256xf32> to vector<1x8x256xbf16>
    %152 = arith.index_cast %c1_i32 : i32 to index
    %c0_61 = arith.constant 0 : index
    %c0_62 = arith.constant 0 : index
    %153 = vector.load %arg7[%152, %c0_61, %c0_62] : memref<8x8x256xbf16, #tpu.memory_space<vmem>>, vector<1x8x256xbf16>
    tpu.vector_store %arg7[%152, %c0_61, %c0_62], %151 {strides = array<i32>} : memref<8x8x256xbf16, #tpu.memory_space<vmem>>, vector<1x8x256xbf16>,
    %c7_i32_63 = arith.constant 7 : i32
    %154 = arith.subi %c7_i32_63, %c1_i32 : i32
    %c8_i32_64 = arith.constant 8 : i32
    %155 = arith.muli %154, %c8_i32_64 : i32
    %156 = tpu.assume_multiple %155, 8 : i32
    %157 = arith.truncf %112 : vector<8x256xf32> to vector<8x256xbf16>
    %cst_65 = arith.constant dense<0.000000e+00> : vector<8x768xf32>
    %158 = tpu.matmul %157, %26, %cst_65 {dimension_numbers = #tpu.dot_dimension_numbers<[1], [0], [0], [1], [0, 0, 1, 1], [], []>} : vector<8x256xbf16>, vector<256x768xbf16>, vector<8x768xf32> -> vector<8x768xf32>
    %159 = arith.index_cast %156 : i32 to index
    %c0_66 = arith.constant 0 : index
    %160 = vector.load %arg12[%159, %c0_66] : memref<64x768xf32, #tpu.memory_space<vmem>>, vector<8x768xf32>
    %161 = vector.extract_strided_slice %160 {offsets = [0, 0], sizes = [8, 256], strides = [1, 1]} : vector<8x768xf32> to vector<8x256xf32>
    %162 = vector.extract_strided_slice %158 {offsets = [0, 0], sizes = [8, 256], strides = [1, 1]} : vector<8x768xf32> to vector<8x256xf32>
    %163 = arith.addf %161, %162 : vector<8x256xf32>
    %164 = arith.negf %163 : vector<8x256xf32>
    %165 = math.exp %164 : vector<8x256xf32>
    %cst_67 = arith.constant 1.000000e+00 : f32
    %166 = vector.broadcast %cst_67 : f32 to vector<8x256xf32>
    %167 = arith.addf %166, %165 : vector<8x256xf32>
    %168 = arith.divf %166, %167 : vector<8x256xf32>
    %169 = vector.extract_strided_slice %160 {offsets = [0, 256], sizes = [8, 256], strides = [1, 1]} : vector<8x768xf32> to vector<8x256xf32>
    %170 = vector.extract_strided_slice %158 {offsets = [0, 256], sizes = [8, 256], strides = [1, 1]} : vector<8x768xf32> to vector<8x256xf32>
    %171 = arith.addf %169, %170 : vector<8x256xf32>
    %172 = arith.negf %171 : vector<8x256xf32>
    %173 = math.exp %172 : vector<8x256xf32>
    %cst_68 = arith.constant 1.000000e+00 : f32
    %174 = vector.broadcast %cst_68 : f32 to vector<8x256xf32>
    %175 = arith.addf %174, %173 : vector<8x256xf32>
    %176 = arith.divf %174, %175 : vector<8x256xf32>
    %177 = vector.extract_strided_slice %160 {offsets = [0, 512], sizes = [8, 256], strides = [1, 1]} : vector<8x768xf32> to vector<8x256xf32>
    %178 = vector.extract_strided_slice %158 {offsets = [0, 512], sizes = [8, 256], strides = [1, 1]} : vector<8x768xf32> to vector<8x256xf32>
    %179 = arith.addf %178, %34 : vector<8x256xf32>
    %180 = arith.mulf %168, %179 : vector<8x256xf32>
    %181 = arith.addf %177, %180 : vector<8x256xf32>
    %182 = math.tanh %181 : vector<8x256xf32>
    %cst_69 = arith.constant 1.000000e+00 : f32
    %183 = vector.broadcast %cst_69 : f32 to vector<8x256xf32>
    %184 = arith.subf %183, %176 : vector<8x256xf32>
    %185 = arith.mulf %184, %182 : vector<8x256xf32>
    %186 = arith.mulf %176, %112 : vector<8x256xf32>
    %187 = arith.addf %185, %186 : vector<8x256xf32>
    %188 = arith.addi %36, %154 : i32
    %c8_i32_70 = arith.constant 8 : i32
    %189 = arith.cmpi slt, %188, %c8_i32_70 : i32
    %190 = arith.select %189, %187, %112 : vector<8x256xf32>
    %191 = vector.shape_cast %190 : vector<8x256xf32> to vector<1x8x256xf32>
    %192 = arith.truncf %191 : vector<1x8x256xf32> to vector<1x8x256xbf16>
    %193 = arith.index_cast %154 : i32 to index
    %c0_71 = arith.constant 0 : index
    %c0_72 = arith.constant 0 : index
    %194 = vector.load %arg8[%193, %c0_71, %c0_72] : memref<8x8x256xbf16, #tpu.memory_space<vmem>>, vector<1x8x256xbf16>
    tpu.vector_store %arg8[%193, %c0_71, %c0_72], %192 {strides = array<i32>} : memref<8x8x256xbf16, #tpu.memory_space<vmem>>, vector<1x8x256xbf16>,
    %c2_i32 = arith.constant 2 : i32
    %c8_i32_73 = arith.constant 8 : i32
    %195 = arith.muli %c2_i32, %c8_i32_73 : i32
    %196 = tpu.assume_multiple %195, 8 : i32
    %197 = arith.truncf %149 : vector<8x256xf32> to vector<8x256xbf16>
    %cst_74 = arith.constant dense<0.000000e+00> : vector<8x768xf32>
    %198 = tpu.matmul %197, %24, %cst_74 {dimension_numbers = #tpu.dot_dimension_numbers<[1], [0], [0], [1], [0, 0, 1, 1], [], []>} : vector<8x256xbf16>, vector<256x768xbf16>, vector<8x768xf32> -> vector<8x768xf32>
    %199 = arith.index_cast %196 : i32 to index
    %c0_75 = arith.constant 0 : index
    %200 = vector.load %arg11[%199, %c0_75] : memref<64x768xf32, #tpu.memory_space<vmem>>, vector<8x768xf32>
    %201 = vector.extract_strided_slice %200 {offsets = [0, 0], sizes = [8, 256], strides = [1, 1]} : vector<8x768xf32> to vector<8x256xf32>
    %202 = vector.extract_strided_slice %198 {offsets = [0, 0], sizes = [8, 256], strides = [1, 1]} : vector<8x768xf32> to vector<8x256xf32>
    %203 = arith.addf %201, %202 : vector<8x256xf32>
    %204 = arith.negf %203 : vector<8x256xf32>
    %205 = math.exp %204 : vector<8x256xf32>
    %cst_76 = arith.constant 1.000000e+00 : f32
    %206 = vector.broadcast %cst_76 : f32 to vector<8x256xf32>
    %207 = arith.addf %206, %205 : vector<8x256xf32>
    %208 = arith.divf %206, %207 : vector<8x256xf32>
    %209 = vector.extract_strided_slice %200 {offsets = [0, 256], sizes = [8, 256], strides = [1, 1]} : vector<8x768xf32> to vector<8x256xf32>
    %210 = vector.extract_strided_slice %198 {offsets = [0, 256], sizes = [8, 256], strides = [1, 1]} : vector<8x768xf32> to vector<8x256xf32>
    %211 = arith.addf %209, %210 : vector<8x256xf32>
    %212 = arith.negf %211 : vector<8x256xf32>
    %213 = math.exp %212 : vector<8x256xf32>
    %cst_77 = arith.constant 1.000000e+00 : f32
    %214 = vector.broadcast %cst_77 : f32 to vector<8x256xf32>
    %215 = arith.addf %214, %213 : vector<8x256xf32>
    %216 = arith.divf %214, %215 : vector<8x256xf32>
    %217 = vector.extract_strided_slice %200 {offsets = [0, 512], sizes = [8, 256], strides = [1, 1]} : vector<8x768xf32> to vector<8x256xf32>
    %218 = vector.extract_strided_slice %198 {offsets = [0, 512], sizes = [8, 256], strides = [1, 1]} : vector<8x768xf32> to vector<8x256xf32>
    %219 = arith.addf %218, %30 : vector<8x256xf32>
    %220 = arith.mulf %208, %219 : vector<8x256xf32>
    %221 = arith.addf %217, %220 : vector<8x256xf32>
    %222 = math.tanh %221 : vector<8x256xf32>
    %cst_78 = arith.constant 1.000000e+00 : f32
    %223 = vector.broadcast %cst_78 : f32 to vector<8x256xf32>
    %224 = arith.subf %223, %216 : vector<8x256xf32>
    %225 = arith.mulf %224, %222 : vector<8x256xf32>
    %226 = arith.mulf %216, %149 : vector<8x256xf32>
    %227 = arith.addf %225, %226 : vector<8x256xf32>
    %228 = vector.shape_cast %227 : vector<8x256xf32> to vector<1x8x256xf32>
    %229 = arith.truncf %228 : vector<1x8x256xf32> to vector<1x8x256xbf16>
    %230 = arith.index_cast %c2_i32 : i32 to index
    %c0_79 = arith.constant 0 : index
    %c0_80 = arith.constant 0 : index
    %231 = vector.load %arg7[%230, %c0_79, %c0_80] : memref<8x8x256xbf16, #tpu.memory_space<vmem>>, vector<1x8x256xbf16>
    tpu.vector_store %arg7[%230, %c0_79, %c0_80], %229 {strides = array<i32>} : memref<8x8x256xbf16, #tpu.memory_space<vmem>>, vector<1x8x256xbf16>,
    %c7_i32_81 = arith.constant 7 : i32
    %232 = arith.subi %c7_i32_81, %c2_i32 : i32
    %c8_i32_82 = arith.constant 8 : i32
    %233 = arith.muli %232, %c8_i32_82 : i32
    %234 = tpu.assume_multiple %233, 8 : i32
    %235 = arith.truncf %190 : vector<8x256xf32> to vector<8x256xbf16>
    %cst_83 = arith.constant dense<0.000000e+00> : vector<8x768xf32>
    %236 = tpu.matmul %235, %26, %cst_83 {dimension_numbers = #tpu.dot_dimension_numbers<[1], [0], [0], [1], [0, 0, 1, 1], [], []>} : vector<8x256xbf16>, vector<256x768xbf16>, vector<8x768xf32> -> vector<8x768xf32>
    %237 = arith.index_cast %234 : i32 to index
    %c0_84 = arith.constant 0 : index
    %238 = vector.load %arg12[%237, %c0_84] : memref<64x768xf32, #tpu.memory_space<vmem>>, vector<8x768xf32>
    %239 = vector.extract_strided_slice %238 {offsets = [0, 0], sizes = [8, 256], strides = [1, 1]} : vector<8x768xf32> to vector<8x256xf32>
    %240 = vector.extract_strided_slice %236 {offsets = [0, 0], sizes = [8, 256], strides = [1, 1]} : vector<8x768xf32> to vector<8x256xf32>
    %241 = arith.addf %239, %240 : vector<8x256xf32>
    %242 = arith.negf %241 : vector<8x256xf32>
    %243 = math.exp %242 : vector<8x256xf32>
    %cst_85 = arith.constant 1.000000e+00 : f32
    %244 = vector.broadcast %cst_85 : f32 to vector<8x256xf32>
    %245 = arith.addf %244, %243 : vector<8x256xf32>
    %246 = arith.divf %244, %245 : vector<8x256xf32>
    %247 = vector.extract_strided_slice %238 {offsets = [0, 256], sizes = [8, 256], strides = [1, 1]} : vector<8x768xf32> to vector<8x256xf32>
    %248 = vector.extract_strided_slice %236 {offsets = [0, 256], sizes = [8, 256], strides = [1, 1]} : vector<8x768xf32> to vector<8x256xf32>
    %249 = arith.addf %247, %248 : vector<8x256xf32>
    %250 = arith.negf %249 : vector<8x256xf32>
    %251 = math.exp %250 : vector<8x256xf32>
    %cst_86 = arith.constant 1.000000e+00 : f32
    %252 = vector.broadcast %cst_86 : f32 to vector<8x256xf32>
    %253 = arith.addf %252, %251 : vector<8x256xf32>
    %254 = arith.divf %252, %253 : vector<8x256xf32>
    %255 = vector.extract_strided_slice %238 {offsets = [0, 512], sizes = [8, 256], strides = [1, 1]} : vector<8x768xf32> to vector<8x256xf32>
    %256 = vector.extract_strided_slice %236 {offsets = [0, 512], sizes = [8, 256], strides = [1, 1]} : vector<8x768xf32> to vector<8x256xf32>
    %257 = arith.addf %256, %34 : vector<8x256xf32>
    %258 = arith.mulf %246, %257 : vector<8x256xf32>
    %259 = arith.addf %255, %258 : vector<8x256xf32>
    %260 = math.tanh %259 : vector<8x256xf32>
    %cst_87 = arith.constant 1.000000e+00 : f32
    %261 = vector.broadcast %cst_87 : f32 to vector<8x256xf32>
    %262 = arith.subf %261, %254 : vector<8x256xf32>
    %263 = arith.mulf %262, %260 : vector<8x256xf32>
    %264 = arith.mulf %254, %190 : vector<8x256xf32>
    %265 = arith.addf %263, %264 : vector<8x256xf32>
    %266 = arith.addi %36, %232 : i32
    %c8_i32_88 = arith.constant 8 : i32
    %267 = arith.cmpi slt, %266, %c8_i32_88 : i32
    %268 = arith.select %267, %265, %190 : vector<8x256xf32>
    %269 = vector.shape_cast %268 : vector<8x256xf32> to vector<1x8x256xf32>
    %270 = arith.truncf %269 : vector<1x8x256xf32> to vector<1x8x256xbf16>
    %271 = arith.index_cast %232 : i32 to index
    %c0_89 = arith.constant 0 : index
    %c0_90 = arith.constant 0 : index
    %272 = vector.load %arg8[%271, %c0_89, %c0_90] : memref<8x8x256xbf16, #tpu.memory_space<vmem>>, vector<1x8x256xbf16>
    tpu.vector_store %arg8[%271, %c0_89, %c0_90], %270 {strides = array<i32>} : memref<8x8x256xbf16, #tpu.memory_space<vmem>>, vector<1x8x256xbf16>,
    %c3_i32 = arith.constant 3 : i32
    %c8_i32_91 = arith.constant 8 : i32
    %273 = arith.muli %c3_i32, %c8_i32_91 : i32
    %274 = tpu.assume_multiple %273, 8 : i32
    %275 = arith.truncf %227 : vector<8x256xf32> to vector<8x256xbf16>
    %cst_92 = arith.constant dense<0.000000e+00> : vector<8x768xf32>
    %276 = tpu.matmul %275, %24, %cst_92 {dimension_numbers = #tpu.dot_dimension_numbers<[1], [0], [0], [1], [0, 0, 1, 1], [], []>} : vector<8x256xbf16>, vector<256x768xbf16>, vector<8x768xf32> -> vector<8x768xf32>
    %277 = arith.index_cast %274 : i32 to index
    %c0_93 = arith.constant 0 : index
    %278 = vector.load %arg11[%277, %c0_93] : memref<64x768xf32, #tpu.memory_space<vmem>>, vector<8x768xf32>
    %279 = vector.extract_strided_slice %278 {offsets = [0, 0], sizes = [8, 256], strides = [1, 1]} : vector<8x768xf32> to vector<8x256xf32>
    %280 = vector.extract_strided_slice %276 {offsets = [0, 0], sizes = [8, 256], strides = [1, 1]} : vector<8x768xf32> to vector<8x256xf32>
    %281 = arith.addf %279, %280 : vector<8x256xf32>
    %282 = arith.negf %281 : vector<8x256xf32>
    %283 = math.exp %282 : vector<8x256xf32>
    %cst_94 = arith.constant 1.000000e+00 : f32
    %284 = vector.broadcast %cst_94 : f32 to vector<8x256xf32>
    %285 = arith.addf %284, %283 : vector<8x256xf32>
    %286 = arith.divf %284, %285 : vector<8x256xf32>
    %287 = vector.extract_strided_slice %278 {offsets = [0, 256], sizes = [8, 256], strides = [1, 1]} : vector<8x768xf32> to vector<8x256xf32>
    %288 = vector.extract_strided_slice %276 {offsets = [0, 256], sizes = [8, 256], strides = [1, 1]} : vector<8x768xf32> to vector<8x256xf32>
    %289 = arith.addf %287, %288 : vector<8x256xf32>
    %290 = arith.negf %289 : vector<8x256xf32>
    %291 = math.exp %290 : vector<8x256xf32>
    %cst_95 = arith.constant 1.000000e+00 : f32
    %292 = vector.broadcast %cst_95 : f32 to vector<8x256xf32>
    %293 = arith.addf %292, %291 : vector<8x256xf32>
    %294 = arith.divf %292, %293 : vector<8x256xf32>
    %295 = vector.extract_strided_slice %278 {offsets = [0, 512], sizes = [8, 256], strides = [1, 1]} : vector<8x768xf32> to vector<8x256xf32>
    %296 = vector.extract_strided_slice %276 {offsets = [0, 512], sizes = [8, 256], strides = [1, 1]} : vector<8x768xf32> to vector<8x256xf32>
    %297 = arith.addf %296, %30 : vector<8x256xf32>
    %298 = arith.mulf %286, %297 : vector<8x256xf32>
    %299 = arith.addf %295, %298 : vector<8x256xf32>
    %300 = math.tanh %299 : vector<8x256xf32>
    %cst_96 = arith.constant 1.000000e+00 : f32
    %301 = vector.broadcast %cst_96 : f32 to vector<8x256xf32>
    %302 = arith.subf %301, %294 : vector<8x256xf32>
    %303 = arith.mulf %302, %300 : vector<8x256xf32>
    %304 = arith.mulf %294, %227 : vector<8x256xf32>
    %305 = arith.addf %303, %304 : vector<8x256xf32>
    %306 = vector.shape_cast %305 : vector<8x256xf32> to vector<1x8x256xf32>
    %307 = arith.truncf %306 : vector<1x8x256xf32> to vector<1x8x256xbf16>
    %308 = arith.index_cast %c3_i32 : i32 to index
    %c0_97 = arith.constant 0 : index
    %c0_98 = arith.constant 0 : index
    %309 = vector.load %arg7[%308, %c0_97, %c0_98] : memref<8x8x256xbf16, #tpu.memory_space<vmem>>, vector<1x8x256xbf16>
    tpu.vector_store %arg7[%308, %c0_97, %c0_98], %307 {strides = array<i32>} : memref<8x8x256xbf16, #tpu.memory_space<vmem>>, vector<1x8x256xbf16>,
    %c7_i32_99 = arith.constant 7 : i32
    %310 = arith.subi %c7_i32_99, %c3_i32 : i32
    %c8_i32_100 = arith.constant 8 : i32
    %311 = arith.muli %310, %c8_i32_100 : i32
    %312 = tpu.assume_multiple %311, 8 : i32
    %313 = arith.truncf %268 : vector<8x256xf32> to vector<8x256xbf16>
    %cst_101 = arith.constant dense<0.000000e+00> : vector<8x768xf32>
    %314 = tpu.matmul %313, %26, %cst_101 {dimension_numbers = #tpu.dot_dimension_numbers<[1], [0], [0], [1], [0, 0, 1, 1], [], []>} : vector<8x256xbf16>, vector<256x768xbf16>, vector<8x768xf32> -> vector<8x768xf32>
    %315 = arith.index_cast %312 : i32 to index
    %c0_102 = arith.constant 0 : index
    %316 = vector.load %arg12[%315, %c0_102] : memref<64x768xf32, #tpu.memory_space<vmem>>, vector<8x768xf32>
    %317 = vector.extract_strided_slice %316 {offsets = [0, 0], sizes = [8, 256], strides = [1, 1]} : vector<8x768xf32> to vector<8x256xf32>
    %318 = vector.extract_strided_slice %314 {offsets = [0, 0], sizes = [8, 256], strides = [1, 1]} : vector<8x768xf32> to vector<8x256xf32>
    %319 = arith.addf %317, %318 : vector<8x256xf32>
    %320 = arith.negf %319 : vector<8x256xf32>
    %321 = math.exp %320 : vector<8x256xf32>
    %cst_103 = arith.constant 1.000000e+00 : f32
    %322 = vector.broadcast %cst_103 : f32 to vector<8x256xf32>
    %323 = arith.addf %322, %321 : vector<8x256xf32>
    %324 = arith.divf %322, %323 : vector<8x256xf32>
    %325 = vector.extract_strided_slice %316 {offsets = [0, 256], sizes = [8, 256], strides = [1, 1]} : vector<8x768xf32> to vector<8x256xf32>
    %326 = vector.extract_strided_slice %314 {offsets = [0, 256], sizes = [8, 256], strides = [1, 1]} : vector<8x768xf32> to vector<8x256xf32>
    %327 = arith.addf %325, %326 : vector<8x256xf32>
    %328 = arith.negf %327 : vector<8x256xf32>
    %329 = math.exp %328 : vector<8x256xf32>
    %cst_104 = arith.constant 1.000000e+00 : f32
    %330 = vector.broadcast %cst_104 : f32 to vector<8x256xf32>
    %331 = arith.addf %330, %329 : vector<8x256xf32>
    %332 = arith.divf %330, %331 : vector<8x256xf32>
    %333 = vector.extract_strided_slice %316 {offsets = [0, 512], sizes = [8, 256], strides = [1, 1]} : vector<8x768xf32> to vector<8x256xf32>
    %334 = vector.extract_strided_slice %314 {offsets = [0, 512], sizes = [8, 256], strides = [1, 1]} : vector<8x768xf32> to vector<8x256xf32>
    %335 = arith.addf %334, %34 : vector<8x256xf32>
    %336 = arith.mulf %324, %335 : vector<8x256xf32>
    %337 = arith.addf %333, %336 : vector<8x256xf32>
    %338 = math.tanh %337 : vector<8x256xf32>
    %cst_105 = arith.constant 1.000000e+00 : f32
    %339 = vector.broadcast %cst_105 : f32 to vector<8x256xf32>
    %340 = arith.subf %339, %332 : vector<8x256xf32>
    %341 = arith.mulf %340, %338 : vector<8x256xf32>
    %342 = arith.mulf %332, %268 : vector<8x256xf32>
    %343 = arith.addf %341, %342 : vector<8x256xf32>
    %344 = arith.addi %36, %310 : i32
    %c8_i32_106 = arith.constant 8 : i32
    %345 = arith.cmpi slt, %344, %c8_i32_106 : i32
    %346 = arith.select %345, %343, %268 : vector<8x256xf32>
    %347 = vector.shape_cast %346 : vector<8x256xf32> to vector<1x8x256xf32>
    %348 = arith.truncf %347 : vector<1x8x256xf32> to vector<1x8x256xbf16>
    %349 = arith.index_cast %310 : i32 to index
    %c0_107 = arith.constant 0 : index
    %c0_108 = arith.constant 0 : index
    %350 = vector.load %arg8[%349, %c0_107, %c0_108] : memref<8x8x256xbf16, #tpu.memory_space<vmem>>, vector<1x8x256xbf16>
    tpu.vector_store %arg8[%349, %c0_107, %c0_108], %348 {strides = array<i32>} : memref<8x8x256xbf16, #tpu.memory_space<vmem>>, vector<1x8x256xbf16>,
    %c4_i32 = arith.constant 4 : i32
    %c8_i32_109 = arith.constant 8 : i32
    %351 = arith.muli %c4_i32, %c8_i32_109 : i32
    %352 = tpu.assume_multiple %351, 8 : i32
    %353 = arith.truncf %305 : vector<8x256xf32> to vector<8x256xbf16>
    %cst_110 = arith.constant dense<0.000000e+00> : vector<8x768xf32>
    %354 = tpu.matmul %353, %24, %cst_110 {dimension_numbers = #tpu.dot_dimension_numbers<[1], [0], [0], [1], [0, 0, 1, 1], [], []>} : vector<8x256xbf16>, vector<256x768xbf16>, vector<8x768xf32> -> vector<8x768xf32>
    %355 = arith.index_cast %352 : i32 to index
    %c0_111 = arith.constant 0 : index
    %356 = vector.load %arg11[%355, %c0_111] : memref<64x768xf32, #tpu.memory_space<vmem>>, vector<8x768xf32>
    %357 = vector.extract_strided_slice %356 {offsets = [0, 0], sizes = [8, 256], strides = [1, 1]} : vector<8x768xf32> to vector<8x256xf32>
    %358 = vector.extract_strided_slice %354 {offsets = [0, 0], sizes = [8, 256], strides = [1, 1]} : vector<8x768xf32> to vector<8x256xf32>
    %359 = arith.addf %357, %358 : vector<8x256xf32>
    %360 = arith.negf %359 : vector<8x256xf32>
    %361 = math.exp %360 : vector<8x256xf32>
    %cst_112 = arith.constant 1.000000e+00 : f32
    %362 = vector.broadcast %cst_112 : f32 to vector<8x256xf32>
    %363 = arith.addf %362, %361 : vector<8x256xf32>
    %364 = arith.divf %362, %363 : vector<8x256xf32>
    %365 = vector.extract_strided_slice %356 {offsets = [0, 256], sizes = [8, 256], strides = [1, 1]} : vector<8x768xf32> to vector<8x256xf32>
    %366 = vector.extract_strided_slice %354 {offsets = [0, 256], sizes = [8, 256], strides = [1, 1]} : vector<8x768xf32> to vector<8x256xf32>
    %367 = arith.addf %365, %366 : vector<8x256xf32>
    %368 = arith.negf %367 : vector<8x256xf32>
    %369 = math.exp %368 : vector<8x256xf32>
    %cst_113 = arith.constant 1.000000e+00 : f32
    %370 = vector.broadcast %cst_113 : f32 to vector<8x256xf32>
    %371 = arith.addf %370, %369 : vector<8x256xf32>
    %372 = arith.divf %370, %371 : vector<8x256xf32>
    %373 = vector.extract_strided_slice %356 {offsets = [0, 512], sizes = [8, 256], strides = [1, 1]} : vector<8x768xf32> to vector<8x256xf32>
    %374 = vector.extract_strided_slice %354 {offsets = [0, 512], sizes = [8, 256], strides = [1, 1]} : vector<8x768xf32> to vector<8x256xf32>
    %375 = arith.addf %374, %30 : vector<8x256xf32>
    %376 = arith.mulf %364, %375 : vector<8x256xf32>
    %377 = arith.addf %373, %376 : vector<8x256xf32>
    %378 = math.tanh %377 : vector<8x256xf32>
    %cst_114 = arith.constant 1.000000e+00 : f32
    %379 = vector.broadcast %cst_114 : f32 to vector<8x256xf32>
    %380 = arith.subf %379, %372 : vector<8x256xf32>
    %381 = arith.mulf %380, %378 : vector<8x256xf32>
    %382 = arith.mulf %372, %305 : vector<8x256xf32>
    %383 = arith.addf %381, %382 : vector<8x256xf32>
    %384 = vector.shape_cast %383 : vector<8x256xf32> to vector<1x8x256xf32>
    %385 = arith.truncf %384 : vector<1x8x256xf32> to vector<1x8x256xbf16>
    %386 = arith.index_cast %c4_i32 : i32 to index
    %c0_115 = arith.constant 0 : index
    %c0_116 = arith.constant 0 : index
    %387 = vector.load %arg7[%386, %c0_115, %c0_116] : memref<8x8x256xbf16, #tpu.memory_space<vmem>>, vector<1x8x256xbf16>
    tpu.vector_store %arg7[%386, %c0_115, %c0_116], %385 {strides = array<i32>} : memref<8x8x256xbf16, #tpu.memory_space<vmem>>, vector<1x8x256xbf16>,
    %c7_i32_117 = arith.constant 7 : i32
    %388 = arith.subi %c7_i32_117, %c4_i32 : i32
    %c8_i32_118 = arith.constant 8 : i32
    %389 = arith.muli %388, %c8_i32_118 : i32
    %390 = tpu.assume_multiple %389, 8 : i32
    %391 = arith.truncf %346 : vector<8x256xf32> to vector<8x256xbf16>
    %cst_119 = arith.constant dense<0.000000e+00> : vector<8x768xf32>
    %392 = tpu.matmul %391, %26, %cst_119 {dimension_numbers = #tpu.dot_dimension_numbers<[1], [0], [0], [1], [0, 0, 1, 1], [], []>} : vector<8x256xbf16>, vector<256x768xbf16>, vector<8x768xf32> -> vector<8x768xf32>
    %393 = arith.index_cast %390 : i32 to index
    %c0_120 = arith.constant 0 : index
    %394 = vector.load %arg12[%393, %c0_120] : memref<64x768xf32, #tpu.memory_space<vmem>>, vector<8x768xf32>
    %395 = vector.extract_strided_slice %394 {offsets = [0, 0], sizes = [8, 256], strides = [1, 1]} : vector<8x768xf32> to vector<8x256xf32>
    %396 = vector.extract_strided_slice %392 {offsets = [0, 0], sizes = [8, 256], strides = [1, 1]} : vector<8x768xf32> to vector<8x256xf32>
    %397 = arith.addf %395, %396 : vector<8x256xf32>
    %398 = arith.negf %397 : vector<8x256xf32>
    %399 = math.exp %398 : vector<8x256xf32>
    %cst_121 = arith.constant 1.000000e+00 : f32
    %400 = vector.broadcast %cst_121 : f32 to vector<8x256xf32>
    %401 = arith.addf %400, %399 : vector<8x256xf32>
    %402 = arith.divf %400, %401 : vector<8x256xf32>
    %403 = vector.extract_strided_slice %394 {offsets = [0, 256], sizes = [8, 256], strides = [1, 1]} : vector<8x768xf32> to vector<8x256xf32>
    %404 = vector.extract_strided_slice %392 {offsets = [0, 256], sizes = [8, 256], strides = [1, 1]} : vector<8x768xf32> to vector<8x256xf32>
    %405 = arith.addf %403, %404 : vector<8x256xf32>
    %406 = arith.negf %405 : vector<8x256xf32>
    %407 = math.exp %406 : vector<8x256xf32>
    %cst_122 = arith.constant 1.000000e+00 : f32
    %408 = vector.broadcast %cst_122 : f32 to vector<8x256xf32>
    %409 = arith.addf %408, %407 : vector<8x256xf32>
    %410 = arith.divf %408, %409 : vector<8x256xf32>
    %411 = vector.extract_strided_slice %394 {offsets = [0, 512], sizes = [8, 256], strides = [1, 1]} : vector<8x768xf32> to vector<8x256xf32>
    %412 = vector.extract_strided_slice %392 {offsets = [0, 512], sizes = [8, 256], strides = [1, 1]} : vector<8x768xf32> to vector<8x256xf32>
    %413 = arith.addf %412, %34 : vector<8x256xf32>
    %414 = arith.mulf %402, %413 : vector<8x256xf32>
    %415 = arith.addf %411, %414 : vector<8x256xf32>
    %416 = math.tanh %415 : vector<8x256xf32>
    %cst_123 = arith.constant 1.000000e+00 : f32
    %417 = vector.broadcast %cst_123 : f32 to vector<8x256xf32>
    %418 = arith.subf %417, %410 : vector<8x256xf32>
    %419 = arith.mulf %418, %416 : vector<8x256xf32>
    %420 = arith.mulf %410, %346 : vector<8x256xf32>
    %421 = arith.addf %419, %420 : vector<8x256xf32>
    %422 = arith.addi %36, %388 : i32
    %c8_i32_124 = arith.constant 8 : i32
    %423 = arith.cmpi slt, %422, %c8_i32_124 : i32
    %424 = arith.select %423, %421, %346 : vector<8x256xf32>
    %425 = vector.shape_cast %424 : vector<8x256xf32> to vector<1x8x256xf32>
    %426 = arith.truncf %425 : vector<1x8x256xf32> to vector<1x8x256xbf16>
    %427 = arith.index_cast %388 : i32 to index
    %c0_125 = arith.constant 0 : index
    %c0_126 = arith.constant 0 : index
    %428 = vector.load %arg8[%427, %c0_125, %c0_126] : memref<8x8x256xbf16, #tpu.memory_space<vmem>>, vector<1x8x256xbf16>
    tpu.vector_store %arg8[%427, %c0_125, %c0_126], %426 {strides = array<i32>} : memref<8x8x256xbf16, #tpu.memory_space<vmem>>, vector<1x8x256xbf16>,
    %c5_i32 = arith.constant 5 : i32
    %c8_i32_127 = arith.constant 8 : i32
    %429 = arith.muli %c5_i32, %c8_i32_127 : i32
    %430 = tpu.assume_multiple %429, 8 : i32
    %431 = arith.truncf %383 : vector<8x256xf32> to vector<8x256xbf16>
    %cst_128 = arith.constant dense<0.000000e+00> : vector<8x768xf32>
    %432 = tpu.matmul %431, %24, %cst_128 {dimension_numbers = #tpu.dot_dimension_numbers<[1], [0], [0], [1], [0, 0, 1, 1], [], []>} : vector<8x256xbf16>, vector<256x768xbf16>, vector<8x768xf32> -> vector<8x768xf32>
    %433 = arith.index_cast %430 : i32 to index
    %c0_129 = arith.constant 0 : index
    %434 = vector.load %arg11[%433, %c0_129] : memref<64x768xf32, #tpu.memory_space<vmem>>, vector<8x768xf32>
    %435 = vector.extract_strided_slice %434 {offsets = [0, 0], sizes = [8, 256], strides = [1, 1]} : vector<8x768xf32> to vector<8x256xf32>
    %436 = vector.extract_strided_slice %432 {offsets = [0, 0], sizes = [8, 256], strides = [1, 1]} : vector<8x768xf32> to vector<8x256xf32>
    %437 = arith.addf %435, %436 : vector<8x256xf32>
    %438 = arith.negf %437 : vector<8x256xf32>
    %439 = math.exp %438 : vector<8x256xf32>
    %cst_130 = arith.constant 1.000000e+00 : f32
    %440 = vector.broadcast %cst_130 : f32 to vector<8x256xf32>
    %441 = arith.addf %440, %439 : vector<8x256xf32>
    %442 = arith.divf %440, %441 : vector<8x256xf32>
    %443 = vector.extract_strided_slice %434 {offsets = [0, 256], sizes = [8, 256], strides = [1, 1]} : vector<8x768xf32> to vector<8x256xf32>
    %444 = vector.extract_strided_slice %432 {offsets = [0, 256], sizes = [8, 256], strides = [1, 1]} : vector<8x768xf32> to vector<8x256xf32>
    %445 = arith.addf %443, %444 : vector<8x256xf32>
    %446 = arith.negf %445 : vector<8x256xf32>
    %447 = math.exp %446 : vector<8x256xf32>
    %cst_131 = arith.constant 1.000000e+00 : f32
    %448 = vector.broadcast %cst_131 : f32 to vector<8x256xf32>
    %449 = arith.addf %448, %447 : vector<8x256xf32>
    %450 = arith.divf %448, %449 : vector<8x256xf32>
    %451 = vector.extract_strided_slice %434 {offsets = [0, 512], sizes = [8, 256], strides = [1, 1]} : vector<8x768xf32> to vector<8x256xf32>
    %452 = vector.extract_strided_slice %432 {offsets = [0, 512], sizes = [8, 256], strides = [1, 1]} : vector<8x768xf32> to vector<8x256xf32>
    %453 = arith.addf %452, %30 : vector<8x256xf32>
    %454 = arith.mulf %442, %453 : vector<8x256xf32>
    %455 = arith.addf %451, %454 : vector<8x256xf32>
    %456 = math.tanh %455 : vector<8x256xf32>
    %cst_132 = arith.constant 1.000000e+00 : f32
    %457 = vector.broadcast %cst_132 : f32 to vector<8x256xf32>
    %458 = arith.subf %457, %450 : vector<8x256xf32>
    %459 = arith.mulf %458, %456 : vector<8x256xf32>
    %460 = arith.mulf %450, %383 : vector<8x256xf32>
    %461 = arith.addf %459, %460 : vector<8x256xf32>
    %462 = vector.shape_cast %461 : vector<8x256xf32> to vector<1x8x256xf32>
    %463 = arith.truncf %462 : vector<1x8x256xf32> to vector<1x8x256xbf16>
    %464 = arith.index_cast %c5_i32 : i32 to index
    %c0_133 = arith.constant 0 : index
    %c0_134 = arith.constant 0 : index
    %465 = vector.load %arg7[%464, %c0_133, %c0_134] : memref<8x8x256xbf16, #tpu.memory_space<vmem>>, vector<1x8x256xbf16>
    tpu.vector_store %arg7[%464, %c0_133, %c0_134], %463 {strides = array<i32>} : memref<8x8x256xbf16, #tpu.memory_space<vmem>>, vector<1x8x256xbf16>,
    %c7_i32_135 = arith.constant 7 : i32
    %466 = arith.subi %c7_i32_135, %c5_i32 : i32
    %c8_i32_136 = arith.constant 8 : i32
    %467 = arith.muli %466, %c8_i32_136 : i32
    %468 = tpu.assume_multiple %467, 8 : i32
    %469 = arith.truncf %424 : vector<8x256xf32> to vector<8x256xbf16>
    %cst_137 = arith.constant dense<0.000000e+00> : vector<8x768xf32>
    %470 = tpu.matmul %469, %26, %cst_137 {dimension_numbers = #tpu.dot_dimension_numbers<[1], [0], [0], [1], [0, 0, 1, 1], [], []>} : vector<8x256xbf16>, vector<256x768xbf16>, vector<8x768xf32> -> vector<8x768xf32>
    %471 = arith.index_cast %468 : i32 to index
    %c0_138 = arith.constant 0 : index
    %472 = vector.load %arg12[%471, %c0_138] : memref<64x768xf32, #tpu.memory_space<vmem>>, vector<8x768xf32>
    %473 = vector.extract_strided_slice %472 {offsets = [0, 0], sizes = [8, 256], strides = [1, 1]} : vector<8x768xf32> to vector<8x256xf32>
    %474 = vector.extract_strided_slice %470 {offsets = [0, 0], sizes = [8, 256], strides = [1, 1]} : vector<8x768xf32> to vector<8x256xf32>
    %475 = arith.addf %473, %474 : vector<8x256xf32>
    %476 = arith.negf %475 : vector<8x256xf32>
    %477 = math.exp %476 : vector<8x256xf32>
    %cst_139 = arith.constant 1.000000e+00 : f32
    %478 = vector.broadcast %cst_139 : f32 to vector<8x256xf32>
    %479 = arith.addf %478, %477 : vector<8x256xf32>
    %480 = arith.divf %478, %479 : vector<8x256xf32>
    %481 = vector.extract_strided_slice %472 {offsets = [0, 256], sizes = [8, 256], strides = [1, 1]} : vector<8x768xf32> to vector<8x256xf32>
    %482 = vector.extract_strided_slice %470 {offsets = [0, 256], sizes = [8, 256], strides = [1, 1]} : vector<8x768xf32> to vector<8x256xf32>
    %483 = arith.addf %481, %482 : vector<8x256xf32>
    %484 = arith.negf %483 : vector<8x256xf32>
    %485 = math.exp %484 : vector<8x256xf32>
    %cst_140 = arith.constant 1.000000e+00 : f32
    %486 = vector.broadcast %cst_140 : f32 to vector<8x256xf32>
    %487 = arith.addf %486, %485 : vector<8x256xf32>
    %488 = arith.divf %486, %487 : vector<8x256xf32>
    %489 = vector.extract_strided_slice %472 {offsets = [0, 512], sizes = [8, 256], strides = [1, 1]} : vector<8x768xf32> to vector<8x256xf32>
    %490 = vector.extract_strided_slice %470 {offsets = [0, 512], sizes = [8, 256], strides = [1, 1]} : vector<8x768xf32> to vector<8x256xf32>
    %491 = arith.addf %490, %34 : vector<8x256xf32>
    %492 = arith.mulf %480, %491 : vector<8x256xf32>
    %493 = arith.addf %489, %492 : vector<8x256xf32>
    %494 = math.tanh %493 : vector<8x256xf32>
    %cst_141 = arith.constant 1.000000e+00 : f32
    %495 = vector.broadcast %cst_141 : f32 to vector<8x256xf32>
    %496 = arith.subf %495, %488 : vector<8x256xf32>
    %497 = arith.mulf %496, %494 : vector<8x256xf32>
    %498 = arith.mulf %488, %424 : vector<8x256xf32>
    %499 = arith.addf %497, %498 : vector<8x256xf32>
    %500 = arith.addi %36, %466 : i32
    %c8_i32_142 = arith.constant 8 : i32
    %501 = arith.cmpi slt, %500, %c8_i32_142 : i32
    %502 = arith.select %501, %499, %424 : vector<8x256xf32>
    %503 = vector.shape_cast %502 : vector<8x256xf32> to vector<1x8x256xf32>
    %504 = arith.truncf %503 : vector<1x8x256xf32> to vector<1x8x256xbf16>
    %505 = arith.index_cast %466 : i32 to index
    %c0_143 = arith.constant 0 : index
    %c0_144 = arith.constant 0 : index
    %506 = vector.load %arg8[%505, %c0_143, %c0_144] : memref<8x8x256xbf16, #tpu.memory_space<vmem>>, vector<1x8x256xbf16>
    tpu.vector_store %arg8[%505, %c0_143, %c0_144], %504 {strides = array<i32>} : memref<8x8x256xbf16, #tpu.memory_space<vmem>>, vector<1x8x256xbf16>,
    %c6_i32 = arith.constant 6 : i32
    %c8_i32_145 = arith.constant 8 : i32
    %507 = arith.muli %c6_i32, %c8_i32_145 : i32
    %508 = tpu.assume_multiple %507, 8 : i32
    %509 = arith.truncf %461 : vector<8x256xf32> to vector<8x256xbf16>
    %cst_146 = arith.constant dense<0.000000e+00> : vector<8x768xf32>
    %510 = tpu.matmul %509, %24, %cst_146 {dimension_numbers = #tpu.dot_dimension_numbers<[1], [0], [0], [1], [0, 0, 1, 1], [], []>} : vector<8x256xbf16>, vector<256x768xbf16>, vector<8x768xf32> -> vector<8x768xf32>
    %511 = arith.index_cast %508 : i32 to index
    %c0_147 = arith.constant 0 : index
    %512 = vector.load %arg11[%511, %c0_147] : memref<64x768xf32, #tpu.memory_space<vmem>>, vector<8x768xf32>
    %513 = vector.extract_strided_slice %512 {offsets = [0, 0], sizes = [8, 256], strides = [1, 1]} : vector<8x768xf32> to vector<8x256xf32>
    %514 = vector.extract_strided_slice %510 {offsets = [0, 0], sizes = [8, 256], strides = [1, 1]} : vector<8x768xf32> to vector<8x256xf32>
    %515 = arith.addf %513, %514 : vector<8x256xf32>
    %516 = arith.negf %515 : vector<8x256xf32>
    %517 = math.exp %516 : vector<8x256xf32>
    %cst_148 = arith.constant 1.000000e+00 : f32
    %518 = vector.broadcast %cst_148 : f32 to vector<8x256xf32>
    %519 = arith.addf %518, %517 : vector<8x256xf32>
    %520 = arith.divf %518, %519 : vector<8x256xf32>
    %521 = vector.extract_strided_slice %512 {offsets = [0, 256], sizes = [8, 256], strides = [1, 1]} : vector<8x768xf32> to vector<8x256xf32>
    %522 = vector.extract_strided_slice %510 {offsets = [0, 256], sizes = [8, 256], strides = [1, 1]} : vector<8x768xf32> to vector<8x256xf32>
    %523 = arith.addf %521, %522 : vector<8x256xf32>
    %524 = arith.negf %523 : vector<8x256xf32>
    %525 = math.exp %524 : vector<8x256xf32>
    %cst_149 = arith.constant 1.000000e+00 : f32
    %526 = vector.broadcast %cst_149 : f32 to vector<8x256xf32>
    %527 = arith.addf %526, %525 : vector<8x256xf32>
    %528 = arith.divf %526, %527 : vector<8x256xf32>
    %529 = vector.extract_strided_slice %512 {offsets = [0, 512], sizes = [8, 256], strides = [1, 1]} : vector<8x768xf32> to vector<8x256xf32>
    %530 = vector.extract_strided_slice %510 {offsets = [0, 512], sizes = [8, 256], strides = [1, 1]} : vector<8x768xf32> to vector<8x256xf32>
    %531 = arith.addf %530, %30 : vector<8x256xf32>
    %532 = arith.mulf %520, %531 : vector<8x256xf32>
    %533 = arith.addf %529, %532 : vector<8x256xf32>
    %534 = math.tanh %533 : vector<8x256xf32>
    %cst_150 = arith.constant 1.000000e+00 : f32
    %535 = vector.broadcast %cst_150 : f32 to vector<8x256xf32>
    %536 = arith.subf %535, %528 : vector<8x256xf32>
    %537 = arith.mulf %536, %534 : vector<8x256xf32>
    %538 = arith.mulf %528, %461 : vector<8x256xf32>
    %539 = arith.addf %537, %538 : vector<8x256xf32>
    %540 = vector.shape_cast %539 : vector<8x256xf32> to vector<1x8x256xf32>
    %541 = arith.truncf %540 : vector<1x8x256xf32> to vector<1x8x256xbf16>
    %542 = arith.index_cast %c6_i32 : i32 to index
    %c0_151 = arith.constant 0 : index
    %c0_152 = arith.constant 0 : index
    %543 = vector.load %arg7[%542, %c0_151, %c0_152] : memref<8x8x256xbf16, #tpu.memory_space<vmem>>, vector<1x8x256xbf16>
    tpu.vector_store %arg7[%542, %c0_151, %c0_152], %541 {strides = array<i32>} : memref<8x8x256xbf16, #tpu.memory_space<vmem>>, vector<1x8x256xbf16>,
    %c7_i32_153 = arith.constant 7 : i32
    %544 = arith.subi %c7_i32_153, %c6_i32 : i32
    %c8_i32_154 = arith.constant 8 : i32
    %545 = arith.muli %544, %c8_i32_154 : i32
    %546 = tpu.assume_multiple %545, 8 : i32
    %547 = arith.truncf %502 : vector<8x256xf32> to vector<8x256xbf16>
    %cst_155 = arith.constant dense<0.000000e+00> : vector<8x768xf32>
    %548 = tpu.matmul %547, %26, %cst_155 {dimension_numbers = #tpu.dot_dimension_numbers<[1], [0], [0], [1], [0, 0, 1, 1], [], []>} : vector<8x256xbf16>, vector<256x768xbf16>, vector<8x768xf32> -> vector<8x768xf32>
    %549 = arith.index_cast %546 : i32 to index
    %c0_156 = arith.constant 0 : index
    %550 = vector.load %arg12[%549, %c0_156] : memref<64x768xf32, #tpu.memory_space<vmem>>, vector<8x768xf32>
    %551 = vector.extract_strided_slice %550 {offsets = [0, 0], sizes = [8, 256], strides = [1, 1]} : vector<8x768xf32> to vector<8x256xf32>
    %552 = vector.extract_strided_slice %548 {offsets = [0, 0], sizes = [8, 256], strides = [1, 1]} : vector<8x768xf32> to vector<8x256xf32>
    %553 = arith.addf %551, %552 : vector<8x256xf32>
    %554 = arith.negf %553 : vector<8x256xf32>
    %555 = math.exp %554 : vector<8x256xf32>
    %cst_157 = arith.constant 1.000000e+00 : f32
    %556 = vector.broadcast %cst_157 : f32 to vector<8x256xf32>
    %557 = arith.addf %556, %555 : vector<8x256xf32>
    %558 = arith.divf %556, %557 : vector<8x256xf32>
    %559 = vector.extract_strided_slice %550 {offsets = [0, 256], sizes = [8, 256], strides = [1, 1]} : vector<8x768xf32> to vector<8x256xf32>
    %560 = vector.extract_strided_slice %548 {offsets = [0, 256], sizes = [8, 256], strides = [1, 1]} : vector<8x768xf32> to vector<8x256xf32>
    %561 = arith.addf %559, %560 : vector<8x256xf32>
    %562 = arith.negf %561 : vector<8x256xf32>
    %563 = math.exp %562 : vector<8x256xf32>
    %cst_158 = arith.constant 1.000000e+00 : f32
    %564 = vector.broadcast %cst_158 : f32 to vector<8x256xf32>
    %565 = arith.addf %564, %563 : vector<8x256xf32>
    %566 = arith.divf %564, %565 : vector<8x256xf32>
    %567 = vector.extract_strided_slice %550 {offsets = [0, 512], sizes = [8, 256], strides = [1, 1]} : vector<8x768xf32> to vector<8x256xf32>
    %568 = vector.extract_strided_slice %548 {offsets = [0, 512], sizes = [8, 256], strides = [1, 1]} : vector<8x768xf32> to vector<8x256xf32>
    %569 = arith.addf %568, %34 : vector<8x256xf32>
    %570 = arith.mulf %558, %569 : vector<8x256xf32>
    %571 = arith.addf %567, %570 : vector<8x256xf32>
    %572 = math.tanh %571 : vector<8x256xf32>
    %cst_159 = arith.constant 1.000000e+00 : f32
    %573 = vector.broadcast %cst_159 : f32 to vector<8x256xf32>
    %574 = arith.subf %573, %566 : vector<8x256xf32>
    %575 = arith.mulf %574, %572 : vector<8x256xf32>
    %576 = arith.mulf %566, %502 : vector<8x256xf32>
    %577 = arith.addf %575, %576 : vector<8x256xf32>
    %578 = arith.addi %36, %544 : i32
    %c8_i32_160 = arith.constant 8 : i32
    %579 = arith.cmpi slt, %578, %c8_i32_160 : i32
    %580 = arith.select %579, %577, %502 : vector<8x256xf32>
    %581 = vector.shape_cast %580 : vector<8x256xf32> to vector<1x8x256xf32>
    %582 = arith.truncf %581 : vector<1x8x256xf32> to vector<1x8x256xbf16>
    %583 = arith.index_cast %544 : i32 to index
    %c0_161 = arith.constant 0 : index
    %c0_162 = arith.constant 0 : index
    %584 = vector.load %arg8[%583, %c0_161, %c0_162] : memref<8x8x256xbf16, #tpu.memory_space<vmem>>, vector<1x8x256xbf16>
    tpu.vector_store %arg8[%583, %c0_161, %c0_162], %582 {strides = array<i32>} : memref<8x8x256xbf16, #tpu.memory_space<vmem>>, vector<1x8x256xbf16>,
    %c7_i32_163 = arith.constant 7 : i32
    %c8_i32_164 = arith.constant 8 : i32
    %585 = arith.muli %c7_i32_163, %c8_i32_164 : i32
    %586 = tpu.assume_multiple %585, 8 : i32
    %587 = arith.truncf %539 : vector<8x256xf32> to vector<8x256xbf16>
    %cst_165 = arith.constant dense<0.000000e+00> : vector<8x768xf32>
    %588 = tpu.matmul %587, %24, %cst_165 {dimension_numbers = #tpu.dot_dimension_numbers<[1], [0], [0], [1], [0, 0, 1, 1], [], []>} : vector<8x256xbf16>, vector<256x768xbf16>, vector<8x768xf32> -> vector<8x768xf32>
    %589 = arith.index_cast %586 : i32 to index
    %c0_166 = arith.constant 0 : index
    %590 = vector.load %arg11[%589, %c0_166] : memref<64x768xf32, #tpu.memory_space<vmem>>, vector<8x768xf32>
    %591 = vector.extract_strided_slice %590 {offsets = [0, 0], sizes = [8, 256], strides = [1, 1]} : vector<8x768xf32> to vector<8x256xf32>
    %592 = vector.extract_strided_slice %588 {offsets = [0, 0], sizes = [8, 256], strides = [1, 1]} : vector<8x768xf32> to vector<8x256xf32>
    %593 = arith.addf %591, %592 : vector<8x256xf32>
    %594 = arith.negf %593 : vector<8x256xf32>
    %595 = math.exp %594 : vector<8x256xf32>
    %cst_167 = arith.constant 1.000000e+00 : f32
    %596 = vector.broadcast %cst_167 : f32 to vector<8x256xf32>
    %597 = arith.addf %596, %595 : vector<8x256xf32>
    %598 = arith.divf %596, %597 : vector<8x256xf32>
    %599 = vector.extract_strided_slice %590 {offsets = [0, 256], sizes = [8, 256], strides = [1, 1]} : vector<8x768xf32> to vector<8x256xf32>
    %600 = vector.extract_strided_slice %588 {offsets = [0, 256], sizes = [8, 256], strides = [1, 1]} : vector<8x768xf32> to vector<8x256xf32>
    %601 = arith.addf %599, %600 : vector<8x256xf32>
    %602 = arith.negf %601 : vector<8x256xf32>
    %603 = math.exp %602 : vector<8x256xf32>
    %cst_168 = arith.constant 1.000000e+00 : f32
    %604 = vector.broadcast %cst_168 : f32 to vector<8x256xf32>
    %605 = arith.addf %604, %603 : vector<8x256xf32>
    %606 = arith.divf %604, %605 : vector<8x256xf32>
    %607 = vector.extract_strided_slice %590 {offsets = [0, 512], sizes = [8, 256], strides = [1, 1]} : vector<8x768xf32> to vector<8x256xf32>
    %608 = vector.extract_strided_slice %588 {offsets = [0, 512], sizes = [8, 256], strides = [1, 1]} : vector<8x768xf32> to vector<8x256xf32>
    %609 = arith.addf %608, %30 : vector<8x256xf32>
    %610 = arith.mulf %598, %609 : vector<8x256xf32>
    %611 = arith.addf %607, %610 : vector<8x256xf32>
    %612 = math.tanh %611 : vector<8x256xf32>
    %cst_169 = arith.constant 1.000000e+00 : f32
    %613 = vector.broadcast %cst_169 : f32 to vector<8x256xf32>
    %614 = arith.subf %613, %606 : vector<8x256xf32>
    %615 = arith.mulf %614, %612 : vector<8x256xf32>
    %616 = arith.mulf %606, %539 : vector<8x256xf32>
    %617 = arith.addf %615, %616 : vector<8x256xf32>
    %618 = vector.shape_cast %617 : vector<8x256xf32> to vector<1x8x256xf32>
    %619 = arith.truncf %618 : vector<1x8x256xf32> to vector<1x8x256xbf16>
    %620 = arith.index_cast %c7_i32_163 : i32 to index
    %c0_170 = arith.constant 0 : index
    %c0_171 = arith.constant 0 : index
    %621 = vector.load %arg7[%620, %c0_170, %c0_171] : memref<8x8x256xbf16, #tpu.memory_space<vmem>>, vector<1x8x256xbf16>
    tpu.vector_store %arg7[%620, %c0_170, %c0_171], %619 {strides = array<i32>} : memref<8x8x256xbf16, #tpu.memory_space<vmem>>, vector<1x8x256xbf16>,
    %c7_i32_172 = arith.constant 7 : i32
    %622 = arith.subi %c7_i32_172, %c7_i32_163 : i32
    %c8_i32_173 = arith.constant 8 : i32
    %623 = arith.muli %622, %c8_i32_173 : i32
    %624 = tpu.assume_multiple %623, 8 : i32
    %625 = arith.truncf %580 : vector<8x256xf32> to vector<8x256xbf16>
    %cst_174 = arith.constant dense<0.000000e+00> : vector<8x768xf32>
    %626 = tpu.matmul %625, %26, %cst_174 {dimension_numbers = #tpu.dot_dimension_numbers<[1], [0], [0], [1], [0, 0, 1, 1], [], []>} : vector<8x256xbf16>, vector<256x768xbf16>, vector<8x768xf32> -> vector<8x768xf32>
    %627 = arith.index_cast %624 : i32 to index
    %c0_175 = arith.constant 0 : index
    %628 = vector.load %arg12[%627, %c0_175] : memref<64x768xf32, #tpu.memory_space<vmem>>, vector<8x768xf32>
    %629 = vector.extract_strided_slice %628 {offsets = [0, 0], sizes = [8, 256], strides = [1, 1]} : vector<8x768xf32> to vector<8x256xf32>
    %630 = vector.extract_strided_slice %626 {offsets = [0, 0], sizes = [8, 256], strides = [1, 1]} : vector<8x768xf32> to vector<8x256xf32>
    %631 = arith.addf %629, %630 : vector<8x256xf32>
    %632 = arith.negf %631 : vector<8x256xf32>
    %633 = math.exp %632 : vector<8x256xf32>
    %cst_176 = arith.constant 1.000000e+00 : f32
    %634 = vector.broadcast %cst_176 : f32 to vector<8x256xf32>
    %635 = arith.addf %634, %633 : vector<8x256xf32>
    %636 = arith.divf %634, %635 : vector<8x256xf32>
    %637 = vector.extract_strided_slice %628 {offsets = [0, 256], sizes = [8, 256], strides = [1, 1]} : vector<8x768xf32> to vector<8x256xf32>
    %638 = vector.extract_strided_slice %626 {offsets = [0, 256], sizes = [8, 256], strides = [1, 1]} : vector<8x768xf32> to vector<8x256xf32>
    %639 = arith.addf %637, %638 : vector<8x256xf32>
    %640 = arith.negf %639 : vector<8x256xf32>
    %641 = math.exp %640 : vector<8x256xf32>
    %cst_177 = arith.constant 1.000000e+00 : f32
    %642 = vector.broadcast %cst_177 : f32 to vector<8x256xf32>
    %643 = arith.addf %642, %641 : vector<8x256xf32>
    %644 = arith.divf %642, %643 : vector<8x256xf32>
    %645 = vector.extract_strided_slice %628 {offsets = [0, 512], sizes = [8, 256], strides = [1, 1]} : vector<8x768xf32> to vector<8x256xf32>
    %646 = vector.extract_strided_slice %626 {offsets = [0, 512], sizes = [8, 256], strides = [1, 1]} : vector<8x768xf32> to vector<8x256xf32>
    %647 = arith.addf %646, %34 : vector<8x256xf32>
    %648 = arith.mulf %636, %647 : vector<8x256xf32>
    %649 = arith.addf %645, %648 : vector<8x256xf32>
    %650 = math.tanh %649 : vector<8x256xf32>
    %cst_178 = arith.constant 1.000000e+00 : f32
    %651 = vector.broadcast %cst_178 : f32 to vector<8x256xf32>
    %652 = arith.subf %651, %644 : vector<8x256xf32>
    %653 = arith.mulf %652, %650 : vector<8x256xf32>
    %654 = arith.mulf %644, %580 : vector<8x256xf32>
    %655 = arith.addf %653, %654 : vector<8x256xf32>
    %656 = arith.addi %36, %622 : i32
    %c8_i32_179 = arith.constant 8 : i32
    %657 = arith.cmpi slt, %656, %c8_i32_179 : i32
    %658 = arith.select %657, %655, %580 : vector<8x256xf32>
    %659 = vector.shape_cast %658 : vector<8x256xf32> to vector<1x8x256xf32>
    %660 = arith.truncf %659 : vector<1x8x256xf32> to vector<1x8x256xbf16>
    %661 = arith.index_cast %622 : i32 to index
    %c0_180 = arith.constant 0 : index
    %c0_181 = arith.constant 0 : index
    %662 = vector.load %arg8[%661, %c0_180, %c0_181] : memref<8x8x256xbf16, #tpu.memory_space<vmem>>, vector<1x8x256xbf16>
    tpu.vector_store %arg8[%661, %c0_180, %c0_181], %660 {strides = array<i32>} : memref<8x8x256xbf16, #tpu.memory_space<vmem>>, vector<1x8x256xbf16>,
    %c8_i32_182 = arith.constant 8 : i32
    %c0_183 = arith.constant 0 : index
    %c0_184 = arith.constant 0 : index
    %663 = vector.load %arg9[%c0_183, %c0_184] : memref<8x256xf32, #tpu.memory_space<vmem>>, vector<8x256xf32>
    tpu.vector_store %arg9[%c0_183, %c0_184], %617 {strides = array<i32>} : memref<8x256xf32, #tpu.memory_space<vmem>>, vector<8x256xf32>,
    %c0_185 = arith.constant 0 : index
    %c0_186 = arith.constant 0 : index
    %664 = vector.load %arg10[%c0_185, %c0_186] : memref<8x256xf32, #tpu.memory_space<vmem>>, vector<8x256xf32>
    tpu.vector_store %arg10[%c0_185, %c0_186], %658 {strides = array<i32>} : memref<8x256xf32, #tpu.memory_space<vmem>>, vector<8x256xf32>,
    return
  }
  func.func @transform_0(%arg0: i32) -> (i32, i32) {
    %c0_i32 = arith.constant 0 : i32
    %c0_i32_0 = arith.constant 0 : i32
    return %arg0, %c0_i32 : i32, i32
  }
  func.func @transform_1(%arg0: i32) -> (i32, i32) {
    %c0_i32 = arith.constant 0 : i32
    %0 = arith.subi %c0_i32, %arg0 : i32
    %c0_i32_0 = arith.constant 0 : i32
    %c0_i32_1 = arith.constant 0 : i32
    return %0, %c0_i32_0 : i32, i32
  }
  func.func @transform_2(%arg0: i32) -> (i32, i32, i32) {
    %c0_i32 = arith.constant 0 : i32
    %c0_i32_0 = arith.constant 0 : i32
    %c0_i32_1 = arith.constant 0 : i32
    %c0_i32_2 = arith.constant 0 : i32
    return %c0_i32, %c0_i32_0, %c0_i32_1 : i32, i32, i32
  }
  func.func @transform_3(%arg0: i32) -> (i32, i32, i32) {
    %c0_i32 = arith.constant 0 : i32
    %c0_i32_0 = arith.constant 0 : i32
    %c0_i32_1 = arith.constant 0 : i32
    %c0_i32_2 = arith.constant 0 : i32
    return %c0_i32, %c0_i32_0, %c0_i32_1 : i32, i32, i32
  }
  func.func @transform_4(%arg0: i32) -> (i32, i32, i32) {
    %c0_i32 = arith.constant 0 : i32
    %c0_i32_0 = arith.constant 0 : i32
    %c0_i32_1 = arith.constant 0 : i32
    %c0_i32_2 = arith.constant 0 : i32
    return %c0_i32, %c0_i32_0, %c0_i32_1 : i32, i32, i32
  }
  func.func @transform_5(%arg0: i32) -> (i32, i32, i32) {
    %c0_i32 = arith.constant 0 : i32
    %c0_i32_0 = arith.constant 0 : i32
    %c0_i32_1 = arith.constant 0 : i32
    %c0_i32_2 = arith.constant 0 : i32
    return %c0_i32, %c0_i32_0, %c0_i32_1 : i32, i32, i32
  }
  func.func @transform_6(%arg0: i32) -> (i32, i32, i32) {
    %c0_i32 = arith.constant 0 : i32
    %c0_i32_0 = arith.constant 0 : i32
    %c0_i32_1 = arith.constant 0 : i32
    return %arg0, %c0_i32, %c0_i32_0 : i32, i32, i32
  }
  func.func @transform_7(%arg0: i32) -> (i32, i32, i32) {
    %c0_i32 = arith.constant 0 : i32
    %0 = arith.subi %c0_i32, %arg0 : i32
    %c0_i32_0 = arith.constant 0 : i32
    %c0_i32_1 = arith.constant 0 : i32
    %c0_i32_2 = arith.constant 0 : i32
    return %0, %c0_i32_0, %c0_i32_1 : i32, i32, i32
  }
}

</mosaic_0001>

<llo_original>
// kernel: detection_network_forward.3
$region0: #{detection_network_forward.3}
  #allocation0 [shape = 'u32[]', space=smem, size = 0x4, offset = 0x4, fixed_abs, tag = 'smem constant byte address 0x4 - core index']
  #allocation1 [shape = 'u32[144,128]{1,0:T(1,128)}', space=vmem, size = 0x12000, scoped, tag = 'internal scratch']
  %s0 = inlined_call_operand.vmem [shape: bf16[64,256], index: 0, kind: input, shape index: {}]
  %s1 = inlined_call_operand.vmem [shape: bf16[64,256], index: 1, kind: input, shape index: {}]
  %s2 = inlined_call_operand.vmem [shape: bf16[2,256,128], index: 2, kind: input, shape index: {}]
  %s3 = inlined_call_operand.vmem [shape: f32[1,128], index: 3, kind: input, shape index: {}]
  %s4 = inlined_call_operand.vmem [shape: f32[64,128], index: 4, kind: output, shape index: {}]
  %s5 = sld [smem:[#allocation0]]
  $region26: #{detection_network_forward.3} parent=0
    _
  %s7 = ssub.s32 1, %s5
  %s8 = scalar_select 0, %s7, %s5
  // Predicated region
  $region2: #{detection_network_forward.3} parent=0 // pred_check
    _
  $region3: #{detection_network_forward.3} parent=0 // pred_check_branch
    %10 = sbr.rel (0) target = $region5
  $region4: #{detection_network_forward.3} parent=0 // pred_region
    _
  $region5: #{detection_network_forward.3} parent=0 // pred_fallthru
    _
  // Predicated region
  $region6: #{detection_network_forward.3} parent=0 // pred_check
    _
  $region7: #{detection_network_forward.3} parent=0 // pred_check_branch
    %12 = sbr.rel (0) target = $region9
  $region8: #{detection_network_forward.3} parent=0 // pred_region
    _
  $region9: #{detection_network_forward.3} parent=0 // pred_fallthru
    _
  // Predicated region
  $region10: #{detection_network_forward.3} parent=0 // pred_check
    _
  $region11: #{detection_network_forward.3} parent=0 // pred_check_branch
    %14 = sbr.rel (0) target = $region13
  $region12: #{detection_network_forward.3} parent=0 // pred_region
    _
  $region13: #{detection_network_forward.3} parent=0 // pred_fallthru
    _
  // Predicated region
  $region14: #{detection_network_forward.3} parent=0 // pred_check
    _
  $region15: #{detection_network_forward.3} parent=0 // pred_check_branch
    %16 = sbr.rel (0) target = $region17
  $region16: #{detection_network_forward.3} parent=0 // pred_region
    _
  $region17: #{detection_network_forward.3} parent=0 // pred_fallthru
    _
  %v18 = vld [vmem:[%s0] sm:$0xff]
  %v19 = vld [vmem:[%s0 + $0x8] sm:$0xff]
  %v20 = vld [vmem:[%s0 + $0x10] sm:$0xff]
  %v21 = vld [vmem:[%s0 + $0x18] sm:$0xff]
  %v22 = vld [vmem:[%s0 + $0x20] sm:$0xff]
  %v23 = vld [vmem:[%s0 + $0x28] sm:$0xff]
  %v24 = vld [vmem:[%s0 + $0x30] sm:$0xff]
  %v25 = vld [vmem:[%s0 + $0x38] sm:$0xff]
  %v26 = vld [vmem:[%s2] sm:$0xf]
  %v27 = vld [vmem:[%s2 + $0x4] sm:$0xf]
  %v28 = vld [vmem:[%s2 + $0x8] sm:$0xf]
  %v29 = vld [vmem:[%s2 + $0xc] sm:$0xf]
  %v30 = vld [vmem:[%s2 + $0x10] sm:$0xf]
  %v31 = vld [vmem:[%s2 + $0x14] sm:$0xf]
  %v32 = vld [vmem:[%s2 + $0x18] sm:$0xf]
  %v33 = vld [vmem:[%s2 + $0x1c] sm:$0xf]
  %v34 = vld [vmem:[%s2 + $0x20] sm:$0xf]
  %v35 = vld [vmem:[%s2 + $0x24] sm:$0xf]
  %v36 = vld [vmem:[%s2 + $0x28] sm:$0xf]
  %v37 = vld [vmem:[%s2 + $0x2c] sm:$0xf]
  %v38 = vld [vmem:[%s2 + $0x30] sm:$0xf]
  %v39 = vld [vmem:[%s2 + $0x34] sm:$0xf]
  %v40 = vld [vmem:[%s2 + $0x38] sm:$0xf]
  %v41 = vld [vmem:[%s2 + $0x3c] sm:$0xf]
  %v42 = vld [vmem:[%s2 + $0x40] sm:$0xf]
  %v43 = vld [vmem:[%s2 + $0x44] sm:$0xf]
  %v44 = vld [vmem:[%s2 + $0x48] sm:$0xf]
  %v45 = vld [vmem:[%s2 + $0x4c] sm:$0xf]
  %v46 = vld [vmem:[%s2 + $0x50] sm:$0xf]
  %v47 = vld [vmem:[%s2 + $0x54] sm:$0xf]
  %v48 = vld [vmem:[%s2 + $0x58] sm:$0xf]
  %v49 = vld [vmem:[%s2 + $0x5c] sm:$0xf]
  %v50 = vld [vmem:[%s2 + $0x60] sm:$0xf]
  %v51 = vld [vmem:[%s2 + $0x64] sm:$0xf]
  %v52 = vld [vmem:[%s2 + $0x68] sm:$0xf]
  %v53 = vld [vmem:[%s2 + $0x6c] sm:$0xf]
  %v54 = vld [vmem:[%s2 + $0x70] sm:$0xf]
  %v55 = vld [vmem:[%s2 + $0x74] sm:$0xf]
  %v56 = vld [vmem:[%s2 + $0x78] sm:$0xf]
  %v57 = vld [vmem:[%s2 + $0x7c] sm:$0xf]
  %v58 = vld [vmem:[%s1] sm:$0xff]
  %v59 = vld [vmem:[%s1 + $0x8] sm:$0xff]
  %v60 = vld [vmem:[%s1 + $0x10] sm:$0xff]
  %v61 = vld [vmem:[%s1 + $0x18] sm:$0xff]
  %v62 = vld [vmem:[%s1 + $0x20] sm:$0xff]
  %v63 = vld [vmem:[%s1 + $0x28] sm:$0xff]
  %v64 = vld [vmem:[%s1 + $0x30] sm:$0xff]
  %v65 = vld [vmem:[%s1 + $0x38] sm:$0xff]
  %s66 = scalar_lea.vmem %s2, 128
  %v67 = vld [vmem:[%s66] sm:$0xf]
  %v68 = vld [vmem:[%s66 + $0x4] sm:$0xf]
  %v69 = vld [vmem:[%s66 + $0x8] sm:$0xf]
  %v70 = vld [vmem:[%s66 + $0xc] sm:$0xf]
  %v71 = vld [vmem:[%s66 + $0x10] sm:$0xf]
  %v72 = vld [vmem:[%s66 + $0x14] sm:$0xf]
  %v73 = vld [vmem:[%s66 + $0x18] sm:$0xf]
  %v74 = vld [vmem:[%s66 + $0x1c] sm:$0xf]
  %v75 = vld [vmem:[%s66 + $0x20] sm:$0xf]
  %v76 = vld [vmem:[%s66 + $0x24] sm:$0xf]
  %v77 = vld [vmem:[%s66 + $0x28] sm:$0xf]
  %v78 = vld [vmem:[%s66 + $0x2c] sm:$0xf]
  %v79 = vld [vmem:[%s66 + $0x30] sm:$0xf]
  %v80 = vld [vmem:[%s66 + $0x34] sm:$0xf]
  %v81 = vld [vmem:[%s66 + $0x38] sm:$0xf]
  %v82 = vld [vmem:[%s66 + $0x3c] sm:$0xf]
  %v83 = vld [vmem:[%s66 + $0x40] sm:$0xf]
  %v84 = vld [vmem:[%s66 + $0x44] sm:$0xf]
  %v85 = vld [vmem:[%s66 + $0x48] sm:$0xf]
  %v86 = vld [vmem:[%s66 + $0x4c] sm:$0xf]
  %v87 = vld [vmem:[%s66 + $0x50] sm:$0xf]
  %v88 = vld [vmem:[%s66 + $0x54] sm:$0xf]
  %v89 = vld [vmem:[%s66 + $0x58] sm:$0xf]
  %v90 = vld [vmem:[%s66 + $0x5c] sm:$0xf]
  %v91 = vld [vmem:[%s66 + $0x60] sm:$0xf]
  %v92 = vld [vmem:[%s66 + $0x64] sm:$0xf]
  %v93 = vld [vmem:[%s66 + $0x68] sm:$0xf]
  %v94 = vld [vmem:[%s66 + $0x6c] sm:$0xf]
  %v95 = vld [vmem:[%s66 + $0x70] sm:$0xf]
  %v96 = vld [vmem:[%s66 + $0x74] sm:$0xf]
  %v97 = vld [vmem:[%s66 + $0x78] sm:$0xf]
  %v98 = vld [vmem:[%s66 + $0x7c] sm:$0xf]
  %v107 = vunpack.c.l.b16 %v58
  %v108 = vunpack.c.h.b16 %v58
  %v109 = vunpack.c.l.b16 %v59
  %v110 = vunpack.c.h.b16 %v59
  %v111 = vunpack.c.l.b16 %v60
  %v112 = vunpack.c.h.b16 %v60
  %v113 = vunpack.c.l.b16 %v61
  %v114 = vunpack.c.h.b16 %v61
  %v115 = vunpack.c.l.b16 %v62
  %v116 = vunpack.c.h.b16 %v62
  %v117 = vunpack.c.l.b16 %v63
  %v118 = vunpack.c.h.b16 %v63
  %v119 = vunpack.c.l.b16 %v64
  %v120 = vunpack.c.h.b16 %v64
  %v121 = vunpack.c.l.b16 %v65
  %v122 = vunpack.c.h.b16 %v65
  %v123 = vpack.c.b16 %v109, %v107
  %v124 = vpack.c.b16 %v110, %v108
  %v125 = vpack.c.b16 %v113, %v111
  %v126 = vpack.c.b16 %v114, %v112
  %v127 = vpack.c.b16 %v117, %v115
  %v128 = vpack.c.b16 %v118, %v116
  %v129 = vpack.c.b16 %v121, %v119
  %v130 = vpack.c.b16 %v122, %v120
  %v171 = vunpack.c.l.b16 %v67
  %v172 = vunpack.c.l.b16 %v68
  %v173 = vunpack.c.l.b16 %v69
  %v174 = vunpack.c.l.b16 %v70
  %v175 = vunpack.c.l.b16 %v71
  %v176 = vunpack.c.l.b16 %v72
  %v177 = vunpack.c.l.b16 %v73
  %v178 = vunpack.c.l.b16 %v74
  %v179 = vunpack.c.l.b16 %v75
  %v180 = vunpack.c.l.b16 %v76
  %v181 = vunpack.c.l.b16 %v77
  %v182 = vunpack.c.l.b16 %v78
  %v183 = vunpack.c.l.b16 %v79
  %v184 = vunpack.c.l.b16 %v80
  %v185 = vunpack.c.l.b16 %v81
  %v186 = vunpack.c.l.b16 %v82
  %v187 = vunpack.c.l.b16 %v83
  %v188 = vunpack.c.l.b16 %v84
  %v189 = vunpack.c.l.b16 %v85
  %v190 = vunpack.c.l.b16 %v86
  %v191 = vunpack.c.l.b16 %v87
  %v192 = vunpack.c.l.b16 %v88
  %v193 = vunpack.c.l.b16 %v89
  %v194 = vunpack.c.l.b16 %v90
  %v195 = vunpack.c.l.b16 %v91
  %v196 = vunpack.c.l.b16 %v92
  %v197 = vunpack.c.l.b16 %v93
  %v198 = vunpack.c.l.b16 %v94
  %v199 = vunpack.c.l.b16 %v95
  %v200 = vunpack.c.l.b16 %v96
  %v201 = vunpack.c.l.b16 %v97
  %v202 = vunpack.c.l.b16 %v98
  %v203 = vpack.c.b16 %v172, %v171
  %v204 = vpack.c.b16 %v174, %v173
  %v205 = vpack.c.b16 %v176, %v175
  %v206 = vpack.c.b16 %v178, %v177
  %v207 = vpack.c.b16 %v180, %v179
  %v208 = vpack.c.b16 %v182, %v181
  %v209 = vpack.c.b16 %v184, %v183
  %v210 = vpack.c.b16 %v186, %v185
  %v211 = vpack.c.b16 %v188, %v187
  %v212 = vpack.c.b16 %v190, %v189
  %v213 = vpack.c.b16 %v192, %v191
  %v214 = vpack.c.b16 %v194, %v193
  %v215 = vpack.c.b16 %v196, %v195
  %v216 = vpack.c.b16 %v198, %v197
  %v217 = vpack.c.b16 %v200, %v199
  %v218 = vpack.c.b16 %v202, %v201
  %235 = vmatprep.subr.bf16.mxu0 0
  %236 = vmatpush1.bf16.msra.mxu0 %v203
  %237 = vmatprep.subr.bf16.mxu0 0
  %238 = vmatpush1.bf16.msra.mxu0 %v204
  %239 = vmatprep.subr.bf16.mxu0 0
  %240 = vmatpush1.bf16.msra.mxu0 %v205
  %241 = vmatprep.subr.bf16.mxu0 0
  %242 = vmatpush1.bf16.msra.mxu0 %v206
  %243 = vmatprep.subr.bf16.mxu0 0
  %244 = vmatpush1.bf16.msra.mxu0 %v207
  %245 = vmatprep.subr.bf16.mxu0 0
  %246 = vmatpush1.bf16.msra.mxu0 %v208
  %247 = vmatprep.subr.bf16.mxu0 0
  %248 = vmatpush1.bf16.msra.mxu0 %v209
  %249 = vmatprep.subr.bf16.mxu0 0
  %250 = vmatpush1.bf16.msra.mxu0 %v210
  %251 = vmatprep.subr.bf16.mxu0 0
  %252 = vmatpush1.bf16.msra.mxu0 %v211
  %253 = vmatprep.subr.bf16.mxu0 0
  %254 = vmatpush1.bf16.msra.mxu0 %v212
  %255 = vmatprep.subr.bf16.mxu0 0
  %256 = vmatpush1.bf16.msra.mxu0 %v213
  %257 = vmatprep.subr.bf16.mxu0 0
  %258 = vmatpush1.bf16.msra.mxu0 %v214
  %259 = vmatprep.subr.bf16.mxu0 0
  %260 = vmatpush1.bf16.msra.mxu0 %v215
  %261 = vmatprep.subr.bf16.mxu0 0
  %262 = vmatpush1.bf16.msra.mxu0 %v216
  %263 = vmatprep.subr.bf16.mxu0 0
  %264 = vmatpush1.bf16.msra.mxu0 %v217
  %265 = vmatprep.subr.bf16.mxu0 0
  %266 = vmatpush1.bf16.msra.mxu0 %v218
  %267 = vmatprep.mubr.bf16.mxu0 %v124
  %268 = vmatmul.mubr.bf16.gmra.mrb[0].mxu0 %v123
  %v269 = vpop.f32.mrb[0].mxu0
  %v270 = vadd.f32 0.0, %v269
  %v271 = vpop.f32.mrb[0].mxu0
  %v272 = vpop.f32.mrb[0].mxu0
  %v273 = vadd.f32 0.0, %v272
  %v274 = vpop.f32.mrb[0].mxu0
  %275 = vmatprep.mubr.bf16.mxu0 %v126
  %276 = vmatmul.mubr.bf16.gmra.mrb[0].mxu0 %v125
  %v277 = vpop.f32.mrb[0].mxu0
  %v278 = vadd.f32 0.0, %v277
  %v279 = vpop.f32.mrb[0].mxu0
  %v280 = vpop.f32.mrb[0].mxu0
  %v281 = vadd.f32 0.0, %v280
  %v282 = vpop.f32.mrb[0].mxu0
  %283 = vmatprep.mubr.bf16.mxu0 %v128
  %284 = vmatmul.mubr.bf16.gmra.mrb[0].mxu0 %v127
  %v285 = vpop.f32.mrb[0].mxu0
  %v286 = vadd.f32 0.0, %v285
  %v287 = vpop.f32.mrb[0].mxu0
  %v288 = vpop.f32.mrb[0].mxu0
  %v289 = vadd.f32 0.0, %v288
  %v290 = vpop.f32.mrb[0].mxu0
  %291 = vmatprep.mubr.bf16.mxu0 %v130
  %292 = vmatmul.mubr.bf16.gmra.mrb[0].mxu0 %v129
  %v293 = vpop.f32.mrb[0].mxu0
  %v294 = vadd.f32 0.0, %v293
  %v295 = vpop.f32.mrb[0].mxu0
  %v296 = vpop.f32.mrb[0].mxu0
  %v297 = vadd.f32 0.0, %v296
  %v298 = vpop.f32.mrb[0].mxu0
  %299 = vdwg.mxu0
  %v308 = vunpack.c.l.b16 %v18
  %v309 = vunpack.c.h.b16 %v18
  %v310 = vunpack.c.l.b16 %v19
  %v311 = vunpack.c.h.b16 %v19
  %v312 = vunpack.c.l.b16 %v20
  %v313 = vunpack.c.h.b16 %v20
  %v314 = vunpack.c.l.b16 %v21
  %v315 = vunpack.c.h.b16 %v21
  %v316 = vunpack.c.l.b16 %v22
  %v317 = vunpack.c.h.b16 %v22
  %v318 = vunpack.c.l.b16 %v23
  %v319 = vunpack.c.h.b16 %v23
  %v320 = vunpack.c.l.b16 %v24
  %v321 = vunpack.c.h.b16 %v24
  %v322 = vunpack.c.l.b16 %v25
  %v323 = vunpack.c.h.b16 %v25
  %v324 = vpack.c.b16 %v310, %v308
  %v325 = vpack.c.b16 %v311, %v309
  %v326 = vpack.c.b16 %v314, %v312
  %v327 = vpack.c.b16 %v315, %v313
  %v328 = vpack.c.b16 %v318, %v316
  %v329 = vpack.c.b16 %v319, %v317
  %v330 = vpack.c.b16 %v322, %v320
  %v331 = vpack.c.b16 %v323, %v321
  %v372 = vunpack.c.l.b16 %v26
  %v373 = vunpack.c.l.b16 %v27
  %v374 = vunpack.c.l.b16 %v28
  %v375 = vunpack.c.l.b16 %v29
  %v376 = vunpack.c.l.b16 %v30
  %v377 = vunpack.c.l.b16 %v31
  %v378 = vunpack.c.l.b16 %v32
  %v379 = vunpack.c.l.b16 %v33
  %v380 = vunpack.c.l.b16 %v34
  %v381 = vunpack.c.l.b16 %v35
  %v382 = vunpack.c.l.b16 %v36
  %v383 = vunpack.c.l.b16 %v37
  %v384 = vunpack.c.l.b16 %v38
  %v385 = vunpack.c.l.b16 %v39
  %v386 = vunpack.c.l.b16 %v40
  %v387 = vunpack.c.l.b16 %v41
  %v388 = vunpack.c.l.b16 %v42
  %v389 = vunpack.c.l.b16 %v43
  %v390 = vunpack.c.l.b16 %v44
  %v391 = vunpack.c.l.b16 %v45
  %v392 = vunpack.c.l.b16 %v46
  %v393 = vunpack.c.l.b16 %v47
  %v394 = vunpack.c.l.b16 %v48
  %v395 = vunpack.c.l.b16 %v49
  %v396 = vunpack.c.l.b16 %v50
  %v397 = vunpack.c.l.b16 %v51
  %v398 = vunpack.c.l.b16 %v52
  %v399 = vunpack.c.l.b16 %v53
  %v400 = vunpack.c.l.b16 %v54
  %v401 = vunpack.c.l.b16 %v55
  %v402 = vunpack.c.l.b16 %v56
  %v403 = vunpack.c.l.b16 %v57
  %v404 = vpack.c.b16 %v373, %v372
  %v405 = vpack.c.b16 %v375, %v374
  %v406 = vpack.c.b16 %v377, %v376
  %v407 = vpack.c.b16 %v379, %v378
  %v408 = vpack.c.b16 %v381, %v380
  %v409 = vpack.c.b16 %v383, %v382
  %v410 = vpack.c.b16 %v385, %v384
  %v411 = vpack.c.b16 %v387, %v386
  %v412 = vpack.c.b16 %v389, %v388
  %v413 = vpack.c.b16 %v391, %v390
  %v414 = vpack.c.b16 %v393, %v392
  %v415 = vpack.c.b16 %v395, %v394
  %v416 = vpack.c.b16 %v397, %v396
  %v417 = vpack.c.b16 %v399, %v398
  %v418 = vpack.c.b16 %v401, %v400
  %v419 = vpack.c.b16 %v403, %v402
  %436 = vmatprep.subr.bf16.mxu0 0
  %437 = vmatpush1.bf16.msra.mxu0 %v404
  %438 = vmatprep.subr.bf16.mxu0 0
  %439 = vmatpush1.bf16.msra.mxu0 %v405
  %440 = vmatprep.subr.bf16.mxu0 0
  %441 = vmatpush1.bf16.msra.mxu0 %v406
  %442 = vmatprep.subr.bf16.mxu0 0
  %443 = vmatpush1.bf16.msra.mxu0 %v407
  %444 = vmatprep.subr.bf16.mxu0 0
  %445 = vmatpush1.bf16.msra.mxu0 %v408
  %446 = vmatprep.subr.bf16.mxu0 0
  %447 = vmatpush1.bf16.msra.mxu0 %v409
  %448 = vmatprep.subr.bf16.mxu0 0
  %449 = vmatpush1.bf16.msra.mxu0 %v410
  %450 = vmatprep.subr.bf16.mxu0 0
  %451 = vmatpush1.bf16.msra.mxu0 %v411
  %452 = vmatprep.subr.bf16.mxu0 0
  %453 = vmatpush1.bf16.msra.mxu0 %v412
  %454 = vmatprep.subr.bf16.mxu0 0
  %455 = vmatpush1.bf16.msra.mxu0 %v413
  %456 = vmatprep.subr.bf16.mxu0 0
  %457 = vmatpush1.bf16.msra.mxu0 %v414
  %458 = vmatprep.subr.bf16.mxu0 0
  %459 = vmatpush1.bf16.msra.mxu0 %v415
  %460 = vmatprep.subr.bf16.mxu0 0
  %461 = vmatpush1.bf16.msra.mxu0 %v416
  %462 = vmatprep.subr.bf16.mxu0 0
  %463 = vmatpush1.bf16.msra.mxu0 %v417
  %464 = vmatprep.subr.bf16.mxu0 0
  %465 = vmatpush1.bf16.msra.mxu0 %v418
  %466 = vmatprep.subr.bf16.mxu0 0
  %467 = vmatpush1.bf16.msra.mxu0 %v419
  %468 = vmatprep.mubr.bf16.mxu0 %v325
  %469 = vmatmul.mubr.bf16.gmra.mrb[0].mxu0 %v324
  %v470 = vpop.f32.mrb[0].mxu0
  %v471 = vadd.f32 %v270, %v470
  %v472 = vpop.f32.mrb[0].mxu0
  %v473 = vpop.f32.mrb[0].mxu0
  %v474 = vadd.f32 %v273, %v473
  %v475 = vpop.f32.mrb[0].mxu0
  %476 = vmatprep.mubr.bf16.mxu0 %v327
  %477 = vmatmul.mubr.bf16.gmra.mrb[0].mxu0 %v326
  %v478 = vpop.f32.mrb[0].mxu0
  %v479 = vadd.f32 %v278, %v478
  %v480 = vpop.f32.mrb[0].mxu0
  %v481 = vpop.f32.mrb[0].mxu0
  %v482 = vadd.f32 %v281, %v481
  %v483 = vpop.f32.mrb[0].mxu0
  %484 = vmatprep.mubr.bf16.mxu0 %v329
  %485 = vmatmul.mubr.bf16.gmra.mrb[0].mxu0 %v328
  %v486 = vpop.f32.mrb[0].mxu0
  %v487 = vadd.f32 %v286, %v486
  %v488 = vpop.f32.mrb[0].mxu0
  %v489 = vpop.f32.mrb[0].mxu0
  %v490 = vadd.f32 %v289, %v489
  %v491 = vpop.f32.mrb[0].mxu0
  %492 = vmatprep.mubr.bf16.mxu0 %v331
  %493 = vmatmul.mubr.bf16.gmra.mrb[0].mxu0 %v330
  %v494 = vpop.f32.mrb[0].mxu0
  %v495 = vadd.f32 %v294, %v494
  %v496 = vpop.f32.mrb[0].mxu0
  %v497 = vpop.f32.mrb[0].mxu0
  %v498 = vadd.f32 %v297, %v497
  %v499 = vpop.f32.mrb[0].mxu0
  %500 = vdwg.mxu0
  %v501 = vld [vmem:[%s3] sm:$0x1]
  %v503 = vlaneseq
  %v504 = vshrl.u32 %v503, 7
  %v505 = vsub.s32 0, %v504
  %v506 = vrot.slane %v501, %v505
  %v508 = vadd.f32 %v471, %v506
  %v509 = vadd.f32 %v474, %v506
  %v510 = vadd.f32 %v479, %v506
  %v511 = vadd.f32 %v482, %v506
  %v512 = vadd.f32 %v487, %v506
  %v513 = vadd.f32 %v490, %v506
  %v514 = vadd.f32 %v495, %v506
  %v515 = vadd.f32 %v498, %v506
  %v516 = vlaneseq
  %v517 = vand.u32 %v516, 127
  %vm518 = vcmp.eq.s32.totalorder %v517, 2
  %v519 = vxor.u32 %v508, 2147483648
  %v520 = vxor.u32 %v509, 2147483648
  %v521 = vxor.u32 %v510, 2147483648
  %v522 = vxor.u32 %v511, 2147483648
  %v523 = vxor.u32 %v512, 2147483648
  %v524 = vxor.u32 %v513, 2147483648
  %v525 = vxor.u32 %v514, 2147483648
  %v526 = vxor.u32 %v515, 2147483648
  %v527 = vmul.f32 %v519, 1.442695
  %v528 = vpow.pop %v527
  %v529 = vmul.f32 %v520, 1.442695
  %v530 = vpow.pop %v529
  %v531 = vmul.f32 %v521, 1.442695
  %v532 = vpow.pop %v531
  %v533 = vmul.f32 %v522, 1.442695
  %v534 = vpow.pop %v533
  %v535 = vmul.f32 %v523, 1.442695
  %v536 = vpow.pop %v535
  %v537 = vmul.f32 %v524, 1.442695
  %v538 = vpow.pop %v537
  %v539 = vmul.f32 %v525, 1.442695
  %v540 = vpow.pop %v539
  %v541 = vmul.f32 %v526, 1.442695
  %v542 = vpow.pop %v541
  %v543 = vadd.f32 %v528, 1.0
  %v544 = vadd.f32 %v530, 1.0
  %v545 = vadd.f32 %v532, 1.0
  %v546 = vadd.f32 %v534, 1.0
  %v547 = vadd.f32 %v536, 1.0
  %v548 = vadd.f32 %v538, 1.0
  %v549 = vadd.f32 %v540, 1.0
  %v550 = vadd.f32 %v542, 1.0
  %v551 = vrcp.pop %v543
  %v552 = vmul.f32 1.0, %v551
  %v553 = vrcp.pop %v544
  %v554 = vmul.f32 1.0, %v553
  %v555 = vrcp.pop %v545
  %v556 = vmul.f32 1.0, %v555
  %v557 = vrcp.pop %v546
  %v558 = vmul.f32 1.0, %v557
  %v559 = vrcp.pop %v547
  %v560 = vmul.f32 1.0, %v559
  %v561 = vrcp.pop %v548
  %v562 = vmul.f32 1.0, %v561
  %v563 = vrcp.pop %v549
  %v564 = vmul.f32 1.0, %v563
  %v565 = vrcp.pop %v550
  %v566 = vmul.f32 1.0, %v565
  %v567 = vsel %vm518, %v552, %v508
  %v568 = vsel %vm518, %v554, %v509
  %v569 = vsel %vm518, %v556, %v510
  %v570 = vsel %vm518, %v558, %v511
  %v571 = vsel %vm518, %v560, %v512
  %v572 = vsel %vm518, %v562, %v513
  %v573 = vsel %vm518, %v564, %v514
  %v574 = vsel %vm518, %v566, %v515
  %575 = vst [vmem:[%s4] sm:$0xff] %v567
  %576 = vst [vmem:[%s4 + $0x8] sm:$0xff] %v568
  %577 = vst [vmem:[%s4 + $0x10] sm:$0xff] %v569
  %578 = vst [vmem:[%s4 + $0x18] sm:$0xff] %v570
  %579 = vst [vmem:[%s4 + $0x20] sm:$0xff] %v571
  %580 = vst [vmem:[%s4 + $0x28] sm:$0xff] %v572
  %581 = vst [vmem:[%s4 + $0x30] sm:$0xff] %v573
  %582 = vst [vmem:[%s4 + $0x38] sm:$0xff] %v574
  // Predicated region
  $region18: #{detection_network_forward.3} parent=0 // pred_check
    _
  $region19: #{detection_network_forward.3} parent=0 // pred_check_branch
    %584 = sbr.rel (0) target = $region21
  $region20: #{detection_network_forward.3} parent=0 // pred_region
    _
  $region21: #{detection_network_forward.3} parent=0 // pred_fallthru
    _
  // Predicated region
  $region22: #{detection_network_forward.3} parent=0 // pred_check
    _
  $region23: #{detection_network_forward.3} parent=0 // pred_check_branch
    %586 = sbr.rel (0) target = $region25
  $region24: #{detection_network_forward.3} parent=0 // pred_region
    _
  $region25: #{detection_network_forward.3} parent=0 // pred_fallthru
    _

// kernel: detection_network_forward.2
$region0: #{detection_network_forward.2}
  #allocation0 [shape = 'u32[]', space=smem, size = 0x4, offset = 0x4, fixed_abs, tag = 'smem constant byte address 0x4 - core index']
  #allocation1 [shape = 'u32[144,128]{1,0:T(1,128)}', space=vmem, size = 0x12000, scoped, tag = 'internal scratch']
  #allocation2 [shape = 'f32[8,256]{1,0:T(8,128)}', space=vmem, size = 0x2000, scoped, tag = 'scratch operand']
  #allocation3 [shape = 'f32[8,256]{1,0:T(8,128)}', space=vmem, size = 0x2000, scoped, tag = 'scratch operand']
  #allocation4 [shape = 'f32[64,768]{1,0:T(8,128)}', space=vmem, size = 0x30000, scoped, tag = 'scratch operand']
  #allocation5 [shape = 'f32[64,768]{1,0:T(8,128)}', space=vmem, size = 0x30000, scoped, tag = 'scratch operand']
  %s0 = inlined_call_operand.vmem [shape: f32[64,768], index: 0, kind: input, shape index: {}, may-alias: {0,1}]
  %s1 = inlined_call_operand.vmem [shape: f32[64,768], index: 1, kind: input, shape index: {}, may-alias: {0,1}]
  %s2 = inlined_call_operand.hbm [shape: bf16[2,768,768], index: 2, kind: input, shape index: {}]
  %s3 = inlined_call_operand.hbm [shape: bf16[2,256,768], index: 3, kind: input, shape index: {}]
  %s4 = inlined_call_operand.hbm [shape: f32[2,1,768], index: 4, kind: input, shape index: {}]
  %s5 = inlined_call_operand.hbm [shape: f32[2,1,256], index: 5, kind: input, shape index: {}]
  %s6 = inlined_call_operand.vmem [shape: bf16[8,8,256], index: 6, kind: output, shape index: {0}]
  %s7 = inlined_call_operand.vmem [shape: bf16[8,8,256], index: 7, kind: output, shape index: {1}]
  %8 = xla_tuple %s6, %s7
  %s9 = sld [smem:[#allocation0]]
  $region62: #{detection_network_forward.2} parent=0
    _
  %s11 = ssub.s32 1, %s9
  %s12 = scalar_select 0, %s11, %s9
  $region1: #{detection_network_forward.2} parent=0
    #allocation6 [shape = 'u8[2359296]{0}', space=vmem, size = 0x240000, scoped, tag = 'input window, operand 2, single buffered']
    #allocation7 [shape = 's32[1]{0}', space=sflag, size = 0x4, scoped, tag = 'scoped memory for detection_network_forward.2']
    #allocation8 [shape = 'u8[786432]{0}', space=vmem, size = 0xc0000, scoped, tag = 'input window, operand 3, single buffered']
    #allocation9 [shape = 's32[1]{0}', space=sflag, size = 0x4, scoped, tag = 'scoped memory for detection_network_forward.2']
    #allocation10 [shape = 'u8[6144]{0}', space=vmem, size = 0x1800, scoped, tag = 'input window, operand 4, single buffered']
    #allocation11 [shape = 'u8[2048]{0}', space=vmem, size = 0x800, scoped, tag = 'input window, operand 5, single buffered']
    #allocation12 [shape = 's32[1]{0}', space=sflag, size = 0x4, scoped, tag = 'scoped memory for detection_network_forward.2']
    %13 = vsyncpa [#allocation7], 0
    %14 = vsyncpa [#allocation9], 0
    %15 = vsyncpa [#allocation12], 0
    // Predicated region
    $region2: #{detection_network_forward.2} parent=1 // pred_check
      _
    $region3: #{detection_network_forward.2} parent=1 // pred_check_branch
      %17 = sbr.rel (0) target = $region5
    $region4: #{detection_network_forward.2} parent=1 // pred_region
      _
    $region5: #{detection_network_forward.2} parent=1 // pred_fallthru
      _
    // Predicated region
    $region6: #{detection_network_forward.2} parent=1 // pred_check
      _
    $region7: #{detection_network_forward.2} parent=1 // pred_check_branch
      %19 = sbr.rel (0) target = $region9
    $region8: #{detection_network_forward.2} parent=1 // pred_region
      %s20 = ssub.s32 0, 0
      %s21 = smul.u32 8, %s20
      %p22 = scmp.lt.s32.totalorder %s21, 7
      %s23 = scalar_select %p22, %s21, 7
      %s24 = smul.addr %s23, 6
      %s25 = smul.addr %s24, 8
      %s26 = scalar_lea.vmem %s1, %s25
      %s27 = ssub.s32 0, 0
      %s28 = smul.u32 8, %s27
    $region9: #{detection_network_forward.2} parent=1 // pred_fallthru
      _
    // Predicated region
    $region10: #{detection_network_forward.2} parent=1 // pred_check
      _
    $region11: #{detection_network_forward.2} parent=1 // pred_check_branch
      %30 = sbr.rel (0) target = $region13
    $region12: #{detection_network_forward.2} parent=1 // pred_region
      %s32 = ssub.s32 73728, 73728
      %33 = vsyncadd [#allocation7], %s32
      %s34 = sshll.u32 [#allocation6], 4
      %s35 = int_to_ptr.vmem [resolvable:$true] %s34
      %40 = dma.hbm_to_vmem [thread:$0]  %s2, 73728, %s35, [#allocation7], 384, 384, 24
    $region13: #{detection_network_forward.2} parent=1 // pred_fallthru
      _
    // Predicated region
    $region14: #{detection_network_forward.2} parent=1 // pred_check
      _
    $region15: #{detection_network_forward.2} parent=1 // pred_check_branch
      %42 = sbr.rel (0) target = $region17
    $region16: #{detection_network_forward.2} parent=1 // pred_region
      %s44 = ssub.s32 24576, 24576
      %45 = vsyncadd [#allocation9], %s44
      %s46 = sshll.u32 [#allocation8], 4
      %s47 = int_to_ptr.vmem [resolvable:$true] %s46
      %52 = dma.hbm_to_vmem [thread:$0]  %s3, 24576, %s47, [#allocation9], 384, 384, 24
    $region17: #{detection_network_forward.2} parent=1 // pred_fallthru
      _
    // Predicated region
    $region18: #{detection_network_forward.2} parent=1 // pred_check
      _
    $region19: #{detection_network_forward.2} parent=1 // pred_check_branch
      %54 = sbr.rel (0) target = $region21
    $region20: #{detection_network_forward.2} parent=1 // pred_region
      %s56 = ssub.s32 192, 192
      %57 = vsyncadd [#allocation9], %s56
      %s58 = sshll.u32 [#allocation10], 4
      %s59 = int_to_ptr.vmem [resolvable:$true] %s58
      %64 = dma.hbm_to_vmem [thread:$0]  %s4, 192, %s59, [#allocation9], 96, 96, 6
    $region21: #{detection_network_forward.2} parent=1 // pred_fallthru
      _
    // Predicated region
    $region22: #{detection_network_forward.2} parent=1 // pred_check
      _
    $region23: #{detection_network_forward.2} parent=1 // pred_check_branch
      %66 = sbr.rel (0) target = $region25
    $region24: #{detection_network_forward.2} parent=1 // pred_region
      %s68 = ssub.s32 64, 64
      %69 = vsyncadd [#allocation12], %s68
      %s70 = sshll.u32 [#allocation11], 4
      %s71 = int_to_ptr.vmem [resolvable:$true] %s70
      %76 = dma.hbm_to_vmem [thread:$0]  %s5, 64, %s71, [#allocation12], 32, 32, 2
    $region25: #{detection_network_forward.2} parent=1 // pred_fallthru
      _
    // Predicated region
    $region26: #{detection_network_forward.2} parent=1 // pred_check
      _
    $region27: #{detection_network_forward.2} parent=1 // pred_check_branch
      %78 = sbr.rel (0) target = $region29
    $region28: #{detection_network_forward.2} parent=1 // pred_region
      %79 = dma.done [#allocation7], 73728
    $region29: #{detection_network_forward.2} parent=1 // pred_fallthru
      _
    // Predicated region
    $region30: #{detection_network_forward.2} parent=1 // pred_check
      _
    $region31: #{detection_network_forward.2} parent=1 // pred_check_branch
      %81 = sbr.rel (0) target = $region33
    $region32: #{detection_network_forward.2} parent=1 // pred_region
      %82 = dma.done [#allocation9], 24576
    $region33: #{detection_network_forward.2} parent=1 // pred_fallthru
      _
    // Predicated region
    $region34: #{detection_network_forward.2} parent=1 // pred_check
      _
    $region35: #{detection_network_forward.2} parent=1 // pred_check_branch
      %84 = sbr.rel (0) target = $region37
    $region36: #{detection_network_forward.2} parent=1 // pred_region
      %85 = dma.done [#allocation9], 192
    $region37: #{detection_network_forward.2} parent=1 // pred_fallthru
      _
    // Predicated region
    $region38: #{detection_network_forward.2} parent=1 // pred_check
      _
    $region39: #{detection_network_forward.2} parent=1 // pred_check_branch
      %87 = sbr.rel (0) target = $region41
    $region40: #{detection_network_forward.2} parent=1 // pred_region
      %88 = dma.done [#allocation12], 64
    $region41: #{detection_network_forward.2} parent=1 // pred_fallthru
      _
    %s89 = ssub.s32 0, 0
    %s90 = smul.u32 8, %s89
    %p91 = scmp.lt.s32.totalorder %s90, 7
    %s92 = scalar_select %p91, %s90, 7
    %s93 = smul.addr %s92, 6
    %s94 = smul.addr %s93, 8
    %s95 = scalar_lea.vmem %s1, %s94
    %s96 = ssub.s32 0, 0
    %s97 = smul.u32 8, %s96
    %p98 = scmp.lt.s32.totalorder %s97, 7
    %s99 = scalar_select %p98, %s97, 7
    %s100 = smul.addr %s99, 2
    %s101 = smul.addr %s100, 4
    %s102 = scalar_lea.vmem %s7, %s101
    %s103 = ssub.s32 0, 0
    %s104 = smul.u32 8, %s103
    %p105 = scmp.lt.s32.totalorder %s104, 7
    %s106 = scalar_select %p105, %s104, 7
    %s107 = smul.addr %s106, 6
    %s108 = smul.addr %s107, 8
    %s109 = scalar_lea.vmem %s1, %s108
    %s110 = ssub.s32 0, 0
    %s111 = smul.u32 8, %s110
    %s112 = ssub.s32 0, 0
    %s113 = smul.u32 8, %s112
    %p114 = scmp.lt.s32.totalorder %s113, 7
    %s115 = scalar_select %p114, %s113, 7
    %s116 = smul.addr %s115, 2
    %s117 = smul.addr %s116, 4
    %s118 = scalar_lea.vmem %s7, %s117
    %s119 = ssub.s32 0, 0
    %s120 = smul.u32 8, %s119
    %p121 = scmp.eq.s32.totalorder 0, 0
    // Predicated region
    $region42: #{detection_network_forward.2} parent=1 // pred_check
      %p122 = pneg %p121
    $region43: #{detection_network_forward.2} parent=1 // pred_check_branch
      %124 = sbr.rel (%p122) target = $region45
    $region44: #{detection_network_forward.2} parent=1 // pred_region
      %125 = vst [vmem:[#allocation2] sm:$0xff] 0.0
      %126 = vst [vmem:[#allocation2 + $0x8] sm:$0xff] 0.0
      %127 = vst [vmem:[#allocation3] sm:$0xff] 0.0
      %128 = vst [vmem:[#allocation3 + $0x8] sm:$0xff] 0.0
    $region45: #{detection_network_forward.2} parent=1 // pred_fallthru
      _
    %v129 = vld [vmem:[%s0] sm:$0xff]
    %v130 = vld [vmem:[%s0 + $0x8] sm:$0xff]
    %v131 = vld [vmem:[%s0 + $0x10] sm:$0xff]
    %v132 = vld [vmem:[%s0 + $0x18] sm:$0xff]
    %v133 = vld [vmem:[%s0 + $0x20] sm:$0xff]
    %v134 = vld [vmem:[%s0 + $0x28] sm:$0xff]
    %v135 = vld [vmem:[%s0 + $0x30] sm:$0xff]
    %v136 = vld [vmem:[%s0 + $0x38] sm:$0xff]
    %v137 = vld [vmem:[%s0 + $0x40] sm:$0xff]
    %v138 = vld [vmem:[%s0 + $0x48] sm:$0xff]
    %v139 = vld [vmem:[%s0 + $0x50] sm:$0xff]
    %v140 = vld [vmem:[%s0 + $0x58] sm:$0xff]
    %v141 = vld [vmem:[%s0 + $0x60] sm:$0xff]
    %v142 = vld [vmem:[%s0 + $0x68] sm:$0xff]
    %v143 = vld [vmem:[%s0 + $0x70] sm:$0xff]
    %v144 = vld [vmem:[%s0 + $0x78] sm:$0xff]
    %v145 = vld [vmem:[%s0 + $0x80] sm:$0xff]
    %v146 = vld [vmem:[%s0 + $0x88] sm:$0xff]
    %v147 = vld [vmem:[%s0 + $0x90] sm:$0xff]
    %v148 = vld [vmem:[%s0 + $0x98] sm:$0xff]
    %v149 = vld [vmem:[%s0 + $0xa0] sm:$0xff]
    %v150 = vld [vmem:[%s0 + $0xa8] sm:$0xff]
    %v151 = vld [vmem:[%s0 + $0xb0] sm:$0xff]
    %v152 = vld [vmem:[%s0 + $0xb8] sm:$0xff]
    %v153 = vld [vmem:[%s0 + $0xc0] sm:$0xff]
    %v154 = vld [vmem:[%s0 + $0xc8] sm:$0xff]
    %v155 = vld [vmem:[%s0 + $0xd0] sm:$0xff]
    %v156 = vld [vmem:[%s0 + $0xd8] sm:$0xff]
    %v157 = vld [vmem:[%s0 + $0xe0] sm:$0xff]
    %v158 = vld [vmem:[%s0 + $0xe8] sm:$0xff]
    %v159 = vld [vmem:[%s0 + $0xf0] sm:$0xff]
    %v160 = vld [vmem:[%s0 + $0xf8] sm:$0xff]
    %v161 = vld [vmem:[%s0 + $0x100] sm:$0xff]
    %v162 = vld [vmem:[%s0 + $0x108] sm:$0xff]
    %v163 = vld [vmem:[%s0 + $0x110] sm:$0xff]
    %v164 = vld [vmem:[%s0 + $0x118] sm:$0xff]
    %v165 = vld [vmem:[%s0 + $0x120] sm:$0xff]
    %v166 = vld [vmem:[%s0 + $0x128] sm:$0xff]
    %v167 = vld [vmem:[%s0 + $0x130] sm:$0xff]
    %v168 = vld [vmem:[%s0 + $0x138] sm:$0xff]
    %v169 = vld [vmem:[%s0 + $0x140] sm:$0xff]
    %v170 = vld [vmem:[%s0 + $0x148] sm:$0xff]
    %v171 = vld [vmem:[%s0 + $0x150] sm:$0xff]
    %v172 = vld [vmem:[%s0 + $0x158] sm:$0xff]
    %v173 = vld [vmem:[%s0 + $0x160] sm:$0xff]
    %v174 = vld [vmem:[%s0 + $0x168] sm:$0xff]
    %v175 = vld [vmem:[%s0 + $0x170] sm:$0xff]
    %v176 = vld [vmem:[%s0 + $0x178] sm:$0xff]
    %v177 = vpack.c.bf16 %v135, %v129
    %v178 = vpack.c.bf16 %v136, %v130
    %v179 = vpack.c.bf16 %v137, %v131
    %v180 = vpack.c.bf16 %v138, %v132
    %v181 = vpack.c.bf16 %v139, %v133
    %v182 = vpack.c.bf16 %v140, %v134
    %v183 = vpack.c.bf16 %v147, %v141
    %v184 = vpack.c.bf16 %v148, %v142
    %v185 = vpack.c.bf16 %v149, %v143
    %v186 = vpack.c.bf16 %v150, %v144
    %v187 = vpack.c.bf16 %v151, %v145
    %v188 = vpack.c.bf16 %v152, %v146
    %v189 = vpack.c.bf16 %v159, %v153
    %v190 = vpack.c.bf16 %v160, %v154
    %v191 = vpack.c.bf16 %v161, %v155
    %v192 = vpack.c.bf16 %v162, %v156
    %v193 = vpack.c.bf16 %v163, %v157
    %v194 = vpack.c.bf16 %v164, %v158
    %v195 = vpack.c.bf16 %v171, %v165
    %v196 = vpack.c.bf16 %v172, %v166
    %v197 = vpack.c.bf16 %v173, %v167
    %v198 = vpack.c.bf16 %v174, %v168
    %v199 = vpack.c.bf16 %v175, %v169
    %v200 = vpack.c.bf16 %v176, %v170
    %v201 = vld [vmem:[#allocation6] sm:$0xff]
    %v202 = vld [vmem:[#allocation6 + $0x8] sm:$0xff]
    %v203 = vld [vmem:[#allocation6 + $0x10] sm:$0xff]
    %v204 = vld [vmem:[#allocation6 + $0x18] sm:$0xff]
    %v205 = vld [vmem:[#allocation6 + $0x20] sm:$0xff]
    %v206 = vld [vmem:[#allocation6 + $0x28] sm:$0xff]
    %v207 = vld [vmem:[#allocation6 + $0x30] sm:$0xff]
    %v208 = vld [vmem:[#allocation6 + $0x38] sm:$0xff]
    %v209 = vld [vmem:[#allocation6 + $0x40] sm:$0xff]
    %v210 = vld [vmem:[#allocation6 + $0x48] sm:$0xff]
    %v211 = vld [vmem:[#allocation6 + $0x50] sm:$0xff]
    %v212 = vld [vmem:[#allocation6 + $0x58] sm:$0xff]
    %v213 = vld [vmem:[#allocation6 + $0x60] sm:$0xff]
    %v214 = vld [vmem:[#allocation6 + $0x68] sm:$0xff]
    %v215 = vld [vmem:[#allocation6 + $0x70] sm:$0xff]
    %v216 = vld [vmem:[#allocation6 + $0x78] sm:$0xff]
    %v217 = vld [vmem:[#allocation6 + $0x80] sm:$0xff]
    %v218 = vld [vmem:[#allocation6 + $0x88] sm:$0xff]
    %v219 = vld [vmem:[#allocation6 + $0x90] sm:$0xff]
    %v220 = vld [vmem:[#allocation6 + $0x98] sm:$0xff]
    %v221 = vld [vmem:[#allocation6 + $0xa0] sm:$0xff]
    %v222 = vld [vmem:[#allocation6 + $0xa8] sm:$0xff]
    %v223 = vld [vmem:[#allocation6 + $0xb0] sm:$0xff]
    %v224 = vld [vmem:[#allocation6 + $0xb8] sm:$0xff]
    %v225 = vld [vmem:[#allocation6 + $0xc0] sm:$0xff]
    %v226 = vld [vmem:[#allocation6 + $0xc8] sm:$0xff]
    %v227 = vld [vmem:[#allocation6 + $0xd0] sm:$0xff]
    %v228 = vld [vmem:[#allocation6 + $0xd8] sm:$0xff]
    %v229 = vld [vmem:[#allocation6 + $0xe0] sm:$0xff]
    %v230 = vld [vmem:[#allocation6 + $0xe8] sm:$0xff]
    %v231 = vld [vmem:[#allocation6 + $0xf0] sm:$0xff]
    %v232 = vld [vmem:[#allocation6 + $0xf8] sm:$0xff]
    %v233 = vld [vmem:[#allocation6 + $0x100] sm:$0xff]
    %v234 = vld [vmem:[#allocation6 + $0x108] sm:$0xff]
    %v235 = vld [vmem:[#allocation6 + $0x110] sm:$0xff]
    %v236 = vld [vmem:[#allocation6 + $0x118] sm:$0xff]
    %v237 = vld [vmem:[#allocation6 + $0x120] sm:$0xff]
    %v238 = vld [vmem:[#allocation6 + $0x128] sm:$0xff]
    %v239 = vld [vmem:[#allocation6 + $0x130] sm:$0xff]
    %v240 = vld [vmem:[#allocation6 + $0x138] sm:$0xff]
    %v241 = vld [vmem:[#allocation6 + $0x140] sm:$0xff]
    %v242 = vld [vmem:[#allocation6 + $0x148] sm:$0xff]
    %v243 = vld [vmem:[#allocation6 + $0x150] sm:$0xff]
    %v244 = vld [vmem:[#allocation6 + $0x158] sm:$0xff]
    %v245 = vld [vmem:[#allocation6 + $0x160] sm:$0xff]
    %v246 = vld [vmem:[#allocation6 + $0x168] sm:$0xff]
    %v247 = vld [vmem:[#allocation6 + $0x170] sm:$0xff]
    %v248 = vld [vmem:[#allocation6 + $0x178] sm:$0xff]
    %v249 = vld [vmem:[#allocation6 + $0x180] sm:$0xff]
    %v250 = vld [vmem:[#allocation6 + $0x188] sm:$0xff]
    %v251 = vld [vmem:[#allocation6 + $0x190] sm:$0xff]
    %v252 = vld [vmem:[#allocation6 + $0x198] sm:$0xff]
    %v253 = vld [vmem:[#allocation6 + $0x1a0] sm:$0xff]
    %v254 = vld [vmem:[#allocation6 + $0x1a8] sm:$0xff]
    %v255 = vld [vmem:[#allocation6 + $0x1b0] sm:$0xff]
    %v256 = vld [vmem:[#allocation6 + $0x1b8] sm:$0xff]
    %v257 = vld [vmem:[#allocation6 + $0x1c0] sm:$0xff]
    %v258 = vld [vmem:[#allocation6 + $0x1c8] sm:$0xff]
    %v259 = vld [vmem:[#allocation6 + $0x1d0] sm:$0xff]
    %v260 = vld [vmem:[#allocation6 + $0x1d8] sm:$0xff]
    %v261 = vld [vmem:[#allocation6 + $0x1e0] sm:$0xff]
    %v262 = vld [vmem:[#allocation6 + $0x1e8] sm:$0xff]
    %v263 = vld [vmem:[#allocation6 + $0x1f0] sm:$0xff]
    %v264 = vld [vmem:[#allocation6 + $0x1f8] sm:$0xff]
    %v265 = vld [vmem:[#allocation6 + $0x200] sm:$0xff]
    %v266 = vld [vmem:[#allocation6 + $0x208] sm:$0xff]
    %v267 = vld [vmem:[#allocation6 + $0x210] sm:$0xff]
    %v268 = vld [vmem:[#allocation6 + $0x218] sm:$0xff]
    %v269 = vld [vmem:[#allocation6 + $0x220] sm:$0xff]
    %v270 = vld [vmem:[#allocation6 + $0x228] sm:$0xff]
    %v271 = vld [vmem:[#allocation6 + $0x230] sm:$0xff]
    %v272 = vld [vmem:[#allocation6 + $0x238] sm:$0xff]
    %v273 = vld [vmem:[#allocation6 + $0x240] sm:$0xff]
    %v274 = vld [vmem:[#allocation6 + $0x248] sm:$0xff]
    %v275 = vld [vmem:[#allocation6 + $0x250] sm:$0xff]
    %v276 = vld [vmem:[#allocation6 + $0x258] sm:$0xff]
    %v277 = vld [vmem:[#allocation6 + $0x260] sm:$0xff]
    %v278 = vld [vmem:[#allocation6 + $0x268] sm:$0xff]
    %v279 = vld [vmem:[#allocation6 + $0x270] sm:$0xff]
    %v280 = vld [vmem:[#allocation6 + $0x278] sm:$0xff]
    %v281 = vld [vmem:[#allocation6 + $0x280] sm:$0xff]
    %v282 = vld [vmem:[#allocation6 + $0x288] sm:$0xff]
    %v283 = vld [vmem:[#allocation6 + $0x290] sm:$0xff]
    %v284 = vld [vmem:[#allocation6 + $0x298] sm:$0xff]
    %v285 = vld [vmem:[#allocation6 + $0x2a0] sm:$0xff]
    %v286 = vld [vmem:[#allocation6 + $0x2a8] sm:$0xff]
    %v287 = vld [vmem:[#allocation6 + $0x2b0] sm:$0xff]
    %v288 = vld [vmem:[#allocation6 + $0x2b8] sm:$0xff]
    %v289 = vld [vmem:[#allocation6 + $0x2c0] sm:$0xff]
    %v290 = vld [vmem:[#allocation6 + $0x2c8] sm:$0xff]
    %v291 = vld [vmem:[#allocation6 + $0x2d0] sm:$0xff]
    %v292 = vld [vmem:[#allocation6 + $0x2d8] sm:$0xff]
    %v293 = vld [vmem:[#allocation6 + $0x2e0] sm:$0xff]
    %v294 = vld [vmem:[#allocation6 + $0x2e8] sm:$0xff]
    %v295 = vld [vmem:[#allocation6 + $0x2f0] sm:$0xff]
    %v296 = vld [vmem:[#allocation6 + $0x2f8] sm:$0xff]
    %v297 = vld [vmem:[#allocation6 + $0x300] sm:$0xff]
    %v298 = vld [vmem:[#allocation6 + $0x308] sm:$0xff]
    %v299 = vld [vmem:[#allocation6 + $0x310] sm:$0xff]
    %v300 = vld [vmem:[#allocation6 + $0x318] sm:$0xff]
    %v301 = vld [vmem:[#allocation6 + $0x320] sm:$0xff]
    %v302 = vld [vmem:[#allocation6 + $0x328] sm:$0xff]
    %v303 = vld [vmem:[#allocation6 + $0x330] sm:$0xff]
    %v304 = vld [vmem:[#allocation6 + $0x338] sm:$0xff]
    %v305 = vld [vmem:[#allocation6 + $0x340] sm:$0xff]
    %v306 = vld [vmem:[#allocation6 + $0x348] sm:$0xff]
    %v307 = vld [vmem:[#allocation6 + $0x350] sm:$0xff]
    %v308 = vld [vmem:[#allocation6 + $0x358] sm:$0xff]
    %v309 = vld [vmem:[#allocation6 + $0x360] sm:$0xff]
    %v310 = vld [vmem:[#allocation6 + $0x368] sm:$0xff]
    %v311 = vld [vmem:[#allocation6 + $0x370] sm:$0xff]
    %v312 = vld [vmem:[#allocation6 + $0x378] sm:$0xff]
    %v313 = vld [vmem:[#allocation6 + $0x380] sm:$0xff]
    %v314 = vld [vmem:[#allocation6 + $0x388] sm:$0xff]
    %v315 = vld [vmem:[#allocation6 + $0x390] sm:$0xff]
    %v316 = vld [vmem:[#allocation6 + $0x398] sm:$0xff]
    %v317 = vld [vmem:[#allocation6 + $0x3a0] sm:$0xff]
    %v318 = vld [vmem:[#allocation6 + $0x3a8] sm:$0xff]
    %v319 = vld [vmem:[#allocation6 + $0x3b0] sm:$0xff]
    %v320 = vld [vmem:[#allocation6 + $0x3b8] sm:$0xff]
    %v321 = vld [vmem:[#allocation6 + $0x3c0] sm:$0xff]
    %v322 = vld [vmem:[#allocation6 + $0x3c8] sm:$0xff]
    %v323 = vld [vmem:[#allocation6 + $0x3d0] sm:$0xff]
    %v324 = vld [vmem:[#allocation6 + $0x3d8] sm:$0xff]
    %v325 = vld [vmem:[#allocation6 + $0x3e0] sm:$0xff]
    %v326 = vld [vmem:[#allocation6 + $0x3e8] sm:$0xff]
    %v327 = vld [vmem:[#allocation6 + $0x3f0] sm:$0xff]
    %v328 = vld [vmem:[#allocation6 + $0x3f8] sm:$0xff]
    %v329 = vld [vmem:[#allocation6 + $0x400] sm:$0xff]
    %v330 = vld [vmem:[#allocation6 + $0x408] sm:$0xff]
    %v331 = vld [vmem:[#allocation6 + $0x410] sm:$0xff]
    %v332 = vld [vmem:[#allocation6 + $0x418] sm:$0xff]
    %v333 = vld [vmem:[#allocation6 + $0x420] sm:$0xff]
    %v334 = vld [vmem:[#allocation6 + $0x428] sm:$0xff]
    %v335 = vld [vmem:[#allocation6 + $0x430] sm:$0xff]
    %v336 = vld [vmem:[#allocation6 + $0x438] sm:$0xff]
    %v337 = vld [vmem:[#allocation6 + $0x440] sm:$0xff]
    %v338 = vld [vmem:[#allocation6 + $0x448] sm:$0xff]
    %v339 = vld [vmem:[#allocation6 + $0x450] sm:$0xff]
    %v340 = vld [vmem:[#allocation6 + $0x458] sm:$0xff]
    %v341 = vld [vmem:[#allocation6 + $0x460] sm:$0xff]
    %v342 = vld [vmem:[#allocation6 + $0x468] sm:$0xff]
    %v343 = vld [vmem:[#allocation6 + $0x470] sm:$0xff]
    %v344 = vld [vmem:[#allocation6 + $0x478] sm:$0xff]
    %v345 = vld [vmem:[#allocation6 + $0x480] sm:$0xff]
    %v346 = vld [vmem:[#allocation6 + $0x488] sm:$0xff]
    %v347 = vld [vmem:[#allocation6 + $0x490] sm:$0xff]
    %v348 = vld [vmem:[#allocation6 + $0x498] sm:$0xff]
    %v349 = vld [vmem:[#allocation6 + $0x4a0] sm:$0xff]
    %v350 = vld [vmem:[#allocation6 + $0x4a8] sm:$0xff]
    %v351 = vld [vmem:[#allocation6 + $0x4b0] sm:$0xff]
    %v352 = vld [vmem:[#allocation6 + $0x4b8] sm:$0xff]
    %v353 = vld [vmem:[#allocation6 + $0x4c0] sm:$0xff]
    %v354 = vld [vmem:[#allocation6 + $0x4c8] sm:$0xff]
    %v355 = vld [vmem:[#allocation6 + $0x4d0] sm:$0xff]
    %v356 = vld [vmem:[#allocation6 + $0x4d8] sm:$0xff]
    %v357 = vld [vmem:[#allocation6 + $0x4e0] sm:$0xff]
    %v358 = vld [vmem:[#allocation6 + $0x4e8] sm:$0xff]
    %v359 = vld [vmem:[#allocation6 + $0x4f0] sm:$0xff]
    %v360 = vld [vmem:[#allocation6 + $0x4f8] sm:$0xff]
    %v361 = vld [vmem:[#allocation6 + $0x500] sm:$0xff]
    %v362 = vld [vmem:[#allocation6 + $0x508] sm:$0xff]
    %v363 = vld [vmem:[#allocation6 + $0x510] sm:$0xff]
    %v364 = vld [vmem:[#allocation6 + $0x518] sm:$0xff]
    %v365 = vld [vmem:[#allocation6 + $0x520] sm:$0xff]
    %v366 = vld [vmem:[#allocation6 + $0x528] sm:$0xff]
    %v367 = vld [vmem:[#allocation6 + $0x530] sm:$0xff]
    %v368 = vld [vmem:[#allocation6 + $0x538] sm:$0xff]
    %v369 = vld [vmem:[#allocation6 + $0x540] sm:$0xff]
    %v370 = vld [vmem:[#allocation6 + $0x548] sm:$0xff]
    %v371 = vld [vmem:[#allocation6 + $0x550] sm:$0xff]
    %v372 = vld [vmem:[#allocation6 + $0x558] sm:$0xff]
    %v373 = vld [vmem:[#allocation6 + $0x560] sm:$0xff]
    %v374 = vld [vmem:[#allocation6 + $0x568] sm:$0xff]
    %v375 = vld [vmem:[#allocation6 + $0x570] sm:$0xff]
    %v376 = vld [vmem:[#allocation6 + $0x578] sm:$0xff]
    %v377 = vld [vmem:[#allocation6 + $0x580] sm:$0xff]
    %v378 = vld [vmem:[#allocation6 + $0x588] sm:$0xff]
    %v379 = vld [vmem:[#allocation6 + $0x590] sm:$0xff]
    %v380 = vld [vmem:[#allocation6 + $0x598] sm:$0xff]
    %v381 = vld [vmem:[#allocation6 + $0x5a0] sm:$0xff]
    %v382 = vld [vmem:[#allocation6 + $0x5a8] sm:$0xff]
    %v383 = vld [vmem:[#allocation6 + $0x5b0] sm:$0xff]
    %v384 = vld [vmem:[#allocation6 + $0x5b8] sm:$0xff]
    %v385 = vld [vmem:[#allocation6 + $0x5c0] sm:$0xff]
    %v386 = vld [vmem:[#allocation6 + $0x5c8] sm:$0xff]
    %v387 = vld [vmem:[#allocation6 + $0x5d0] sm:$0xff]
    %v388 = vld [vmem:[#allocation6 + $0x5d8] sm:$0xff]
    %v389 = vld [vmem:[#allocation6 + $0x5e0] sm:$0xff]
    %v390 = vld [vmem:[#allocation6 + $0x5e8] sm:$0xff]
    %v391 = vld [vmem:[#allocation6 + $0x5f0] sm:$0xff]
    %v392 = vld [vmem:[#allocation6 + $0x5f8] sm:$0xff]
    %v393 = vld [vmem:[#allocation6 + $0x600] sm:$0xff]
    %v394 = vld [vmem:[#allocation6 + $0x608] sm:$0xff]
    %v395 = vld [vmem:[#allocation6 + $0x610] sm:$0xff]
    %v396 = vld [vmem:[#allocation6 + $0x618] sm:$0xff]
    %v397 = vld [vmem:[#allocation6 + $0x620] sm:$0xff]
    %v398 = vld [vmem:[#allocation6 + $0x628] sm:$0xff]
    %v399 = vld [vmem:[#allocation6 + $0x630] sm:$0xff]
    %v400 = vld [vmem:[#allocation6 + $0x638] sm:$0xff]
    %v401 = vld [vmem:[#allocation6 + $0x640] sm:$0xff]
    %v402 = vld [vmem:[#allocation6 + $0x648] sm:$0xff]
    %v403 = vld [vmem:[#allocation6 + $0x650] sm:$0xff]
    %v404 = vld [vmem:[#allocation6 + $0x658] sm:$0xff]
    %v405 = vld [vmem:[#allocation6 + $0x660] sm:$0xff]
    %v406 = vld [vmem:[#allocation6 + $0x668] sm:$0xff]
    %v407 = vld [vmem:[#allocation6 + $0x670] sm:$0xff]
    %v408 = vld [vmem:[#allocation6 + $0x678] sm:$0xff]
    %v409 = vld [vmem:[#allocation6 + $0x680] sm:$0xff]
    %v410 = vld [vmem:[#allocation6 + $0x688] sm:$0xff]
    %v411 = vld [vmem:[#allocation6 + $0x690] sm:$0xff]
    %v412 = vld [vmem:[#allocation6 + $0x698] sm:$0xff]
    %v413 = vld [vmem:[#allocation6 + $0x6a0] sm:$0xff]
    %v414 = vld [vmem:[#allocation6 + $0x6a8] sm:$0xff]
    %v415 = vld [vmem:[#allocation6 + $0x6b0] sm:$0xff]
    %v416 = vld [vmem:[#allocation6 + $0x6b8] sm:$0xff]
    %v417 = vld [vmem:[#allocation6 + $0x6c0] sm:$0xff]
    %v418 = vld [vmem:[#allocation6 + $0x6c8] sm:$0xff]
    %v419 = vld [vmem:[#allocation6 + $0x6d0] sm:$0xff]
    %v420 = vld [vmem:[#allocation6 + $0x6d8] sm:$0xff]
    %v421 = vld [vmem:[#allocation6 + $0x6e0] sm:$0xff]
    %v422 = vld [vmem:[#allocation6 + $0x6e8] sm:$0xff]
    %v423 = vld [vmem:[#allocation6 + $0x6f0] sm:$0xff]
    %v424 = vld [vmem:[#allocation6 + $0x6f8] sm:$0xff]
    %v425 = vld [vmem:[#allocation6 + $0x700] sm:$0xff]
    %v426 = vld [vmem:[#allocation6 + $0x708] sm:$0xff]
    %v427 = vld [vmem:[#allocation6 + $0x710] sm:$0xff]
    %v428 = vld [vmem:[#allocation6 + $0x718] sm:$0xff]
    %v429 = vld [vmem:[#allocation6 + $0x720] sm:$0xff]
    %v430 = vld [vmem:[#allocation6 + $0x728] sm:$0xff]
    %v431 = vld [vmem:[#allocation6 + $0x730] sm:$0xff]
    %v432 = vld [vmem:[#allocation6 + $0x738] sm:$0xff]
    %v433 = vld [vmem:[#allocation6 + $0x740] sm:$0xff]
    %v434 = vld [vmem:[#allocation6 + $0x748] sm:$0xff]
    %v435 = vld [vmem:[#allocation6 + $0x750] sm:$0xff]
    %v436 = vld [vmem:[#allocation6 + $0x758] sm:$0xff]
    %v437 = vld [vmem:[#allocation6 + $0x760] sm:$0xff]
    %v438 = vld [vmem:[#allocation6 + $0x768] sm:$0xff]
    %v439 = vld [vmem:[#allocation6 + $0x770] sm:$0xff]
    %v440 = vld [vmem:[#allocation6 + $0x778] sm:$0xff]
    %v441 = vld [vmem:[#allocation6 + $0x780] sm:$0xff]
    %v442 = vld [vmem:[#allocation6 + $0x788] sm:$0xff]
    %v443 = vld [vmem:[#allocation6 + $0x790] sm:$0xff]
    %v444 = vld [vmem:[#allocation6 + $0x798] sm:$0xff]
    %v445 = vld [vmem:[#allocation6 + $0x7a0] sm:$0xff]
    %v446 = vld [vmem:[#allocation6 + $0x7a8] sm:$0xff]
    %v447 = vld [vmem:[#allocation6 + $0x7b0] sm:$0xff]
    %v448 = vld [vmem:[#allocation6 + $0x7b8] sm:$0xff]
    %v449 = vld [vmem:[#allocation6 + $0x7c0] sm:$0xff]
    %v450 = vld [vmem:[#allocation6 + $0x7c8] sm:$0xff]
    %v451 = vld [vmem:[#allocation6 + $0x7d0] sm:$0xff]
    %v452 = vld [vmem:[#allocation6 + $0x7d8] sm:$0xff]
    %v453 = vld [vmem:[#allocation6 + $0x7e0] sm:$0xff]
    %v454 = vld [vmem:[#allocation6 + $0x7e8] sm:$0xff]
    %v455 = vld [vmem:[#allocation6 + $0x7f0] sm:$0xff]
    %v456 = vld [vmem:[#allocation6 + $0x7f8] sm:$0xff]
    %v457 = vld [vmem:[#allocation6 + $0x800] sm:$0xff]
    %v458 = vld [vmem:[#allocation6 + $0x808] sm:$0xff]
    %v459 = vld [vmem:[#allocation6 + $0x810] sm:$0xff]
    %v460 = vld [vmem:[#allocation6 + $0x818] sm:$0xff]
    %v461 = vld [vmem:[#allocation6 + $0x820] sm:$0xff]
    %v462 = vld [vmem:[#allocation6 + $0x828] sm:$0xff]
    %v463 = vld [vmem:[#allocation6 + $0x830] sm:$0xff]
    %v464 = vld [vmem:[#allocation6 + $0x838] sm:$0xff]
    %v465 = vld [vmem:[#allocation6 + $0x840] sm:$0xff]
    %v466 = vld [vmem:[#allocation6 + $0x848] sm:$0xff]
    %v467 = vld [vmem:[#allocation6 + $0x850] sm:$0xff]
    %v468 = vld [vmem:[#allocation6 + $0x858] sm:$0xff]
    %v469 = vld [vmem:[#allocation6 + $0x860] sm:$0xff]
    %v470 = vld [vmem:[#allocation6 + $0x868] sm:$0xff]
    %v471 = vld [vmem:[#allocation6 + $0x870] sm:$0xff]
    %v472 = vld [vmem:[#allocation6 + $0x878] sm:$0xff]
    %v473 = vld [vmem:[#allocation6 + $0x880] sm:$0xff]
    %v474 = vld [vmem:[#allocation6 + $0x888] sm:$0xff]
    %v475 = vld [vmem:[#allocation6 + $0x890] sm:$0xff]
    %v476 = vld [vmem:[#allocation6 + $0x898] sm:$0xff]
    %v477 = vld [vmem:[#allocation6 + $0x8a0] sm:$0xff]
    %v478 = vld [vmem:[#allocation6 + $0x8a8] sm:$0xff]
    %v479 = vld [vmem:[#allocation6 + $0x8b0] sm:$0xff]
    %v480 = vld [vmem:[#allocation6 + $0x8b8] sm:$0xff]
    %v481 = vld [vmem:[#allocation6 + $0x8c0] sm:$0xff]
    %v482 = vld [vmem:[#allocation6 + $0x8c8] sm:$0xff]
    %v483 = vld [vmem:[#allocation6 + $0x8d0] sm:$0xff]
    %v484 = vld [vmem:[#allocation6 + $0x8d8] sm:$0xff]
    %v485 = vld [vmem:[#allocation6 + $0x8e0] sm:$0xff]
    %v486 = vld [vmem:[#allocation6 + $0x8e8] sm:$0xff]
    %v487 = vld [vmem:[#allocation6 + $0x8f0] sm:$0xff]
    %v488 = vld [vmem:[#allocation6 + $0x8f8] sm:$0xff]
    %v489 = vld [vmem:[#allocation10] sm:$0x3f]
    %v491 = vlaneseq
    %v492 = vshrl.u32 %v491, 7
    %v493 = vsub.s32 0, %v492
    %v494 = vrot.slane %v489, %v493
    %v495 = vlaneseq
    %v496 = vshrl.u32 %v495, 7
    %v497 = vsub.s32 1, %v496
    %v498 = vrot.slane %v489, %v497
    %v499 = vlaneseq
    %v500 = vshrl.u32 %v499, 7
    %v501 = vsub.s32 2, %v500
    %v502 = vrot.slane %v489, %v501
    %v503 = vlaneseq
    %v504 = vshrl.u32 %v503, 7
    %v505 = vsub.s32 3, %v504
    %v506 = vrot.slane %v489, %v505
    %v507 = vlaneseq
    %v508 = vshrl.u32 %v507, 7
    %v509 = vsub.s32 4, %v508
    %v510 = vrot.slane %v489, %v509
    %v511 = vlaneseq
    %v512 = vshrl.u32 %v511, 7
    %v513 = vsub.s32 5, %v512
    %v514 = vrot.slane %v489, %v513
    %v809 = vunpack.c.l.b16 %v201
    %v810 = vunpack.c.h.b16 %v201
    %v811 = vunpack.c.l.b16 %v202
    %v812 = vunpack.c.h.b16 %v202
    %v813 = vunpack.c.l.b16 %v203
    %v814 = vunpack.c.h.b16 %v203
    %v815 = vunpack.c.l.b16 %v204
    %v816 = vunpack.c.h.b16 %v204
    %v817 = vunpack.c.l.b16 %v205
    %v818 = vunpack.c.h.b16 %v205
    %v819 = vunpack.c.l.b16 %v206
    %v820 = vunpack.c.h.b16 %v206
    %v821 = vunpack.c.l.b16 %v207
    %v822 = vunpack.c.h.b16 %v207
    %v823 = vunpack.c.l.b16 %v208
    %v824 = vunpack.c.h.b16 %v208
    %v825 = vunpack.c.l.b16 %v209
    %v826 = vunpack.c.h.b16 %v209
    %v827 = vunpack.c.l.b16 %v210
    %v828 = vunpack.c.h.b16 %v210
    %v829 = vunpack.c.l.b16 %v211
    %v830 = vunpack.c.h.b16 %v211
    %v831 = vunpack.c.l.b16 %v212
    %v832 = vunpack.c.h.b16 %v212
    %v833 = vunpack.c.l.b16 %v213
    %v834 = vunpack.c.h.b16 %v213
    %v835 = vunpack.c.l.b16 %v214
    %v836 = vunpack.c.h.b16 %v214
    %v837 = vunpack.c.l.b16 %v215
    %v838 = vunpack.c.h.b16 %v215
    %v839 = vunpack.c.l.b16 %v216
    %v840 = vunpack.c.h.b16 %v216
    %v841 = vunpack.c.l.b16 %v217
    %v842 = vunpack.c.h.b16 %v217
    %v843 = vunpack.c.l.b16 %v218
    %v844 = vunpack.c.h.b16 %v218
    %v845 = vunpack.c.l.b16 %v219
    %v846 = vunpack.c.h.b16 %v219
    %v847 = vunpack.c.l.b16 %v220
    %v848 = vunpack.c.h.b16 %v220
    %v849 = vunpack.c.l.b16 %v221
    %v850 = vunpack.c.h.b16 %v221
    %v851 = vunpack.c.l.b16 %v222
    %v852 = vunpack.c.h.b16 %v222
    %v853 = vunpack.c.l.b16 %v223
    %v854 = vunpack.c.h.b16 %v223
    %v855 = vunpack.c.l.b16 %v224
    %v856 = vunpack.c.h.b16 %v224
    %v857 = vunpack.c.l.b16 %v225
    %v858 = vunpack.c.h.b16 %v225
    %v859 = vunpack.c.l.b16 %v226
    %v860 = vunpack.c.h.b16 %v226
    %v861 = vunpack.c.l.b16 %v227
    %v862 = vunpack.c.h.b16 %v227
    %v863 = vunpack.c.l.b16 %v228
    %v864 = vunpack.c.h.b16 %v228
    %v865 = vunpack.c.l.b16 %v229
    %v866 = vunpack.c.h.b16 %v229
    %v867 = vunpack.c.l.b16 %v230
    %v868 = vunpack.c.h.b16 %v230
    %v869 = vunpack.c.l.b16 %v231
    %v870 = vunpack.c.h.b16 %v231
    %v871 = vunpack.c.l.b16 %v232
    %v872 = vunpack.c.h.b16 %v232
    %v873 = vunpack.c.l.b16 %v233
    %v874 = vunpack.c.h.b16 %v233
    %v875 = vunpack.c.l.b16 %v234
    %v876 = vunpack.c.h.b16 %v234
    %v877 = vunpack.c.l.b16 %v235
    %v878 = vunpack.c.h.b16 %v235
    %v879 = vunpack.c.l.b16 %v236
    %v880 = vunpack.c.h.b16 %v236
    %v881 = vunpack.c.l.b16 %v237
    %v882 = vunpack.c.h.b16 %v237
    %v883 = vunpack.c.l.b16 %v238
    %v884 = vunpack.c.h.b16 %v238
    %v885 = vunpack.c.l.b16 %v239
    %v886 = vunpack.c.h.b16 %v239
    %v887 = vunpack.c.l.b16 %v240
    %v888 = vunpack.c.h.b16 %v240
    %v889 = vunpack.c.l.b16 %v241
    %v890 = vunpack.c.h.b16 %v241
    %v891 = vunpack.c.l.b16 %v242
    %v892 = vunpack.c.h.b16 %v242
    %v893 = vunpack.c.l.b16 %v243
    %v894 = vunpack.c.h.b16 %v243
    %v895 = vunpack.c.l.b16 %v244
    %v896 = vunpack.c.h.b16 %v244
    %v897 = vunpack.c.l.b16 %v245
    %v898 = vunpack.c.h.b16 %v245
    %v899 = vunpack.c.l.b16 %v246
    %v900 = vunpack.c.h.b16 %v246
    %v901 = vunpack.c.l.b16 %v247
    %v902 = vunpack.c.h.b16 %v247
    %v903 = vunpack.c.l.b16 %v248
    %v904 = vunpack.c.h.b16 %v248
    %v905 = vunpack.c.l.b16 %v249
    %v906 = vunpack.c.h.b16 %v249
    %v907 = vunpack.c.l.b16 %v250
    %v908 = vunpack.c.h.b16 %v250
    %v909 = vunpack.c.l.b16 %v251
    %v910 = vunpack.c.h.b16 %v251
    %v911 = vunpack.c.l.b16 %v252
    %v912 = vunpack.c.h.b16 %v252
    %v913 = vunpack.c.l.b16 %v253
    %v914 = vunpack.c.h.b16 %v253
    %v915 = vunpack.c.l.b16 %v254
    %v916 = vunpack.c.h.b16 %v254
    %v917 = vunpack.c.l.b16 %v255
    %v918 = vunpack.c.h.b16 %v255
    %v919 = vunpack.c.l.b16 %v256
    %v920 = vunpack.c.h.b16 %v256
    %v921 = vunpack.c.l.b16 %v257
    %v922 = vunpack.c.h.b16 %v257
    %v923 = vunpack.c.l.b16 %v258
    %v924 = vunpack.c.h.b16 %v258
    %v925 = vunpack.c.l.b16 %v259
    %v926 = vunpack.c.h.b16 %v259
    %v927 = vunpack.c.l.b16 %v260
    %v928 = vunpack.c.h.b16 %v260
    %v929 = vunpack.c.l.b16 %v261
    %v930 = vunpack.c.h.b16 %v261
    %v931 = vunpack.c.l.b16 %v262
    %v932 = vunpack.c.h.b16 %v262
    %v933 = vunpack.c.l.b16 %v263
    %v934 = vunpack.c.h.b16 %v263
    %v935 = vunpack.c.l.b16 %v264
    %v936 = vunpack.c.h.b16 %v264
    %v937 = vunpack.c.l.b16 %v265
    %v938 = vunpack.c.h.b16 %v265
    %v939 = vunpack.c.l.b16 %v266
    %v940 = vunpack.c.h.b16 %v266
    %v941 = vunpack.c.l.b16 %v267
    %v942 = vunpack.c.h.b16 %v267
    %v943 = vunpack.c.l.b16 %v268
    %v944 = vunpack.c.h.b16 %v268
    %v945 = vunpack.c.l.b16 %v269
    %v946 = vunpack.c.h.b16 %v269
    %v947 = vunpack.c.l.b16 %v270
    %v948 = vunpack.c.h.b16 %v270
    %v949 = vunpack.c.l.b16 %v271
    %v950 = vunpack.c.h.b16 %v271
    %v951 = vunpack.c.l.b16 %v272
    %v952 = vunpack.c.h.b16 %v272
    %v953 = vunpack.c.l.b16 %v273
    %v954 = vunpack.c.h.b16 %v273
    %v955 = vunpack.c.l.b16 %v274
    %v956 = vunpack.c.h.b16 %v274
    %v957 = vunpack.c.l.b16 %v275
    %v958 = vunpack.c.h.b16 %v275
    %v959 = vunpack.c.l.b16 %v276
    %v960 = vunpack.c.h.b16 %v276
    %v961 = vunpack.c.l.b16 %v277
    %v962 = vunpack.c.h.b16 %v277
    %v963 = vunpack.c.l.b16 %v278
    %v964 = vunpack.c.h.b16 %v278
    %v965 = vunpack.c.l.b16 %v279
    %v966 = vunpack.c.h.b16 %v279
    %v967 = vunpack.c.l.b16 %v280
    %v968 = vunpack.c.h.b16 %v280
    %v969 = vunpack.c.l.b16 %v281
    %v970 = vunpack.c.h.b16 %v281
    %v971 = vunpack.c.l.b16 %v282
    %v972 = vunpack.c.h.b16 %v282
    %v973 = vunpack.c.l.b16 %v283
    %v974 = vunpack.c.h.b16 %v283
    %v975 = vunpack.c.l.b16 %v284
    %v976 = vunpack.c.h.b16 %v284
    %v977 = vunpack.c.l.b16 %v285
    %v978 = vunpack.c.h.b16 %v285
    %v979 = vunpack.c.l.b16 %v286
    %v980 = vunpack.c.h.b16 %v286
    %v981 = vunpack.c.l.b16 %v287
    %v982 = vunpack.c.h.b16 %v287
    %v983 = vunpack.c.l.b16 %v288
    %v984 = vunpack.c.h.b16 %v288
    %v985 = vunpack.c.l.b16 %v289
    %v986 = vunpack.c.h.b16 %v289
    %v987 = vunpack.c.l.b16 %v290
    %v988 = vunpack.c.h.b16 %v290
    %v989 = vunpack.c.l.b16 %v291
    %v990 = vunpack.c.h.b16 %v291
    %v991 = vunpack.c.l.b16 %v292
    %v992 = vunpack.c.h.b16 %v292
    %v993 = vunpack.c.l.b16 %v293
    %v994 = vunpack.c.h.b16 %v293
    %v995 = vunpack.c.l.b16 %v294
    %v996 = vunpack.c.h.b16 %v294
    %v997 = vunpack.c.l.b16 %v295
    %v998 = vunpack.c.h.b16 %v295
    %v999 = vunpack.c.l.b16 %v296
    %v1000 = vunpack.c.h.b16 %v296
    %v1001 = vunpack.c.l.b16 %v297
    %v1002 = vunpack.c.h.b16 %v297
    %v1003 = vunpack.c.l.b16 %v298
    %v1004 = vunpack.c.h.b16 %v298
    %v1005 = vunpack.c.l.b16 %v299
    %v1006 = vunpack.c.h.b16 %v299
    %v1007 = vunpack.c.l.b16 %v300
    %v1008 = vunpack.c.h.b16 %v300
    %v1009 = vunpack.c.l.b16 %v301
    %v1010 = vunpack.c.h.b16 %v301
    %v1011 = vunpack.c.l.b16 %v302
    %v1012 = vunpack.c.h.b16 %v302
    %v1013 = vunpack.c.l.b16 %v303
    %v1014 = vunpack.c.h.b16 %v303
    %v1015 = vunpack.c.l.b16 %v304
    %v1016 = vunpack.c.h.b16 %v304
    %v1017 = vunpack.c.l.b16 %v305
    %v1018 = vunpack.c.h.b16 %v305
    %v1019 = vunpack.c.l.b16 %v306
    %v1020 = vunpack.c.h.b16 %v306
    %v1021 = vunpack.c.l.b16 %v307
    %v1022 = vunpack.c.h.b16 %v307
    %v1023 = vunpack.c.l.b16 %v308
    %v1024 = vunpack.c.h.b16 %v308
    %v1025 = vunpack.c.l.b16 %v309
    %v1026 = vunpack.c.h.b16 %v309
    %v1027 = vunpack.c.l.b16 %v310
    %v1028 = vunpack.c.h.b16 %v310
    %v1029 = vunpack.c.l.b16 %v311
    %v1030 = vunpack.c.h.b16 %v311
    %v1031 = vunpack.c.l.b16 %v312
    %v1032 = vunpack.c.h.b16 %v312
    %v1033 = vunpack.c.l.b16 %v313
    %v1034 = vunpack.c.h.b16 %v313
    %v1035 = vunpack.c.l.b16 %v314
    %v1036 = vunpack.c.h.b16 %v314
    %v1037 = vunpack.c.l.b16 %v315
    %v1038 = vunpack.c.h.b16 %v315
    %v1039 = vunpack.c.l.b16 %v316
    %v1040 = vunpack.c.h.b16 %v316
    %v1041 = vunpack.c.l.b16 %v317
    %v1042 = vunpack.c.h.b16 %v317
    %v1043 = vunpack.c.l.b16 %v318
    %v1044 = vunpack.c.h.b16 %v318
    %v1045 = vunpack.c.l.b16 %v319
    %v1046 = vunpack.c.h.b16 %v319
    %v1047 = vunpack.c.l.b16 %v320
    %v1048 = vunpack.c.h.b16 %v320
    %v1049 = vunpack.c.l.b16 %v321
    %v1050 = vunpack.c.h.b16 %v321
    %v1051 = vunpack.c.l.b16 %v322
    %v1052 = vunpack.c.h.b16 %v322
    %v1053 = vunpack.c.l.b16 %v323
    %v1054 = vunpack.c.h.b16 %v323
    %v1055 = vunpack.c.l.b16 %v324
    %v1056 = vunpack.c.h.b16 %v324
    %v1057 = vunpack.c.l.b16 %v325
    %v1058 = vunpack.c.h.b16 %v325
    %v1059 = vunpack.c.l.b16 %v326
    %v1060 = vunpack.c.h.b16 %v326
    %v1061 = vunpack.c.l.b16 %v327
    %v1062 = vunpack.c.h.b16 %v327
    %v1063 = vunpack.c.l.b16 %v328
    %v1064 = vunpack.c.h.b16 %v328
    %v1065 = vunpack.c.l.b16 %v329
    %v1066 = vunpack.c.h.b16 %v329
    %v1067 = vunpack.c.l.b16 %v330
    %v1068 = vunpack.c.h.b16 %v330
    %v1069 = vunpack.c.l.b16 %v331
    %v1070 = vunpack.c.h.b16 %v331
    %v1071 = vunpack.c.l.b16 %v332
    %v1072 = vunpack.c.h.b16 %v332
    %v1073 = vunpack.c.l.b16 %v333
    %v1074 = vunpack.c.h.b16 %v333
    %v1075 = vunpack.c.l.b16 %v334
    %v1076 = vunpack.c.h.b16 %v334
    %v1077 = vunpack.c.l.b16 %v335
    %v1078 = vunpack.c.h.b16 %v335
    %v1079 = vunpack.c.l.b16 %v336
    %v1080 = vunpack.c.h.b16 %v336
    %v1081 = vunpack.c.l.b16 %v337
    %v1082 = vunpack.c.h.b16 %v337
    %v1083 = vunpack.c.l.b16 %v338
    %v1084 = vunpack.c.h.b16 %v338
    %v1085 = vunpack.c.l.b16 %v339
    %v1086 = vunpack.c.h.b16 %v339
    %v1087 = vunpack.c.l.b16 %v340
    %v1088 = vunpack.c.h.b16 %v340
    %v1089 = vunpack.c.l.b16 %v341
    %v1090 = vunpack.c.h.b16 %v341
    %v1091 = vunpack.c.l.b16 %v342
    %v1092 = vunpack.c.h.b16 %v342
    %v1093 = vunpack.c.l.b16 %v343
    %v1094 = vunpack.c.h.b16 %v343
    %v1095 = vunpack.c.l.b16 %v344
    %v1096 = vunpack.c.h.b16 %v344
    %v1097 = vunpack.c.l.b16 %v345
    %v1098 = vunpack.c.h.b16 %v345
    %v1099 = vunpack.c.l.b16 %v346
    %v1100 = vunpack.c.h.b16 %v346
    %v1101 = vunpack.c.l.b16 %v347
    %v1102 = vunpack.c.h.b16 %v347
    %v1103 = vunpack.c.l.b16 %v348
    %v1104 = vunpack.c.h.b16 %v348
    %v1105 = vunpack.c.l.b16 %v349
    %v1106 = vunpack.c.h.b16 %v349
    %v1107 = vunpack.c.l.b16 %v350
    %v1108 = vunpack.c.h.b16 %v350
    %v1109 = vunpack.c.l.b16 %v351
    %v1110 = vunpack.c.h.b16 %v351
    %v1111 = vunpack.c.l.b16 %v352
    %v1112 = vunpack.c.h.b16 %v352
    %v1113 = vunpack.c.l.b16 %v353
    %v1114 = vunpack.c.h.b16 %v353
    %v1115 = vunpack.c.l.b16 %v354
    %v1116 = vunpack.c.h.b16 %v354
    %v1117 = vunpack.c.l.b16 %v355
    %v1118 = vunpack.c.h.b16 %v355
    %v1119 = vunpack.c.l.b16 %v356
    %v1120 = vunpack.c.h.b16 %v356
    %v1121 = vunpack.c.l.b16 %v357
    %v1122 = vunpack.c.h.b16 %v357
    %v1123 = vunpack.c.l.b16 %v358
    %v1124 = vunpack.c.h.b16 %v358
    %v1125 = vunpack.c.l.b16 %v359
    %v1126 = vunpack.c.h.b16 %v359
    %v1127 = vunpack.c.l.b16 %v360
    %v1128 = vunpack.c.h.b16 %v360
    %v1129 = vunpack.c.l.b16 %v361
    %v1130 = vunpack.c.h.b16 %v361
    %v1131 = vunpack.c.l.b16 %v362
    %v1132 = vunpack.c.h.b16 %v362
    %v1133 = vunpack.c.l.b16 %v363
    %v1134 = vunpack.c.h.b16 %v363
    %v1135 = vunpack.c.l.b16 %v364
    %v1136 = vunpack.c.h.b16 %v364
    %v1137 = vunpack.c.l.b16 %v365
    %v1138 = vunpack.c.h.b16 %v365
    %v1139 = vunpack.c.l.b16 %v366
    %v1140 = vunpack.c.h.b16 %v366
    %v1141 = vunpack.c.l.b16 %v367
    %v1142 = vunpack.c.h.b16 %v367
    %v1143 = vunpack.c.l.b16 %v368
    %v1144 = vunpack.c.h.b16 %v368
    %v1145 = vunpack.c.l.b16 %v369
    %v1146 = vunpack.c.h.b16 %v369
    %v1147 = vunpack.c.l.b16 %v370
    %v1148 = vunpack.c.h.b16 %v370
    %v1149 = vunpack.c.l.b16 %v371
    %v1150 = vunpack.c.h.b16 %v371
    %v1151 = vunpack.c.l.b16 %v372
    %v1152 = vunpack.c.h.b16 %v372
    %v1153 = vunpack.c.l.b16 %v373
    %v1154 = vunpack.c.h.b16 %v373
    %v1155 = vunpack.c.l.b16 %v374
    %v1156 = vunpack.c.h.b16 %v374
    %v1157 = vunpack.c.l.b16 %v375
    %v1158 = vunpack.c.h.b16 %v375
    %v1159 = vunpack.c.l.b16 %v376
    %v1160 = vunpack.c.h.b16 %v376
    %v1161 = vunpack.c.l.b16 %v377
    %v1162 = vunpack.c.h.b16 %v377
    %v1163 = vunpack.c.l.b16 %v378
    %v1164 = vunpack.c.h.b16 %v378
    %v1165 = vunpack.c.l.b16 %v379
    %v1166 = vunpack.c.h.b16 %v379
    %v1167 = vunpack.c.l.b16 %v380
    %v1168 = vunpack.c.h.b16 %v380
    %v1169 = vunpack.c.l.b16 %v381
    %v1170 = vunpack.c.h.b16 %v381
    %v1171 = vunpack.c.l.b16 %v382
    %v1172 = vunpack.c.h.b16 %v382
    %v1173 = vunpack.c.l.b16 %v383
    %v1174 = vunpack.c.h.b16 %v383
    %v1175 = vunpack.c.l.b16 %v384
    %v1176 = vunpack.c.h.b16 %v384
    %v1177 = vunpack.c.l.b16 %v385
    %v1178 = vunpack.c.h.b16 %v385
    %v1179 = vunpack.c.l.b16 %v386
    %v1180 = vunpack.c.h.b16 %v386
    %v1181 = vunpack.c.l.b16 %v387
    %v1182 = vunpack.c.h.b16 %v387
    %v1183 = vunpack.c.l.b16 %v388
    %v1184 = vunpack.c.h.b16 %v388
    %v1185 = vunpack.c.l.b16 %v389
    %v1186 = vunpack.c.h.b16 %v389
    %v1187 = vunpack.c.l.b16 %v390
    %v1188 = vunpack.c.h.b16 %v390
    %v1189 = vunpack.c.l.b16 %v391
    %v1190 = vunpack.c.h.b16 %v391
    %v1191 = vunpack.c.l.b16 %v392
    %v1192 = vunpack.c.h.b16 %v392
    %v1193 = vunpack.c.l.b16 %v393
    %v1194 = vunpack.c.h.b16 %v393
    %v1195 = vunpack.c.l.b16 %v394
    %v1196 = vunpack.c.h.b16 %v394
    %v1197 = vunpack.c.l.b16 %v395
    %v1198 = vunpack.c.h.b16 %v395
    %v1199 = vunpack.c.l.b16 %v396
    %v1200 = vunpack.c.h.b16 %v396
    %v1201 = vunpack.c.l.b16 %v397
    %v1202 = vunpack.c.h.b16 %v397
    %v1203 = vunpack.c.l.b16 %v398
    %v1204 = vunpack.c.h.b16 %v398
    %v1205 = vunpack.c.l.b16 %v399
    %v1206 = vunpack.c.h.b16 %v399
    %v1207 = vunpack.c.l.b16 %v400
    %v1208 = vunpack.c.h.b16 %v400
    %v1209 = vunpack.c.l.b16 %v401
    %v1210 = vunpack.c.h.b16 %v401
    %v1211 = vunpack.c.l.b16 %v402
    %v1212 = vunpack.c.h.b16 %v402
    %v1213 = vunpack.c.l.b16 %v403
    %v1214 = vunpack.c.h.b16 %v403
    %v1215 = vunpack.c.l.b16 %v404
    %v1216 = vunpack.c.h.b16 %v404
    %v1217 = vunpack.c.l.b16 %v405
    %v1218 = vunpack.c.h.b16 %v405
    %v1219 = vunpack.c.l.b16 %v406
    %v1220 = vunpack.c.h.b16 %v406
    %v1221 = vunpack.c.l.b16 %v407
    %v1222 = vunpack.c.h.b16 %v407
    %v1223 = vunpack.c.l.b16 %v408
    %v1224 = vunpack.c.h.b16 %v408
    %v1225 = vunpack.c.l.b16 %v409
    %v1226 = vunpack.c.h.b16 %v409
    %v1227 = vunpack.c.l.b16 %v410
    %v1228 = vunpack.c.h.b16 %v410
    %v1229 = vunpack.c.l.b16 %v411
    %v1230 = vunpack.c.h.b16 %v411
    %v1231 = vunpack.c.l.b16 %v412
    %v1232 = vunpack.c.h.b16 %v412
    %v1233 = vunpack.c.l.b16 %v413
    %v1234 = vunpack.c.h.b16 %v413
    %v1235 = vunpack.c.l.b16 %v414
    %v1236 = vunpack.c.h.b16 %v414
    %v1237 = vunpack.c.l.b16 %v415
    %v1238 = vunpack.c.h.b16 %v415
    %v1239 = vunpack.c.l.b16 %v416
    %v1240 = vunpack.c.h.b16 %v416
    %v1241 = vunpack.c.l.b16 %v417
    %v1242 = vunpack.c.h.b16 %v417
    %v1243 = vunpack.c.l.b16 %v418
    %v1244 = vunpack.c.h.b16 %v418
    %v1245 = vunpack.c.l.b16 %v419
    %v1246 = vunpack.c.h.b16 %v419
    %v1247 = vunpack.c.l.b16 %v420
    %v1248 = vunpack.c.h.b16 %v420
    %v1249 = vunpack.c.l.b16 %v421
    %v1250 = vunpack.c.h.b16 %v421
    %v1251 = vunpack.c.l.b16 %v422
    %v1252 = vunpack.c.h.b16 %v422
    %v1253 = vunpack.c.l.b16 %v423
    %v1254 = vunpack.c.h.b16 %v423
    %v1255 = vunpack.c.l.b16 %v424
    %v1256 = vunpack.c.h.b16 %v424
    %v1257 = vunpack.c.l.b16 %v425
    %v1258 = vunpack.c.h.b16 %v425
    %v1259 = vunpack.c.l.b16 %v426
    %v1260 = vunpack.c.h.b16 %v426
    %v1261 = vunpack.c.l.b16 %v427
    %v1262 = vunpack.c.h.b16 %v427
    %v1263 = vunpack.c.l.b16 %v428
    %v1264 = vunpack.c.h.b16 %v428
    %v1265 = vunpack.c.l.b16 %v429
    %v1266 = vunpack.c.h.b16 %v429
    %v1267 = vunpack.c.l.b16 %v430
    %v1268 = vunpack.c.h.b16 %v430
    %v1269 = vunpack.c.l.b16 %v431
    %v1270 = vunpack.c.h.b16 %v431
    %v1271 = vunpack.c.l.b16 %v432
    %v1272 = vunpack.c.h.b16 %v432
    %v1273 = vunpack.c.l.b16 %v433
    %v1274 = vunpack.c.h.b16 %v433
    %v1275 = vunpack.c.l.b16 %v434
    %v1276 = vunpack.c.h.b16 %v434
    %v1277 = vunpack.c.l.b16 %v435
    %v1278 = vunpack.c.h.b16 %v435
    %v1279 = vunpack.c.l.b16 %v436
    %v1280 = vunpack.c.h.b16 %v436
    %v1281 = vunpack.c.l.b16 %v437
    %v1282 = vunpack.c.h.b16 %v437
    %v1283 = vunpack.c.l.b16 %v438
    %v1284 = vunpack.c.h.b16 %v438
    %v1285 = vunpack.c.l.b16 %v439
    %v1286 = vunpack.c.h.b16 %v439
    %v1287 = vunpack.c.l.b16 %v440
    %v1288 = vunpack.c.h.b16 %v440
    %v1289 = vunpack.c.l.b16 %v441
    %v1290 = vunpack.c.h.b16 %v441
    %v1291 = vunpack.c.l.b16 %v442
    %v1292 = vunpack.c.h.b16 %v442
    %v1293 = vunpack.c.l.b16 %v443
    %v1294 = vunpack.c.h.b16 %v443
    %v1295 = vunpack.c.l.b16 %v444
    %v1296 = vunpack.c.h.b16 %v444
    %v1297 = vunpack.c.l.b16 %v445
    %v1298 = vunpack.c.h.b16 %v445
    %v1299 = vunpack.c.l.b16 %v446
    %v1300 = vunpack.c.h.b16 %v446
    %v1301 = vunpack.c.l.b16 %v447
    %v1302 = vunpack.c.h.b16 %v447
    %v1303 = vunpack.c.l.b16 %v448
    %v1304 = vunpack.c.h.b16 %v448
    %v1305 = vunpack.c.l.b16 %v449
    %v1306 = vunpack.c.h.b16 %v449
    %v1307 = vunpack.c.l.b16 %v450
    %v1308 = vunpack.c.h.b16 %v450
    %v1309 = vunpack.c.l.b16 %v451
    %v1310 = vunpack.c.h.b16 %v451
    %v1311 = vunpack.c.l.b16 %v452
    %v1312 = vunpack.c.h.b16 %v452
    %v1313 = vunpack.c.l.b16 %v453
    %v1314 = vunpack.c.h.b16 %v453
    %v1315 = vunpack.c.l.b16 %v454
    %v1316 = vunpack.c.h.b16 %v454
    %v1317 = vunpack.c.l.b16 %v455
    %v1318 = vunpack.c.h.b16 %v455
    %v1319 = vunpack.c.l.b16 %v456
    %v1320 = vunpack.c.h.b16 %v456
    %v1321 = vunpack.c.l.b16 %v457
    %v1322 = vunpack.c.h.b16 %v457
    %v1323 = vunpack.c.l.b16 %v458
    %v1324 = vunpack.c.h.b16 %v458
    %v1325 = vunpack.c.l.b16 %v459
    %v1326 = vunpack.c.h.b16 %v459
    %v1327 = vunpack.c.l.b16 %v460
    %v1328 = vunpack.c.h.b16 %v460
    %v1329 = vunpack.c.l.b16 %v461
    %v1330 = vunpack.c.h.b16 %v461
    %v1331 = vunpack.c.l.b16 %v462
    %v1332 = vunpack.c.h.b16 %v462
    %v1333 = vunpack.c.l.b16 %v463
    %v1334 = vunpack.c.h.b16 %v463
    %v1335 = vunpack.c.l.b16 %v464
    %v1336 = vunpack.c.h.b16 %v464
    %v1337 = vunpack.c.l.b16 %v465
    %v1338 = vunpack.c.h.b16 %v465
    %v1339 = vunpack.c.l.b16 %v466
    %v1340 = vunpack.c.h.b16 %v466
    %v1341 = vunpack.c.l.b16 %v467
    %v1342 = vunpack.c.h.b16 %v467
    %v1343 = vunpack.c.l.b16 %v468
    %v1344 = vunpack.c.h.b16 %v468
    %v1345 = vunpack.c.l.b16 %v469
    %v1346 = vunpack.c.h.b16 %v469
    %v1347 = vunpack.c.l.b16 %v470
    %v1348 = vunpack.c.h.b16 %v470
    %v1349 = vunpack.c.l.b16 %v471
    %v1350 = vunpack.c.h.b16 %v471
    %v1351 = vunpack.c.l.b16 %v472
    %v1352 = vunpack.c.h.b16 %v472
    %v1353 = vunpack.c.l.b16 %v473
    %v1354 = vunpack.c.h.b16 %v473
    %v1355 = vunpack.c.l.b16 %v474
    %v1356 = vunpack.c.h.b16 %v474
    %v1357 = vunpack.c.l.b16 %v475
    %v1358 = vunpack.c.h.b16 %v475
    %v1359 = vunpack.c.l.b16 %v476
    %v1360 = vunpack.c.h.b16 %v476
    %v1361 = vunpack.c.l.b16 %v477
    %v1362 = vunpack.c.h.b16 %v477
    %v1363 = vunpack.c.l.b16 %v478
    %v1364 = vunpack.c.h.b16 %v478
    %v1365 = vunpack.c.l.b16 %v479
    %v1366 = vunpack.c.h.b16 %v479
    %v1367 = vunpack.c.l.b16 %v480
    %v1368 = vunpack.c.h.b16 %v480
    %v1369 = vunpack.c.l.b16 %v481
    %v1370 = vunpack.c.h.b16 %v481
    %v1371 = vunpack.c.l.b16 %v482
    %v1372 = vunpack.c.h.b16 %v482
    %v1373 = vunpack.c.l.b16 %v483
    %v1374 = vunpack.c.h.b16 %v483
    %v1375 = vunpack.c.l.b16 %v484
    %v1376 = vunpack.c.h.b16 %v484
    %v1377 = vunpack.c.l.b16 %v485
    %v1378 = vunpack.c.h.b16 %v485
    %v1379 = vunpack.c.l.b16 %v486
    %v1380 = vunpack.c.h.b16 %v486
    %v1381 = vunpack.c.l.b16 %v487
    %v1382 = vunpack.c.h.b16 %v487
    %v1383 = vunpack.c.l.b16 %v488
    %v1384 = vunpack.c.h.b16 %v488
    %v1385 = vpack.c.b16 %v815, %v809
    %v1386 = vpack.c.b16 %v816, %v810
    %v1387 = vpack.c.b16 %v817, %v811
    %v1388 = vpack.c.b16 %v818, %v812
    %v1389 = vpack.c.b16 %v819, %v813
    %v1390 = vpack.c.b16 %v820, %v814
    %v1391 = vpack.c.b16 %v827, %v821
    %v1392 = vpack.c.b16 %v828, %v822
    %v1393 = vpack.c.b16 %v829, %v823
    %v1394 = vpack.c.b16 %v830, %v824
    %v1395 = vpack.c.b16 %v831, %v825
    %v1396 = vpack.c.b16 %v832, %v826
    %v1397 = vpack.c.b16 %v839, %v833
    %v1398 = vpack.c.b16 %v840, %v834
    %v1399 = vpack.c.b16 %v841, %v835
    %v1400 = vpack.c.b16 %v842, %v836
    %v1401 = vpack.c.b16 %v843, %v837
    %v1402 = vpack.c.b16 %v844, %v838
    %v1403 = vpack.c.b16 %v851, %v845
    %v1404 = vpack.c.b16 %v852, %v846
    %v1405 = vpack.c.b16 %v853, %v847
    %v1406 = vpack.c.b16 %v854, %v848
    %v1407 = vpack.c.b16 %v855, %v849
    %v1408 = vpack.c.b16 %v856, %v850
    %v1409 = vpack.c.b16 %v863, %v857
    %v1410 = vpack.c.b16 %v864, %v858
    %v1411 = vpack.c.b16 %v865, %v859
    %v1412 = vpack.c.b16 %v866, %v860
    %v1413 = vpack.c.b16 %v867, %v861
    %v1414 = vpack.c.b16 %v868, %v862
    %v1415 = vpack.c.b16 %v875, %v869
    %v1416 = vpack.c.b16 %v876, %v870
    %v1417 = vpack.c.b16 %v877, %v871
    %v1418 = vpack.c.b16 %v878, %v872
    %v1419 = vpack.c.b16 %v879, %v873
    %v1420 = vpack.c.b16 %v880, %v874
    %v1421 = vpack.c.b16 %v887, %v881
    %v1422 = vpack.c.b16 %v888, %v882
    %v1423 = vpack.c.b16 %v889, %v883
    %v1424 = vpack.c.b16 %v890, %v884
    %v1425 = vpack.c.b16 %v891, %v885
    %v1426 = vpack.c.b16 %v892, %v886
    %v1427 = vpack.c.b16 %v899, %v893
    %v1428 = vpack.c.b16 %v900, %v894
    %v1429 = vpack.c.b16 %v901, %v895
    %v1430 = vpack.c.b16 %v902, %v896
    %v1431 = vpack.c.b16 %v903, %v897
    %v1432 = vpack.c.b16 %v904, %v898
    %v1433 = vpack.c.b16 %v911, %v905
    %v1434 = vpack.c.b16 %v912, %v906
    %v1435 = vpack.c.b16 %v913, %v907
    %v1436 = vpack.c.b16 %v914, %v908
    %v1437 = vpack.c.b16 %v915, %v909
    %v1438 = vpack.c.b16 %v916, %v910
    %v1439 = vpack.c.b16 %v923, %v917
    %v1440 = vpack.c.b16 %v924, %v918
    %v1441 = vpack.c.b16 %v925, %v919
    %v1442 = vpack.c.b16 %v926, %v920
    %v1443 = vpack.c.b16 %v927, %v921
    %v1444 = vpack.c.b16 %v928, %v922
    %v1445 = vpack.c.b16 %v935, %v929
    %v1446 = vpack.c.b16 %v936, %v930
    %v1447 = vpack.c.b16 %v937, %v931
    %v1448 = vpack.c.b16 %v938, %v932
    %v1449 = vpack.c.b16 %v939, %v933
    %v1450 = vpack.c.b16 %v940, %v934
    %v1451 = vpack.c.b16 %v947, %v941
    %v1452 = vpack.c.b16 %v948, %v942
    %v1453 = vpack.c.b16 %v949, %v943
    %v1454 = vpack.c.b16 %v950, %v944
    %v1455 = vpack.c.b16 %v951, %v945
    %v1456 = vpack.c.b16 %v952, %v946
    %v1457 = vpack.c.b16 %v959, %v953
    %v1458 = vpack.c.b16 %v960, %v954
    %v1459 = vpack.c.b16 %v961, %v955
    %v1460 = vpack.c.b16 %v962, %v956
    %v1461 = vpack.c.b16 %v963, %v957
    %v1462 = vpack.c.b16 %v964, %v958
    %v1463 = vpack.c.b16 %v971, %v965
    %v1464 = vpack.c.b16 %v972, %v966
    %v1465 = vpack.c.b16 %v973, %v967
    %v1466 = vpack.c.b16 %v974, %v968
    %v1467 = vpack.c.b16 %v975, %v969
    %v1468 = vpack.c.b16 %v976, %v970
    %v1469 = vpack.c.b16 %v983, %v977
    %v1470 = vpack.c.b16 %v984, %v978
    %v1471 = vpack.c.b16 %v985, %v979
    %v1472 = vpack.c.b16 %v986, %v980
    %v1473 = vpack.c.b16 %v987, %v981
    %v1474 = vpack.c.b16 %v988, %v982
    %v1475 = vpack.c.b16 %v995, %v989
    %v1476 = vpack.c.b16 %v996, %v990
    %v1477 = vpack.c.b16 %v997, %v991
    %v1478 = vpack.c.b16 %v998, %v992
    %v1479 = vpack.c.b16 %v999, %v993
    %v1480 = vpack.c.b16 %v1000, %v994
    %v1481 = vpack.c.b16 %v1007, %v1001
    %v1482 = vpack.c.b16 %v1008, %v1002
    %v1483 = vpack.c.b16 %v1009, %v1003
    %v1484 = vpack.c.b16 %v1010, %v1004
    %v1485 = vpack.c.b16 %v1011, %v1005
    %v1486 = vpack.c.b16 %v1012, %v1006
    %v1487 = vpack.c.b16 %v1019, %v1013
    %v1488 = vpack.c.b16 %v1020, %v1014
    %v1489 = vpack.c.b16 %v1021, %v1015
    %v1490 = vpack.c.b16 %v1022, %v1016
    %v1491 = vpack.c.b16 %v1023, %v1017
    %v1492 = vpack.c.b16 %v1024, %v1018
    %v1493 = vpack.c.b16 %v1031, %v1025
    %v1494 = vpack.c.b16 %v1032, %v1026
    %v1495 = vpack.c.b16 %v1033, %v1027
    %v1496 = vpack.c.b16 %v1034, %v1028
    %v1497 = vpack.c.b16 %v1035, %v1029
    %v1498 = vpack.c.b16 %v1036, %v1030
    %v1499 = vpack.c.b16 %v1043, %v1037
    %v1500 = vpack.c.b16 %v1044, %v1038
    %v1501 = vpack.c.b16 %v1045, %v1039
    %v1502 = vpack.c.b16 %v1046, %v1040
    %v1503 = vpack.c.b16 %v1047, %v1041
    %v1504 = vpack.c.b16 %v1048, %v1042
    %v1505 = vpack.c.b16 %v1055, %v1049
    %v1506 = vpack.c.b16 %v1056, %v1050
    %v1507 = vpack.c.b16 %v1057, %v1051
    %v1508 = vpack.c.b16 %v1058, %v1052
    %v1509 = vpack.c.b16 %v1059, %v1053
    %v1510 = vpack.c.b16 %v1060, %v1054
    %v1511 = vpack.c.b16 %v1067, %v1061
    %v1512 = vpack.c.b16 %v1068, %v1062
    %v1513 = vpack.c.b16 %v1069, %v1063
    %v1514 = vpack.c.b16 %v1070, %v1064
    %v1515 = vpack.c.b16 %v1071, %v1065
    %v1516 = vpack.c.b16 %v1072, %v1066
    %v1517 = vpack.c.b16 %v1079, %v1073
    %v1518 = vpack.c.b16 %v1080, %v1074
    %v1519 = vpack.c.b16 %v1081, %v1075
    %v1520 = vpack.c.b16 %v1082, %v1076
    %v1521 = vpack.c.b16 %v1083, %v1077
    %v1522 = vpack.c.b16 %v1084, %v1078
    %v1523 = vpack.c.b16 %v1091, %v1085
    %v1524 = vpack.c.b16 %v1092, %v1086
    %v1525 = vpack.c.b16 %v1093, %v1087
    %v1526 = vpack.c.b16 %v1094, %v1088
    %v1527 = vpack.c.b16 %v1095, %v1089
    %v1528 = vpack.c.b16 %v1096, %v1090
    %v1529 = vpack.c.b16 %v1103, %v1097
    %v1530 = vpack.c.b16 %v1104, %v1098
    %v1531 = vpack.c.b16 %v1105, %v1099
    %v1532 = vpack.c.b16 %v1106, %v1100
    %v1533 = vpack.c.b16 %v1107, %v1101
    %v1534 = vpack.c.b16 %v1108, %v1102
    %v1535 = vpack.c.b16 %v1115, %v1109
    %v1536 = vpack.c.b16 %v1116, %v1110
    %v1537 = vpack.c.b16 %v1117, %v1111
    %v1538 = vpack.c.b16 %v1118, %v1112
    %v1539 = vpack.c.b16 %v1119, %v1113
    %v1540 = vpack.c.b16 %v1120, %v1114
    %v1541 = vpack.c.b16 %v1127, %v1121
    %v1542 = vpack.c.b16 %v1128, %v1122
    %v1543 = vpack.c.b16 %v1129, %v1123
    %v1544 = vpack.c.b16 %v1130, %v1124
    %v1545 = vpack.c.b16 %v1131, %v1125
    %v1546 = vpack.c.b16 %v1132, %v1126
    %v1547 = vpack.c.b16 %v1139, %v1133
    %v1548 = vpack.c.b16 %v1140, %v1134
    %v1549 = vpack.c.b16 %v1141, %v1135
    %v1550 = vpack.c.b16 %v1142, %v1136
    %v1551 = vpack.c.b16 %v1143, %v1137
    %v1552 = vpack.c.b16 %v1144, %v1138
    %v1553 = vpack.c.b16 %v1151, %v1145
    %v1554 = vpack.c.b16 %v1152, %v1146
    %v1555 = vpack.c.b16 %v1153, %v1147
    %v1556 = vpack.c.b16 %v1154, %v1148
    %v1557 = vpack.c.b16 %v1155, %v1149
    %v1558 = vpack.c.b16 %v1156, %v1150
    %v1559 = vpack.c.b16 %v1163, %v1157
    %v1560 = vpack.c.b16 %v1164, %v1158
    %v1561 = vpack.c.b16 %v1165, %v1159
    %v1562 = vpack.c.b16 %v1166, %v1160
    %v1563 = vpack.c.b16 %v1167, %v1161
    %v1564 = vpack.c.b16 %v1168, %v1162
    %v1565 = vpack.c.b16 %v1175, %v1169
    %v1566 = vpack.c.b16 %v1176, %v1170
    %v1567 = vpack.c.b16 %v1177, %v1171
    %v1568 = vpack.c.b16 %v1178, %v1172
    %v1569 = vpack.c.b16 %v1179, %v1173
    %v1570 = vpack.c.b16 %v1180, %v1174
    %v1571 = vpack.c.b16 %v1187, %v1181
    %v1572 = vpack.c.b16 %v1188, %v1182
    %v1573 = vpack.c.b16 %v1189, %v1183
    %v1574 = vpack.c.b16 %v1190, %v1184
    %v1575 = vpack.c.b16 %v1191, %v1185
    %v1576 = vpack.c.b16 %v1192, %v1186
    %v1577 = vpack.c.b16 %v1199, %v1193
    %v1578 = vpack.c.b16 %v1200, %v1194
    %v1579 = vpack.c.b16 %v1201, %v1195
    %v1580 = vpack.c.b16 %v1202, %v1196
    %v1581 = vpack.c.b16 %v1203, %v1197
    %v1582 = vpack.c.b16 %v1204, %v1198
    %v1583 = vpack.c.b16 %v1211, %v1205
    %v1584 = vpack.c.b16 %v1212, %v1206
    %v1585 = vpack.c.b16 %v1213, %v1207
    %v1586 = vpack.c.b16 %v1214, %v1208
    %v1587 = vpack.c.b16 %v1215, %v1209
    %v1588 = vpack.c.b16 %v1216, %v1210
    %v1589 = vpack.c.b16 %v1223, %v1217
    %v1590 = vpack.c.b16 %v1224, %v1218
    %v1591 = vpack.c.b16 %v1225, %v1219
    %v1592 = vpack.c.b16 %v1226, %v1220
    %v1593 = vpack.c.b16 %v1227, %v1221
    %v1594 = vpack.c.b16 %v1228, %v1222
    %v1595 = vpack.c.b16 %v1235, %v1229
    %v1596 = vpack.c.b16 %v1236, %v1230
    %v1597 = vpack.c.b16 %v1237, %v1231
    %v1598 = vpack.c.b16 %v1238, %v1232
    %v1599 = vpack.c.b16 %v1239, %v1233
    %v1600 = vpack.c.b16 %v1240, %v1234
    %v1601 = vpack.c.b16 %v1247, %v1241
    %v1602 = vpack.c.b16 %v1248, %v1242
    %v1603 = vpack.c.b16 %v1249, %v1243
    %v1604 = vpack.c.b16 %v1250, %v1244
    %v1605 = vpack.c.b16 %v1251, %v1245
    %v1606 = vpack.c.b16 %v1252, %v1246
    %v1607 = vpack.c.b16 %v1259, %v1253
    %v1608 = vpack.c.b16 %v1260, %v1254
    %v1609 = vpack.c.b16 %v1261, %v1255
    %v1610 = vpack.c.b16 %v1262, %v1256
    %v1611 = vpack.c.b16 %v1263, %v1257
    %v1612 = vpack.c.b16 %v1264, %v1258
    %v1613 = vpack.c.b16 %v1271, %v1265
    %v1614 = vpack.c.b16 %v1272, %v1266
    %v1615 = vpack.c.b16 %v1273, %v1267
    %v1616 = vpack.c.b16 %v1274, %v1268
    %v1617 = vpack.c.b16 %v1275, %v1269
    %v1618 = vpack.c.b16 %v1276, %v1270
    %v1619 = vpack.c.b16 %v1283, %v1277
    %v1620 = vpack.c.b16 %v1284, %v1278
    %v1621 = vpack.c.b16 %v1285, %v1279
    %v1622 = vpack.c.b16 %v1286, %v1280
    %v1623 = vpack.c.b16 %v1287, %v1281
    %v1624 = vpack.c.b16 %v1288, %v1282
    %v1625 = vpack.c.b16 %v1295, %v1289
    %v1626 = vpack.c.b16 %v1296, %v1290
    %v1627 = vpack.c.b16 %v1297, %v1291
    %v1628 = vpack.c.b16 %v1298, %v1292
    %v1629 = vpack.c.b16 %v1299, %v1293
    %v1630 = vpack.c.b16 %v1300, %v1294
    %v1631 = vpack.c.b16 %v1307, %v1301
    %v1632 = vpack.c.b16 %v1308, %v1302
    %v1633 = vpack.c.b16 %v1309, %v1303
    %v1634 = vpack.c.b16 %v1310, %v1304
    %v1635 = vpack.c.b16 %v1311, %v1305
    %v1636 = vpack.c.b16 %v1312, %v1306
    %v1637 = vpack.c.b16 %v1319, %v1313
    %v1638 = vpack.c.b16 %v1320, %v1314
    %v1639 = vpack.c.b16 %v1321, %v1315
    %v1640 = vpack.c.b16 %v1322, %v1316
    %v1641 = vpack.c.b16 %v1323, %v1317
    %v1642 = vpack.c.b16 %v1324, %v1318
    %v1643 = vpack.c.b16 %v1331, %v1325
    %v1644 = vpack.c.b16 %v1332, %v1326
    %v1645 = vpack.c.b16 %v1333, %v1327
    %v1646 = vpack.c.b16 %v1334, %v1328
    %v1647 = vpack.c.b16 %v1335, %v1329
    %v1648 = vpack.c.b16 %v1336, %v1330
    %v1649 = vpack.c.b16 %v1343, %v1337
    %v1650 = vpack.c.b16 %v1344, %v1338
    %v1651 = vpack.c.b16 %v1345, %v1339
    %v1652 = vpack.c.b16 %v1346, %v1340
    %v1653 = vpack.c.b16 %v1347, %v1341
    %v1654 = vpack.c.b16 %v1348, %v1342
    %v1655 = vpack.c.b16 %v1355, %v1349
    %v1656 = vpack.c.b16 %v1356, %v1350
    %v1657 = vpack.c.b16 %v1357, %v1351
    %v1658 = vpack.c.b16 %v1358, %v1352
    %v1659 = vpack.c.b16 %v1359, %v1353
    %v1660 = vpack.c.b16 %v1360, %v1354
    %v1661 = vpack.c.b16 %v1367, %v1361
    %v1662 = vpack.c.b16 %v1368, %v1362
    %v1663 = vpack.c.b16 %v1369, %v1363
    %v1664 = vpack.c.b16 %v1370, %v1364
    %v1665 = vpack.c.b16 %v1371, %v1365
    %v1666 = vpack.c.b16 %v1372, %v1366
    %v1667 = vpack.c.b16 %v1379, %v1373
    %v1668 = vpack.c.b16 %v1380, %v1374
    %v1669 = vpack.c.b16 %v1381, %v1375
    %v1670 = vpack.c.b16 %v1382, %v1376
    %v1671 = vpack.c.b16 %v1383, %v1377
    %v1672 = vpack.c.b16 %v1384, %v1378
    %1961 = vmatprep.subr.bf16.mxu0 %v1386
    %1962 = vmatpush1.bf16.msra.mxu0 %v1385
    %1963 = vmatprep.subr.bf16.mxu0 %v1392
    %1964 = vmatpush1.bf16.msra.mxu0 %v1391
    %1965 = vmatprep.subr.bf16.mxu0 %v1398
    %1966 = vmatpush1.bf16.msra.mxu0 %v1397
    %1967 = vmatprep.subr.bf16.mxu0 %v1404
    %1968 = vmatpush1.bf16.msra.mxu0 %v1403
    %1969 = vmatprep.subr.bf16.mxu0 %v1410
    %1970 = vmatpush1.bf16.msra.mxu0 %v1409
    %1971 = vmatprep.subr.bf16.mxu0 %v1416
    %1972 = vmatpush1.bf16.msra.mxu0 %v1415
    %1973 = vmatprep.subr.bf16.mxu0 %v1422
    %1974 = vmatpush1.bf16.msra.mxu0 %v1421
    %1975 = vmatprep.subr.bf16.mxu0 %v1428
    %1976 = vmatpush1.bf16.msra.mxu0 %v1427
    %1977 = vmatprep.subr.bf16.mxu0 %v1434
    %1978 = vmatpush1.bf16.msra.mxu0 %v1433
    %1979 = vmatprep.subr.bf16.mxu0 %v1440
    %1980 = vmatpush1.bf16.msra.mxu0 %v1439
    %1981 = vmatprep.subr.bf16.mxu0 %v1446
    %1982 = vmatpush1.bf16.msra.mxu0 %v1445
    %1983 = vmatprep.subr.bf16.mxu0 %v1452
    %1984 = vmatpush1.bf16.msra.mxu0 %v1451
    %1985 = vmatprep.subr.bf16.mxu0 %v1458
    %1986 = vmatpush1.bf16.msra.mxu0 %v1457
    %1987 = vmatprep.subr.bf16.mxu0 %v1464
    %1988 = vmatpush1.bf16.msra.mxu0 %v1463
    %1989 = vmatprep.subr.bf16.mxu0 %v1470
    %1990 = vmatpush1.bf16.msra.mxu0 %v1469
    %1991 = vmatprep.subr.bf16.mxu0 %v1476
    %1992 = vmatpush1.bf16.msra.mxu0 %v1475
    %1993 = vmatprep.mubr.bf16.mxu0 %v178
    %1994 = vmatmul.mubr.bf16.gmra.mrb[0].mxu0 %v177
    %v1995 = vpop.f32.mrb[0].mxu0
    %v1996 = vadd.f32 %v494, %v1995
    %v1997 = vpop.f32.mrb[0].mxu0
    %v1998 = vadd.f32 %v498, %v1997
    %v1999 = vpop.f32.mrb[0].mxu0
    %v2000 = vadd.f32 %v494, %v1999
    %v2001 = vpop.f32.mrb[0].mxu0
    %v2002 = vadd.f32 %v498, %v2001
    %2003 = vmatprep.mubr.bf16.mxu0 %v184
    %2004 = vmatmul.mubr.bf16.gmra.mrb[0].mxu0 %v183
    %v2005 = vpop.f32.mrb[0].mxu0
    %v2006 = vadd.f32 %v494, %v2005
    %v2007 = vpop.f32.mrb[0].mxu0
    %v2008 = vadd.f32 %v498, %v2007
    %v2009 = vpop.f32.mrb[0].mxu0
    %v2010 = vadd.f32 %v494, %v2009
    %v2011 = vpop.f32.mrb[0].mxu0
    %v2012 = vadd.f32 %v498, %v2011
    %2013 = vmatprep.mubr.bf16.mxu0 %v190
    %2014 = vmatmul.mubr.bf16.gmra.mrb[0].mxu0 %v189
    %v2015 = vpop.f32.mrb[0].mxu0
    %v2016 = vadd.f32 %v494, %v2015
    %v2017 = vpop.f32.mrb[0].mxu0
    %v2018 = vadd.f32 %v498, %v2017
    %v2019 = vpop.f32.mrb[0].mxu0
    %v2020 = vadd.f32 %v494, %v2019
    %v2021 = vpop.f32.mrb[0].mxu0
    %v2022 = vadd.f32 %v498, %v2021
    %2023 = vmatprep.mubr.bf16.mxu0 %v196
    %2024 = vmatmul.mubr.bf16.gmra.mrb[0].mxu0 %v195
    %v2025 = vpop.f32.mrb[0].mxu0
    %v2026 = vadd.f32 %v494, %v2025
    %v2027 = vpop.f32.mrb[0].mxu0
    %v2028 = vadd.f32 %v498, %v2027
    %v2029 = vpop.f32.mrb[0].mxu0
    %v2030 = vadd.f32 %v494, %v2029
    %v2031 = vpop.f32.mrb[0].mxu0
    %v2032 = vadd.f32 %v498, %v2031
    %2033 = vdwg.mxu0
    %2034 = vmatprep.subr.bf16.mxu0 %v1482
    %2035 = vmatpush1.bf16.msra.mxu0 %v1481
    %2036 = vmatprep.subr.bf16.mxu0 %v1488
    %2037 = vmatpush1.bf16.msra.mxu0 %v1487
    %2038 = vmatprep.subr.bf16.mxu0 %v1494
    %2039 = vmatpush1.bf16.msra.mxu0 %v1493
    %2040 = vmatprep.subr.bf16.mxu0 %v1500
    %2041 = vmatpush1.bf16.msra.mxu0 %v1499
    %2042 = vmatprep.subr.bf16.mxu0 %v1506
    %2043 = vmatpush1.bf16.msra.mxu0 %v1505
    %2044 = vmatprep.subr.bf16.mxu0 %v1512
    %2045 = vmatpush1.bf16.msra.mxu0 %v1511
    %2046 = vmatprep.subr.bf16.mxu0 %v1518
    %2047 = vmatpush1.bf16.msra.mxu0 %v1517
    %2048 = vmatprep.subr.bf16.mxu0 %v1524
    %2049 = vmatpush1.bf16.msra.mxu0 %v1523
    %2050 = vmatprep.subr.bf16.mxu0 %v1530
    %2051 = vmatpush1.bf16.msra.mxu0 %v1529
    %2052 = vmatprep.subr.bf16.mxu0 %v1536
    %2053 = vmatpush1.bf16.msra.mxu0 %v1535
    %2054 = vmatprep.subr.bf16.mxu0 %v1542
    %2055 = vmatpush1.bf16.msra.mxu0 %v1541
    %2056 = vmatprep.subr.bf16.mxu0 %v1548
    %2057 = vmatpush1.bf16.msra.mxu0 %v1547
    %2058 = vmatprep.subr.bf16.mxu0 %v1554
    %2059 = vmatpush1.bf16.msra.mxu0 %v1553
    %2060 = vmatprep.subr.bf16.mxu0 %v1560
    %2061 = vmatpush1.bf16.msra.mxu0 %v1559
    %2062 = vmatprep.subr.bf16.mxu0 %v1566
    %2063 = vmatpush1.bf16.msra.mxu0 %v1565
    %2064 = vmatprep.subr.bf16.mxu0 %v1572
    %2065 = vmatpush1.bf16.msra.mxu0 %v1571
    %2066 = vmatprep.mubr.bf16.mxu0 %v180
    %2067 = vmatmul.mubr.bf16.gmra.mrb[0].mxu0 %v179
    %v2068 = vpop.f32.mrb[0].mxu0
    %v2069 = vadd.f32 %v1996, %v2068
    %v2070 = vpop.f32.mrb[0].mxu0
    %v2071 = vadd.f32 %v1998, %v2070
    %v2072 = vpop.f32.mrb[0].mxu0
    %v2073 = vadd.f32 %v2000, %v2072
    %v2074 = vpop.f32.mrb[0].mxu0
    %v2075 = vadd.f32 %v2002, %v2074
    %2076 = vmatprep.mubr.bf16.mxu0 %v186
    %2077 = vmatmul.mubr.bf16.gmra.mrb[0].mxu0 %v185
    %v2078 = vpop.f32.mrb[0].mxu0
    %v2079 = vadd.f32 %v2006, %v2078
    %v2080 = vpop.f32.mrb[0].mxu0
    %v2081 = vadd.f32 %v2008, %v2080
    %v2082 = vpop.f32.mrb[0].mxu0
    %v2083 = vadd.f32 %v2010, %v2082
    %v2084 = vpop.f32.mrb[0].mxu0
    %v2085 = vadd.f32 %v2012, %v2084
    %2086 = vmatprep.mubr.bf16.mxu0 %v192
    %2087 = vmatmul.mubr.bf16.gmra.mrb[0].mxu0 %v191
    %v2088 = vpop.f32.mrb[0].mxu0
    %v2089 = vadd.f32 %v2016, %v2088
    %v2090 = vpop.f32.mrb[0].mxu0
    %v2091 = vadd.f32 %v2018, %v2090
    %v2092 = vpop.f32.mrb[0].mxu0
    %v2093 = vadd.f32 %v2020, %v2092
    %v2094 = vpop.f32.mrb[0].mxu0
    %v2095 = vadd.f32 %v2022, %v2094
    %2096 = vmatprep.mubr.bf16.mxu0 %v198
    %2097 = vmatmul.mubr.bf16.gmra.mrb[0].mxu0 %v197
    %v2098 = vpop.f32.mrb[0].mxu0
    %v2099 = vadd.f32 %v2026, %v2098
    %v2100 = vpop.f32.mrb[0].mxu0
    %v2101 = vadd.f32 %v2028, %v2100
    %v2102 = vpop.f32.mrb[0].mxu0
    %v2103 = vadd.f32 %v2030, %v2102
    %v2104 = vpop.f32.mrb[0].mxu0
    %v2105 = vadd.f32 %v2032, %v2104
    %2106 = vdwg.mxu0
    %2107 = vmatprep.subr.bf16.mxu0 %v1578
    %2108 = vmatpush1.bf16.msra.mxu0 %v1577
    %2109 = vmatprep.subr.bf16.mxu0 %v1584
    %2110 = vmatpush1.bf16.msra.mxu0 %v1583
    %2111 = vmatprep.subr.bf16.mxu0 %v1590
    %2112 = vmatpush1.bf16.msra.mxu0 %v1589
    %2113 = vmatprep.subr.bf16.mxu0 %v1596
    %2114 = vmatpush1.bf16.msra.mxu0 %v1595
    %2115 = vmatprep.subr.bf16.mxu0 %v1602
    %2116 = vmatpush1.bf16.msra.mxu0 %v1601
    %2117 = vmatprep.subr.bf16.mxu0 %v1608
    %2118 = vmatpush1.bf16.msra.mxu0 %v1607
    %2119 = vmatprep.subr.bf16.mxu0 %v1614
    %2120 = vmatpush1.bf16.msra.mxu0 %v1613
    %2121 = vmatprep.subr.bf16.mxu0 %v1620
    %2122 = vmatpush1.bf16.msra.mxu0 %v1619
    %2123 = vmatprep.subr.bf16.mxu0 %v1626
    %2124 = vmatpush1.bf16.msra.mxu0 %v1625
    %2125 = vmatprep.subr.bf16.mxu0 %v1632
    %2126 = vmatpush1.bf16.msra.mxu0 %v1631
    %2127 = vmatprep.subr.bf16.mxu0 %v1638
    %2128 = vmatpush1.bf16.msra.mxu0 %v1637
    %2129 = vmatprep.subr.bf16.mxu0 %v1644
    %2130 = vmatpush1.bf16.msra.mxu0 %v1643
    %2131 = vmatprep.subr.bf16.mxu0 %v1650
    %2132 = vmatpush1.bf16.msra.mxu0 %v1649
    %2133 = vmatprep.subr.bf16.mxu0 %v1656
    %2134 = vmatpush1.bf16.msra.mxu0 %v1655
    %2135 = vmatprep.subr.bf16.mxu0 %v1662
    %2136 = vmatpush1.bf16.msra.mxu0 %v1661
    %2137 = vmatprep.subr.bf16.mxu0 %v1668
    %2138 = vmatpush1.bf16.msra.mxu0 %v1667
    %2139 = vmatprep.mubr.bf16.mxu0 %v182
    %2140 = vmatmul.mubr.bf16.gmra.mrb[0].mxu0 %v181
    %v2141 = vpop.f32.mrb[0].mxu0
    %v2142 = vadd.f32 %v2069, %v2141
    %v2143 = vpop.f32.mrb[0].mxu0
    %v2144 = vadd.f32 %v2071, %v2143
    %v2145 = vpop.f32.mrb[0].mxu0
    %v2146 = vadd.f32 %v2073, %v2145
    %v2147 = vpop.f32.mrb[0].mxu0
    %v2148 = vadd.f32 %v2075, %v2147
    %2149 = vmatprep.mubr.bf16.mxu0 %v188
    %2150 = vmatmul.mubr.bf16.gmra.mrb[0].mxu0 %v187
    %v2151 = vpop.f32.mrb[0].mxu0
    %v2152 = vadd.f32 %v2079, %v2151
    %v2153 = vpop.f32.mrb[0].mxu0
    %v2154 = vadd.f32 %v2081, %v2153
    %v2155 = vpop.f32.mrb[0].mxu0
    %v2156 = vadd.f32 %v2083, %v2155
    %v2157 = vpop.f32.mrb[0].mxu0
    %v2158 = vadd.f32 %v2085, %v2157
    %2159 = vmatprep.mubr.bf16.mxu0 %v194
    %2160 = vmatmul.mubr.bf16.gmra.mrb[0].mxu0 %v193
    %v2161 = vpop.f32.mrb[0].mxu0
    %v2162 = vadd.f32 %v2089, %v2161
    %v2163 = vpop.f32.mrb[0].mxu0
    %v2164 = vadd.f32 %v2091, %v2163
    %v2165 = vpop.f32.mrb[0].mxu0
    %v2166 = vadd.f32 %v2093, %v2165
    %v2167 = vpop.f32.mrb[0].mxu0
    %v2168 = vadd.f32 %v2095, %v2167
    %2169 = vmatprep.mubr.bf16.mxu0 %v200
    %2170 = vmatmul.mubr.bf16.gmra.mrb[0].mxu0 %v199
    %v2171 = vpop.f32.mrb[0].mxu0
    %v2172 = vadd.f32 %v2099, %v2171
    %v2173 = vpop.f32.mrb[0].mxu0
    %v2174 = vadd.f32 %v2101, %v2173
    %v2175 = vpop.f32.mrb[0].mxu0
    %v2176 = vadd.f32 %v2103, %v2175
    %v2177 = vpop.f32.mrb[0].mxu0
    %v2178 = vadd.f32 %v2105, %v2177
    %2179 = vdwg.mxu0
    %2180 = vmatprep.subr.bf16.mxu0 %v1388
    %2181 = vmatpush1.bf16.msra.mxu0 %v1387
    %2182 = vmatprep.subr.bf16.mxu0 %v1394
    %2183 = vmatpush1.bf16.msra.mxu0 %v1393
    %2184 = vmatprep.subr.bf16.mxu0 %v1400
    %2185 = vmatpush1.bf16.msra.mxu0 %v1399
    %2186 = vmatprep.subr.bf16.mxu0 %v1406
    %2187 = vmatpush1.bf16.msra.mxu0 %v1405
    %2188 = vmatprep.subr.bf16.mxu0 %v1412
    %2189 = vmatpush1.bf16.msra.mxu0 %v1411
    %2190 = vmatprep.subr.bf16.mxu0 %v1418
    %2191 = vmatpush1.bf16.msra.mxu0 %v1417
    %2192 = vmatprep.subr.bf16.mxu0 %v1424
    %2193 = vmatpush1.bf16.msra.mxu0 %v1423
    %2194 = vmatprep.subr.bf16.mxu0 %v1430
    %2195 = vmatpush1.bf16.msra.mxu0 %v1429
    %2196 = vmatprep.subr.bf16.mxu0 %v1436
    %2197 = vmatpush1.bf16.msra.mxu0 %v1435
    %2198 = vmatprep.subr.bf16.mxu0 %v1442
    %2199 = vmatpush1.bf16.msra.mxu0 %v1441
    %2200 = vmatprep.subr.bf16.mxu0 %v1448
    %2201 = vmatpush1.bf16.msra.mxu0 %v1447
    %2202 = vmatprep.subr.bf16.mxu0 %v1454
    %2203 = vmatpush1.bf16.msra.mxu0 %v1453
    %2204 = vmatprep.subr.bf16.mxu0 %v1460
    %2205 = vmatpush1.bf16.msra.mxu0 %v1459
    %2206 = vmatprep.subr.bf16.mxu0 %v1466
    %2207 = vmatpush1.bf16.msra.mxu0 %v1465
    %2208 = vmatprep.subr.bf16.mxu0 %v1472
    %2209 = vmatpush1.bf16.msra.mxu0 %v1471
    %2210 = vmatprep.subr.bf16.mxu0 %v1478
    %2211 = vmatpush1.bf16.msra.mxu0 %v1477
    %2212 = vmatprep.mubr.bf16.mxu0 %v178
    %2213 = vmatmul.mubr.bf16.gmra.mrb[0].mxu0 %v177
    %v2214 = vpop.f32.mrb[0].mxu0
    %v2215 = vadd.f32 %v502, %v2214
    %v2216 = vpop.f32.mrb[0].mxu0
    %v2217 = vadd.f32 %v506, %v2216
    %v2218 = vpop.f32.mrb[0].mxu0
    %v2219 = vadd.f32 %v502, %v2218
    %v2220 = vpop.f32.mrb[0].mxu0
    %v2221 = vadd.f32 %v506, %v2220
    %2222 = vmatprep.mubr.bf16.mxu0 %v184
    %2223 = vmatmul.mubr.bf16.gmra.mrb[0].mxu0 %v183
    %v2224 = vpop.f32.mrb[0].mxu0
    %v2225 = vadd.f32 %v502, %v2224
    %v2226 = vpop.f32.mrb[0].mxu0
    %v2227 = vadd.f32 %v506, %v2226
    %v2228 = vpop.f32.mrb[0].mxu0
    %v2229 = vadd.f32 %v502, %v2228
    %v2230 = vpop.f32.mrb[0].mxu0
    %v2231 = vadd.f32 %v506, %v2230
    %2232 = vmatprep.mubr.bf16.mxu0 %v190
    %2233 = vmatmul.mubr.bf16.gmra.mrb[0].mxu0 %v189
    %v2234 = vpop.f32.mrb[0].mxu0
    %v2235 = vadd.f32 %v502, %v2234
    %v2236 = vpop.f32.mrb[0].mxu0
    %v2237 = vadd.f32 %v506, %v2236
    %v2238 = vpop.f32.mrb[0].mxu0
    %v2239 = vadd.f32 %v502, %v2238
    %v2240 = vpop.f32.mrb[0].mxu0
    %v2241 = vadd.f32 %v506, %v2240
    %2242 = vmatprep.mubr.bf16.mxu0 %v196
    %2243 = vmatmul.mubr.bf16.gmra.mrb[0].mxu0 %v195
    %v2244 = vpop.f32.mrb[0].mxu0
    %v2245 = vadd.f32 %v502, %v2244
    %v2246 = vpop.f32.mrb[0].mxu0
    %v2247 = vadd.f32 %v506, %v2246
    %v2248 = vpop.f32.mrb[0].mxu0
    %v2249 = vadd.f32 %v502, %v2248
    %v2250 = vpop.f32.mrb[0].mxu0
    %v2251 = vadd.f32 %v506, %v2250
    %2252 = vdwg.mxu0
    %2253 = vmatprep.subr.bf16.mxu0 %v1484
    %2254 = vmatpush1.bf16.msra.mxu0 %v1483
    %2255 = vmatprep.subr.bf16.mxu0 %v1490
    %2256 = vmatpush1.bf16.msra.mxu0 %v1489
    %2257 = vmatprep.subr.bf16.mxu0 %v1496
    %2258 = vmatpush1.bf16.msra.mxu0 %v1495
    %2259 = vmatprep.subr.bf16.mxu0 %v1502
    %2260 = vmatpush1.bf16.msra.mxu0 %v1501
    %2261 = vmatprep.subr.bf16.mxu0 %v1508
    %2262 = vmatpush1.bf16.msra.mxu0 %v1507
    %2263 = vmatprep.subr.bf16.mxu0 %v1514
    %2264 = vmatpush1.bf16.msra.mxu0 %v1513
    %2265 = vmatprep.subr.bf16.mxu0 %v1520
    %2266 = vmatpush1.bf16.msra.mxu0 %v1519
    %2267 = vmatprep.subr.bf16.mxu0 %v1526
    %2268 = vmatpush1.bf16.msra.mxu0 %v1525
    %2269 = vmatprep.subr.bf16.mxu0 %v1532
    %2270 = vmatpush1.bf16.msra.mxu0 %v1531
    %2271 = vmatprep.subr.bf16.mxu0 %v1538
    %2272 = vmatpush1.bf16.msra.mxu0 %v1537
    %2273 = vmatprep.subr.bf16.mxu0 %v1544
    %2274 = vmatpush1.bf16.msra.mxu0 %v1543
    %2275 = vmatprep.subr.bf16.mxu0 %v1550
    %2276 = vmatpush1.bf16.msra.mxu0 %v1549
    %2277 = vmatprep.subr.bf16.mxu0 %v1556
    %2278 = vmatpush1.bf16.msra.mxu0 %v1555
    %2279 = vmatprep.subr.bf16.mxu0 %v1562
    %2280 = vmatpush1.bf16.msra.mxu0 %v1561
    %2281 = vmatprep.subr.bf16.mxu0 %v1568
    %2282 = vmatpush1.bf16.msra.mxu0 %v1567
    %2283 = vmatprep.subr.bf16.mxu0 %v1574
    %2284 = vmatpush1.bf16.msra.mxu0 %v1573
    %2285 = vmatprep.mubr.bf16.mxu0 %v180
    %2286 = vmatmul.mubr.bf16.gmra.mrb[0].mxu0 %v179
    %v2287 = vpop.f32.mrb[0].mxu0
    %v2288 = vadd.f32 %v2215, %v2287
    %v2289 = vpop.f32.mrb[0].mxu0
    %v2290 = vadd.f32 %v2217, %v2289
    %v2291 = vpop.f32.mrb[0].mxu0
    %v2292 = vadd.f32 %v2219, %v2291
    %v2293 = vpop.f32.mrb[0].mxu0
    %v2294 = vadd.f32 %v2221, %v2293
    %2295 = vmatprep.mubr.bf16.mxu0 %v186
    %2296 = vmatmul.mubr.bf16.gmra.mrb[0].mxu0 %v185
    %v2297 = vpop.f32.mrb[0].mxu0
    %v2298 = vadd.f32 %v2225, %v2297
    %v2299 = vpop.f32.mrb[0].mxu0
    %v2300 = vadd.f32 %v2227, %v2299
    %v2301 = vpop.f32.mrb[0].mxu0
    %v2302 = vadd.f32 %v2229, %v2301
    %v2303 = vpop.f32.mrb[0].mxu0
    %v2304 = vadd.f32 %v2231, %v2303
    %2305 = vmatprep.mubr.bf16.mxu0 %v192
    %2306 = vmatmul.mubr.bf16.gmra.mrb[0].mxu0 %v191
    %v2307 = vpop.f32.mrb[0].mxu0
    %v2308 = vadd.f32 %v2235, %v2307
    %v2309 = vpop.f32.mrb[0].mxu0
    %v2310 = vadd.f32 %v2237, %v2309
    %v2311 = vpop.f32.mrb[0].mxu0
    %v2312 = vadd.f32 %v2239, %v2311
    %v2313 = vpop.f32.mrb[0].mxu0
    %v2314 = vadd.f32 %v2241, %v2313
    %2315 = vmatprep.mubr.bf16.mxu0 %v198
    %2316 = vmatmul.mubr.bf16.gmra.mrb[0].mxu0 %v197
    %v2317 = vpop.f32.mrb[0].mxu0
    %v2318 = vadd.f32 %v2245, %v2317
    %v2319 = vpop.f32.mrb[0].mxu0
    %v2320 = vadd.f32 %v2247, %v2319
    %v2321 = vpop.f32.mrb[0].mxu0
    %v2322 = vadd.f32 %v2249, %v2321
    %v2323 = vpop.f32.mrb[0].mxu0
    %v2324 = vadd.f32 %v2251, %v2323
    %2325 = vdwg.mxu0
    %2326 = vmatprep.subr.bf16.mxu0 %v1580
    %2327 = vmatpush1.bf16.msra.mxu0 %v1579
    %2328 = vmatprep.subr.bf16.mxu0 %v1586
    %2329 = vmatpush1.bf16.msra.mxu0 %v1585
    %2330 = vmatprep.subr.bf16.mxu0 %v1592
    %2331 = vmatpush1.bf16.msra.mxu0 %v1591
    %2332 = vmatprep.subr.bf16.mxu0 %v1598
    %2333 = vmatpush1.bf16.msra.mxu0 %v1597
    %2334 = vmatprep.subr.bf16.mxu0 %v1604
    %2335 = vmatpush1.bf16.msra.mxu0 %v1603
    %2336 = vmatprep.subr.bf16.mxu0 %v1610
    %2337 = vmatpush1.bf16.msra.mxu0 %v1609
    %2338 = vmatprep.subr.bf16.mxu0 %v1616
    %2339 = vmatpush1.bf16.msra.mxu0 %v1615
    %2340 = vmatprep.subr.bf16.mxu0 %v1622
    %2341 = vmatpush1.bf16.msra.mxu0 %v1621
    %2342 = vmatprep.subr.bf16.mxu0 %v1628
    %2343 = vmatpush1.bf16.msra.mxu0 %v1627
    %2344 = vmatprep.subr.bf16.mxu0 %v1634
    %2345 = vmatpush1.bf16.msra.mxu0 %v1633
    %2346 = vmatprep.subr.bf16.mxu0 %v1640
    %2347 = vmatpush1.bf16.msra.mxu0 %v1639
    %2348 = vmatprep.subr.bf16.mxu0 %v1646
    %2349 = vmatpush1.bf16.msra.mxu0 %v1645
    %2350 = vmatprep.subr.bf16.mxu0 %v1652
    %2351 = vmatpush1.bf16.msra.mxu0 %v1651
    %2352 = vmatprep.subr.bf16.mxu0 %v1658
    %2353 = vmatpush1.bf16.msra.mxu0 %v1657
    %2354 = vmatprep.subr.bf16.mxu0 %v1664
    %2355 = vmatpush1.bf16.msra.mxu0 %v1663
    %2356 = vmatprep.subr.bf16.mxu0 %v1670
    %2357 = vmatpush1.bf16.msra.mxu0 %v1669
    %2358 = vmatprep.mubr.bf16.mxu0 %v182
    %2359 = vmatmul.mubr.bf16.gmra.mrb[0].mxu0 %v181
    %v2360 = vpop.f32.mrb[0].mxu0
    %v2361 = vadd.f32 %v2288, %v2360
    %v2362 = vpop.f32.mrb[0].mxu0
    %v2363 = vadd.f32 %v2290, %v2362
    %v2364 = vpop.f32.mrb[0].mxu0
    %v2365 = vadd.f32 %v2292, %v2364
    %v2366 = vpop.f32.mrb[0].mxu0
    %v2367 = vadd.f32 %v2294, %v2366
    %2368 = vmatprep.mubr.bf16.mxu0 %v188
    %2369 = vmatmul.mubr.bf16.gmra.mrb[0].mxu0 %v187
    %v2370 = vpop.f32.mrb[0].mxu0
    %v2371 = vadd.f32 %v2298, %v2370
    %v2372 = vpop.f32.mrb[0].mxu0
    %v2373 = vadd.f32 %v2300, %v2372
    %v2374 = vpop.f32.mrb[0].mxu0
    %v2375 = vadd.f32 %v2302, %v2374
    %v2376 = vpop.f32.mrb[0].mxu0
    %v2377 = vadd.f32 %v2304, %v2376
    %2378 = vmatprep.mubr.bf16.mxu0 %v194
    %2379 = vmatmul.mubr.bf16.gmra.mrb[0].mxu0 %v193
    %v2380 = vpop.f32.mrb[0].mxu0
    %v2381 = vadd.f32 %v2308, %v2380
    %v2382 = vpop.f32.mrb[0].mxu0
    %v2383 = vadd.f32 %v2310, %v2382
    %v2384 = vpop.f32.mrb[0].mxu0
    %v2385 = vadd.f32 %v2312, %v2384
    %v2386 = vpop.f32.mrb[0].mxu0
    %v2387 = vadd.f32 %v2314, %v2386
    %2388 = vmatprep.mubr.bf16.mxu0 %v200
    %2389 = vmatmul.mubr.bf16.gmra.mrb[0].mxu0 %v199
    %v2390 = vpop.f32.mrb[0].mxu0
    %v2391 = vadd.f32 %v2318, %v2390
    %v2392 = vpop.f32.mrb[0].mxu0
    %v2393 = vadd.f32 %v2320, %v2392
    %v2394 = vpop.f32.mrb[0].mxu0
    %v2395 = vadd.f32 %v2322, %v2394
    %v2396 = vpop.f32.mrb[0].mxu0
    %v2397 = vadd.f32 %v2324, %v2396
    %2398 = vdwg.mxu0
    %2399 = vmatprep.subr.bf16.mxu0 %v1390
    %2400 = vmatpush1.bf16.msra.mxu0 %v1389
    %2401 = vmatprep.subr.bf16.mxu0 %v1396
    %2402 = vmatpush1.bf16.msra.mxu0 %v1395
    %2403 = vmatprep.subr.bf16.mxu0 %v1402
    %2404 = vmatpush1.bf16.msra.mxu0 %v1401
    %2405 = vmatprep.subr.bf16.mxu0 %v1408
    %2406 = vmatpush1.bf16.msra.mxu0 %v1407
    %2407 = vmatprep.subr.bf16.mxu0 %v1414
    %2408 = vmatpush1.bf16.msra.mxu0 %v1413
    %2409 = vmatprep.subr.bf16.mxu0 %v1420
    %2410 = vmatpush1.bf16.msra.mxu0 %v1419
    %2411 = vmatprep.subr.bf16.mxu0 %v1426
    %2412 = vmatpush1.bf16.msra.mxu0 %v1425
    %2413 = vmatprep.subr.bf16.mxu0 %v1432
    %2414 = vmatpush1.bf16.msra.mxu0 %v1431
    %2415 = vmatprep.subr.bf16.mxu0 %v1438
    %2416 = vmatpush1.bf16.msra.mxu0 %v1437
    %2417 = vmatprep.subr.bf16.mxu0 %v1444
    %2418 = vmatpush1.bf16.msra.mxu0 %v1443
    %2419 = vmatprep.subr.bf16.mxu0 %v1450
    %2420 = vmatpush1.bf16.msra.mxu0 %v1449
    %2421 = vmatprep.subr.bf16.mxu0 %v1456
    %2422 = vmatpush1.bf16.msra.mxu0 %v1455
    %2423 = vmatprep.subr.bf16.mxu0 %v1462
    %2424 = vmatpush1.bf16.msra.mxu0 %v1461
    %2425 = vmatprep.subr.bf16.mxu0 %v1468
    %2426 = vmatpush1.bf16.msra.mxu0 %v1467
    %2427 = vmatprep.subr.bf16.mxu0 %v1474
    %2428 = vmatpush1.bf16.msra.mxu0 %v1473
    %2429 = vmatprep.subr.bf16.mxu0 %v1480
    %2430 = vmatpush1.bf16.msra.mxu0 %v1479
    %2431 = vmatprep.mubr.bf16.mxu0 %v178
    %2432 = vmatmul.mubr.bf16.gmra.mrb[0].mxu0 %v177
    %v2433 = vpop.f32.mrb[0].mxu0
    %v2434 = vadd.f32 %v510, %v2433
    %v2435 = vpop.f32.mrb[0].mxu0
    %v2436 = vadd.f32 %v514, %v2435
    %v2437 = vpop.f32.mrb[0].mxu0
    %v2438 = vadd.f32 %v510, %v2437
    %v2439 = vpop.f32.mrb[0].mxu0
    %v2440 = vadd.f32 %v514, %v2439
    %2441 = vmatprep.mubr.bf16.mxu0 %v184
    %2442 = vmatmul.mubr.bf16.gmra.mrb[0].mxu0 %v183
    %v2443 = vpop.f32.mrb[0].mxu0
    %v2444 = vadd.f32 %v510, %v2443
    %v2445 = vpop.f32.mrb[0].mxu0
    %v2446 = vadd.f32 %v514, %v2445
    %v2447 = vpop.f32.mrb[0].mxu0
    %v2448 = vadd.f32 %v510, %v2447
    %v2449 = vpop.f32.mrb[0].mxu0
    %v2450 = vadd.f32 %v514, %v2449
    %2451 = vmatprep.mubr.bf16.mxu0 %v190
    %2452 = vmatmul.mubr.bf16.gmra.mrb[0].mxu0 %v189
    %v2453 = vpop.f32.mrb[0].mxu0
    %v2454 = vadd.f32 %v510, %v2453
    %v2455 = vpop.f32.mrb[0].mxu0
    %v2456 = vadd.f32 %v514, %v2455
    %v2457 = vpop.f32.mrb[0].mxu0
    %v2458 = vadd.f32 %v510, %v2457
    %v2459 = vpop.f32.mrb[0].mxu0
    %v2460 = vadd.f32 %v514, %v2459
    %2461 = vmatprep.mubr.bf16.mxu0 %v196
    %2462 = vmatmul.mubr.bf16.gmra.mrb[0].mxu0 %v195
    %v2463 = vpop.f32.mrb[0].mxu0
    %v2464 = vadd.f32 %v510, %v2463
    %v2465 = vpop.f32.mrb[0].mxu0
    %v2466 = vadd.f32 %v514, %v2465
    %v2467 = vpop.f32.mrb[0].mxu0
    %v2468 = vadd.f32 %v510, %v2467
    %v2469 = vpop.f32.mrb[0].mxu0
    %v2470 = vadd.f32 %v514, %v2469
    %2471 = vdwg.mxu0
    %2472 = vmatprep.subr.bf16.mxu0 %v1486
    %2473 = vmatpush1.bf16.msra.mxu0 %v1485
    %2474 = vmatprep.subr.bf16.mxu0 %v1492
    %2475 = vmatpush1.bf16.msra.mxu0 %v1491
    %2476 = vmatprep.subr.bf16.mxu0 %v1498
    %2477 = vmatpush1.bf16.msra.mxu0 %v1497
    %2478 = vmatprep.subr.bf16.mxu0 %v1504
    %2479 = vmatpush1.bf16.msra.mxu0 %v1503
    %2480 = vmatprep.subr.bf16.mxu0 %v1510
    %2481 = vmatpush1.bf16.msra.mxu0 %v1509
    %2482 = vmatprep.subr.bf16.mxu0 %v1516
    %2483 = vmatpush1.bf16.msra.mxu0 %v1515
    %2484 = vmatprep.subr.bf16.mxu0 %v1522
    %2485 = vmatpush1.bf16.msra.mxu0 %v1521
    %2486 = vmatprep.subr.bf16.mxu0 %v1528
    %2487 = vmatpush1.bf16.msra.mxu0 %v1527
    %2488 = vmatprep.subr.bf16.mxu0 %v1534
    %2489 = vmatpush1.bf16.msra.mxu0 %v1533
    %2490 = vmatprep.subr.bf16.mxu0 %v1540
    %2491 = vmatpush1.bf16.msra.mxu0 %v1539
    %2492 = vmatprep.subr.bf16.mxu0 %v1546
    %2493 = vmatpush1.bf16.msra.mxu0 %v1545
    %2494 = vmatprep.subr.bf16.mxu0 %v1552
    %2495 = vmatpush1.bf16.msra.mxu0 %v1551
    %2496 = vmatprep.subr.bf16.mxu0 %v1558
    %2497 = vmatpush1.bf16.msra.mxu0 %v1557
    %2498 = vmatprep.subr.bf16.mxu0 %v1564
    %2499 = vmatpush1.bf16.msra.mxu0 %v1563
    %2500 = vmatprep.subr.bf16.mxu0 %v1570
    %2501 = vmatpush1.bf16.msra.mxu0 %v1569
    %2502 = vmatprep.subr.bf16.mxu0 %v1576
    %2503 = vmatpush1.bf16.msra.mxu0 %v1575
    %2504 = vmatprep.mubr.bf16.mxu0 %v180
    %2505 = vmatmul.mubr.bf16.gmra.mrb[0].mxu0 %v179
    %v2506 = vpop.f32.mrb[0].mxu0
    %v2507 = vadd.f32 %v2434, %v2506
    %v2508 = vpop.f32.mrb[0].mxu0
    %v2509 = vadd.f32 %v2436, %v2508
    %v2510 = vpop.f32.mrb[0].mxu0
    %v2511 = vadd.f32 %v2438, %v2510
    %v2512 = vpop.f32.mrb[0].mxu0
    %v2513 = vadd.f32 %v2440, %v2512
    %2514 = vmatprep.mubr.bf16.mxu0 %v186
    %2515 = vmatmul.mubr.bf16.gmra.mrb[0].mxu0 %v185
    %v2516 = vpop.f32.mrb[0].mxu0
    %v2517 = vadd.f32 %v2444, %v2516
    %v2518 = vpop.f32.mrb[0].mxu0
    %v2519 = vadd.f32 %v2446, %v2518
    %v2520 = vpop.f32.mrb[0].mxu0
    %v2521 = vadd.f32 %v2448, %v2520
    %v2522 = vpop.f32.mrb[0].mxu0
    %v2523 = vadd.f32 %v2450, %v2522
    %2524 = vmatprep.mubr.bf16.mxu0 %v192
    %2525 = vmatmul.mubr.bf16.gmra.mrb[0].mxu0 %v191
    %v2526 = vpop.f32.mrb[0].mxu0
    %v2527 = vadd.f32 %v2454, %v2526
    %v2528 = vpop.f32.mrb[0].mxu0
    %v2529 = vadd.f32 %v2456, %v2528
    %v2530 = vpop.f32.mrb[0].mxu0
    %v2531 = vadd.f32 %v2458, %v2530
    %v2532 = vpop.f32.mrb[0].mxu0
    %v2533 = vadd.f32 %v2460, %v2532
    %2534 = vmatprep.mubr.bf16.mxu0 %v198
    %2535 = vmatmul.mubr.bf16.gmra.mrb[0].mxu0 %v197
    %v2536 = vpop.f32.mrb[0].mxu0
    %v2537 = vadd.f32 %v2464, %v2536
    %v2538 = vpop.f32.mrb[0].mxu0
    %v2539 = vadd.f32 %v2466, %v2538
    %v2540 = vpop.f32.mrb[0].mxu0
    %v2541 = vadd.f32 %v2468, %v2540
    %v2542 = vpop.f32.mrb[0].mxu0
    %v2543 = vadd.f32 %v2470, %v2542
    %2544 = vdwg.mxu0
    %2545 = vmatprep.subr.bf16.mxu0 %v1582
    %2546 = vmatpush1.bf16.msra.mxu0 %v1581
    %2547 = vmatprep.subr.bf16.mxu0 %v1588
    %2548 = vmatpush1.bf16.msra.mxu0 %v1587
    %2549 = vmatprep.subr.bf16.mxu0 %v1594
    %2550 = vmatpush1.bf16.msra.mxu0 %v1593
    %2551 = vmatprep.subr.bf16.mxu0 %v1600
    %2552 = vmatpush1.bf16.msra.mxu0 %v1599
    %2553 = vmatprep.subr.bf16.mxu0 %v1606
    %2554 = vmatpush1.bf16.msra.mxu0 %v1605
    %2555 = vmatprep.subr.bf16.mxu0 %v1612
    %2556 = vmatpush1.bf16.msra.mxu0 %v1611
    %2557 = vmatprep.subr.bf16.mxu0 %v1618
    %2558 = vmatpush1.bf16.msra.mxu0 %v1617
    %2559 = vmatprep.subr.bf16.mxu0 %v1624
    %2560 = vmatpush1.bf16.msra.mxu0 %v1623
    %2561 = vmatprep.subr.bf16.mxu0 %v1630
    %2562 = vmatpush1.bf16.msra.mxu0 %v1629
    %2563 = vmatprep.subr.bf16.mxu0 %v1636
    %2564 = vmatpush1.bf16.msra.mxu0 %v1635
    %2565 = vmatprep.subr.bf16.mxu0 %v1642
    %2566 = vmatpush1.bf16.msra.mxu0 %v1641
    %2567 = vmatprep.subr.bf16.mxu0 %v1648
    %2568 = vmatpush1.bf16.msra.mxu0 %v1647
    %2569 = vmatprep.subr.bf16.mxu0 %v1654
    %2570 = vmatpush1.bf16.msra.mxu0 %v1653
    %2571 = vmatprep.subr.bf16.mxu0 %v1660
    %2572 = vmatpush1.bf16.msra.mxu0 %v1659
    %2573 = vmatprep.subr.bf16.mxu0 %v1666
    %2574 = vmatpush1.bf16.msra.mxu0 %v1665
    %2575 = vmatprep.subr.bf16.mxu0 %v1672
    %2576 = vmatpush1.bf16.msra.mxu0 %v1671
    %2577 = vmatprep.mubr.bf16.mxu0 %v182
    %2578 = vmatmul.mubr.bf16.gmra.mrb[0].mxu0 %v181
    %v2579 = vpop.f32.mrb[0].mxu0
    %v2580 = vadd.f32 %v2507, %v2579
    %v2581 = vpop.f32.mrb[0].mxu0
    %v2582 = vadd.f32 %v2509, %v2581
    %v2583 = vpop.f32.mrb[0].mxu0
    %v2584 = vadd.f32 %v2511, %v2583
    %v2585 = vpop.f32.mrb[0].mxu0
    %v2586 = vadd.f32 %v2513, %v2585
    %2587 = vmatprep.mubr.bf16.mxu0 %v188
    %2588 = vmatmul.mubr.bf16.gmra.mrb[0].mxu0 %v187
    %v2589 = vpop.f32.mrb[0].mxu0
    %v2590 = vadd.f32 %v2517, %v2589
    %v2591 = vpop.f32.mrb[0].mxu0
    %v2592 = vadd.f32 %v2519, %v2591
    %v2593 = vpop.f32.mrb[0].mxu0
    %v2594 = vadd.f32 %v2521, %v2593
    %v2595 = vpop.f32.mrb[0].mxu0
    %v2596 = vadd.f32 %v2523, %v2595
    %2597 = vmatprep.mubr.bf16.mxu0 %v194
    %2598 = vmatmul.mubr.bf16.gmra.mrb[0].mxu0 %v193
    %v2599 = vpop.f32.mrb[0].mxu0
    %v2600 = vadd.f32 %v2527, %v2599
    %v2601 = vpop.f32.mrb[0].mxu0
    %v2602 = vadd.f32 %v2529, %v2601
    %v2603 = vpop.f32.mrb[0].mxu0
    %v2604 = vadd.f32 %v2531, %v2603
    %v2605 = vpop.f32.mrb[0].mxu0
    %v2606 = vadd.f32 %v2533, %v2605
    %2607 = vmatprep.mubr.bf16.mxu0 %v200
    %2608 = vmatmul.mubr.bf16.gmra.mrb[0].mxu0 %v199
    %v2609 = vpop.f32.mrb[0].mxu0
    %v2610 = vadd.f32 %v2537, %v2609
    %v2611 = vpop.f32.mrb[0].mxu0
    %v2612 = vadd.f32 %v2539, %v2611
    %v2613 = vpop.f32.mrb[0].mxu0
    %v2614 = vadd.f32 %v2541, %v2613
    %v2615 = vpop.f32.mrb[0].mxu0
    %v2616 = vadd.f32 %v2543, %v2615
    %2617 = vdwg.mxu0
    %2618 = vst [vmem:[#allocation4] sm:$0xff] %v2142
    %2619 = vst [vmem:[#allocation4 + $0x8] sm:$0xff] %v2144
    %2620 = vst [vmem:[#allocation4 + $0x10] sm:$0xff] %v2361
    %2621 = vst [vmem:[#allocation4 + $0x18] sm:$0xff] %v2363
    %2622 = vst [vmem:[#allocation4 + $0x20] sm:$0xff] %v2580
    %2623 = vst [vmem:[#allocation4 + $0x28] sm:$0xff] %v2582
    %2624 = vst [vmem:[#allocation4 + $0x30] sm:$0xff] %v2146
    %2625 = vst [vmem:[#allocation4 + $0x38] sm:$0xff] %v2148
    %2626 = vst [vmem:[#allocation4 + $0x40] sm:$0xff] %v2365
    %2627 = vst [vmem:[#allocation4 + $0x48] sm:$0xff] %v2367
    %2628 = vst [vmem:[#allocation4 + $0x50] sm:$0xff] %v2584
    %2629 = vst [vmem:[#allocation4 + $0x58] sm:$0xff] %v2586
    %2630 = vst [vmem:[#allocation4 + $0x60] sm:$0xff] %v2152
    %2631 = vst [vmem:[#allocation4 + $0x68] sm:$0xff] %v2154
    %2632 = vst [vmem:[#allocation4 + $0x70] sm:$0xff] %v2371
    %2633 = vst [vmem:[#allocation4 + $0x78] sm:$0xff] %v2373
    %2634 = vst [vmem:[#allocation4 + $0x80] sm:$0xff] %v2590
    %2635 = vst [vmem:[#allocation4 + $0x88] sm:$0xff] %v2592
    %2636 = vst [vmem:[#allocation4 + $0x90] sm:$0xff] %v2156
    %2637 = vst [vmem:[#allocation4 + $0x98] sm:$0xff] %v2158
    %2638 = vst [vmem:[#allocation4 + $0xa0] sm:$0xff] %v2375
    %2639 = vst [vmem:[#allocation4 + $0xa8] sm:$0xff] %v2377
    %2640 = vst [vmem:[#allocation4 + $0xb0] sm:$0xff] %v2594
    %2641 = vst [vmem:[#allocation4 + $0xb8] sm:$0xff] %v2596
    %2642 = vst [vmem:[#allocation4 + $0xc0] sm:$0xff] %v2162
    %2643 = vst [vmem:[#allocation4 + $0xc8] sm:$0xff] %v2164
    %2644 = vst [vmem:[#allocation4 + $0xd0] sm:$0xff] %v2381
    %2645 = vst [vmem:[#allocation4 + $0xd8] sm:$0xff] %v2383
    %2646 = vst [vmem:[#allocation4 + $0xe0] sm:$0xff] %v2600
    %2647 = vst [vmem:[#allocation4 + $0xe8] sm:$0xff] %v2602
    %2648 = vst [vmem:[#allocation4 + $0xf0] sm:$0xff] %v2166
    %2649 = vst [vmem:[#allocation4 + $0xf8] sm:$0xff] %v2168
    %2650 = vst [vmem:[#allocation4 + $0x100] sm:$0xff] %v2385
    %2651 = vst [vmem:[#allocation4 + $0x108] sm:$0xff] %v2387
    %2652 = vst [vmem:[#allocation4 + $0x110] sm:$0xff] %v2604
    %2653 = vst [vmem:[#allocation4 + $0x118] sm:$0xff] %v2606
    %2654 = vst [vmem:[#allocation4 + $0x120] sm:$0xff] %v2172
    %2655 = vst [vmem:[#allocation4 + $0x128] sm:$0xff] %v2174
    %2656 = vst [vmem:[#allocation4 + $0x130] sm:$0xff] %v2391
    %2657 = vst [vmem:[#allocation4 + $0x138] sm:$0xff] %v2393
    %2658 = vst [vmem:[#allocation4 + $0x140] sm:$0xff] %v2610
    %2659 = vst [vmem:[#allocation4 + $0x148] sm:$0xff] %v2612
    %2660 = vst [vmem:[#allocation4 + $0x150] sm:$0xff] %v2176
    %2661 = vst [vmem:[#allocation4 + $0x158] sm:$0xff] %v2178
    %2662 = vst [vmem:[#allocation4 + $0x160] sm:$0xff] %v2395
    %2663 = vst [vmem:[#allocation4 + $0x168] sm:$0xff] %v2397
    %2664 = vst [vmem:[#allocation4 + $0x170] sm:$0xff] %v2614
    %2665 = vst [vmem:[#allocation4 + $0x178] sm:$0xff] %v2616
    %v2666 = vld [vmem:[%s109] sm:$0xff]
    %v2667 = vld [vmem:[%s109 + $0x8] sm:$0xff]
    %v2668 = vld [vmem:[%s109 + $0x10] sm:$0xff]
    %v2669 = vld [vmem:[%s109 + $0x18] sm:$0xff]
    %v2670 = vld [vmem:[%s109 + $0x20] sm:$0xff]
    %v2671 = vld [vmem:[%s109 + $0x28] sm:$0xff]
    %v2672 = vld [vmem:[%s109 + $0x30] sm:$0xff]
    %v2673 = vld [vmem:[%s109 + $0x38] sm:$0xff]
    %v2674 = vld [vmem:[%s109 + $0x40] sm:$0xff]
    %v2675 = vld [vmem:[%s109 + $0x48] sm:$0xff]
    %v2676 = vld [vmem:[%s109 + $0x50] sm:$0xff]
    %v2677 = vld [vmem:[%s109 + $0x58] sm:$0xff]
    %v2678 = vld [vmem:[%s109 + $0x60] sm:$0xff]
    %v2679 = vld [vmem:[%s109 + $0x68] sm:$0xff]
    %v2680 = vld [vmem:[%s109 + $0x70] sm:$0xff]
    %v2681 = vld [vmem:[%s109 + $0x78] sm:$0xff]
    %v2682 = vld [vmem:[%s109 + $0x80] sm:$0xff]
    %v2683 = vld [vmem:[%s109 + $0x88] sm:$0xff]
    %v2684 = vld [vmem:[%s109 + $0x90] sm:$0xff]
    %v2685 = vld [vmem:[%s109 + $0x98] sm:$0xff]
    %v2686 = vld [vmem:[%s109 + $0xa0] sm:$0xff]
    %v2687 = vld [vmem:[%s109 + $0xa8] sm:$0xff]
    %v2688 = vld [vmem:[%s109 + $0xb0] sm:$0xff]
    %v2689 = vld [vmem:[%s109 + $0xb8] sm:$0xff]
    %v2690 = vld [vmem:[%s109 + $0xc0] sm:$0xff]
    %v2691 = vld [vmem:[%s109 + $0xc8] sm:$0xff]
    %v2692 = vld [vmem:[%s109 + $0xd0] sm:$0xff]
    %v2693 = vld [vmem:[%s109 + $0xd8] sm:$0xff]
    %v2694 = vld [vmem:[%s109 + $0xe0] sm:$0xff]
    %v2695 = vld [vmem:[%s109 + $0xe8] sm:$0xff]
    %v2696 = vld [vmem:[%s109 + $0xf0] sm:$0xff]
    %v2697 = vld [vmem:[%s109 + $0xf8] sm:$0xff]
    %v2698 = vld [vmem:[%s109 + $0x100] sm:$0xff]
    %v2699 = vld [vmem:[%s109 + $0x108] sm:$0xff]
    %v2700 = vld [vmem:[%s109 + $0x110] sm:$0xff]
    %v2701 = vld [vmem:[%s109 + $0x118] sm:$0xff]
    %v2702 = vld [vmem:[%s109 + $0x120] sm:$0xff]
    %v2703 = vld [vmem:[%s109 + $0x128] sm:$0xff]
    %v2704 = vld [vmem:[%s109 + $0x130] sm:$0xff]
    %v2705 = vld [vmem:[%s109 + $0x138] sm:$0xff]
    %v2706 = vld [vmem:[%s109 + $0x140] sm:$0xff]
    %v2707 = vld [vmem:[%s109 + $0x148] sm:$0xff]
    %v2708 = vld [vmem:[%s109 + $0x150] sm:$0xff]
    %v2709 = vld [vmem:[%s109 + $0x158] sm:$0xff]
    %v2710 = vld [vmem:[%s109 + $0x160] sm:$0xff]
    %v2711 = vld [vmem:[%s109 + $0x168] sm:$0xff]
    %v2712 = vld [vmem:[%s109 + $0x170] sm:$0xff]
    %v2713 = vld [vmem:[%s109 + $0x178] sm:$0xff]
    %v2714 = vpack.c.bf16 %v2672, %v2666
    %v2715 = vpack.c.bf16 %v2673, %v2667
    %v2716 = vpack.c.bf16 %v2674, %v2668
    %v2717 = vpack.c.bf16 %v2675, %v2669
    %v2718 = vpack.c.bf16 %v2676, %v2670
    %v2719 = vpack.c.bf16 %v2677, %v2671
    %v2720 = vpack.c.bf16 %v2684, %v2678
    %v2721 = vpack.c.bf16 %v2685, %v2679
    %v2722 = vpack.c.bf16 %v2686, %v2680
    %v2723 = vpack.c.bf16 %v2687, %v2681
    %v2724 = vpack.c.bf16 %v2688, %v2682
    %v2725 = vpack.c.bf16 %v2689, %v2683
    %v2726 = vpack.c.bf16 %v2696, %v2690
    %v2727 = vpack.c.bf16 %v2697, %v2691
    %v2728 = vpack.c.bf16 %v2698, %v2692
    %v2729 = vpack.c.bf16 %v2699, %v2693
    %v2730 = vpack.c.bf16 %v2700, %v2694
    %v2731 = vpack.c.bf16 %v2701, %v2695
    %v2732 = vpack.c.bf16 %v2708, %v2702
    %v2733 = vpack.c.bf16 %v2709, %v2703
    %v2734 = vpack.c.bf16 %v2710, %v2704
    %v2735 = vpack.c.bf16 %v2711, %v2705
    %v2736 = vpack.c.bf16 %v2712, %v2706
    %v2737 = vpack.c.bf16 %v2713, %v2707
    %s2738 = scalar_lea.vmem [#allocation6], 2304
    %v2739 = vld [vmem:[%s2738] sm:$0xff]
    %v2740 = vld [vmem:[%s2738 + $0x8] sm:$0xff]
    %v2741 = vld [vmem:[%s2738 + $0x10] sm:$0xff]
    %v2742 = vld [vmem:[%s2738 + $0x18] sm:$0xff]
    %v2743 = vld [vmem:[%s2738 + $0x20] sm:$0xff]
    %v2744 = vld [vmem:[%s2738 + $0x28] sm:$0xff]
    %v2745 = vld [vmem:[%s2738 + $0x30] sm:$0xff]
    %v2746 = vld [vmem:[%s2738 + $0x38] sm:$0xff]
    %v2747 = vld [vmem:[%s2738 + $0x40] sm:$0xff]
    %v2748 = vld [vmem:[%s2738 + $0x48] sm:$0xff]
    %v2749 = vld [vmem:[%s2738 + $0x50] sm:$0xff]
    %v2750 = vld [vmem:[%s2738 + $0x58] sm:$0xff]
    %v2751 = vld [vmem:[%s2738 + $0x60] sm:$0xff]
    %v2752 = vld [vmem:[%s2738 + $0x68] sm:$0xff]
    %v2753 = vld [vmem:[%s2738 + $0x70] sm:$0xff]
    %v2754 = vld [vmem:[%s2738 + $0x78] sm:$0xff]
    %v2755 = vld [vmem:[%s2738 + $0x80] sm:$0xff]
    %v2756 = vld [vmem:[%s2738 + $0x88] sm:$0xff]
    %v2757 = vld [vmem:[%s2738 + $0x90] sm:$0xff]
    %v2758 = vld [vmem:[%s2738 + $0x98] sm:$0xff]
    %v2759 = vld [vmem:[%s2738 + $0xa0] sm:$0xff]
    %v2760 = vld [vmem:[%s2738 + $0xa8] sm:$0xff]
    %v2761 = vld [vmem:[%s2738 + $0xb0] sm:$0xff]
    %v2762 = vld [vmem:[%s2738 + $0xb8] sm:$0xff]
    %v2763 = vld [vmem:[%s2738 + $0xc0] sm:$0xff]
    %v2764 = vld [vmem:[%s2738 + $0xc8] sm:$0xff]
    %v2765 = vld [vmem:[%s2738 + $0xd0] sm:$0xff]
    %v2766 = vld [vmem:[%s2738 + $0xd8] sm:$0xff]
    %v2767 = vld [vmem:[%s2738 + $0xe0] sm:$0xff]
    %v2768 = vld [vmem:[%s2738 + $0xe8] sm:$0xff]
    %v2769 = vld [vmem:[%s2738 + $0xf0] sm:$0xff]
    %v2770 = vld [vmem:[%s2738 + $0xf8] sm:$0xff]
    %v2771 = vld [vmem:[%s2738 + $0x100] sm:$0xff]
    %v2772 = vld [vmem:[%s2738 + $0x108] sm:$0xff]
    %v2773 = vld [vmem:[%s2738 + $0x110] sm:$0xff]
    %v2774 = vld [vmem:[%s2738 + $0x118] sm:$0xff]
    %v2775 = vld [vmem:[%s2738 + $0x120] sm:$0xff]
    %v2776 = vld [vmem:[%s2738 + $0x128] sm:$0xff]
    %v2777 = vld [vmem:[%s2738 + $0x130] sm:$0xff]
    %v2778 = vld [vmem:[%s2738 + $0x138] sm:$0xff]
    %v2779 = vld [vmem:[%s2738 + $0x140] sm:$0xff]
    %v2780 = vld [vmem:[%s2738 + $0x148] sm:$0xff]
    %v2781 = vld [vmem:[%s2738 + $0x150] sm:$0xff]
    %v2782 = vld [vmem:[%s2738 + $0x158] sm:$0xff]
    %v2783 = vld [vmem:[%s2738 + $0x160] sm:$0xff]
    %v2784 = vld [vmem:[%s2738 + $0x168] sm:$0xff]
    %v2785 = vld [vmem:[%s2738 + $0x170] sm:$0xff]
    %v2786 = vld [vmem:[%s2738 + $0x178] sm:$0xff]
    %v2787 = vld [vmem:[%s2738 + $0x180] sm:$0xff]
    %v2788 = vld [vmem:[%s2738 + $0x188] sm:$0xff]
    %v2789 = vld [vmem:[%s2738 + $0x190] sm:$0xff]
    %v2790 = vld [vmem:[%s2738 + $0x198] sm:$0xff]
    %v2791 = vld [vmem:[%s2738 + $0x1a0] sm:$0xff]
    %v2792 = vld [vmem:[%s2738 + $0x1a8] sm:$0xff]
    %v2793 = vld [vmem:[%s2738 + $0x1b0] sm:$0xff]
    %v2794 = vld [vmem:[%s2738 + $0x1b8] sm:$0xff]
    %v2795 = vld [vmem:[%s2738 + $0x1c0] sm:$0xff]
    %v2796 = vld [vmem:[%s2738 + $0x1c8] sm:$0xff]
    %v2797 = vld [vmem:[%s2738 + $0x1d0] sm:$0xff]
    %v2798 = vld [vmem:[%s2738 + $0x1d8] sm:$0xff]
    %v2799 = vld [vmem:[%s2738 + $0x1e0] sm:$0xff]
    %v2800 = vld [vmem:[%s2738 + $0x1e8] sm:$0xff]
    %v2801 = vld [vmem:[%s2738 + $0x1f0] sm:$0xff]
    %v2802 = vld [vmem:[%s2738 + $0x1f8] sm:$0xff]
    %v2803 = vld [vmem:[%s2738 + $0x200] sm:$0xff]
    %v2804 = vld [vmem:[%s2738 + $0x208] sm:$0xff]
    %v2805 = vld [vmem:[%s2738 + $0x210] sm:$0xff]
    %v2806 = vld [vmem:[%s2738 + $0x218] sm:$0xff]
    %v2807 = vld [vmem:[%s2738 + $0x220] sm:$0xff]
    %v2808 = vld [vmem:[%s2738 + $0x228] sm:$0xff]
    %v2809 = vld [vmem:[%s2738 + $0x230] sm:$0xff]
    %v2810 = vld [vmem:[%s2738 + $0x238] sm:$0xff]
    %v2811 = vld [vmem:[%s2738 + $0x240] sm:$0xff]
    %v2812 = vld [vmem:[%s2738 + $0x248] sm:$0xff]
    %v2813 = vld [vmem:[%s2738 + $0x250] sm:$0xff]
    %v2814 = vld [vmem:[%s2738 + $0x258] sm:$0xff]
    %v2815 = vld [vmem:[%s2738 + $0x260] sm:$0xff]
    %v2816 = vld [vmem:[%s2738 + $0x268] sm:$0xff]
    %v2817 = vld [vmem:[%s2738 + $0x270] sm:$0xff]
    %v2818 = vld [vmem:[%s2738 + $0x278] sm:$0xff]
    %v2819 = vld [vmem:[%s2738 + $0x280] sm:$0xff]
    %v2820 = vld [vmem:[%s2738 + $0x288] sm:$0xff]
    %v2821 = vld [vmem:[%s2738 + $0x290] sm:$0xff]
    %v2822 = vld [vmem:[%s2738 + $0x298] sm:$0xff]
    %v2823 = vld [vmem:[%s2738 + $0x2a0] sm:$0xff]
    %v2824 = vld [vmem:[%s2738 + $0x2a8] sm:$0xff]
    %v2825 = vld [vmem:[%s2738 + $0x2b0] sm:$0xff]
    %v2826 = vld [vmem:[%s2738 + $0x2b8] sm:$0xff]
    %v2827 = vld [vmem:[%s2738 + $0x2c0] sm:$0xff]
    %v2828 = vld [vmem:[%s2738 + $0x2c8] sm:$0xff]
    %v2829 = vld [vmem:[%s2738 + $0x2d0] sm:$0xff]
    %v2830 = vld [vmem:[%s2738 + $0x2d8] sm:$0xff]
    %v2831 = vld [vmem:[%s2738 + $0x2e0] sm:$0xff]
    %v2832 = vld [vmem:[%s2738 + $0x2e8] sm:$0xff]
    %v2833 = vld [vmem:[%s2738 + $0x2f0] sm:$0xff]
    %v2834 = vld [vmem:[%s2738 + $0x2f8] sm:$0xff]
    %v2835 = vld [vmem:[%s2738 + $0x300] sm:$0xff]
    %v2836 = vld [vmem:[%s2738 + $0x308] sm:$0xff]
    %v2837 = vld [vmem:[%s2738 + $0x310] sm:$0xff]
    %v2838 = vld [vmem:[%s2738 + $0x318] sm:$0xff]
    %v2839 = vld [vmem:[%s2738 + $0x320] sm:$0xff]
    %v2840 = vld [vmem:[%s2738 + $0x328] sm:$0xff]
    %v2841 = vld [vmem:[%s2738 + $0x330] sm:$0xff]
    %v2842 = vld [vmem:[%s2738 + $0x338] sm:$0xff]
    %v2843 = vld [vmem:[%s2738 + $0x340] sm:$0xff]
    %v2844 = vld [vmem:[%s2738 + $0x348] sm:$0xff]
    %v2845 = vld [vmem:[%s2738 + $0x350] sm:$0xff]
    %v2846 = vld [vmem:[%s2738 + $0x358] sm:$0xff]
    %v2847 = vld [vmem:[%s2738 + $0x360] sm:$0xff]
    %v2848 = vld [vmem:[%s2738 + $0x368] sm:$0xff]
    %v2849 = vld [vmem:[%s2738 + $0x370] sm:$0xff]
    %v2850 = vld [vmem:[%s2738 + $0x378] sm:$0xff]
    %v2851 = vld [vmem:[%s2738 + $0x380] sm:$0xff]
    %v2852 = vld [vmem:[%s2738 + $0x388] sm:$0xff]
    %v2853 = vld [vmem:[%s2738 + $0x390] sm:$0xff]
    %v2854 = vld [vmem:[%s2738 + $0x398] sm:$0xff]
    %v2855 = vld [vmem:[%s2738 + $0x3a0] sm:$0xff]
    %v2856 = vld [vmem:[%s2738 + $0x3a8] sm:$0xff]
    %v2857 = vld [vmem:[%s2738 + $0x3b0] sm:$0xff]
    %v2858 = vld [vmem:[%s2738 + $0x3b8] sm:$0xff]
    %v2859 = vld [vmem:[%s2738 + $0x3c0] sm:$0xff]
    %v2860 = vld [vmem:[%s2738 + $0x3c8] sm:$0xff]
    %v2861 = vld [vmem:[%s2738 + $0x3d0] sm:$0xff]
    %v2862 = vld [vmem:[%s2738 + $0x3d8] sm:$0xff]
    %v2863 = vld [vmem:[%s2738 + $0x3e0] sm:$0xff]
    %v2864 = vld [vmem:[%s2738 + $0x3e8] sm:$0xff]
    %v2865 = vld [vmem:[%s2738 + $0x3f0] sm:$0xff]
    %v2866 = vld [vmem:[%s2738 + $0x3f8] sm:$0xff]
    %v2867 = vld [vmem:[%s2738 + $0x400] sm:$0xff]
    %v2868 = vld [vmem:[%s2738 + $0x408] sm:$0xff]
    %v2869 = vld [vmem:[%s2738 + $0x410] sm:$0xff]
    %v2870 = vld [vmem:[%s2738 + $0x418] sm:$0xff]
    %v2871 = vld [vmem:[%s2738 + $0x420] sm:$0xff]
    %v2872 = vld [vmem:[%s2738 + $0x428] sm:$0xff]
    %v2873 = vld [vmem:[%s2738 + $0x430] sm:$0xff]
    %v2874 = vld [vmem:[%s2738 + $0x438] sm:$0xff]
    %v2875 = vld [vmem:[%s2738 + $0x440] sm:$0xff]
    %v2876 = vld [vmem:[%s2738 + $0x448] sm:$0xff]
    %v2877 = vld [vmem:[%s2738 + $0x450] sm:$0xff]
    %v2878 = vld [vmem:[%s2738 + $0x458] sm:$0xff]
    %v2879 = vld [vmem:[%s2738 + $0x460] sm:$0xff]
    %v2880 = vld [vmem:[%s2738 + $0x468] sm:$0xff]
    %v2881 = vld [vmem:[%s2738 + $0x470] sm:$0xff]
    %v2882 = vld [vmem:[%s2738 + $0x478] sm:$0xff]
    %v2883 = vld [vmem:[%s2738 + $0x480] sm:$0xff]
    %v2884 = vld [vmem:[%s2738 + $0x488] sm:$0xff]
    %v2885 = vld [vmem:[%s2738 + $0x490] sm:$0xff]
    %v2886 = vld [vmem:[%s2738 + $0x498] sm:$0xff]
    %v2887 = vld [vmem:[%s2738 + $0x4a0] sm:$0xff]
    %v2888 = vld [vmem:[%s2738 + $0x4a8] sm:$0xff]
    %v2889 = vld [vmem:[%s2738 + $0x4b0] sm:$0xff]
    %v2890 = vld [vmem:[%s2738 + $0x4b8] sm:$0xff]
    %v2891 = vld [vmem:[%s2738 + $0x4c0] sm:$0xff]
    %v2892 = vld [vmem:[%s2738 + $0x4c8] sm:$0xff]
    %v2893 = vld [vmem:[%s2738 + $0x4d0] sm:$0xff]
    %v2894 = vld [vmem:[%s2738 + $0x4d8] sm:$0xff]
    %v2895 = vld [vmem:[%s2738 + $0x4e0] sm:$0xff]
    %v2896 = vld [vmem:[%s2738 + $0x4e8] sm:$0xff]
    %v2897 = vld [vmem:[%s2738 + $0x4f0] sm:$0xff]
    %v2898 = vld [vmem:[%s2738 + $0x4f8] sm:$0xff]
    %v2899 = vld [vmem:[%s2738 + $0x500] sm:$0xff]
    %v2900 = vld [vmem:[%s2738 + $0x508] sm:$0xff]
    %v2901 = vld [vmem:[%s2738 + $0x510] sm:$0xff]
    %v2902 = vld [vmem:[%s2738 + $0x518] sm:$0xff]
    %v2903 = vld [vmem:[%s2738 + $0x520] sm:$0xff]
    %v2904 = vld [vmem:[%s2738 + $0x528] sm:$0xff]
    %v2905 = vld [vmem:[%s2738 + $0x530] sm:$0xff]
    %v2906 = vld [vmem:[%s2738 + $0x538] sm:$0xff]
    %v2907 = vld [vmem:[%s2738 + $0x540] sm:$0xff]
    %v2908 = vld [vmem:[%s2738 + $0x548] sm:$0xff]
    %v2909 = vld [vmem:[%s2738 + $0x550] sm:$0xff]
    %v2910 = vld [vmem:[%s2738 + $0x558] sm:$0xff]
    %v2911 = vld [vmem:[%s2738 + $0x560] sm:$0xff]
    %v2912 = vld [vmem:[%s2738 + $0x568] sm:$0xff]
    %v2913 = vld [vmem:[%s2738 + $0x570] sm:$0xff]
    %v2914 = vld [vmem:[%s2738 + $0x578] sm:$0xff]
    %v2915 = vld [vmem:[%s2738 + $0x580] sm:$0xff]
    %v2916 = vld [vmem:[%s2738 + $0x588] sm:$0xff]
    %v2917 = vld [vmem:[%s2738 + $0x590] sm:$0xff]
    %v2918 = vld [vmem:[%s2738 + $0x598] sm:$0xff]
    %v2919 = vld [vmem:[%s2738 + $0x5a0] sm:$0xff]
    %v2920 = vld [vmem:[%s2738 + $0x5a8] sm:$0xff]
    %v2921 = vld [vmem:[%s2738 + $0x5b0] sm:$0xff]
    %v2922 = vld [vmem:[%s2738 + $0x5b8] sm:$0xff]
    %v2923 = vld [vmem:[%s2738 + $0x5c0] sm:$0xff]
    %v2924 = vld [vmem:[%s2738 + $0x5c8] sm:$0xff]
    %v2925 = vld [vmem:[%s2738 + $0x5d0] sm:$0xff]
    %v2926 = vld [vmem:[%s2738 + $0x5d8] sm:$0xff]
    %v2927 = vld [vmem:[%s2738 + $0x5e0] sm:$0xff]
    %v2928 = vld [vmem:[%s2738 + $0x5e8] sm:$0xff]
    %v2929 = vld [vmem:[%s2738 + $0x5f0] sm:$0xff]
    %v2930 = vld [vmem:[%s2738 + $0x5f8] sm:$0xff]
    %v2931 = vld [vmem:[%s2738 + $0x600] sm:$0xff]
    %v2932 = vld [vmem:[%s2738 + $0x608] sm:$0xff]
    %v2933 = vld [vmem:[%s2738 + $0x610] sm:$0xff]
    %v2934 = vld [vmem:[%s2738 + $0x618] sm:$0xff]
    %v2935 = vld [vmem:[%s2738 + $0x620] sm:$0xff]
    %v2936 = vld [vmem:[%s2738 + $0x628] sm:$0xff]
    %v2937 = vld [vmem:[%s2738 + $0x630] sm:$0xff]
    %v2938 = vld [vmem:[%s2738 + $0x638] sm:$0xff]
    %v2939 = vld [vmem:[%s2738 + $0x640] sm:$0xff]
    %v2940 = vld [vmem:[%s2738 + $0x648] sm:$0xff]
    %v2941 = vld [vmem:[%s2738 + $0x650] sm:$0xff]
    %v2942 = vld [vmem:[%s2738 + $0x658] sm:$0xff]
    %v2943 = vld [vmem:[%s2738 + $0x660] sm:$0xff]
    %v2944 = vld [vmem:[%s2738 + $0x668] sm:$0xff]
    %v2945 = vld [vmem:[%s2738 + $0x670] sm:$0xff]
    %v2946 = vld [vmem:[%s2738 + $0x678] sm:$0xff]
    %v2947 = vld [vmem:[%s2738 + $0x680] sm:$0xff]
    %v2948 = vld [vmem:[%s2738 + $0x688] sm:$0xff]
    %v2949 = vld [vmem:[%s2738 + $0x690] sm:$0xff]
    %v2950 = vld [vmem:[%s2738 + $0x698] sm:$0xff]
    %v2951 = vld [vmem:[%s2738 + $0x6a0] sm:$0xff]
    %v2952 = vld [vmem:[%s2738 + $0x6a8] sm:$0xff]
    %v2953 = vld [vmem:[%s2738 + $0x6b0] sm:$0xff]
    %v2954 = vld [vmem:[%s2738 + $0x6b8] sm:$0xff]
    %v2955 = vld [vmem:[%s2738 + $0x6c0] sm:$0xff]
    %v2956 = vld [vmem:[%s2738 + $0x6c8] sm:$0xff]
    %v2957 = vld [vmem:[%s2738 + $0x6d0] sm:$0xff]
    %v2958 = vld [vmem:[%s2738 + $0x6d8] sm:$0xff]
    %v2959 = vld [vmem:[%s2738 + $0x6e0] sm:$0xff]
    %v2960 = vld [vmem:[%s2738 + $0x6e8] sm:$0xff]
    %v2961 = vld [vmem:[%s2738 + $0x6f0] sm:$0xff]
    %v2962 = vld [vmem:[%s2738 + $0x6f8] sm:$0xff]
    %v2963 = vld [vmem:[%s2738 + $0x700] sm:$0xff]
    %v2964 = vld [vmem:[%s2738 + $0x708] sm:$0xff]
    %v2965 = vld [vmem:[%s2738 + $0x710] sm:$0xff]
    %v2966 = vld [vmem:[%s2738 + $0x718] sm:$0xff]
    %v2967 = vld [vmem:[%s2738 + $0x720] sm:$0xff]
    %v2968 = vld [vmem:[%s2738 + $0x728] sm:$0xff]
    %v2969 = vld [vmem:[%s2738 + $0x730] sm:$0xff]
    %v2970 = vld [vmem:[%s2738 + $0x738] sm:$0xff]
    %v2971 = vld [vmem:[%s2738 + $0x740] sm:$0xff]
    %v2972 = vld [vmem:[%s2738 + $0x748] sm:$0xff]
    %v2973 = vld [vmem:[%s2738 + $0x750] sm:$0xff]
    %v2974 = vld [vmem:[%s2738 + $0x758] sm:$0xff]
    %v2975 = vld [vmem:[%s2738 + $0x760] sm:$0xff]
    %v2976 = vld [vmem:[%s2738 + $0x768] sm:$0xff]
    %v2977 = vld [vmem:[%s2738 + $0x770] sm:$0xff]
    %v2978 = vld [vmem:[%s2738 + $0x778] sm:$0xff]
    %v2979 = vld [vmem:[%s2738 + $0x780] sm:$0xff]
    %v2980 = vld [vmem:[%s2738 + $0x788] sm:$0xff]
    %v2981 = vld [vmem:[%s2738 + $0x790] sm:$0xff]
    %v2982 = vld [vmem:[%s2738 + $0x798] sm:$0xff]
    %v2983 = vld [vmem:[%s2738 + $0x7a0] sm:$0xff]
    %v2984 = vld [vmem:[%s2738 + $0x7a8] sm:$0xff]
    %v2985 = vld [vmem:[%s2738 + $0x7b0] sm:$0xff]
    %v2986 = vld [vmem:[%s2738 + $0x7b8] sm:$0xff]
    %v2987 = vld [vmem:[%s2738 + $0x7c0] sm:$0xff]
    %v2988 = vld [vmem:[%s2738 + $0x7c8] sm:$0xff]
    %v2989 = vld [vmem:[%s2738 + $0x7d0] sm:$0xff]
    %v2990 = vld [vmem:[%s2738 + $0x7d8] sm:$0xff]
    %v2991 = vld [vmem:[%s2738 + $0x7e0] sm:$0xff]
    %v2992 = vld [vmem:[%s2738 + $0x7e8] sm:$0xff]
    %v2993 = vld [vmem:[%s2738 + $0x7f0] sm:$0xff]
    %v2994 = vld [vmem:[%s2738 + $0x7f8] sm:$0xff]
    %v2995 = vld [vmem:[%s2738 + $0x800] sm:$0xff]
    %v2996 = vld [vmem:[%s2738 + $0x808] sm:$0xff]
    %v2997 = vld [vmem:[%s2738 + $0x810] sm:$0xff]
    %v2998 = vld [vmem:[%s2738 + $0x818] sm:$0xff]
    %v2999 = vld [vmem:[%s2738 + $0x820] sm:$0xff]
    %v3000 = vld [vmem:[%s2738 + $0x828] sm:$0xff]
    %v3001 = vld [vmem:[%s2738 + $0x830] sm:$0xff]
    %v3002 = vld [vmem:[%s2738 + $0x838] sm:$0xff]
    %v3003 = vld [vmem:[%s2738 + $0x840] sm:$0xff]
    %v3004 = vld [vmem:[%s2738 + $0x848] sm:$0xff]
    %v3005 = vld [vmem:[%s2738 + $0x850] sm:$0xff]
    %v3006 = vld [vmem:[%s2738 + $0x858] sm:$0xff]
    %v3007 = vld [vmem:[%s2738 + $0x860] sm:$0xff]
    %v3008 = vld [vmem:[%s2738 + $0x868] sm:$0xff]
    %v3009 = vld [vmem:[%s2738 + $0x870] sm:$0xff]
    %v3010 = vld [vmem:[%s2738 + $0x878] sm:$0xff]
    %v3011 = vld [vmem:[%s2738 + $0x880] sm:$0xff]
    %v3012 = vld [vmem:[%s2738 + $0x888] sm:$0xff]
    %v3013 = vld [vmem:[%s2738 + $0x890] sm:$0xff]
    %v3014 = vld [vmem:[%s2738 + $0x898] sm:$0xff]
    %v3015 = vld [vmem:[%s2738 + $0x8a0] sm:$0xff]
    %v3016 = vld [vmem:[%s2738 + $0x8a8] sm:$0xff]
    %v3017 = vld [vmem:[%s2738 + $0x8b0] sm:$0xff]
    %v3018 = vld [vmem:[%s2738 + $0x8b8] sm:$0xff]
    %v3019 = vld [vmem:[%s2738 + $0x8c0] sm:$0xff]
    %v3020 = vld [vmem:[%s2738 + $0x8c8] sm:$0xff]
    %v3021 = vld [vmem:[%s2738 + $0x8d0] sm:$0xff]
    %v3022 = vld [vmem:[%s2738 + $0x8d8] sm:$0xff]
    %v3023 = vld [vmem:[%s2738 + $0x8e0] sm:$0xff]
    %v3024 = vld [vmem:[%s2738 + $0x8e8] sm:$0xff]
    %v3025 = vld [vmem:[%s2738 + $0x8f0] sm:$0xff]
    %v3026 = vld [vmem:[%s2738 + $0x8f8] sm:$0xff]
    %s3027 = scalar_lea.vmem [#allocation10], 6
    %v3028 = vld [vmem:[%s3027] sm:$0x3f]
    %v3030 = vlaneseq
    %v3031 = vshrl.u32 %v3030, 7
    %v3032 = vsub.s32 0, %v3031
    %v3033 = vrot.slane %v3028, %v3032
    %v3034 = vlaneseq
    %v3035 = vshrl.u32 %v3034, 7
    %v3036 = vsub.s32 1, %v3035
    %v3037 = vrot.slane %v3028, %v3036
    %v3038 = vlaneseq
    %v3039 = vshrl.u32 %v3038, 7
    %v3040 = vsub.s32 2, %v3039
    %v3041 = vrot.slane %v3028, %v3040
    %v3042 = vlaneseq
    %v3043 = vshrl.u32 %v3042, 7
    %v3044 = vsub.s32 3, %v3043
    %v3045 = vrot.slane %v3028, %v3044
    %v3046 = vlaneseq
    %v3047 = vshrl.u32 %v3046, 7
    %v3048 = vsub.s32 4, %v3047
    %v3049 = vrot.slane %v3028, %v3048
    %v3050 = vlaneseq
    %v3051 = vshrl.u32 %v3050, 7
    %v3052 = vsub.s32 5, %v3051
    %v3053 = vrot.slane %v3028, %v3052
    %v3348 = vunpack.c.l.b16 %v2739
    %v3349 = vunpack.c.h.b16 %v2739
    %v3350 = vunpack.c.l.b16 %v2740
    %v3351 = vunpack.c.h.b16 %v2740
    %v3352 = vunpack.c.l.b16 %v2741
    %v3353 = vunpack.c.h.b16 %v2741
    %v3354 = vunpack.c.l.b16 %v2742
    %v3355 = vunpack.c.h.b16 %v2742
    %v3356 = vunpack.c.l.b16 %v2743
    %v3357 = vunpack.c.h.b16 %v2743
    %v3358 = vunpack.c.l.b16 %v2744
    %v3359 = vunpack.c.h.b16 %v2744
    %v3360 = vunpack.c.l.b16 %v2745
    %v3361 = vunpack.c.h.b16 %v2745
    %v3362 = vunpack.c.l.b16 %v2746
    %v3363 = vunpack.c.h.b16 %v2746
    %v3364 = vunpack.c.l.b16 %v2747
    %v3365 = vunpack.c.h.b16 %v2747
    %v3366 = vunpack.c.l.b16 %v2748
    %v3367 = vunpack.c.h.b16 %v2748
    %v3368 = vunpack.c.l.b16 %v2749
    %v3369 = vunpack.c.h.b16 %v2749
    %v3370 = vunpack.c.l.b16 %v2750
    %v3371 = vunpack.c.h.b16 %v2750
    %v3372 = vunpack.c.l.b16 %v2751
    %v3373 = vunpack.c.h.b16 %v2751
    %v3374 = vunpack.c.l.b16 %v2752
    %v3375 = vunpack.c.h.b16 %v2752
    %v3376 = vunpack.c.l.b16 %v2753
    %v3377 = vunpack.c.h.b16 %v2753
    %v3378 = vunpack.c.l.b16 %v2754
    %v3379 = vunpack.c.h.b16 %v2754
    %v3380 = vunpack.c.l.b16 %v2755
    %v3381 = vunpack.c.h.b16 %v2755
    %v3382 = vunpack.c.l.b16 %v2756
    %v3383 = vunpack.c.h.b16 %v2756
    %v3384 = vunpack.c.l.b16 %v2757
    %v3385 = vunpack.c.h.b16 %v2757
    %v3386 = vunpack.c.l.b16 %v2758
    %v3387 = vunpack.c.h.b16 %v2758
    %v3388 = vunpack.c.l.b16 %v2759
    %v3389 = vunpack.c.h.b16 %v2759
    %v3390 = vunpack.c.l.b16 %v2760
    %v3391 = vunpack.c.h.b16 %v2760
    %v3392 = vunpack.c.l.b16 %v2761
    %v3393 = vunpack.c.h.b16 %v2761
    %v3394 = vunpack.c.l.b16 %v2762
    %v3395 = vunpack.c.h.b16 %v2762
    %v3396 = vunpack.c.l.b16 %v2763
    %v3397 = vunpack.c.h.b16 %v2763
    %v3398 = vunpack.c.l.b16 %v2764
    %v3399 = vunpack.c.h.b16 %v2764
    %v3400 = vunpack.c.l.b16 %v2765
    %v3401 = vunpack.c.h.b16 %v2765
    %v3402 = vunpack.c.l.b16 %v2766
    %v3403 = vunpack.c.h.b16 %v2766
    %v3404 = vunpack.c.l.b16 %v2767
    %v3405 = vunpack.c.h.b16 %v2767
    %v3406 = vunpack.c.l.b16 %v2768
    %v3407 = vunpack.c.h.b16 %v2768
    %v3408 = vunpack.c.l.b16 %v2769
    %v3409 = vunpack.c.h.b16 %v2769
    %v3410 = vunpack.c.l.b16 %v2770
    %v3411 = vunpack.c.h.b16 %v2770
    %v3412 = vunpack.c.l.b16 %v2771
    %v3413 = vunpack.c.h.b16 %v2771
    %v3414 = vunpack.c.l.b16 %v2772
    %v3415 = vunpack.c.h.b16 %v2772
    %v3416 = vunpack.c.l.b16 %v2773
    %v3417 = vunpack.c.h.b16 %v2773
    %v3418 = vunpack.c.l.b16 %v2774
    %v3419 = vunpack.c.h.b16 %v2774
    %v3420 = vunpack.c.l.b16 %v2775
    %v3421 = vunpack.c.h.b16 %v2775
    %v3422 = vunpack.c.l.b16 %v2776
    %v3423 = vunpack.c.h.b16 %v2776
    %v3424 = vunpack.c.l.b16 %v2777
    %v3425 = vunpack.c.h.b16 %v2777
    %v3426 = vunpack.c.l.b16 %v2778
    %v3427 = vunpack.c.h.b16 %v2778
    %v3428 = vunpack.c.l.b16 %v2779
    %v3429 = vunpack.c.h.b16 %v2779
    %v3430 = vunpack.c.l.b16 %v2780
    %v3431 = vunpack.c.h.b16 %v2780
    %v3432 = vunpack.c.l.b16 %v2781
    %v3433 = vunpack.c.h.b16 %v2781
    %v3434 = vunpack.c.l.b16 %v2782
    %v3435 = vunpack.c.h.b16 %v2782
    %v3436 = vunpack.c.l.b16 %v2783
    %v3437 = vunpack.c.h.b16 %v2783
    %v3438 = vunpack.c.l.b16 %v2784
    %v3439 = vunpack.c.h.b16 %v2784
    %v3440 = vunpack.c.l.b16 %v2785
    %v3441 = vunpack.c.h.b16 %v2785
    %v3442 = vunpack.c.l.b16 %v2786
    %v3443 = vunpack.c.h.b16 %v2786
    %v3444 = vunpack.c.l.b16 %v2787
    %v3445 = vunpack.c.h.b16 %v2787
    %v3446 = vunpack.c.l.b16 %v2788
    %v3447 = vunpack.c.h.b16 %v2788
    %v3448 = vunpack.c.l.b16 %v2789
    %v3449 = vunpack.c.h.b16 %v2789
    %v3450 = vunpack.c.l.b16 %v2790
    %v3451 = vunpack.c.h.b16 %v2790
    %v3452 = vunpack.c.l.b16 %v2791
    %v3453 = vunpack.c.h.b16 %v2791
    %v3454 = vunpack.c.l.b16 %v2792
    %v3455 = vunpack.c.h.b16 %v2792
    %v3456 = vunpack.c.l.b16 %v2793
    %v3457 = vunpack.c.h.b16 %v2793
    %v3458 = vunpack.c.l.b16 %v2794
    %v3459 = vunpack.c.h.b16 %v2794
    %v3460 = vunpack.c.l.b16 %v2795
    %v3461 = vunpack.c.h.b16 %v2795
    %v3462 = vunpack.c.l.b16 %v2796
    %v3463 = vunpack.c.h.b16 %v2796
    %v3464 = vunpack.c.l.b16 %v2797
    %v3465 = vunpack.c.h.b16 %v2797
    %v3466 = vunpack.c.l.b16 %v2798
    %v3467 = vunpack.c.h.b16 %v2798
    %v3468 = vunpack.c.l.b16 %v2799
    %v3469 = vunpack.c.h.b16 %v2799
    %v3470 = vunpack.c.l.b16 %v2800
    %v3471 = vunpack.c.h.b16 %v2800
    %v3472 = vunpack.c.l.b16 %v2801
    %v3473 = vunpack.c.h.b16 %v2801
    %v3474 = vunpack.c.l.b16 %v2802
    %v3475 = vunpack.c.h.b16 %v2802
    %v3476 = vunpack.c.l.b16 %v2803
    %v3477 = vunpack.c.h.b16 %v2803
    %v3478 = vunpack.c.l.b16 %v2804
    %v3479 = vunpack.c.h.b16 %v2804
    %v3480 = vunpack.c.l.b16 %v2805
    %v3481 = vunpack.c.h.b16 %v2805
    %v3482 = vunpack.c.l.b16 %v2806
    %v3483 = vunpack.c.h.b16 %v2806
    %v3484 = vunpack.c.l.b16 %v2807
    %v3485 = vunpack.c.h.b16 %v2807
    %v3486 = vunpack.c.l.b16 %v2808
    %v3487 = vunpack.c.h.b16 %v2808
    %v3488 = vunpack.c.l.b16 %v2809
    %v3489 = vunpack.c.h.b16 %v2809
    %v3490 = vunpack.c.l.b16 %v2810
    %v3491 = vunpack.c.h.b16 %v2810
    %v3492 = vunpack.c.l.b16 %v2811
    %v3493 = vunpack.c.h.b16 %v2811
    %v3494 = vunpack.c.l.b16 %v2812
    %v3495 = vunpack.c.h.b16 %v2812
    %v3496 = vunpack.c.l.b16 %v2813
    %v3497 = vunpack.c.h.b16 %v2813
    %v3498 = vunpack.c.l.b16 %v2814
    %v3499 = vunpack.c.h.b16 %v2814
    %v3500 = vunpack.c.l.b16 %v2815
    %v3501 = vunpack.c.h.b16 %v2815
    %v3502 = vunpack.c.l.b16 %v2816
    %v3503 = vunpack.c.h.b16 %v2816
    %v3504 = vunpack.c.l.b16 %v2817
    %v3505 = vunpack.c.h.b16 %v2817
    %v3506 = vunpack.c.l.b16 %v2818
    %v3507 = vunpack.c.h.b16 %v2818
    %v3508 = vunpack.c.l.b16 %v2819
    %v3509 = vunpack.c.h.b16 %v2819
    %v3510 = vunpack.c.l.b16 %v2820
    %v3511 = vunpack.c.h.b16 %v2820
    %v3512 = vunpack.c.l.b16 %v2821
    %v3513 = vunpack.c.h.b16 %v2821
    %v3514 = vunpack.c.l.b16 %v2822
    %v3515 = vunpack.c.h.b16 %v2822
    %v3516 = vunpack.c.l.b16 %v2823
    %v3517 = vunpack.c.h.b16 %v2823
    %v3518 = vunpack.c.l.b16 %v2824
    %v3519 = vunpack.c.h.b16 %v2824
    %v3520 = vunpack.c.l.b16 %v2825
    %v3521 = vunpack.c.h.b16 %v2825
    %v3522 = vunpack.c.l.b16 %v2826
    %v3523 = vunpack.c.h.b16 %v2826
    %v3524 = vunpack.c.l.b16 %v2827
    %v3525 = vunpack.c.h.b16 %v2827
    %v3526 = vunpack.c.l.b16 %v2828
    %v3527 = vunpack.c.h.b16 %v2828
    %v3528 = vunpack.c.l.b16 %v2829
    %v3529 = vunpack.c.h.b16 %v2829
    %v3530 = vunpack.c.l.b16 %v2830
    %v3531 = vunpack.c.h.b16 %v2830
    %v3532 = vunpack.c.l.b16 %v2831
    %v3533 = vunpack.c.h.b16 %v2831
    %v3534 = vunpack.c.l.b16 %v2832
    %v3535 = vunpack.c.h.b16 %v2832
    %v3536 = vunpack.c.l.b16 %v2833
    %v3537 = vunpack.c.h.b16 %v2833
    %v3538 = vunpack.c.l.b16 %v2834
    %v3539 = vunpack.c.h.b16 %v2834
    %v3540 = vunpack.c.l.b16 %v2835
    %v3541 = vunpack.c.h.b16 %v2835
    %v3542 = vunpack.c.l.b16 %v2836
    %v3543 = vunpack.c.h.b16 %v2836
    %v3544 = vunpack.c.l.b16 %v2837
    %v3545 = vunpack.c.h.b16 %v2837
    %v3546 = vunpack.c.l.b16 %v2838
    %v3547 = vunpack.c.h.b16 %v2838
    %v3548 = vunpack.c.l.b16 %v2839
    %v3549 = vunpack.c.h.b16 %v2839
    %v3550 = vunpack.c.l.b16 %v2840
    %v3551 = vunpack.c.h.b16 %v2840
    %v3552 = vunpack.c.l.b16 %v2841
    %v3553 = vunpack.c.h.b16 %v2841
    %v3554 = vunpack.c.l.b16 %v2842
    %v3555 = vunpack.c.h.b16 %v2842
    %v3556 = vunpack.c.l.b16 %v2843
    %v3557 = vunpack.c.h.b16 %v2843
    %v3558 = vunpack.c.l.b16 %v2844
    %v3559 = vunpack.c.h.b16 %v2844
    %v3560 = vunpack.c.l.b16 %v2845
    %v3561 = vunpack.c.h.b16 %v2845
    %v3562 = vunpack.c.l.b16 %v2846
    %v3563 = vunpack.c.h.b16 %v2846
    %v3564 = vunpack.c.l.b16 %v2847
    %v3565 = vunpack.c.h.b16 %v2847
    %v3566 = vunpack.c.l.b16 %v2848
    %v3567 = vunpack.c.h.b16 %v2848
    %v3568 = vunpack.c.l.b16 %v2849
    %v3569 = vunpack.c.h.b16 %v2849
    %v3570 = vunpack.c.l.b16 %v2850
    %v3571 = vunpack.c.h.b16 %v2850
    %v3572 = vunpack.c.l.b16 %v2851
    %v3573 = vunpack.c.h.b16 %v2851
    %v3574 = vunpack.c.l.b16 %v2852
    %v3575 = vunpack.c.h.b16 %v2852
    %v3576 = vunpack.c.l.b16 %v2853
    %v3577 = vunpack.c.h.b16 %v2853
    %v3578 = vunpack.c.l.b16 %v2854
    %v3579 = vunpack.c.h.b16 %v2854
    %v3580 = vunpack.c.l.b16 %v2855
    %v3581 = vunpack.c.h.b16 %v2855
    %v3582 = vunpack.c.l.b16 %v2856
    %v3583 = vunpack.c.h.b16 %v2856
    %v3584 = vunpack.c.l.b16 %v2857
    %v3585 = vunpack.c.h.b16 %v2857
    %v3586 = vunpack.c.l.b16 %v2858
    %v3587 = vunpack.c.h.b16 %v2858
    %v3588 = vunpack.c.l.b16 %v2859
    %v3589 = vunpack.c.h.b16 %v2859
    %v3590 = vunpack.c.l.b16 %v2860
    %v3591 = vunpack.c.h.b16 %v2860
    %v3592 = vunpack.c.l.b16 %v2861
    %v3593 = vunpack.c.h.b16 %v2861
    %v3594 = vunpack.c.l.b16 %v2862
    %v3595 = vunpack.c.h.b16 %v2862
    %v3596 = vunpack.c.l.b16 %v2863
    %v3597 = vunpack.c.h.b16 %v2863
    %v3598 = vunpack.c.l.b16 %v2864
    %v3599 = vunpack.c.h.b16 %v2864
    %v3600 = vunpack.c.l.b16 %v2865
    %v3601 = vunpack.c.h.b16 %v2865
    %v3602 = vunpack.c.l.b16 %v2866
    %v3603 = vunpack.c.h.b16 %v2866
    %v3604 = vunpack.c.l.b16 %v2867
    %v3605 = vunpack.c.h.b16 %v2867
    %v3606 = vunpack.c.l.b16 %v2868
    %v3607 = vunpack.c.h.b16 %v2868
    %v3608 = vunpack.c.l.b16 %v2869
    %v3609 = vunpack.c.h.b16 %v2869
    %v3610 = vunpack.c.l.b16 %v2870
    %v3611 = vunpack.c.h.b16 %v2870
    %v3612 = vunpack.c.l.b16 %v2871
    %v3613 = vunpack.c.h.b16 %v2871
    %v3614 = vunpack.c.l.b16 %v2872
    %v3615 = vunpack.c.h.b16 %v2872
    %v3616 = vunpack.c.l.b16 %v2873
    %v3617 = vunpack.c.h.b16 %v2873
    %v3618 = vunpack.c.l.b16 %v2874
    %v3619 = vunpack.c.h.b16 %v2874
    %v3620 = vunpack.c.l.b16 %v2875
    %v3621 = vunpack.c.h.b16 %v2875
    %v3622 = vunpack.c.l.b16 %v2876
    %v3623 = vunpack.c.h.b16 %v2876
    %v3624 = vunpack.c.l.b16 %v2877
    %v3625 = vunpack.c.h.b16 %v2877
    %v3626 = vunpack.c.l.b16 %v2878
    %v3627 = vunpack.c.h.b16 %v2878
    %v3628 = vunpack.c.l.b16 %v2879
    %v3629 = vunpack.c.h.b16 %v2879
    %v3630 = vunpack.c.l.b16 %v2880
    %v3631 = vunpack.c.h.b16 %v2880
    %v3632 = vunpack.c.l.b16 %v2881
    %v3633 = vunpack.c.h.b16 %v2881
    %v3634 = vunpack.c.l.b16 %v2882
    %v3635 = vunpack.c.h.b16 %v2882
    %v3636 = vunpack.c.l.b16 %v2883
    %v3637 = vunpack.c.h.b16 %v2883
    %v3638 = vunpack.c.l.b16 %v2884
    %v3639 = vunpack.c.h.b16 %v2884
    %v3640 = vunpack.c.l.b16 %v2885
    %v3641 = vunpack.c.h.b16 %v2885
    %v3642 = vunpack.c.l.b16 %v2886
    %v3643 = vunpack.c.h.b16 %v2886
    %v3644 = vunpack.c.l.b16 %v2887
    %v3645 = vunpack.c.h.b16 %v2887
    %v3646 = vunpack.c.l.b16 %v2888
    %v3647 = vunpack.c.h.b16 %v2888
    %v3648 = vunpack.c.l.b16 %v2889
    %v3649 = vunpack.c.h.b16 %v2889
    %v3650 = vunpack.c.l.b16 %v2890
    %v3651 = vunpack.c.h.b16 %v2890
    %v3652 = vunpack.c.l.b16 %v2891
    %v3653 = vunpack.c.h.b16 %v2891
    %v3654 = vunpack.c.l.b16 %v2892
    %v3655 = vunpack.c.h.b16 %v2892
    %v3656 = vunpack.c.l.b16 %v2893
    %v3657 = vunpack.c.h.b16 %v2893
    %v3658 = vunpack.c.l.b16 %v2894
    %v3659 = vunpack.c.h.b16 %v2894
    %v3660 = vunpack.c.l.b16 %v2895
    %v3661 = vunpack.c.h.b16 %v2895
    %v3662 = vunpack.c.l.b16 %v2896
    %v3663 = vunpack.c.h.b16 %v2896
    %v3664 = vunpack.c.l.b16 %v2897
    %v3665 = vunpack.c.h.b16 %v2897
    %v3666 = vunpack.c.l.b16 %v2898
    %v3667 = vunpack.c.h.b16 %v2898
    %v3668 = vunpack.c.l.b16 %v2899
    %v3669 = vunpack.c.h.b16 %v2899
    %v3670 = vunpack.c.l.b16 %v2900
    %v3671 = vunpack.c.h.b16 %v2900
    %v3672 = vunpack.c.l.b16 %v2901
    %v3673 = vunpack.c.h.b16 %v2901
    %v3674 = vunpack.c.l.b16 %v2902
    %v3675 = vunpack.c.h.b16 %v2902
    %v3676 = vunpack.c.l.b16 %v2903
    %v3677 = vunpack.c.h.b16 %v2903
    %v3678 = vunpack.c.l.b16 %v2904
    %v3679 = vunpack.c.h.b16 %v2904
    %v3680 = vunpack.c.l.b16 %v2905
    %v3681 = vunpack.c.h.b16 %v2905
    %v3682 = vunpack.c.l.b16 %v2906
    %v3683 = vunpack.c.h.b16 %v2906
    %v3684 = vunpack.c.l.b16 %v2907
    %v3685 = vunpack.c.h.b16 %v2907
    %v3686 = vunpack.c.l.b16 %v2908
    %v3687 = vunpack.c.h.b16 %v2908
    %v3688 = vunpack.c.l.b16 %v2909
    %v3689 = vunpack.c.h.b16 %v2909
    %v3690 = vunpack.c.l.b16 %v2910
    %v3691 = vunpack.c.h.b16 %v2910
    %v3692 = vunpack.c.l.b16 %v2911
    %v3693 = vunpack.c.h.b16 %v2911
    %v3694 = vunpack.c.l.b16 %v2912
    %v3695 = vunpack.c.h.b16 %v2912
    %v3696 = vunpack.c.l.b16 %v2913
    %v3697 = vunpack.c.h.b16 %v2913
    %v3698 = vunpack.c.l.b16 %v2914
    %v3699 = vunpack.c.h.b16 %v2914
    %v3700 = vunpack.c.l.b16 %v2915
    %v3701 = vunpack.c.h.b16 %v2915
    %v3702 = vunpack.c.l.b16 %v2916
    %v3703 = vunpack.c.h.b16 %v2916
    %v3704 = vunpack.c.l.b16 %v2917
    %v3705 = vunpack.c.h.b16 %v2917
    %v3706 = vunpack.c.l.b16 %v2918
    %v3707 = vunpack.c.h.b16 %v2918
    %v3708 = vunpack.c.l.b16 %v2919
    %v3709 = vunpack.c.h.b16 %v2919
    %v3710 = vunpack.c.l.b16 %v2920
    %v3711 = vunpack.c.h.b16 %v2920
    %v3712 = vunpack.c.l.b16 %v2921
    %v3713 = vunpack.c.h.b16 %v2921
    %v3714 = vunpack.c.l.b16 %v2922
    %v3715 = vunpack.c.h.b16 %v2922
    %v3716 = vunpack.c.l.b16 %v2923
    %v3717 = vunpack.c.h.b16 %v2923
    %v3718 = vunpack.c.l.b16 %v2924
    %v3719 = vunpack.c.h.b16 %v2924
    %v3720 = vunpack.c.l.b16 %v2925
    %v3721 = vunpack.c.h.b16 %v2925
    %v3722 = vunpack.c.l.b16 %v2926
    %v3723 = vunpack.c.h.b16 %v2926
    %v3724 = vunpack.c.l.b16 %v2927
    %v3725 = vunpack.c.h.b16 %v2927
    %v3726 = vunpack.c.l.b16 %v2928
    %v3727 = vunpack.c.h.b16 %v2928
    %v3728 = vunpack.c.l.b16 %v2929
    %v3729 = vunpack.c.h.b16 %v2929
    %v3730 = vunpack.c.l.b16 %v2930
    %v3731 = vunpack.c.h.b16 %v2930
    %v3732 = vunpack.c.l.b16 %v2931
    %v3733 = vunpack.c.h.b16 %v2931
    %v3734 = vunpack.c.l.b16 %v2932
    %v3735 = vunpack.c.h.b16 %v2932
    %v3736 = vunpack.c.l.b16 %v2933
    %v3737 = vunpack.c.h.b16 %v2933
    %v3738 = vunpack.c.l.b16 %v2934
    %v3739 = vunpack.c.h.b16 %v2934
    %v3740 = vunpack.c.l.b16 %v2935
    %v3741 = vunpack.c.h.b16 %v2935
    %v3742 = vunpack.c.l.b16 %v2936
    %v3743 = vunpack.c.h.b16 %v2936
    %v3744 = vunpack.c.l.b16 %v2937
    %v3745 = vunpack.c.h.b16 %v2937
    %v3746 = vunpack.c.l.b16 %v2938
    %v3747 = vunpack.c.h.b16 %v2938
    %v3748 = vunpack.c.l.b16 %v2939
    %v3749 = vunpack.c.h.b16 %v2939
    %v3750 = vunpack.c.l.b16 %v2940
    %v3751 = vunpack.c.h.b16 %v2940
    %v3752 = vunpack.c.l.b16 %v2941
    %v3753 = vunpack.c.h.b16 %v2941
    %v3754 = vunpack.c.l.b16 %v2942
    %v3755 = vunpack.c.h.b16 %v2942
    %v3756 = vunpack.c.l.b16 %v2943
    %v3757 = vunpack.c.h.b16 %v2943
    %v3758 = vunpack.c.l.b16 %v2944
    %v3759 = vunpack.c.h.b16 %v2944
    %v3760 = vunpack.c.l.b16 %v2945
    %v3761 = vunpack.c.h.b16 %v2945
    %v3762 = vunpack.c.l.b16 %v2946
    %v3763 = vunpack.c.h.b16 %v2946
    %v3764 = vunpack.c.l.b16 %v2947
    %v3765 = vunpack.c.h.b16 %v2947
    %v3766 = vunpack.c.l.b16 %v2948
    %v3767 = vunpack.c.h.b16 %v2948
    %v3768 = vunpack.c.l.b16 %v2949
    %v3769 = vunpack.c.h.b16 %v2949
    %v3770 = vunpack.c.l.b16 %v2950
    %v3771 = vunpack.c.h.b16 %v2950
    %v3772 = vunpack.c.l.b16 %v2951
    %v3773 = vunpack.c.h.b16 %v2951
    %v3774 = vunpack.c.l.b16 %v2952
    %v3775 = vunpack.c.h.b16 %v2952
    %v3776 = vunpack.c.l.b16 %v2953
    %v3777 = vunpack.c.h.b16 %v2953
    %v3778 = vunpack.c.l.b16 %v2954
    %v3779 = vunpack.c.h.b16 %v2954
    %v3780 = vunpack.c.l.b16 %v2955
    %v3781 = vunpack.c.h.b16 %v2955
    %v3782 = vunpack.c.l.b16 %v2956
    %v3783 = vunpack.c.h.b16 %v2956
    %v3784 = vunpack.c.l.b16 %v2957
    %v3785 = vunpack.c.h.b16 %v2957
    %v3786 = vunpack.c.l.b16 %v2958
    %v3787 = vunpack.c.h.b16 %v2958
    %v3788 = vunpack.c.l.b16 %v2959
    %v3789 = vunpack.c.h.b16 %v2959
    %v3790 = vunpack.c.l.b16 %v2960
    %v3791 = vunpack.c.h.b16 %v2960
    %v3792 = vunpack.c.l.b16 %v2961
    %v3793 = vunpack.c.h.b16 %v2961
    %v3794 = vunpack.c.l.b16 %v2962
    %v3795 = vunpack.c.h.b16 %v2962
    %v3796 = vunpack.c.l.b16 %v2963
    %v3797 = vunpack.c.h.b16 %v2963
    %v3798 = vunpack.c.l.b16 %v2964
    %v3799 = vunpack.c.h.b16 %v2964
    %v3800 = vunpack.c.l.b16 %v2965
    %v3801 = vunpack.c.h.b16 %v2965
    %v3802 = vunpack.c.l.b16 %v2966
    %v3803 = vunpack.c.h.b16 %v2966
    %v3804 = vunpack.c.l.b16 %v2967
    %v3805 = vunpack.c.h.b16 %v2967
    %v3806 = vunpack.c.l.b16 %v2968
    %v3807 = vunpack.c.h.b16 %v2968
    %v3808 = vunpack.c.l.b16 %v2969
    %v3809 = vunpack.c.h.b16 %v2969
    %v3810 = vunpack.c.l.b16 %v2970
    %v3811 = vunpack.c.h.b16 %v2970
    %v3812 = vunpack.c.l.b16 %v2971
    %v3813 = vunpack.c.h.b16 %v2971
    %v3814 = vunpack.c.l.b16 %v2972
    %v3815 = vunpack.c.h.b16 %v2972
    %v3816 = vunpack.c.l.b16 %v2973
    %v3817 = vunpack.c.h.b16 %v2973
    %v3818 = vunpack.c.l.b16 %v2974
    %v3819 = vunpack.c.h.b16 %v2974
    %v3820 = vunpack.c.l.b16 %v2975
    %v3821 = vunpack.c.h.b16 %v2975
    %v3822 = vunpack.c.l.b16 %v2976
    %v3823 = vunpack.c.h.b16 %v2976
    %v3824 = vunpack.c.l.b16 %v2977
    %v3825 = vunpack.c.h.b16 %v2977
    %v3826 = vunpack.c.l.b16 %v2978
    %v3827 = vunpack.c.h.b16 %v2978
    %v3828 = vunpack.c.l.b16 %v2979
    %v3829 = vunpack.c.h.b16 %v2979
    %v3830 = vunpack.c.l.b16 %v2980
    %v3831 = vunpack.c.h.b16 %v2980
    %v3832 = vunpack.c.l.b16 %v2981
    %v3833 = vunpack.c.h.b16 %v2981
    %v3834 = vunpack.c.l.b16 %v2982
    %v3835 = vunpack.c.h.b16 %v2982
    %v3836 = vunpack.c.l.b16 %v2983
    %v3837 = vunpack.c.h.b16 %v2983
    %v3838 = vunpack.c.l.b16 %v2984
    %v3839 = vunpack.c.h.b16 %v2984
    %v3840 = vunpack.c.l.b16 %v2985
    %v3841 = vunpack.c.h.b16 %v2985
    %v3842 = vunpack.c.l.b16 %v2986
    %v3843 = vunpack.c.h.b16 %v2986
    %v3844 = vunpack.c.l.b16 %v2987
    %v3845 = vunpack.c.h.b16 %v2987
    %v3846 = vunpack.c.l.b16 %v2988
    %v3847 = vunpack.c.h.b16 %v2988
    %v3848 = vunpack.c.l.b16 %v2989
    %v3849 = vunpack.c.h.b16 %v2989
    %v3850 = vunpack.c.l.b16 %v2990
    %v3851 = vunpack.c.h.b16 %v2990
    %v3852 = vunpack.c.l.b16 %v2991
    %v3853 = vunpack.c.h.b16 %v2991
    %v3854 = vunpack.c.l.b16 %v2992
    %v3855 = vunpack.c.h.b16 %v2992
    %v3856 = vunpack.c.l.b16 %v2993
    %v3857 = vunpack.c.h.b16 %v2993
    %v3858 = vunpack.c.l.b16 %v2994
    %v3859 = vunpack.c.h.b16 %v2994
    %v3860 = vunpack.c.l.b16 %v2995
    %v3861 = vunpack.c.h.b16 %v2995
    %v3862 = vunpack.c.l.b16 %v2996
    %v3863 = vunpack.c.h.b16 %v2996
    %v3864 = vunpack.c.l.b16 %v2997
    %v3865 = vunpack.c.h.b16 %v2997
    %v3866 = vunpack.c.l.b16 %v2998
    %v3867 = vunpack.c.h.b16 %v2998
    %v3868 = vunpack.c.l.b16 %v2999
    %v3869 = vunpack.c.h.b16 %v2999
    %v3870 = vunpack.c.l.b16 %v3000
    %v3871 = vunpack.c.h.b16 %v3000
    %v3872 = vunpack.c.l.b16 %v3001
    %v3873 = vunpack.c.h.b16 %v3001
    %v3874 = vunpack.c.l.b16 %v3002
    %v3875 = vunpack.c.h.b16 %v3002
    %v3876 = vunpack.c.l.b16 %v3003
    %v3877 = vunpack.c.h.b16 %v3003
    %v3878 = vunpack.c.l.b16 %v3004
    %v3879 = vunpack.c.h.b16 %v3004
    %v3880 = vunpack.c.l.b16 %v3005
    %v3881 = vunpack.c.h.b16 %v3005
    %v3882 = vunpack.c.l.b16 %v3006
    %v3883 = vunpack.c.h.b16 %v3006
    %v3884 = vunpack.c.l.b16 %v3007
    %v3885 = vunpack.c.h.b16 %v3007
    %v3886 = vunpack.c.l.b16 %v3008
    %v3887 = vunpack.c.h.b16 %v3008
    %v3888 = vunpack.c.l.b16 %v3009
    %v3889 = vunpack.c.h.b16 %v3009
    %v3890 = vunpack.c.l.b16 %v3010
    %v3891 = vunpack.c.h.b16 %v3010
    %v3892 = vunpack.c.l.b16 %v3011
    %v3893 = vunpack.c.h.b16 %v3011
    %v3894 = vunpack.c.l.b16 %v3012
    %v3895 = vunpack.c.h.b16 %v3012
    %v3896 = vunpack.c.l.b16 %v3013
    %v3897 = vunpack.c.h.b16 %v3013
    %v3898 = vunpack.c.l.b16 %v3014
    %v3899 = vunpack.c.h.b16 %v3014
    %v3900 = vunpack.c.l.b16 %v3015
    %v3901 = vunpack.c.h.b16 %v3015
    %v3902 = vunpack.c.l.b16 %v3016
    %v3903 = vunpack.c.h.b16 %v3016
    %v3904 = vunpack.c.l.b16 %v3017
    %v3905 = vunpack.c.h.b16 %v3017
    %v3906 = vunpack.c.l.b16 %v3018
    %v3907 = vunpack.c.h.b16 %v3018
    %v3908 = vunpack.c.l.b16 %v3019
    %v3909 = vunpack.c.h.b16 %v3019
    %v3910 = vunpack.c.l.b16 %v3020
    %v3911 = vunpack.c.h.b16 %v3020
    %v3912 = vunpack.c.l.b16 %v3021
    %v3913 = vunpack.c.h.b16 %v3021
    %v3914 = vunpack.c.l.b16 %v3022
    %v3915 = vunpack.c.h.b16 %v3022
    %v3916 = vunpack.c.l.b16 %v3023
    %v3917 = vunpack.c.h.b16 %v3023
    %v3918 = vunpack.c.l.b16 %v3024
    %v3919 = vunpack.c.h.b16 %v3024
    %v3920 = vunpack.c.l.b16 %v3025
    %v3921 = vunpack.c.h.b16 %v3025
    %v3922 = vunpack.c.l.b16 %v3026
    %v3923 = vunpack.c.h.b16 %v3026
    %v3924 = vpack.c.b16 %v3354, %v3348
    %v3925 = vpack.c.b16 %v3355, %v3349
    %v3926 = vpack.c.b16 %v3356, %v3350
    %v3927 = vpack.c.b16 %v3357, %v3351
    %v3928 = vpack.c.b16 %v3358, %v3352
    %v3929 = vpack.c.b16 %v3359, %v3353
    %v3930 = vpack.c.b16 %v3366, %v3360
    %v3931 = vpack.c.b16 %v3367, %v3361
    %v3932 = vpack.c.b16 %v3368, %v3362
    %v3933 = vpack.c.b16 %v3369, %v3363
    %v3934 = vpack.c.b16 %v3370, %v3364
    %v3935 = vpack.c.b16 %v3371, %v3365
    %v3936 = vpack.c.b16 %v3378, %v3372
    %v3937 = vpack.c.b16 %v3379, %v3373
    %v3938 = vpack.c.b16 %v3380, %v3374
    %v3939 = vpack.c.b16 %v3381, %v3375
    %v3940 = vpack.c.b16 %v3382, %v3376
    %v3941 = vpack.c.b16 %v3383, %v3377
    %v3942 = vpack.c.b16 %v3390, %v3384
    %v3943 = vpack.c.b16 %v3391, %v3385
    %v3944 = vpack.c.b16 %v3392, %v3386
    %v3945 = vpack.c.b16 %v3393, %v3387
    %v3946 = vpack.c.b16 %v3394, %v3388
    %v3947 = vpack.c.b16 %v3395, %v3389
    %v3948 = vpack.c.b16 %v3402, %v3396
    %v3949 = vpack.c.b16 %v3403, %v3397
    %v3950 = vpack.c.b16 %v3404, %v3398
    %v3951 = vpack.c.b16 %v3405, %v3399
    %v3952 = vpack.c.b16 %v3406, %v3400
    %v3953 = vpack.c.b16 %v3407, %v3401
    %v3954 = vpack.c.b16 %v3414, %v3408
    %v3955 = vpack.c.b16 %v3415, %v3409
    %v3956 = vpack.c.b16 %v3416, %v3410
    %v3957 = vpack.c.b16 %v3417, %v3411
    %v3958 = vpack.c.b16 %v3418, %v3412
    %v3959 = vpack.c.b16 %v3419, %v3413
    %v3960 = vpack.c.b16 %v3426, %v3420
    %v3961 = vpack.c.b16 %v3427, %v3421
    %v3962 = vpack.c.b16 %v3428, %v3422
    %v3963 = vpack.c.b16 %v3429, %v3423
    %v3964 = vpack.c.b16 %v3430, %v3424
    %v3965 = vpack.c.b16 %v3431, %v3425
    %v3966 = vpack.c.b16 %v3438, %v3432
    %v3967 = vpack.c.b16 %v3439, %v3433
    %v3968 = vpack.c.b16 %v3440, %v3434
    %v3969 = vpack.c.b16 %v3441, %v3435
    %v3970 = vpack.c.b16 %v3442, %v3436
    %v3971 = vpack.c.b16 %v3443, %v3437
    %v3972 = vpack.c.b16 %v3450, %v3444
    %v3973 = vpack.c.b16 %v3451, %v3445
    %v3974 = vpack.c.b16 %v3452, %v3446
    %v3975 = vpack.c.b16 %v3453, %v3447
    %v3976 = vpack.c.b16 %v3454, %v3448
    %v3977 = vpack.c.b16 %v3455, %v3449
    %v3978 = vpack.c.b16 %v3462, %v3456
    %v3979 = vpack.c.b16 %v3463, %v3457
    %v3980 = vpack.c.b16 %v3464, %v3458
    %v3981 = vpack.c.b16 %v3465, %v3459
    %v3982 = vpack.c.b16 %v3466, %v3460
    %v3983 = vpack.c.b16 %v3467, %v3461
    %v3984 = vpack.c.b16 %v3474, %v3468
    %v3985 = vpack.c.b16 %v3475, %v3469
    %v3986 = vpack.c.b16 %v3476, %v3470
    %v3987 = vpack.c.b16 %v3477, %v3471
    %v3988 = vpack.c.b16 %v3478, %v3472
    %v3989 = vpack.c.b16 %v3479, %v3473
    %v3990 = vpack.c.b16 %v3486, %v3480
    %v3991 = vpack.c.b16 %v3487, %v3481
    %v3992 = vpack.c.b16 %v3488, %v3482
    %v3993 = vpack.c.b16 %v3489, %v3483
    %v3994 = vpack.c.b16 %v3490, %v3484
    %v3995 = vpack.c.b16 %v3491, %v3485
    %v3996 = vpack.c.b16 %v3498, %v3492
    %v3997 = vpack.c.b16 %v3499, %v3493
    %v3998 = vpack.c.b16 %v3500, %v3494
    %v3999 = vpack.c.b16 %v3501, %v3495
    %v4000 = vpack.c.b16 %v3502, %v3496
    %v4001 = vpack.c.b16 %v3503, %v3497
    %v4002 = vpack.c.b16 %v3510, %v3504
    %v4003 = vpack.c.b16 %v3511, %v3505
    %v4004 = vpack.c.b16 %v3512, %v3506
    %v4005 = vpack.c.b16 %v3513, %v3507
    %v4006 = vpack.c.b16 %v3514, %v3508
    %v4007 = vpack.c.b16 %v3515, %v3509
    %v4008 = vpack.c.b16 %v3522, %v3516
    %v4009 = vpack.c.b16 %v3523, %v3517
    %v4010 = vpack.c.b16 %v3524, %v3518
    %v4011 = vpack.c.b16 %v3525, %v3519
    %v4012 = vpack.c.b16 %v3526, %v3520
    %v4013 = vpack.c.b16 %v3527, %v3521
    %v4014 = vpack.c.b16 %v3534, %v3528
    %v4015 = vpack.c.b16 %v3535, %v3529
    %v4016 = vpack.c.b16 %v3536, %v3530
    %v4017 = vpack.c.b16 %v3537, %v3531
    %v4018 = vpack.c.b16 %v3538, %v3532
    %v4019 = vpack.c.b16 %v3539, %v3533
    %v4020 = vpack.c.b16 %v3546, %v3540
    %v4021 = vpack.c.b16 %v3547, %v3541
    %v4022 = vpack.c.b16 %v3548, %v3542
    %v4023 = vpack.c.b16 %v3549, %v3543
    %v4024 = vpack.c.b16 %v3550, %v3544
    %v4025 = vpack.c.b16 %v3551, %v3545
    %v4026 = vpack.c.b16 %v3558, %v3552
    %v4027 = vpack.c.b16 %v3559, %v3553
    %v4028 = vpack.c.b16 %v3560, %v3554
    %v4029 = vpack.c.b16 %v3561, %v3555
    %v4030 = vpack.c.b16 %v3562, %v3556
    %v4031 = vpack.c.b16 %v3563, %v3557
    %v4032 = vpack.c.b16 %v3570, %v3564
    %v4033 = vpack.c.b16 %v3571, %v3565
    %v4034 = vpack.c.b16 %v3572, %v3566
    %v4035 = vpack.c.b16 %v3573, %v3567
    %v4036 = vpack.c.b16 %v3574, %v3568
    %v4037 = vpack.c.b16 %v3575, %v3569
    %v4038 = vpack.c.b16 %v3582, %v3576
    %v4039 = vpack.c.b16 %v3583, %v3577
    %v4040 = vpack.c.b16 %v3584, %v3578
    %v4041 = vpack.c.b16 %v3585, %v3579
    %v4042 = vpack.c.b16 %v3586, %v3580
    %v4043 = vpack.c.b16 %v3587, %v3581
    %v4044 = vpack.c.b16 %v3594, %v3588
    %v4045 = vpack.c.b16 %v3595, %v3589
    %v4046 = vpack.c.b16 %v3596, %v3590
    %v4047 = vpack.c.b16 %v3597, %v3591
    %v4048 = vpack.c.b16 %v3598, %v3592
    %v4049 = vpack.c.b16 %v3599, %v3593
    %v4050 = vpack.c.b16 %v3606, %v3600
    %v4051 = vpack.c.b16 %v3607, %v3601
    %v4052 = vpack.c.b16 %v3608, %v3602
    %v4053 = vpack.c.b16 %v3609, %v3603
    %v4054 = vpack.c.b16 %v3610, %v3604
    %v4055 = vpack.c.b16 %v3611, %v3605
    %v4056 = vpack.c.b16 %v3618, %v3612
    %v4057 = vpack.c.b16 %v3619, %v3613
    %v4058 = vpack.c.b16 %v3620, %v3614
    %v4059 = vpack.c.b16 %v3621, %v3615
    %v4060 = vpack.c.b16 %v3622, %v3616
    %v4061 = vpack.c.b16 %v3623, %v3617
    %v4062 = vpack.c.b16 %v3630, %v3624
    %v4063 = vpack.c.b16 %v3631, %v3625
    %v4064 = vpack.c.b16 %v3632, %v3626
    %v4065 = vpack.c.b16 %v3633, %v3627
    %v4066 = vpack.c.b16 %v3634, %v3628
    %v4067 = vpack.c.b16 %v3635, %v3629
    %v4068 = vpack.c.b16 %v3642, %v3636
    %v4069 = vpack.c.b16 %v3643, %v3637
    %v4070 = vpack.c.b16 %v3644, %v3638
    %v4071 = vpack.c.b16 %v3645, %v3639
    %v4072 = vpack.c.b16 %v3646, %v3640
    %v4073 = vpack.c.b16 %v3647, %v3641
    %v4074 = vpack.c.b16 %v3654, %v3648
    %v4075 = vpack.c.b16 %v3655, %v3649
    %v4076 = vpack.c.b16 %v3656, %v3650
    %v4077 = vpack.c.b16 %v3657, %v3651
    %v4078 = vpack.c.b16 %v3658, %v3652
    %v4079 = vpack.c.b16 %v3659, %v3653
    %v4080 = vpack.c.b16 %v3666, %v3660
    %v4081 = vpack.c.b16 %v3667, %v3661
    %v4082 = vpack.c.b16 %v3668, %v3662
    %v4083 = vpack.c.b16 %v3669, %v3663
    %v4084 = vpack.c.b16 %v3670, %v3664
    %v4085 = vpack.c.b16 %v3671, %v3665
    %v4086 = vpack.c.b16 %v3678, %v3672
    %v4087 = vpack.c.b16 %v3679, %v3673
    %v4088 = vpack.c.b16 %v3680, %v3674
    %v4089 = vpack.c.b16 %v3681, %v3675
    %v4090 = vpack.c.b16 %v3682, %v3676
    %v4091 = vpack.c.b16 %v3683, %v3677
    %v4092 = vpack.c.b16 %v3690, %v3684
    %v4093 = vpack.c.b16 %v3691, %v3685
    %v4094 = vpack.c.b16 %v3692, %v3686
    %v4095 = vpack.c.b16 %v3693, %v3687
    %v4096 = vpack.c.b16 %v3694, %v3688
    %v4097 = vpack.c.b16 %v3695, %v3689
    %v4098 = vpack.c.b16 %v3702, %v3696
    %v4099 = vpack.c.b16 %v3703, %v3697
    %v4100 = vpack.c.b16 %v3704, %v3698
    %v4101 = vpack.c.b16 %v3705, %v3699
    %v4102 = vpack.c.b16 %v3706, %v3700
    %v4103 = vpack.c.b16 %v3707, %v3701
    %v4104 = vpack.c.b16 %v3714, %v3708
    %v4105 = vpack.c.b16 %v3715, %v3709
    %v4106 = vpack.c.b16 %v3716, %v3710
    %v4107 = vpack.c.b16 %v3717, %v3711
    %v4108 = vpack.c.b16 %v3718, %v3712
    %v4109 = vpack.c.b16 %v3719, %v3713
    %v4110 = vpack.c.b16 %v3726, %v3720
    %v4111 = vpack.c.b16 %v3727, %v3721
    %v4112 = vpack.c.b16 %v3728, %v3722
    %v4113 = vpack.c.b16 %v3729, %v3723
    %v4114 = vpack.c.b16 %v3730, %v3724
    %v4115 = vpack.c.b16 %v3731, %v3725
    %v4116 = vpack.c.b16 %v3738, %v3732
    %v4117 = vpack.c.b16 %v3739, %v3733
    %v4118 = vpack.c.b16 %v3740, %v3734
    %v4119 = vpack.c.b16 %v3741, %v3735
    %v4120 = vpack.c.b16 %v3742, %v3736
    %v4121 = vpack.c.b16 %v3743, %v3737
    %v4122 = vpack.c.b16 %v3750, %v3744
    %v4123 = vpack.c.b16 %v3751, %v3745
    %v4124 = vpack.c.b16 %v3752, %v3746
    %v4125 = vpack.c.b16 %v3753, %v3747
    %v4126 = vpack.c.b16 %v3754, %v3748
    %v4127 = vpack.c.b16 %v3755, %v3749
    %v4128 = vpack.c.b16 %v3762, %v3756
    %v4129 = vpack.c.b16 %v3763, %v3757
    %v4130 = vpack.c.b16 %v3764, %v3758
    %v4131 = vpack.c.b16 %v3765, %v3759
    %v4132 = vpack.c.b16 %v3766, %v3760
    %v4133 = vpack.c.b16 %v3767, %v3761
    %v4134 = vpack.c.b16 %v3774, %v3768
    %v4135 = vpack.c.b16 %v3775, %v3769
    %v4136 = vpack.c.b16 %v3776, %v3770
    %v4137 = vpack.c.b16 %v3777, %v3771
    %v4138 = vpack.c.b16 %v3778, %v3772
    %v4139 = vpack.c.b16 %v3779, %v3773
    %v4140 = vpack.c.b16 %v3786, %v3780
    %v4141 = vpack.c.b16 %v3787, %v3781
    %v4142 = vpack.c.b16 %v3788, %v3782
    %v4143 = vpack.c.b16 %v3789, %v3783
    %v4144 = vpack.c.b16 %v3790, %v3784
    %v4145 = vpack.c.b16 %v3791, %v3785
    %v4146 = vpack.c.b16 %v3798, %v3792
    %v4147 = vpack.c.b16 %v3799, %v3793
    %v4148 = vpack.c.b16 %v3800, %v3794
    %v4149 = vpack.c.b16 %v3801, %v3795
    %v4150 = vpack.c.b16 %v3802, %v3796
    %v4151 = vpack.c.b16 %v3803, %v3797
    %v4152 = vpack.c.b16 %v3810, %v3804
    %v4153 = vpack.c.b16 %v3811, %v3805
    %v4154 = vpack.c.b16 %v3812, %v3806
    %v4155 = vpack.c.b16 %v3813, %v3807
    %v4156 = vpack.c.b16 %v3814, %v3808
    %v4157 = vpack.c.b16 %v3815, %v3809
    %v4158 = vpack.c.b16 %v3822, %v3816
    %v4159 = vpack.c.b16 %v3823, %v3817
    %v4160 = vpack.c.b16 %v3824, %v3818
    %v4161 = vpack.c.b16 %v3825, %v3819
    %v4162 = vpack.c.b16 %v3826, %v3820
    %v4163 = vpack.c.b16 %v3827, %v3821
    %v4164 = vpack.c.b16 %v3834, %v3828
    %v4165 = vpack.c.b16 %v3835, %v3829
    %v4166 = vpack.c.b16 %v3836, %v3830
    %v4167 = vpack.c.b16 %v3837, %v3831
    %v4168 = vpack.c.b16 %v3838, %v3832
    %v4169 = vpack.c.b16 %v3839, %v3833
    %v4170 = vpack.c.b16 %v3846, %v3840
    %v4171 = vpack.c.b16 %v3847, %v3841
    %v4172 = vpack.c.b16 %v3848, %v3842
    %v4173 = vpack.c.b16 %v3849, %v3843
    %v4174 = vpack.c.b16 %v3850, %v3844
    %v4175 = vpack.c.b16 %v3851, %v3845
    %v4176 = vpack.c.b16 %v3858, %v3852
    %v4177 = vpack.c.b16 %v3859, %v3853
    %v4178 = vpack.c.b16 %v3860, %v3854
    %v4179 = vpack.c.b16 %v3861, %v3855
    %v4180 = vpack.c.b16 %v3862, %v3856
    %v4181 = vpack.c.b16 %v3863, %v3857
    %v4182 = vpack.c.b16 %v3870, %v3864
    %v4183 = vpack.c.b16 %v3871, %v3865
    %v4184 = vpack.c.b16 %v3872, %v3866
    %v4185 = vpack.c.b16 %v3873, %v3867
    %v4186 = vpack.c.b16 %v3874, %v3868
    %v4187 = vpack.c.b16 %v3875, %v3869
    %v4188 = vpack.c.b16 %v3882, %v3876
    %v4189 = vpack.c.b16 %v3883, %v3877
    %v4190 = vpack.c.b16 %v3884, %v3878
    %v4191 = vpack.c.b16 %v3885, %v3879
    %v4192 = vpack.c.b16 %v3886, %v3880
    %v4193 = vpack.c.b16 %v3887, %v3881
    %v4194 = vpack.c.b16 %v3894, %v3888
    %v4195 = vpack.c.b16 %v3895, %v3889
    %v4196 = vpack.c.b16 %v3896, %v3890
    %v4197 = vpack.c.b16 %v3897, %v3891
    %v4198 = vpack.c.b16 %v3898, %v3892
    %v4199 = vpack.c.b16 %v3899, %v3893
    %v4200 = vpack.c.b16 %v3906, %v3900
    %v4201 = vpack.c.b16 %v3907, %v3901
    %v4202 = vpack.c.b16 %v3908, %v3902
    %v4203 = vpack.c.b16 %v3909, %v3903
    %v4204 = vpack.c.b16 %v3910, %v3904
    %v4205 = vpack.c.b16 %v3911, %v3905
    %v4206 = vpack.c.b16 %v3918, %v3912
    %v4207 = vpack.c.b16 %v3919, %v3913
    %v4208 = vpack.c.b16 %v3920, %v3914
    %v4209 = vpack.c.b16 %v3921, %v3915
    %v4210 = vpack.c.b16 %v3922, %v3916
    %v4211 = vpack.c.b16 %v3923, %v3917
    %4500 = vmatprep.subr.bf16.mxu0 %v3925
    %4501 = vmatpush1.bf16.msra.mxu0 %v3924
    %4502 = vmatprep.subr.bf16.mxu0 %v3931
    %4503 = vmatpush1.bf16.msra.mxu0 %v3930
    %4504 = vmatprep.subr.bf16.mxu0 %v3937
    %4505 = vmatpush1.bf16.msra.mxu0 %v3936
    %4506 = vmatprep.subr.bf16.mxu0 %v3943
    %4507 = vmatpush1.bf16.msra.mxu0 %v3942
    %4508 = vmatprep.subr.bf16.mxu0 %v3949
    %4509 = vmatpush1.bf16.msra.mxu0 %v3948
    %4510 = vmatprep.subr.bf16.mxu0 %v3955
    %4511 = vmatpush1.bf16.msra.mxu0 %v3954
    %4512 = vmatprep.subr.bf16.mxu0 %v3961
    %4513 = vmatpush1.bf16.msra.mxu0 %v3960
    %4514 = vmatprep.subr.bf16.mxu0 %v3967
    %4515 = vmatpush1.bf16.msra.mxu0 %v3966
    %4516 = vmatprep.subr.bf16.mxu0 %v3973
    %4517 = vmatpush1.bf16.msra.mxu0 %v3972
    %4518 = vmatprep.subr.bf16.mxu0 %v3979
    %4519 = vmatpush1.bf16.msra.mxu0 %v3978
    %4520 = vmatprep.subr.bf16.mxu0 %v3985
    %4521 = vmatpush1.bf16.msra.mxu0 %v3984
    %4522 = vmatprep.subr.bf16.mxu0 %v3991
    %4523 = vmatpush1.bf16.msra.mxu0 %v3990
    %4524 = vmatprep.subr.bf16.mxu0 %v3997
    %4525 = vmatpush1.bf16.msra.mxu0 %v3996
    %4526 = vmatprep.subr.bf16.mxu0 %v4003
    %4527 = vmatpush1.bf16.msra.mxu0 %v4002
    %4528 = vmatprep.subr.bf16.mxu0 %v4009
    %4529 = vmatpush1.bf16.msra.mxu0 %v4008
    %4530 = vmatprep.subr.bf16.mxu0 %v4015
    %4531 = vmatpush1.bf16.msra.mxu0 %v4014
    %4532 = vmatprep.mubr.bf16.mxu0 %v2715
    %4533 = vmatmul.mubr.bf16.gmra.mrb[0].mxu0 %v2714
    %v4534 = vpop.f32.mrb[0].mxu0
    %v4535 = vadd.f32 %v3033, %v4534
    %v4536 = vpop.f32.mrb[0].mxu0
    %v4537 = vadd.f32 %v3037, %v4536
    %v4538 = vpop.f32.mrb[0].mxu0
    %v4539 = vadd.f32 %v3033, %v4538
    %v4540 = vpop.f32.mrb[0].mxu0
    %v4541 = vadd.f32 %v3037, %v4540
    %4542 = vmatprep.mubr.bf16.mxu0 %v2721
    %4543 = vmatmul.mubr.bf16.gmra.mrb[0].mxu0 %v2720
    %v4544 = vpop.f32.mrb[0].mxu0
    %v4545 = vadd.f32 %v3033, %v4544
    %v4546 = vpop.f32.mrb[0].mxu0
    %v4547 = vadd.f32 %v3037, %v4546
    %v4548 = vpop.f32.mrb[0].mxu0
    %v4549 = vadd.f32 %v3033, %v4548
    %v4550 = vpop.f32.mrb[0].mxu0
    %v4551 = vadd.f32 %v3037, %v4550
    %4552 = vmatprep.mubr.bf16.mxu0 %v2727
    %4553 = vmatmul.mubr.bf16.gmra.mrb[0].mxu0 %v2726
    %v4554 = vpop.f32.mrb[0].mxu0
    %v4555 = vadd.f32 %v3033, %v4554
    %v4556 = vpop.f32.mrb[0].mxu0
    %v4557 = vadd.f32 %v3037, %v4556
    %v4558 = vpop.f32.mrb[0].mxu0
    %v4559 = vadd.f32 %v3033, %v4558
    %v4560 = vpop.f32.mrb[0].mxu0
    %v4561 = vadd.f32 %v3037, %v4560
    %4562 = vmatprep.mubr.bf16.mxu0 %v2733
    %4563 = vmatmul.mubr.bf16.gmra.mrb[0].mxu0 %v2732
    %v4564 = vpop.f32.mrb[0].mxu0
    %v4565 = vadd.f32 %v3033, %v4564
    %v4566 = vpop.f32.mrb[0].mxu0
    %v4567 = vadd.f32 %v3037, %v4566
    %v4568 = vpop.f32.mrb[0].mxu0
    %v4569 = vadd.f32 %v3033, %v4568
    %v4570 = vpop.f32.mrb[0].mxu0
    %v4571 = vadd.f32 %v3037, %v4570
    %4572 = vdwg.mxu0
    %4573 = vmatprep.subr.bf16.mxu0 %v4021
    %4574 = vmatpush1.bf16.msra.mxu0 %v4020
    %4575 = vmatprep.subr.bf16.mxu0 %v4027
    %4576 = vmatpush1.bf16.msra.mxu0 %v4026
    %4577 = vmatprep.subr.bf16.mxu0 %v4033
    %4578 = vmatpush1.bf16.msra.mxu0 %v4032
    %4579 = vmatprep.subr.bf16.mxu0 %v4039
    %4580 = vmatpush1.bf16.msra.mxu0 %v4038
    %4581 = vmatprep.subr.bf16.mxu0 %v4045
    %4582 = vmatpush1.bf16.msra.mxu0 %v4044
    %4583 = vmatprep.subr.bf16.mxu0 %v4051
    %4584 = vmatpush1.bf16.msra.mxu0 %v4050
    %4585 = vmatprep.subr.bf16.mxu0 %v4057
    %4586 = vmatpush1.bf16.msra.mxu0 %v4056
    %4587 = vmatprep.subr.bf16.mxu0 %v4063
    %4588 = vmatpush1.bf16.msra.mxu0 %v4062
    %4589 = vmatprep.subr.bf16.mxu0 %v4069
    %4590 = vmatpush1.bf16.msra.mxu0 %v4068
    %4591 = vmatprep.subr.bf16.mxu0 %v4075
    %4592 = vmatpush1.bf16.msra.mxu0 %v4074
    %4593 = vmatprep.subr.bf16.mxu0 %v4081
    %4594 = vmatpush1.bf16.msra.mxu0 %v4080
    %4595 = vmatprep.subr.bf16.mxu0 %v4087
    %4596 = vmatpush1.bf16.msra.mxu0 %v4086
    %4597 = vmatprep.subr.bf16.mxu0 %v4093
    %4598 = vmatpush1.bf16.msra.mxu0 %v4092
    %4599 = vmatprep.subr.bf16.mxu0 %v4099
    %4600 = vmatpush1.bf16.msra.mxu0 %v4098
    %4601 = vmatprep.subr.bf16.mxu0 %v4105
    %4602 = vmatpush1.bf16.msra.mxu0 %v4104
    %4603 = vmatprep.subr.bf16.mxu0 %v4111
    %4604 = vmatpush1.bf16.msra.mxu0 %v4110
    %4605 = vmatprep.mubr.bf16.mxu0 %v2717
    %4606 = vmatmul.mubr.bf16.gmra.mrb[0].mxu0 %v2716
    %v4607 = vpop.f32.mrb[0].mxu0
    %v4608 = vadd.f32 %v4535, %v4607
    %v4609 = vpop.f32.mrb[0].mxu0
    %v4610 = vadd.f32 %v4537, %v4609
    %v4611 = vpop.f32.mrb[0].mxu0
    %v4612 = vadd.f32 %v4539, %v4611
    %v4613 = vpop.f32.mrb[0].mxu0
    %v4614 = vadd.f32 %v4541, %v4613
    %4615 = vmatprep.mubr.bf16.mxu0 %v2723
    %4616 = vmatmul.mubr.bf16.gmra.mrb[0].mxu0 %v2722
    %v4617 = vpop.f32.mrb[0].mxu0
    %v4618 = vadd.f32 %v4545, %v4617
    %v4619 = vpop.f32.mrb[0].mxu0
    %v4620 = vadd.f32 %v4547, %v4619
    %v4621 = vpop.f32.mrb[0].mxu0
    %v4622 = vadd.f32 %v4549, %v4621
    %v4623 = vpop.f32.mrb[0].mxu0
    %v4624 = vadd.f32 %v4551, %v4623
    %4625 = vmatprep.mubr.bf16.mxu0 %v2729
    %4626 = vmatmul.mubr.bf16.gmra.mrb[0].mxu0 %v2728
    %v4627 = vpop.f32.mrb[0].mxu0
    %v4628 = vadd.f32 %v4555, %v4627
    %v4629 = vpop.f32.mrb[0].mxu0
    %v4630 = vadd.f32 %v4557, %v4629
    %v4631 = vpop.f32.mrb[0].mxu0
    %v4632 = vadd.f32 %v4559, %v4631
    %v4633 = vpop.f32.mrb[0].mxu0
    %v4634 = vadd.f32 %v4561, %v4633
    %4635 = vmatprep.mubr.bf16.mxu0 %v2735
    %4636 = vmatmul.mubr.bf16.gmra.mrb[0].mxu0 %v2734
    %v4637 = vpop.f32.mrb[0].mxu0
    %v4638 = vadd.f32 %v4565, %v4637
    %v4639 = vpop.f32.mrb[0].mxu0
    %v4640 = vadd.f32 %v4567, %v4639
    %v4641 = vpop.f32.mrb[0].mxu0
    %v4642 = vadd.f32 %v4569, %v4641
    %v4643 = vpop.f32.mrb[0].mxu0
    %v4644 = vadd.f32 %v4571, %v4643
    %4645 = vdwg.mxu0
    %4646 = vmatprep.subr.bf16.mxu0 %v4117
    %4647 = vmatpush1.bf16.msra.mxu0 %v4116
    %4648 = vmatprep.subr.bf16.mxu0 %v4123
    %4649 = vmatpush1.bf16.msra.mxu0 %v4122
    %4650 = vmatprep.subr.bf16.mxu0 %v4129
    %4651 = vmatpush1.bf16.msra.mxu0 %v4128
    %4652 = vmatprep.subr.bf16.mxu0 %v4135
    %4653 = vmatpush1.bf16.msra.mxu0 %v4134
    %4654 = vmatprep.subr.bf16.mxu0 %v4141
    %4655 = vmatpush1.bf16.msra.mxu0 %v4140
    %4656 = vmatprep.subr.bf16.mxu0 %v4147
    %4657 = vmatpush1.bf16.msra.mxu0 %v4146
    %4658 = vmatprep.subr.bf16.mxu0 %v4153
    %4659 = vmatpush1.bf16.msra.mxu0 %v4152
    %4660 = vmatprep.subr.bf16.mxu0 %v4159
    %4661 = vmatpush1.bf16.msra.mxu0 %v4158
    %4662 = vmatprep.subr.bf16.mxu0 %v4165
    %4663 = vmatpush1.bf16.msra.mxu0 %v4164
    %4664 = vmatprep.subr.bf16.mxu0 %v4171
    %4665 = vmatpush1.bf16.msra.mxu0 %v4170
    %4666 = vmatprep.subr.bf16.mxu0 %v4177
    %4667 = vmatpush1.bf16.msra.mxu0 %v4176
    %4668 = vmatprep.subr.bf16.mxu0 %v4183
    %4669 = vmatpush1.bf16.msra.mxu0 %v4182
    %4670 = vmatprep.subr.bf16.mxu0 %v4189
    %4671 = vmatpush1.bf16.msra.mxu0 %v4188
    %4672 = vmatprep.subr.bf16.mxu0 %v4195
    %4673 = vmatpush1.bf16.msra.mxu0 %v4194
    %4674 = vmatprep.subr.bf16.mxu0 %v4201
    %4675 = vmatpush1.bf16.msra.mxu0 %v4200
    %4676 = vmatprep.subr.bf16.mxu0 %v4207
    %4677 = vmatpush1.bf16.msra.mxu0 %v4206
    %4678 = vmatprep.mubr.bf16.mxu0 %v2719
    %4679 = vmatmul.mubr.bf16.gmra.mrb[0].mxu0 %v2718
    %v4680 = vpop.f32.mrb[0].mxu0
    %v4681 = vadd.f32 %v4608, %v4680
    %v4682 = vpop.f32.mrb[0].mxu0
    %v4683 = vadd.f32 %v4610, %v4682
    %v4684 = vpop.f32.mrb[0].mxu0
    %v4685 = vadd.f32 %v4612, %v4684
    %v4686 = vpop.f32.mrb[0].mxu0
    %v4687 = vadd.f32 %v4614, %v4686
    %4688 = vmatprep.mubr.bf16.mxu0 %v2725
    %4689 = vmatmul.mubr.bf16.gmra.mrb[0].mxu0 %v2724
    %v4690 = vpop.f32.mrb[0].mxu0
    %v4691 = vadd.f32 %v4618, %v4690
    %v4692 = vpop.f32.mrb[0].mxu0
    %v4693 = vadd.f32 %v4620, %v4692
    %v4694 = vpop.f32.mrb[0].mxu0
    %v4695 = vadd.f32 %v4622, %v4694
    %v4696 = vpop.f32.mrb[0].mxu0
    %v4697 = vadd.f32 %v4624, %v4696
    %4698 = vmatprep.mubr.bf16.mxu0 %v2731
    %4699 = vmatmul.mubr.bf16.gmra.mrb[0].mxu0 %v2730
    %v4700 = vpop.f32.mrb[0].mxu0
    %v4701 = vadd.f32 %v4628, %v4700
    %v4702 = vpop.f32.mrb[0].mxu0
    %v4703 = vadd.f32 %v4630, %v4702
    %v4704 = vpop.f32.mrb[0].mxu0
    %v4705 = vadd.f32 %v4632, %v4704
    %v4706 = vpop.f32.mrb[0].mxu0
    %v4707 = vadd.f32 %v4634, %v4706
    %4708 = vmatprep.mubr.bf16.mxu0 %v2737
    %4709 = vmatmul.mubr.bf16.gmra.mrb[0].mxu0 %v2736
    %v4710 = vpop.f32.mrb[0].mxu0
    %v4711 = vadd.f32 %v4638, %v4710
    %v4712 = vpop.f32.mrb[0].mxu0
    %v4713 = vadd.f32 %v4640, %v4712
    %v4714 = vpop.f32.mrb[0].mxu0
    %v4715 = vadd.f32 %v4642, %v4714
    %v4716 = vpop.f32.mrb[0].mxu0
    %v4717 = vadd.f32 %v4644, %v4716
    %4718 = vdwg.mxu0
    %4719 = vmatprep.subr.bf16.mxu0 %v3927
    %4720 = vmatpush1.bf16.msra.mxu0 %v3926
    %4721 = vmatprep.subr.bf16.mxu0 %v3933
    %4722 = vmatpush1.bf16.msra.mxu0 %v3932
    %4723 = vmatprep.subr.bf16.mxu0 %v3939
    %4724 = vmatpush1.bf16.msra.mxu0 %v3938
    %4725 = vmatprep.subr.bf16.mxu0 %v3945
    %4726 = vmatpush1.bf16.msra.mxu0 %v3944
    %4727 = vmatprep.subr.bf16.mxu0 %v3951
    %4728 = vmatpush1.bf16.msra.mxu0 %v3950
    %4729 = vmatprep.subr.bf16.mxu0 %v3957
    %4730 = vmatpush1.bf16.msra.mxu0 %v3956
    %4731 = vmatprep.subr.bf16.mxu0 %v3963
    %4732 = vmatpush1.bf16.msra.mxu0 %v3962
    %4733 = vmatprep.subr.bf16.mxu0 %v3969
    %4734 = vmatpush1.bf16.msra.mxu0 %v3968
    %4735 = vmatprep.subr.bf16.mxu0 %v3975
    %4736 = vmatpush1.bf16.msra.mxu0 %v3974
    %4737 = vmatprep.subr.bf16.mxu0 %v3981
    %4738 = vmatpush1.bf16.msra.mxu0 %v3980
    %4739 = vmatprep.subr.bf16.mxu0 %v3987
    %4740 = vmatpush1.bf16.msra.mxu0 %v3986
    %4741 = vmatprep.subr.bf16.mxu0 %v3993
    %4742 = vmatpush1.bf16.msra.mxu0 %v3992
    %4743 = vmatprep.subr.bf16.mxu0 %v3999
    %4744 = vmatpush1.bf16.msra.mxu0 %v3998
    %4745 = vmatprep.subr.bf16.mxu0 %v4005
    %4746 = vmatpush1.bf16.msra.mxu0 %v4004
    %4747 = vmatprep.subr.bf16.mxu0 %v4011
    %4748 = vmatpush1.bf16.msra.mxu0 %v4010
    %4749 = vmatprep.subr.bf16.mxu0 %v4017
    %4750 = vmatpush1.bf16.msra.mxu0 %v4016
    %4751 = vmatprep.mubr.bf16.mxu0 %v2715
    %4752 = vmatmul.mubr.bf16.gmra.mrb[0].mxu0 %v2714
    %v4753 = vpop.f32.mrb[0].mxu0
    %v4754 = vadd.f32 %v3041, %v4753
    %v4755 = vpop.f32.mrb[0].mxu0
    %v4756 = vadd.f32 %v3045, %v4755
    %v4757 = vpop.f32.mrb[0].mxu0
    %v4758 = vadd.f32 %v3041, %v4757
    %v4759 = vpop.f32.mrb[0].mxu0
    %v4760 = vadd.f32 %v3045, %v4759
    %4761 = vmatprep.mubr.bf16.mxu0 %v2721
    %4762 = vmatmul.mubr.bf16.gmra.mrb[0].mxu0 %v2720
    %v4763 = vpop.f32.mrb[0].mxu0
    %v4764 = vadd.f32 %v3041, %v4763
    %v4765 = vpop.f32.mrb[0].mxu0
    %v4766 = vadd.f32 %v3045, %v4765
    %v4767 = vpop.f32.mrb[0].mxu0
    %v4768 = vadd.f32 %v3041, %v4767
    %v4769 = vpop.f32.mrb[0].mxu0
    %v4770 = vadd.f32 %v3045, %v4769
    %4771 = vmatprep.mubr.bf16.mxu0 %v2727
    %4772 = vmatmul.mubr.bf16.gmra.mrb[0].mxu0 %v2726
    %v4773 = vpop.f32.mrb[0].mxu0
    %v4774 = vadd.f32 %v3041, %v4773
    %v4775 = vpop.f32.mrb[0].mxu0
    %v4776 = vadd.f32 %v3045, %v4775
    %v4777 = vpop.f32.mrb[0].mxu0
    %v4778 = vadd.f32 %v3041, %v4777
    %v4779 = vpop.f32.mrb[0].mxu0
    %v4780 = vadd.f32 %v3045, %v4779
    %4781 = vmatprep.mubr.bf16.mxu0 %v2733
    %4782 = vmatmul.mubr.bf16.gmra.mrb[0].mxu0 %v2732
    %v4783 = vpop.f32.mrb[0].mxu0
    %v4784 = vadd.f32 %v3041, %v4783
    %v4785 = vpop.f32.mrb[0].mxu0
    %v4786 = vadd.f32 %v3045, %v4785
    %v4787 = vpop.f32.mrb[0].mxu0
    %v4788 = vadd.f32 %v3041, %v4787
    %v4789 = vpop.f32.mrb[0].mxu0
    %v4790 = vadd.f32 %v3045, %v4789
    %4791 = vdwg.mxu0
    %4792 = vmatprep.subr.bf16.mxu0 %v4023
    %4793 = vmatpush1.bf16.msra.mxu0 %v4022
    %4794 = vmatprep.subr.bf16.mxu0 %v4029
    %4795 = vmatpush1.bf16.msra.mxu0 %v4028
    %4796 = vmatprep.subr.bf16.mxu0 %v4035
    %4797 = vmatpush1.bf16.msra.mxu0 %v4034
    %4798 = vmatprep.subr.bf16.mxu0 %v4041
    %4799 = vmatpush1.bf16.msra.mxu0 %v4040
    %4800 = vmatprep.subr.bf16.mxu0 %v4047
    %4801 = vmatpush1.bf16.msra.mxu0 %v4046
    %4802 = vmatprep.subr.bf16.mxu0 %v4053
    %4803 = vmatpush1.bf16.msra.mxu0 %v4052
    %4804 = vmatprep.subr.bf16.mxu0 %v4059
    %4805 = vmatpush1.bf16.msra.mxu0 %v4058
    %4806 = vmatprep.subr.bf16.mxu0 %v4065
    %4807 = vmatpush1.bf16.msra.mxu0 %v4064
    %4808 = vmatprep.subr.bf16.mxu0 %v4071
    %4809 = vmatpush1.bf16.msra.mxu0 %v4070
    %4810 = vmatprep.subr.bf16.mxu0 %v4077
    %4811 = vmatpush1.bf16.msra.mxu0 %v4076
    %4812 = vmatprep.subr.bf16.mxu0 %v4083
    %4813 = vmatpush1.bf16.msra.mxu0 %v4082
    %4814 = vmatprep.subr.bf16.mxu0 %v4089
    %4815 = vmatpush1.bf16.msra.mxu0 %v4088
    %4816 = vmatprep.subr.bf16.mxu0 %v4095
    %4817 = vmatpush1.bf16.msra.mxu0 %v4094
    %4818 = vmatprep.subr.bf16.mxu0 %v4101
    %4819 = vmatpush1.bf16.msra.mxu0 %v4100
    %4820 = vmatprep.subr.bf16.mxu0 %v4107
    %4821 = vmatpush1.bf16.msra.mxu0 %v4106
    %4822 = vmatprep.subr.bf16.mxu0 %v4113
    %4823 = vmatpush1.bf16.msra.mxu0 %v4112
    %4824 = vmatprep.mubr.bf16.mxu0 %v2717
    %4825 = vmatmul.mubr.bf16.gmra.mrb[0].mxu0 %v2716
    %v4826 = vpop.f32.mrb[0].mxu0
    %v4827 = vadd.f32 %v4754, %v4826
    %v4828 = vpop.f32.mrb[0].mxu0
    %v4829 = vadd.f32 %v4756, %v4828
    %v4830 = vpop.f32.mrb[0].mxu0
    %v4831 = vadd.f32 %v4758, %v4830
    %v4832 = vpop.f32.mrb[0].mxu0
    %v4833 = vadd.f32 %v4760, %v4832
    %4834 = vmatprep.mubr.bf16.mxu0 %v2723
    %4835 = vmatmul.mubr.bf16.gmra.mrb[0].mxu0 %v2722
    %v4836 = vpop.f32.mrb[0].mxu0
    %v4837 = vadd.f32 %v4764, %v4836
    %v4838 = vpop.f32.mrb[0].mxu0
    %v4839 = vadd.f32 %v4766, %v4838
    %v4840 = vpop.f32.mrb[0].mxu0
    %v4841 = vadd.f32 %v4768, %v4840
    %v4842 = vpop.f32.mrb[0].mxu0
    %v4843 = vadd.f32 %v4770, %v4842
    %4844 = vmatprep.mubr.bf16.mxu0 %v2729
    %4845 = vmatmul.mubr.bf16.gmra.mrb[0].mxu0 %v2728
    %v4846 = vpop.f32.mrb[0].mxu0
    %v4847 = vadd.f32 %v4774, %v4846
    %v4848 = vpop.f32.mrb[0].mxu0
    %v4849 = vadd.f32 %v4776, %v4848
    %v4850 = vpop.f32.mrb[0].mxu0
    %v4851 = vadd.f32 %v4778, %v4850
    %v4852 = vpop.f32.mrb[0].mxu0
    %v4853 = vadd.f32 %v4780, %v4852
    %4854 = vmatprep.mubr.bf16.mxu0 %v2735
    %4855 = vmatmul.mubr.bf16.gmra.mrb[0].mxu0 %v2734
    %v4856 = vpop.f32.mrb[0].mxu0
    %v4857 = vadd.f32 %v4784, %v4856
    %v4858 = vpop.f32.mrb[0].mxu0
    %v4859 = vadd.f32 %v4786, %v4858
    %v4860 = vpop.f32.mrb[0].mxu0
    %v4861 = vadd.f32 %v4788, %v4860
    %v4862 = vpop.f32.mrb[0].mxu0
    %v4863 = vadd.f32 %v4790, %v4862
    %4864 = vdwg.mxu0
    %4865 = vmatprep.subr.bf16.mxu0 %v4119
    %4866 = vmatpush1.bf16.msra.mxu0 %v4118
    %4867 = vmatprep.subr.bf16.mxu0 %v4125
    %4868 = vmatpush1.bf16.msra.mxu0 %v4124
    %4869 = vmatprep.subr.bf16.mxu0 %v4131
    %4870 = vmatpush1.bf16.msra.mxu0 %v4130
    %4871 = vmatprep.subr.bf16.mxu0 %v4137
    %4872 = vmatpush1.bf16.msra.mxu0 %v4136
    %4873 = vmatprep.subr.bf16.mxu0 %v4143
    %4874 = vmatpush1.bf16.msra.mxu0 %v4142
    %4875 = vmatprep.subr.bf16.mxu0 %v4149
    %4876 = vmatpush1.bf16.msra.mxu0 %v4148
    %4877 = vmatprep.subr.bf16.mxu0 %v4155
    %4878 = vmatpush1.bf16.msra.mxu0 %v4154
    %4879 = vmatprep.subr.bf16.mxu0 %v4161
    %4880 = vmatpush1.bf16.msra.mxu0 %v4160
    %4881 = vmatprep.subr.bf16.mxu0 %v4167
    %4882 = vmatpush1.bf16.msra.mxu0 %v4166
    %4883 = vmatprep.subr.bf16.mxu0 %v4173
    %4884 = vmatpush1.bf16.msra.mxu0 %v4172
    %4885 = vmatprep.subr.bf16.mxu0 %v4179
    %4886 = vmatpush1.bf16.msra.mxu0 %v4178
    %4887 = vmatprep.subr.bf16.mxu0 %v4185
    %4888 = vmatpush1.bf16.msra.mxu0 %v4184
    %4889 = vmatprep.subr.bf16.mxu0 %v4191
    %4890 = vmatpush1.bf16.msra.mxu0 %v4190
    %4891 = vmatprep.subr.bf16.mxu0 %v4197
    %4892 = vmatpush1.bf16.msra.mxu0 %v4196
    %4893 = vmatprep.subr.bf16.mxu0 %v4203
    %4894 = vmatpush1.bf16.msra.mxu0 %v4202
    %4895 = vmatprep.subr.bf16.mxu0 %v4209
    %4896 = vmatpush1.bf16.msra.mxu0 %v4208
    %4897 = vmatprep.mubr.bf16.mxu0 %v2719
    %4898 = vmatmul.mubr.bf16.gmra.mrb[0].mxu0 %v2718
    %v4899 = vpop.f32.mrb[0].mxu0
    %v4900 = vadd.f32 %v4827, %v4899
    %v4901 = vpop.f32.mrb[0].mxu0
    %v4902 = vadd.f32 %v4829, %v4901
    %v4903 = vpop.f32.mrb[0].mxu0
    %v4904 = vadd.f32 %v4831, %v4903
    %v4905 = vpop.f32.mrb[0].mxu0
    %v4906 = vadd.f32 %v4833, %v4905
    %4907 = vmatprep.mubr.bf16.mxu0 %v2725
    %4908 = vmatmul.mubr.bf16.gmra.mrb[0].mxu0 %v2724
    %v4909 = vpop.f32.mrb[0].mxu0
    %v4910 = vadd.f32 %v4837, %v4909
    %v4911 = vpop.f32.mrb[0].mxu0
    %v4912 = vadd.f32 %v4839, %v4911
    %v4913 = vpop.f32.mrb[0].mxu0
    %v4914 = vadd.f32 %v4841, %v4913
    %v4915 = vpop.f32.mrb[0].mxu0
    %v4916 = vadd.f32 %v4843, %v4915
    %4917 = vmatprep.mubr.bf16.mxu0 %v2731
    %4918 = vmatmul.mubr.bf16.gmra.mrb[0].mxu0 %v2730
    %v4919 = vpop.f32.mrb[0].mxu0
    %v4920 = vadd.f32 %v4847, %v4919
    %v4921 = vpop.f32.mrb[0].mxu0
    %v4922 = vadd.f32 %v4849, %v4921
    %v4923 = vpop.f32.mrb[0].mxu0
    %v4924 = vadd.f32 %v4851, %v4923
    %v4925 = vpop.f32.mrb[0].mxu0
    %v4926 = vadd.f32 %v4853, %v4925
    %4927 = vmatprep.mubr.bf16.mxu0 %v2737
    %4928 = vmatmul.mubr.bf16.gmra.mrb[0].mxu0 %v2736
    %v4929 = vpop.f32.mrb[0].mxu0
    %v4930 = vadd.f32 %v4857, %v4929
    %v4931 = vpop.f32.mrb[0].mxu0
    %v4932 = vadd.f32 %v4859, %v4931
    %v4933 = vpop.f32.mrb[0].mxu0
    %v4934 = vadd.f32 %v4861, %v4933
    %v4935 = vpop.f32.mrb[0].mxu0
    %v4936 = vadd.f32 %v4863, %v4935
    %4937 = vdwg.mxu0
    %4938 = vmatprep.subr.bf16.mxu0 %v3929
    %4939 = vmatpush1.bf16.msra.mxu0 %v3928
    %4940 = vmatprep.subr.bf16.mxu0 %v3935
    %4941 = vmatpush1.bf16.msra.mxu0 %v3934
    %4942 = vmatprep.subr.bf16.mxu0 %v3941
    %4943 = vmatpush1.bf16.msra.mxu0 %v3940
    %4944 = vmatprep.subr.bf16.mxu0 %v3947
    %4945 = vmatpush1.bf16.msra.mxu0 %v3946
    %4946 = vmatprep.subr.bf16.mxu0 %v3953
    %4947 = vmatpush1.bf16.msra.mxu0 %v3952
    %4948 = vmatprep.subr.bf16.mxu0 %v3959
    %4949 = vmatpush1.bf16.msra.mxu0 %v3958
    %4950 = vmatprep.subr.bf16.mxu0 %v3965
    %4951 = vmatpush1.bf16.msra.mxu0 %v3964
    %4952 = vmatprep.subr.bf16.mxu0 %v3971
    %4953 = vmatpush1.bf16.msra.mxu0 %v3970
    %4954 = vmatprep.subr.bf16.mxu0 %v3977
    %4955 = vmatpush1.bf16.msra.mxu0 %v3976
    %4956 = vmatprep.subr.bf16.mxu0 %v3983
    %4957 = vmatpush1.bf16.msra.mxu0 %v3982
    %4958 = vmatprep.subr.bf16.mxu0 %v3989
    %4959 = vmatpush1.bf16.msra.mxu0 %v3988
    %4960 = vmatprep.subr.bf16.mxu0 %v3995
    %4961 = vmatpush1.bf16.msra.mxu0 %v3994
    %4962 = vmatprep.subr.bf16.mxu0 %v4001
    %4963 = vmatpush1.bf16.msra.mxu0 %v4000
    %4964 = vmatprep.subr.bf16.mxu0 %v4007
    %4965 = vmatpush1.bf16.msra.mxu0 %v4006
    %4966 = vmatprep.subr.bf16.mxu0 %v4013
    %4967 = vmatpush1.bf16.msra.mxu0 %v4012
    %4968 = vmatprep.subr.bf16.mxu0 %v4019
    %4969 = vmatpush1.bf16.msra.mxu0 %v4018
    %4970 = vmatprep.mubr.bf16.mxu0 %v2715
    %4971 = vmatmul.mubr.bf16.gmra.mrb[0].mxu0 %v2714
    %v4972 = vpop.f32.mrb[0].mxu0
    %v4973 = vadd.f32 %v3049, %v4972
    %v4974 = vpop.f32.mrb[0].mxu0
    %v4975 = vadd.f32 %v3053, %v4974
    %v4976 = vpop.f32.mrb[0].mxu0
    %v4977 = vadd.f32 %v3049, %v4976
    %v4978 = vpop.f32.mrb[0].mxu0
    %v4979 = vadd.f32 %v3053, %v4978
    %4980 = vmatprep.mubr.bf16.mxu0 %v2721
    %4981 = vmatmul.mubr.bf16.gmra.mrb[0].mxu0 %v2720
    %v4982 = vpop.f32.mrb[0].mxu0
    %v4983 = vadd.f32 %v3049, %v4982
    %v4984 = vpop.f32.mrb[0].mxu0
    %v4985 = vadd.f32 %v3053, %v4984
    %v4986 = vpop.f32.mrb[0].mxu0
    %v4987 = vadd.f32 %v3049, %v4986
    %v4988 = vpop.f32.mrb[0].mxu0
    %v4989 = vadd.f32 %v3053, %v4988
    %4990 = vmatprep.mubr.bf16.mxu0 %v2727
    %4991 = vmatmul.mubr.bf16.gmra.mrb[0].mxu0 %v2726
    %v4992 = vpop.f32.mrb[0].mxu0
    %v4993 = vadd.f32 %v3049, %v4992
    %v4994 = vpop.f32.mrb[0].mxu0
    %v4995 = vadd.f32 %v3053, %v4994
    %v4996 = vpop.f32.mrb[0].mxu0
    %v4997 = vadd.f32 %v3049, %v4996
    %v4998 = vpop.f32.mrb[0].mxu0
    %v4999 = vadd.f32 %v3053, %v4998
    %5000 = vmatprep.mubr.bf16.mxu0 %v2733
    %5001 = vmatmul.mubr.bf16.gmra.mrb[0].mxu0 %v2732
    %v5002 = vpop.f32.mrb[0].mxu0
    %v5003 = vadd.f32 %v3049, %v5002
    %v5004 = vpop.f32.mrb[0].mxu0
    %v5005 = vadd.f32 %v3053, %v5004
    %v5006 = vpop.f32.mrb[0].mxu0
    %v5007 = vadd.f32 %v3049, %v5006
    %v5008 = vpop.f32.mrb[0].mxu0
    %v5009 = vadd.f32 %v3053, %v5008
    %5010 = vdwg.mxu0
    %5011 = vmatprep.subr.bf16.mxu0 %v4025
    %5012 = vmatpush1.bf16.msra.mxu0 %v4024
    %5013 = vmatprep.subr.bf16.mxu0 %v4031
    %5014 = vmatpush1.bf16.msra.mxu0 %v4030
    %5015 = vmatprep.subr.bf16.mxu0 %v4037
    %5016 = vmatpush1.bf16.msra.mxu0 %v4036
    %5017 = vmatprep.subr.bf16.mxu0 %v4043
    %5018 = vmatpush1.bf16.msra.mxu0 %v4042
    %5019 = vmatprep.subr.bf16.mxu0 %v4049
    %5020 = vmatpush1.bf16.msra.mxu0 %v4048
    %5021 = vmatprep.subr.bf16.mxu0 %v4055
    %5022 = vmatpush1.bf16.msra.mxu0 %v4054
    %5023 = vmatprep.subr.bf16.mxu0 %v4061
    %5024 = vmatpush1.bf16.msra.mxu0 %v4060
    %5025 = vmatprep.subr.bf16.mxu0 %v4067
    %5026 = vmatpush1.bf16.msra.mxu0 %v4066
    %5027 = vmatprep.subr.bf16.mxu0 %v4073
    %5028 = vmatpush1.bf16.msra.mxu0 %v4072
    %5029 = vmatprep.subr.bf16.mxu0 %v4079
    %5030 = vmatpush1.bf16.msra.mxu0 %v4078
    %5031 = vmatprep.subr.bf16.mxu0 %v4085
    %5032 = vmatpush1.bf16.msra.mxu0 %v4084
    %5033 = vmatprep.subr.bf16.mxu0 %v4091
    %5034 = vmatpush1.bf16.msra.mxu0 %v4090
    %5035 = vmatprep.subr.bf16.mxu0 %v4097
    %5036 = vmatpush1.bf16.msra.mxu0 %v4096
    %5037 = vmatprep.subr.bf16.mxu0 %v4103
    %5038 = vmatpush1.bf16.msra.mxu0 %v4102
    %5039 = vmatprep.subr.bf16.mxu0 %v4109
    %5040 = vmatpush1.bf16.msra.mxu0 %v4108
    %5041 = vmatprep.subr.bf16.mxu0 %v4115
    %5042 = vmatpush1.bf16.msra.mxu0 %v4114
    %5043 = vmatprep.mubr.bf16.mxu0 %v2717
    %5044 = vmatmul.mubr.bf16.gmra.mrb[0].mxu0 %v2716
    %v5045 = vpop.f32.mrb[0].mxu0
    %v5046 = vadd.f32 %v4973, %v5045
    %v5047 = vpop.f32.mrb[0].mxu0
    %v5048 = vadd.f32 %v4975, %v5047
    %v5049 = vpop.f32.mrb[0].mxu0
    %v5050 = vadd.f32 %v4977, %v5049
    %v5051 = vpop.f32.mrb[0].mxu0
    %v5052 = vadd.f32 %v4979, %v5051
    %5053 = vmatprep.mubr.bf16.mxu0 %v2723
    %5054 = vmatmul.mubr.bf16.gmra.mrb[0].mxu0 %v2722
    %v5055 = vpop.f32.mrb[0].mxu0
    %v5056 = vadd.f32 %v4983, %v5055
    %v5057 = vpop.f32.mrb[0].mxu0
    %v5058 = vadd.f32 %v4985, %v5057
    %v5059 = vpop.f32.mrb[0].mxu0
    %v5060 = vadd.f32 %v4987, %v5059
    %v5061 = vpop.f32.mrb[0].mxu0
    %v5062 = vadd.f32 %v4989, %v5061
    %5063 = vmatprep.mubr.bf16.mxu0 %v2729
    %5064 = vmatmul.mubr.bf16.gmra.mrb[0].mxu0 %v2728
    %v5065 = vpop.f32.mrb[0].mxu0
    %v5066 = vadd.f32 %v4993, %v5065
    %v5067 = vpop.f32.mrb[0].mxu0
    %v5068 = vadd.f32 %v4995, %v5067
    %v5069 = vpop.f32.mrb[0].mxu0
    %v5070 = vadd.f32 %v4997, %v5069
    %v5071 = vpop.f32.mrb[0].mxu0
    %v5072 = vadd.f32 %v4999, %v5071
    %5073 = vmatprep.mubr.bf16.mxu0 %v2735
    %5074 = vmatmul.mubr.bf16.gmra.mrb[0].mxu0 %v2734
    %v5075 = vpop.f32.mrb[0].mxu0
    %v5076 = vadd.f32 %v5003, %v5075
    %v5077 = vpop.f32.mrb[0].mxu0
    %v5078 = vadd.f32 %v5005, %v5077
    %v5079 = vpop.f32.mrb[0].mxu0
    %v5080 = vadd.f32 %v5007, %v5079
    %v5081 = vpop.f32.mrb[0].mxu0
    %v5082 = vadd.f32 %v5009, %v5081
    %5083 = vdwg.mxu0
    %5084 = vmatprep.subr.bf16.mxu0 %v4121
    %5085 = vmatpush1.bf16.msra.mxu0 %v4120
    %5086 = vmatprep.subr.bf16.mxu0 %v4127
    %5087 = vmatpush1.bf16.msra.mxu0 %v4126
    %5088 = vmatprep.subr.bf16.mxu0 %v4133
    %5089 = vmatpush1.bf16.msra.mxu0 %v4132
    %5090 = vmatprep.subr.bf16.mxu0 %v4139
    %5091 = vmatpush1.bf16.msra.mxu0 %v4138
    %5092 = vmatprep.subr.bf16.mxu0 %v4145
    %5093 = vmatpush1.bf16.msra.mxu0 %v4144
    %5094 = vmatprep.subr.bf16.mxu0 %v4151
    %5095 = vmatpush1.bf16.msra.mxu0 %v4150
    %5096 = vmatprep.subr.bf16.mxu0 %v4157
    %5097 = vmatpush1.bf16.msra.mxu0 %v4156
    %5098 = vmatprep.subr.bf16.mxu0 %v4163
    %5099 = vmatpush1.bf16.msra.mxu0 %v4162
    %5100 = vmatprep.subr.bf16.mxu0 %v4169
    %5101 = vmatpush1.bf16.msra.mxu0 %v4168
    %5102 = vmatprep.subr.bf16.mxu0 %v4175
    %5103 = vmatpush1.bf16.msra.mxu0 %v4174
    %5104 = vmatprep.subr.bf16.mxu0 %v4181
    %5105 = vmatpush1.bf16.msra.mxu0 %v4180
    %5106 = vmatprep.subr.bf16.mxu0 %v4187
    %5107 = vmatpush1.bf16.msra.mxu0 %v4186
    %5108 = vmatprep.subr.bf16.mxu0 %v4193
    %5109 = vmatpush1.bf16.msra.mxu0 %v4192
    %5110 = vmatprep.subr.bf16.mxu0 %v4199
    %5111 = vmatpush1.bf16.msra.mxu0 %v4198
    %5112 = vmatprep.subr.bf16.mxu0 %v4205
    %5113 = vmatpush1.bf16.msra.mxu0 %v4204
    %5114 = vmatprep.subr.bf16.mxu0 %v4211
    %5115 = vmatpush1.bf16.msra.mxu0 %v4210
    %5116 = vmatprep.mubr.bf16.mxu0 %v2719
    %5117 = vmatmul.mubr.bf16.gmra.mrb[0].mxu0 %v2718
    %v5118 = vpop.f32.mrb[0].mxu0
    %v5119 = vadd.f32 %v5046, %v5118
    %v5120 = vpop.f32.mrb[0].mxu0
    %v5121 = vadd.f32 %v5048, %v5120
    %v5122 = vpop.f32.mrb[0].mxu0
    %v5123 = vadd.f32 %v5050, %v5122
    %v5124 = vpop.f32.mrb[0].mxu0
    %v5125 = vadd.f32 %v5052, %v5124
    %5126 = vmatprep.mubr.bf16.mxu0 %v2725
    %5127 = vmatmul.mubr.bf16.gmra.mrb[0].mxu0 %v2724
    %v5128 = vpop.f32.mrb[0].mxu0
    %v5129 = vadd.f32 %v5056, %v5128
    %v5130 = vpop.f32.mrb[0].mxu0
    %v5131 = vadd.f32 %v5058, %v5130
    %v5132 = vpop.f32.mrb[0].mxu0
    %v5133 = vadd.f32 %v5060, %v5132
    %v5134 = vpop.f32.mrb[0].mxu0
    %v5135 = vadd.f32 %v5062, %v5134
    %5136 = vmatprep.mubr.bf16.mxu0 %v2731
    %5137 = vmatmul.mubr.bf16.gmra.mrb[0].mxu0 %v2730
    %v5138 = vpop.f32.mrb[0].mxu0
    %v5139 = vadd.f32 %v5066, %v5138
    %v5140 = vpop.f32.mrb[0].mxu0
    %v5141 = vadd.f32 %v5068, %v5140
    %v5142 = vpop.f32.mrb[0].mxu0
    %v5143 = vadd.f32 %v5070, %v5142
    %v5144 = vpop.f32.mrb[0].mxu0
    %v5145 = vadd.f32 %v5072, %v5144
    %5146 = vmatprep.mubr.bf16.mxu0 %v2737
    %5147 = vmatmul.mubr.bf16.gmra.mrb[0].mxu0 %v2736
    %v5148 = vpop.f32.mrb[0].mxu0
    %v5149 = vadd.f32 %v5076, %v5148
    %v5150 = vpop.f32.mrb[0].mxu0
    %v5151 = vadd.f32 %v5078, %v5150
    %v5152 = vpop.f32.mrb[0].mxu0
    %v5153 = vadd.f32 %v5080, %v5152
    %v5154 = vpop.f32.mrb[0].mxu0
    %v5155 = vadd.f32 %v5082, %v5154
    %5156 = vdwg.mxu0
    %5157 = vst [vmem:[#allocation5] sm:$0xff] %v4681
    %5158 = vst [vmem:[#allocation5 + $0x8] sm:$0xff] %v4683
    %5159 = vst [vmem:[#allocation5 + $0x10] sm:$0xff] %v4900
    %5160 = vst [vmem:[#allocation5 + $0x18] sm:$0xff] %v4902
    %5161 = vst [vmem:[#allocation5 + $0x20] sm:$0xff] %v5119
    %5162 = vst [vmem:[#allocation5 + $0x28] sm:$0xff] %v5121
    %5163 = vst [vmem:[#allocation5 + $0x30] sm:$0xff] %v4685
    %5164 = vst [vmem:[#allocation5 + $0x38] sm:$0xff] %v4687
    %5165 = vst [vmem:[#allocation5 + $0x40] sm:$0xff] %v4904
    %5166 = vst [vmem:[#allocation5 + $0x48] sm:$0xff] %v4906
    %5167 = vst [vmem:[#allocation5 + $0x50] sm:$0xff] %v5123
    %5168 = vst [vmem:[#allocation5 + $0x58] sm:$0xff] %v5125
    %5169 = vst [vmem:[#allocation5 + $0x60] sm:$0xff] %v4691
    %5170 = vst [vmem:[#allocation5 + $0x68] sm:$0xff] %v4693
    %5171 = vst [vmem:[#allocation5 + $0x70] sm:$0xff] %v4910
    %5172 = vst [vmem:[#allocation5 + $0x78] sm:$0xff] %v4912
    %5173 = vst [vmem:[#allocation5 + $0x80] sm:$0xff] %v5129
    %5174 = vst [vmem:[#allocation5 + $0x88] sm:$0xff] %v5131
    %5175 = vst [vmem:[#allocation5 + $0x90] sm:$0xff] %v4695
    %5176 = vst [vmem:[#allocation5 + $0x98] sm:$0xff] %v4697
    %5177 = vst [vmem:[#allocation5 + $0xa0] sm:$0xff] %v4914
    %5178 = vst [vmem:[#allocation5 + $0xa8] sm:$0xff] %v4916
    %5179 = vst [vmem:[#allocation5 + $0xb0] sm:$0xff] %v5133
    %5180 = vst [vmem:[#allocation5 + $0xb8] sm:$0xff] %v5135
    %5181 = vst [vmem:[#allocation5 + $0xc0] sm:$0xff] %v4701
    %5182 = vst [vmem:[#allocation5 + $0xc8] sm:$0xff] %v4703
    %5183 = vst [vmem:[#allocation5 + $0xd0] sm:$0xff] %v4920
    %5184 = vst [vmem:[#allocation5 + $0xd8] sm:$0xff] %v4922
    %5185 = vst [vmem:[#allocation5 + $0xe0] sm:$0xff] %v5139
    %5186 = vst [vmem:[#allocation5 + $0xe8] sm:$0xff] %v5141
    %5187 = vst [vmem:[#allocation5 + $0xf0] sm:$0xff] %v4705
    %5188 = vst [vmem:[#allocation5 + $0xf8] sm:$0xff] %v4707
    %5189 = vst [vmem:[#allocation5 + $0x100] sm:$0xff] %v4924
    %5190 = vst [vmem:[#allocation5 + $0x108] sm:$0xff] %v4926
    %5191 = vst [vmem:[#allocation5 + $0x110] sm:$0xff] %v5143
    %5192 = vst [vmem:[#allocation5 + $0x118] sm:$0xff] %v5145
    %5193 = vst [vmem:[#allocation5 + $0x120] sm:$0xff] %v4711
    %5194 = vst [vmem:[#allocation5 + $0x128] sm:$0xff] %v4713
    %5195 = vst [vmem:[#allocation5 + $0x130] sm:$0xff] %v4930
    %5196 = vst [vmem:[#allocation5 + $0x138] sm:$0xff] %v4932
    %5197 = vst [vmem:[#allocation5 + $0x140] sm:$0xff] %v5149
    %5198 = vst [vmem:[#allocation5 + $0x148] sm:$0xff] %v5151
    %5199 = vst [vmem:[#allocation5 + $0x150] sm:$0xff] %v4715
    %5200 = vst [vmem:[#allocation5 + $0x158] sm:$0xff] %v4717
    %5201 = vst [vmem:[#allocation5 + $0x160] sm:$0xff] %v4934
    %5202 = vst [vmem:[#allocation5 + $0x168] sm:$0xff] %v4936
    %5203 = vst [vmem:[#allocation5 + $0x170] sm:$0xff] %v5153
    %5204 = vst [vmem:[#allocation5 + $0x178] sm:$0xff] %v5155
    %v5205 = vld [vmem:[#allocation8] sm:$0xff]
    %v5206 = vld [vmem:[#allocation8 + $0x8] sm:$0xff]
    %v5207 = vld [vmem:[#allocation8 + $0x10] sm:$0xff]
    %v5208 = vld [vmem:[#allocation8 + $0x18] sm:$0xff]
    %v5209 = vld [vmem:[#allocation8 + $0x20] sm:$0xff]
    %v5210 = vld [vmem:[#allocation8 + $0x28] sm:$0xff]
    %v5211 = vld [vmem:[#allocation8 + $0x30] sm:$0xff]
    %v5212 = vld [vmem:[#allocation8 + $0x38] sm:$0xff]
    %v5213 = vld [vmem:[#allocation8 + $0x40] sm:$0xff]
    %v5214 = vld [vmem:[#allocation8 + $0x48] sm:$0xff]
    %v5215 = vld [vmem:[#allocation8 + $0x50] sm:$0xff]
    %v5216 = vld [vmem:[#allocation8 + $0x58] sm:$0xff]
    %v5217 = vld [vmem:[#allocation8 + $0x60] sm:$0xff]
    %v5218 = vld [vmem:[#allocation8 + $0x68] sm:$0xff]
    %v5219 = vld [vmem:[#allocation8 + $0x70] sm:$0xff]
    %v5220 = vld [vmem:[#allocation8 + $0x78] sm:$0xff]
    %v5221 = vld [vmem:[#allocation8 + $0x80] sm:$0xff]
    %v5222 = vld [vmem:[#allocation8 + $0x88] sm:$0xff]
    %v5223 = vld [vmem:[#allocation8 + $0x90] sm:$0xff]
    %v5224 = vld [vmem:[#allocation8 + $0x98] sm:$0xff]
    %v5225 = vld [vmem:[#allocation8 + $0xa0] sm:$0xff]
    %v5226 = vld [vmem:[#allocation8 + $0xa8] sm:$0xff]
    %v5227 = vld [vmem:[#allocation8 + $0xb0] sm:$0xff]
    %v5228 = vld [vmem:[#allocation8 + $0xb8] sm:$0xff]
    %v5229 = vld [vmem:[#allocation8 + $0xc0] sm:$0xff]
    %v5230 = vld [vmem:[#allocation8 + $0xc8] sm:$0xff]
    %v5231 = vld [vmem:[#allocation8 + $0xd0] sm:$0xff]
    %v5232 = vld [vmem:[#allocation8 + $0xd8] sm:$0xff]
    %v5233 = vld [vmem:[#allocation8 + $0xe0] sm:$0xff]
    %v5234 = vld [vmem:[#allocation8 + $0xe8] sm:$0xff]
    %v5235 = vld [vmem:[#allocation8 + $0xf0] sm:$0xff]
    %v5236 = vld [vmem:[#allocation8 + $0xf8] sm:$0xff]
    %v5237 = vld [vmem:[#allocation8 + $0x100] sm:$0xff]
    %v5238 = vld [vmem:[#allocation8 + $0x108] sm:$0xff]
    %v5239 = vld [vmem:[#allocation8 + $0x110] sm:$0xff]
    %v5240 = vld [vmem:[#allocation8 + $0x118] sm:$0xff]
    %v5241 = vld [vmem:[#allocation8 + $0x120] sm:$0xff]
    %v5242 = vld [vmem:[#allocation8 + $0x128] sm:$0xff]
    %v5243 = vld [vmem:[#allocation8 + $0x130] sm:$0xff]
    %v5244 = vld [vmem:[#allocation8 + $0x138] sm:$0xff]
    %v5245 = vld [vmem:[#allocation8 + $0x140] sm:$0xff]
    %v5246 = vld [vmem:[#allocation8 + $0x148] sm:$0xff]
    %v5247 = vld [vmem:[#allocation8 + $0x150] sm:$0xff]
    %v5248 = vld [vmem:[#allocation8 + $0x158] sm:$0xff]
    %v5249 = vld [vmem:[#allocation8 + $0x160] sm:$0xff]
    %v5250 = vld [vmem:[#allocation8 + $0x168] sm:$0xff]
    %v5251 = vld [vmem:[#allocation8 + $0x170] sm:$0xff]
    %v5252 = vld [vmem:[#allocation8 + $0x178] sm:$0xff]
    %v5253 = vld [vmem:[#allocation8 + $0x180] sm:$0xff]
    %v5254 = vld [vmem:[#allocation8 + $0x188] sm:$0xff]
    %v5255 = vld [vmem:[#allocation8 + $0x190] sm:$0xff]
    %v5256 = vld [vmem:[#allocation8 + $0x198] sm:$0xff]
    %v5257 = vld [vmem:[#allocation8 + $0x1a0] sm:$0xff]
    %v5258 = vld [vmem:[#allocation8 + $0x1a8] sm:$0xff]
    %v5259 = vld [vmem:[#allocation8 + $0x1b0] sm:$0xff]
    %v5260 = vld [vmem:[#allocation8 + $0x1b8] sm:$0xff]
    %v5261 = vld [vmem:[#allocation8 + $0x1c0] sm:$0xff]
    %v5262 = vld [vmem:[#allocation8 + $0x1c8] sm:$0xff]
    %v5263 = vld [vmem:[#allocation8 + $0x1d0] sm:$0xff]
    %v5264 = vld [vmem:[#allocation8 + $0x1d8] sm:$0xff]
    %v5265 = vld [vmem:[#allocation8 + $0x1e0] sm:$0xff]
    %v5266 = vld [vmem:[#allocation8 + $0x1e8] sm:$0xff]
    %v5267 = vld [vmem:[#allocation8 + $0x1f0] sm:$0xff]
    %v5268 = vld [vmem:[#allocation8 + $0x1f8] sm:$0xff]
    %v5269 = vld [vmem:[#allocation8 + $0x200] sm:$0xff]
    %v5270 = vld [vmem:[#allocation8 + $0x208] sm:$0xff]
    %v5271 = vld [vmem:[#allocation8 + $0x210] sm:$0xff]
    %v5272 = vld [vmem:[#allocation8 + $0x218] sm:$0xff]
    %v5273 = vld [vmem:[#allocation8 + $0x220] sm:$0xff]
    %v5274 = vld [vmem:[#allocation8 + $0x228] sm:$0xff]
    %v5275 = vld [vmem:[#allocation8 + $0x230] sm:$0xff]
    %v5276 = vld [vmem:[#allocation8 + $0x238] sm:$0xff]
    %v5277 = vld [vmem:[#allocation8 + $0x240] sm:$0xff]
    %v5278 = vld [vmem:[#allocation8 + $0x248] sm:$0xff]
    %v5279 = vld [vmem:[#allocation8 + $0x250] sm:$0xff]
    %v5280 = vld [vmem:[#allocation8 + $0x258] sm:$0xff]
    %v5281 = vld [vmem:[#allocation8 + $0x260] sm:$0xff]
    %v5282 = vld [vmem:[#allocation8 + $0x268] sm:$0xff]
    %v5283 = vld [vmem:[#allocation8 + $0x270] sm:$0xff]
    %v5284 = vld [vmem:[#allocation8 + $0x278] sm:$0xff]
    %v5285 = vld [vmem:[#allocation8 + $0x280] sm:$0xff]
    %v5286 = vld [vmem:[#allocation8 + $0x288] sm:$0xff]
    %v5287 = vld [vmem:[#allocation8 + $0x290] sm:$0xff]
    %v5288 = vld [vmem:[#allocation8 + $0x298] sm:$0xff]
    %v5289 = vld [vmem:[#allocation8 + $0x2a0] sm:$0xff]
    %v5290 = vld [vmem:[#allocation8 + $0x2a8] sm:$0xff]
    %v5291 = vld [vmem:[#allocation8 + $0x2b0] sm:$0xff]
    %v5292 = vld [vmem:[#allocation8 + $0x2b8] sm:$0xff]
    %v5293 = vld [vmem:[#allocation8 + $0x2c0] sm:$0xff]
    %v5294 = vld [vmem:[#allocation8 + $0x2c8] sm:$0xff]
    %v5295 = vld [vmem:[#allocation8 + $0x2d0] sm:$0xff]
    %v5296 = vld [vmem:[#allocation8 + $0x2d8] sm:$0xff]
    %v5297 = vld [vmem:[#allocation8 + $0x2e0] sm:$0xff]
    %v5298 = vld [vmem:[#allocation8 + $0x2e8] sm:$0xff]
    %v5299 = vld [vmem:[#allocation8 + $0x2f0] sm:$0xff]
    %v5300 = vld [vmem:[#allocation8 + $0x2f8] sm:$0xff]
    %s5301 = scalar_lea.vmem [#allocation8], 768
    %v5302 = vld [vmem:[%s5301] sm:$0xff]
    %v5303 = vld [vmem:[%s5301 + $0x8] sm:$0xff]
    %v5304 = vld [vmem:[%s5301 + $0x10] sm:$0xff]
    %v5305 = vld [vmem:[%s5301 + $0x18] sm:$0xff]
    %v5306 = vld [vmem:[%s5301 + $0x20] sm:$0xff]
    %v5307 = vld [vmem:[%s5301 + $0x28] sm:$0xff]
    %v5308 = vld [vmem:[%s5301 + $0x30] sm:$0xff]
    %v5309 = vld [vmem:[%s5301 + $0x38] sm:$0xff]
    %v5310 = vld [vmem:[%s5301 + $0x40] sm:$0xff]
    %v5311 = vld [vmem:[%s5301 + $0x48] sm:$0xff]
    %v5312 = vld [vmem:[%s5301 + $0x50] sm:$0xff]
    %v5313 = vld [vmem:[%s5301 + $0x58] sm:$0xff]
    %v5314 = vld [vmem:[%s5301 + $0x60] sm:$0xff]
    %v5315 = vld [vmem:[%s5301 + $0x68] sm:$0xff]
    %v5316 = vld [vmem:[%s5301 + $0x70] sm:$0xff]
    %v5317 = vld [vmem:[%s5301 + $0x78] sm:$0xff]
    %v5318 = vld [vmem:[%s5301 + $0x80] sm:$0xff]
    %v5319 = vld [vmem:[%s5301 + $0x88] sm:$0xff]
    %v5320 = vld [vmem:[%s5301 + $0x90] sm:$0xff]
    %v5321 = vld [vmem:[%s5301 + $0x98] sm:$0xff]
    %v5322 = vld [vmem:[%s5301 + $0xa0] sm:$0xff]
    %v5323 = vld [vmem:[%s5301 + $0xa8] sm:$0xff]
    %v5324 = vld [vmem:[%s5301 + $0xb0] sm:$0xff]
    %v5325 = vld [vmem:[%s5301 + $0xb8] sm:$0xff]
    %v5326 = vld [vmem:[%s5301 + $0xc0] sm:$0xff]
    %v5327 = vld [vmem:[%s5301 + $0xc8] sm:$0xff]
    %v5328 = vld [vmem:[%s5301 + $0xd0] sm:$0xff]
    %v5329 = vld [vmem:[%s5301 + $0xd8] sm:$0xff]
    %v5330 = vld [vmem:[%s5301 + $0xe0] sm:$0xff]
    %v5331 = vld [vmem:[%s5301 + $0xe8] sm:$0xff]
    %v5332 = vld [vmem:[%s5301 + $0xf0] sm:$0xff]
    %v5333 = vld [vmem:[%s5301 + $0xf8] sm:$0xff]
    %v5334 = vld [vmem:[%s5301 + $0x100] sm:$0xff]
    %v5335 = vld [vmem:[%s5301 + $0x108] sm:$0xff]
    %v5336 = vld [vmem:[%s5301 + $0x110] sm:$0xff]
    %v5337 = vld [vmem:[%s5301 + $0x118] sm:$0xff]
    %v5338 = vld [vmem:[%s5301 + $0x120] sm:$0xff]
    %v5339 = vld [vmem:[%s5301 + $0x128] sm:$0xff]
    %v5340 = vld [vmem:[%s5301 + $0x130] sm:$0xff]
    %v5341 = vld [vmem:[%s5301 + $0x138] sm:$0xff]
    %v5342 = vld [vmem:[%s5301 + $0x140] sm:$0xff]
    %v5343 = vld [vmem:[%s5301 + $0x148] sm:$0xff]
    %v5344 = vld [vmem:[%s5301 + $0x150] sm:$0xff]
    %v5345 = vld [vmem:[%s5301 + $0x158] sm:$0xff]
    %v5346 = vld [vmem:[%s5301 + $0x160] sm:$0xff]
    %v5347 = vld [vmem:[%s5301 + $0x168] sm:$0xff]
    %v5348 = vld [vmem:[%s5301 + $0x170] sm:$0xff]
    %v5349 = vld [vmem:[%s5301 + $0x178] sm:$0xff]
    %v5350 = vld [vmem:[%s5301 + $0x180] sm:$0xff]
    %v5351 = vld [vmem:[%s5301 + $0x188] sm:$0xff]
    %v5352 = vld [vmem:[%s5301 + $0x190] sm:$0xff]
    %v5353 = vld [vmem:[%s5301 + $0x198] sm:$0xff]
    %v5354 = vld [vmem:[%s5301 + $0x1a0] sm:$0xff]
    %v5355 = vld [vmem:[%s5301 + $0x1a8] sm:$0xff]
    %v5356 = vld [vmem:[%s5301 + $0x1b0] sm:$0xff]
    %v5357 = vld [vmem:[%s5301 + $0x1b8] sm:$0xff]
    %v5358 = vld [vmem:[%s5301 + $0x1c0] sm:$0xff]
    %v5359 = vld [vmem:[%s5301 + $0x1c8] sm:$0xff]
    %v5360 = vld [vmem:[%s5301 + $0x1d0] sm:$0xff]
    %v5361 = vld [vmem:[%s5301 + $0x1d8] sm:$0xff]
    %v5362 = vld [vmem:[%s5301 + $0x1e0] sm:$0xff]
    %v5363 = vld [vmem:[%s5301 + $0x1e8] sm:$0xff]
    %v5364 = vld [vmem:[%s5301 + $0x1f0] sm:$0xff]
    %v5365 = vld [vmem:[%s5301 + $0x1f8] sm:$0xff]
    %v5366 = vld [vmem:[%s5301 + $0x200] sm:$0xff]
    %v5367 = vld [vmem:[%s5301 + $0x208] sm:$0xff]
    %v5368 = vld [vmem:[%s5301 + $0x210] sm:$0xff]
    %v5369 = vld [vmem:[%s5301 + $0x218] sm:$0xff]
    %v5370 = vld [vmem:[%s5301 + $0x220] sm:$0xff]
    %v5371 = vld [vmem:[%s5301 + $0x228] sm:$0xff]
    %v5372 = vld [vmem:[%s5301 + $0x230] sm:$0xff]
    %v5373 = vld [vmem:[%s5301 + $0x238] sm:$0xff]
    %v5374 = vld [vmem:[%s5301 + $0x240] sm:$0xff]
    %v5375 = vld [vmem:[%s5301 + $0x248] sm:$0xff]
    %v5376 = vld [vmem:[%s5301 + $0x250] sm:$0xff]
    %v5377 = vld [vmem:[%s5301 + $0x258] sm:$0xff]
    %v5378 = vld [vmem:[%s5301 + $0x260] sm:$0xff]
    %v5379 = vld [vmem:[%s5301 + $0x268] sm:$0xff]
    %v5380 = vld [vmem:[%s5301 + $0x270] sm:$0xff]
    %v5381 = vld [vmem:[%s5301 + $0x278] sm:$0xff]
    %v5382 = vld [vmem:[%s5301 + $0x280] sm:$0xff]
    %v5383 = vld [vmem:[%s5301 + $0x288] sm:$0xff]
    %v5384 = vld [vmem:[%s5301 + $0x290] sm:$0xff]
    %v5385 = vld [vmem:[%s5301 + $0x298] sm:$0xff]
    %v5386 = vld [vmem:[%s5301 + $0x2a0] sm:$0xff]
    %v5387 = vld [vmem:[%s5301 + $0x2a8] sm:$0xff]
    %v5388 = vld [vmem:[%s5301 + $0x2b0] sm:$0xff]
    %v5389 = vld [vmem:[%s5301 + $0x2b8] sm:$0xff]
    %v5390 = vld [vmem:[%s5301 + $0x2c0] sm:$0xff]
    %v5391 = vld [vmem:[%s5301 + $0x2c8] sm:$0xff]
    %v5392 = vld [vmem:[%s5301 + $0x2d0] sm:$0xff]
    %v5393 = vld [vmem:[%s5301 + $0x2d8] sm:$0xff]
    %v5394 = vld [vmem:[%s5301 + $0x2e0] sm:$0xff]
    %v5395 = vld [vmem:[%s5301 + $0x2e8] sm:$0xff]
    %v5396 = vld [vmem:[%s5301 + $0x2f0] sm:$0xff]
    %v5397 = vld [vmem:[%s5301 + $0x2f8] sm:$0xff]
    %v5398 = vld [vmem:[#allocation11] sm:$0x3]
    %v5400 = vlaneseq
    %v5401 = vshrl.u32 %v5400, 7
    %v5402 = vsub.s32 0, %v5401
    %v5403 = vrot.slane %v5398, %v5402
    %v5404 = vlaneseq
    %v5405 = vshrl.u32 %v5404, 7
    %v5406 = vsub.s32 1, %v5405
    %v5407 = vrot.slane %v5398, %v5406
    %s5410 = scalar_lea.vmem [#allocation11], 2
    %v5411 = vld [vmem:[%s5410] sm:$0x3]
    %v5413 = vlaneseq
    %v5414 = vshrl.u32 %v5413, 7
    %v5415 = vsub.s32 0, %v5414
    %v5416 = vrot.slane %v5411, %v5415
    %v5417 = vlaneseq
    %v5418 = vshrl.u32 %v5417, 7
    %v5419 = vsub.s32 1, %v5418
    %v5420 = vrot.slane %v5411, %v5419
    %s5423 = ssub.s32 0, 0
    %s5424 = smul.u32 %s5423, 8
    %v5425 = vld [vmem:[#allocation2] sm:$0xff]
    %v5426 = vld [vmem:[#allocation2 + $0x8] sm:$0xff]
    %v5427 = vld [vmem:[#allocation3] sm:$0xff]
    %v5428 = vld [vmem:[#allocation3 + $0x8] sm:$0xff]
    %v5429 = vpack.c.bf16 %v5425, %v5425
    %v5430 = vpack.c.bf16 %v5426, %v5426
    %v5527 = vunpack.c.l.b16 %v5205
    %v5528 = vunpack.c.h.b16 %v5205
    %v5529 = vunpack.c.l.b16 %v5206
    %v5530 = vunpack.c.h.b16 %v5206
    %v5531 = vunpack.c.l.b16 %v5207
    %v5532 = vunpack.c.h.b16 %v5207
    %v5533 = vunpack.c.l.b16 %v5208
    %v5534 = vunpack.c.h.b16 %v5208
    %v5535 = vunpack.c.l.b16 %v5209
    %v5536 = vunpack.c.h.b16 %v5209
    %v5537 = vunpack.c.l.b16 %v5210
    %v5538 = vunpack.c.h.b16 %v5210
    %v5539 = vunpack.c.l.b16 %v5211
    %v5540 = vunpack.c.h.b16 %v5211
    %v5541 = vunpack.c.l.b16 %v5212
    %v5542 = vunpack.c.h.b16 %v5212
    %v5543 = vunpack.c.l.b16 %v5213
    %v5544 = vunpack.c.h.b16 %v5213
    %v5545 = vunpack.c.l.b16 %v5214
    %v5546 = vunpack.c.h.b16 %v5214
    %v5547 = vunpack.c.l.b16 %v5215
    %v5548 = vunpack.c.h.b16 %v5215
    %v5549 = vunpack.c.l.b16 %v5216
    %v5550 = vunpack.c.h.b16 %v5216
    %v5551 = vunpack.c.l.b16 %v5217
    %v5552 = vunpack.c.h.b16 %v5217
    %v5553 = vunpack.c.l.b16 %v5218
    %v5554 = vunpack.c.h.b16 %v5218
    %v5555 = vunpack.c.l.b16 %v5219
    %v5556 = vunpack.c.h.b16 %v5219
    %v5557 = vunpack.c.l.b16 %v5220
    %v5558 = vunpack.c.h.b16 %v5220
    %v5559 = vunpack.c.l.b16 %v5221
    %v5560 = vunpack.c.h.b16 %v5221
    %v5561 = vunpack.c.l.b16 %v5222
    %v5562 = vunpack.c.h.b16 %v5222
    %v5563 = vunpack.c.l.b16 %v5223
    %v5564 = vunpack.c.h.b16 %v5223
    %v5565 = vunpack.c.l.b16 %v5224
    %v5566 = vunpack.c.h.b16 %v5224
    %v5567 = vunpack.c.l.b16 %v5225
    %v5568 = vunpack.c.h.b16 %v5225
    %v5569 = vunpack.c.l.b16 %v5226
    %v5570 = vunpack.c.h.b16 %v5226
    %v5571 = vunpack.c.l.b16 %v5227
    %v5572 = vunpack.c.h.b16 %v5227
    %v5573 = vunpack.c.l.b16 %v5228
    %v5574 = vunpack.c.h.b16 %v5228
    %v5575 = vunpack.c.l.b16 %v5229
    %v5576 = vunpack.c.h.b16 %v5229
    %v5577 = vunpack.c.l.b16 %v5230
    %v5578 = vunpack.c.h.b16 %v5230
    %v5579 = vunpack.c.l.b16 %v5231
    %v5580 = vunpack.c.h.b16 %v5231
    %v5581 = vunpack.c.l.b16 %v5232
    %v5582 = vunpack.c.h.b16 %v5232
    %v5583 = vunpack.c.l.b16 %v5233
    %v5584 = vunpack.c.h.b16 %v5233
    %v5585 = vunpack.c.l.b16 %v5234
    %v5586 = vunpack.c.h.b16 %v5234
    %v5587 = vunpack.c.l.b16 %v5235
    %v5588 = vunpack.c.h.b16 %v5235
    %v5589 = vunpack.c.l.b16 %v5236
    %v5590 = vunpack.c.h.b16 %v5236
    %v5591 = vunpack.c.l.b16 %v5237
    %v5592 = vunpack.c.h.b16 %v5237
    %v5593 = vunpack.c.l.b16 %v5238
    %v5594 = vunpack.c.h.b16 %v5238
    %v5595 = vunpack.c.l.b16 %v5239
    %v5596 = vunpack.c.h.b16 %v5239
    %v5597 = vunpack.c.l.b16 %v5240
    %v5598 = vunpack.c.h.b16 %v5240
    %v5599 = vunpack.c.l.b16 %v5241
    %v5600 = vunpack.c.h.b16 %v5241
    %v5601 = vunpack.c.l.b16 %v5242
    %v5602 = vunpack.c.h.b16 %v5242
    %v5603 = vunpack.c.l.b16 %v5243
    %v5604 = vunpack.c.h.b16 %v5243
    %v5605 = vunpack.c.l.b16 %v5244
    %v5606 = vunpack.c.h.b16 %v5244
    %v5607 = vunpack.c.l.b16 %v5245
    %v5608 = vunpack.c.h.b16 %v5245
    %v5609 = vunpack.c.l.b16 %v5246
    %v5610 = vunpack.c.h.b16 %v5246
    %v5611 = vunpack.c.l.b16 %v5247
    %v5612 = vunpack.c.h.b16 %v5247
    %v5613 = vunpack.c.l.b16 %v5248
    %v5614 = vunpack.c.h.b16 %v5248
    %v5615 = vunpack.c.l.b16 %v5249
    %v5616 = vunpack.c.h.b16 %v5249
    %v5617 = vunpack.c.l.b16 %v5250
    %v5618 = vunpack.c.h.b16 %v5250
    %v5619 = vunpack.c.l.b16 %v5251
    %v5620 = vunpack.c.h.b16 %v5251
    %v5621 = vunpack.c.l.b16 %v5252
    %v5622 = vunpack.c.h.b16 %v5252
    %v5623 = vunpack.c.l.b16 %v5253
    %v5624 = vunpack.c.h.b16 %v5253
    %v5625 = vunpack.c.l.b16 %v5254
    %v5626 = vunpack.c.h.b16 %v5254
    %v5627 = vunpack.c.l.b16 %v5255
    %v5628 = vunpack.c.h.b16 %v5255
    %v5629 = vunpack.c.l.b16 %v5256
    %v5630 = vunpack.c.h.b16 %v5256
    %v5631 = vunpack.c.l.b16 %v5257
    %v5632 = vunpack.c.h.b16 %v5257
    %v5633 = vunpack.c.l.b16 %v5258
    %v5634 = vunpack.c.h.b16 %v5258
    %v5635 = vunpack.c.l.b16 %v5259
    %v5636 = vunpack.c.h.b16 %v5259
    %v5637 = vunpack.c.l.b16 %v5260
    %v5638 = vunpack.c.h.b16 %v5260
    %v5639 = vunpack.c.l.b16 %v5261
    %v5640 = vunpack.c.h.b16 %v5261
    %v5641 = vunpack.c.l.b16 %v5262
    %v5642 = vunpack.c.h.b16 %v5262
    %v5643 = vunpack.c.l.b16 %v5263
    %v5644 = vunpack.c.h.b16 %v5263
    %v5645 = vunpack.c.l.b16 %v5264
    %v5646 = vunpack.c.h.b16 %v5264
    %v5647 = vunpack.c.l.b16 %v5265
    %v5648 = vunpack.c.h.b16 %v5265
    %v5649 = vunpack.c.l.b16 %v5266
    %v5650 = vunpack.c.h.b16 %v5266
    %v5651 = vunpack.c.l.b16 %v5267
    %v5652 = vunpack.c.h.b16 %v5267
    %v5653 = vunpack.c.l.b16 %v5268
    %v5654 = vunpack.c.h.b16 %v5268
    %v5655 = vunpack.c.l.b16 %v5269
    %v5656 = vunpack.c.h.b16 %v5269
    %v5657 = vunpack.c.l.b16 %v5270
    %v5658 = vunpack.c.h.b16 %v5270
    %v5659 = vunpack.c.l.b16 %v5271
    %v5660 = vunpack.c.h.b16 %v5271
    %v5661 = vunpack.c.l.b16 %v5272
    %v5662 = vunpack.c.h.b16 %v5272
    %v5663 = vunpack.c.l.b16 %v5273
    %v5664 = vunpack.c.h.b16 %v5273
    %v5665 = vunpack.c.l.b16 %v5274
    %v5666 = vunpack.c.h.b16 %v5274
    %v5667 = vunpack.c.l.b16 %v5275
    %v5668 = vunpack.c.h.b16 %v5275
    %v5669 = vunpack.c.l.b16 %v5276
    %v5670 = vunpack.c.h.b16 %v5276
    %v5671 = vunpack.c.l.b16 %v5277
    %v5672 = vunpack.c.h.b16 %v5277
    %v5673 = vunpack.c.l.b16 %v5278
    %v5674 = vunpack.c.h.b16 %v5278
    %v5675 = vunpack.c.l.b16 %v5279
    %v5676 = vunpack.c.h.b16 %v5279
    %v5677 = vunpack.c.l.b16 %v5280
    %v5678 = vunpack.c.h.b16 %v5280
    %v5679 = vunpack.c.l.b16 %v5281
    %v5680 = vunpack.c.h.b16 %v5281
    %v5681 = vunpack.c.l.b16 %v5282
    %v5682 = vunpack.c.h.b16 %v5282
    %v5683 = vunpack.c.l.b16 %v5283
    %v5684 = vunpack.c.h.b16 %v5283
    %v5685 = vunpack.c.l.b16 %v5284
    %v5686 = vunpack.c.h.b16 %v5284
    %v5687 = vunpack.c.l.b16 %v5285
    %v5688 = vunpack.c.h.b16 %v5285
    %v5689 = vunpack.c.l.b16 %v5286
    %v5690 = vunpack.c.h.b16 %v5286
    %v5691 = vunpack.c.l.b16 %v5287
    %v5692 = vunpack.c.h.b16 %v5287
    %v5693 = vunpack.c.l.b16 %v5288
    %v5694 = vunpack.c.h.b16 %v5288
    %v5695 = vunpack.c.l.b16 %v5289
    %v5696 = vunpack.c.h.b16 %v5289
    %v5697 = vunpack.c.l.b16 %v5290
    %v5698 = vunpack.c.h.b16 %v5290
    %v5699 = vunpack.c.l.b16 %v5291
    %v5700 = vunpack.c.h.b16 %v5291
    %v5701 = vunpack.c.l.b16 %v5292
    %v5702 = vunpack.c.h.b16 %v5292
    %v5703 = vunpack.c.l.b16 %v5293
    %v5704 = vunpack.c.h.b16 %v5293
    %v5705 = vunpack.c.l.b16 %v5294
    %v5706 = vunpack.c.h.b16 %v5294
    %v5707 = vunpack.c.l.b16 %v5295
    %v5708 = vunpack.c.h.b16 %v5295
    %v5709 = vunpack.c.l.b16 %v5296
    %v5710 = vunpack.c.h.b16 %v5296
    %v5711 = vunpack.c.l.b16 %v5297
    %v5712 = vunpack.c.h.b16 %v5297
    %v5713 = vunpack.c.l.b16 %v5298
    %v5714 = vunpack.c.h.b16 %v5298
    %v5715 = vunpack.c.l.b16 %v5299
    %v5716 = vunpack.c.h.b16 %v5299
    %v5717 = vunpack.c.l.b16 %v5300
    %v5718 = vunpack.c.h.b16 %v5300
    %v5719 = vpack.c.b16 %v5533, %v5527
    %v5720 = vpack.c.b16 %v5534, %v5528
    %v5721 = vpack.c.b16 %v5535, %v5529
    %v5722 = vpack.c.b16 %v5536, %v5530
    %v5723 = vpack.c.b16 %v5537, %v5531
    %v5724 = vpack.c.b16 %v5538, %v5532
    %v5725 = vpack.c.b16 %v5545, %v5539
    %v5726 = vpack.c.b16 %v5546, %v5540
    %v5727 = vpack.c.b16 %v5547, %v5541
    %v5728 = vpack.c.b16 %v5548, %v5542
    %v5729 = vpack.c.b16 %v5549, %v5543
    %v5730 = vpack.c.b16 %v5550, %v5544
    %v5731 = vpack.c.b16 %v5557, %v5551
    %v5732 = vpack.c.b16 %v5558, %v5552
    %v5733 = vpack.c.b16 %v5559, %v5553
    %v5734 = vpack.c.b16 %v5560, %v5554
    %v5735 = vpack.c.b16 %v5561, %v5555
    %v5736 = vpack.c.b16 %v5562, %v5556
    %v5737 = vpack.c.b16 %v5569, %v5563
    %v5738 = vpack.c.b16 %v5570, %v5564
    %v5739 = vpack.c.b16 %v5571, %v5565
    %v5740 = vpack.c.b16 %v5572, %v5566
    %v5741 = vpack.c.b16 %v5573, %v5567
    %v5742 = vpack.c.b16 %v5574, %v5568
    %v5743 = vpack.c.b16 %v5581, %v5575
    %v5744 = vpack.c.b16 %v5582, %v5576
    %v5745 = vpack.c.b16 %v5583, %v5577
    %v5746 = vpack.c.b16 %v5584, %v5578
    %v5747 = vpack.c.b16 %v5585, %v5579
    %v5748 = vpack.c.b16 %v5586, %v5580
    %v5749 = vpack.c.b16 %v5593, %v5587
    %v5750 = vpack.c.b16 %v5594, %v5588
    %v5751 = vpack.c.b16 %v5595, %v5589
    %v5752 = vpack.c.b16 %v5596, %v5590
    %v5753 = vpack.c.b16 %v5597, %v5591
    %v5754 = vpack.c.b16 %v5598, %v5592
    %v5755 = vpack.c.b16 %v5605, %v5599
    %v5756 = vpack.c.b16 %v5606, %v5600
    %v5757 = vpack.c.b16 %v5607, %v5601
    %v5758 = vpack.c.b16 %v5608, %v5602
    %v5759 = vpack.c.b16 %v5609, %v5603
    %v5760 = vpack.c.b16 %v5610, %v5604
    %v5761 = vpack.c.b16 %v5617, %v5611
    %v5762 = vpack.c.b16 %v5618, %v5612
    %v5763 = vpack.c.b16 %v5619, %v5613
    %v5764 = vpack.c.b16 %v5620, %v5614
    %v5765 = vpack.c.b16 %v5621, %v5615
    %v5766 = vpack.c.b16 %v5622, %v5616
    %v5767 = vpack.c.b16 %v5629, %v5623
    %v5768 = vpack.c.b16 %v5630, %v5624
    %v5769 = vpack.c.b16 %v5631, %v5625
    %v5770 = vpack.c.b16 %v5632, %v5626
    %v5771 = vpack.c.b16 %v5633, %v5627
    %v5772 = vpack.c.b16 %v5634, %v5628
    %v5773 = vpack.c.b16 %v5641, %v5635
    %v5774 = vpack.c.b16 %v5642, %v5636
    %v5775 = vpack.c.b16 %v5643, %v5637
    %v5776 = vpack.c.b16 %v5644, %v5638
    %v5777 = vpack.c.b16 %v5645, %v5639
    %v5778 = vpack.c.b16 %v5646, %v5640
    %v5779 = vpack.c.b16 %v5653, %v5647
    %v5780 = vpack.c.b16 %v5654, %v5648
    %v5781 = vpack.c.b16 %v5655, %v5649
    %v5782 = vpack.c.b16 %v5656, %v5650
    %v5783 = vpack.c.b16 %v5657, %v5651
    %v5784 = vpack.c.b16 %v5658, %v5652
    %v5785 = vpack.c.b16 %v5665, %v5659
    %v5786 = vpack.c.b16 %v5666, %v5660
    %v5787 = vpack.c.b16 %v5667, %v5661
    %v5788 = vpack.c.b16 %v5668, %v5662
    %v5789 = vpack.c.b16 %v5669, %v5663
    %v5790 = vpack.c.b16 %v5670, %v5664
    %v5791 = vpack.c.b16 %v5677, %v5671
    %v5792 = vpack.c.b16 %v5678, %v5672
    %v5793 = vpack.c.b16 %v5679, %v5673
    %v5794 = vpack.c.b16 %v5680, %v5674
    %v5795 = vpack.c.b16 %v5681, %v5675
    %v5796 = vpack.c.b16 %v5682, %v5676
    %v5797 = vpack.c.b16 %v5689, %v5683
    %v5798 = vpack.c.b16 %v5690, %v5684
    %v5799 = vpack.c.b16 %v5691, %v5685
    %v5800 = vpack.c.b16 %v5692, %v5686
    %v5801 = vpack.c.b16 %v5693, %v5687
    %v5802 = vpack.c.b16 %v5694, %v5688
    %v5803 = vpack.c.b16 %v5701, %v5695
    %v5804 = vpack.c.b16 %v5702, %v5696
    %v5805 = vpack.c.b16 %v5703, %v5697
    %v5806 = vpack.c.b16 %v5704, %v5698
    %v5807 = vpack.c.b16 %v5705, %v5699
    %v5808 = vpack.c.b16 %v5706, %v5700
    %v5809 = vpack.c.b16 %v5713, %v5707
    %v5810 = vpack.c.b16 %v5714, %v5708
    %v5811 = vpack.c.b16 %v5715, %v5709
    %v5812 = vpack.c.b16 %v5716, %v5710
    %v5813 = vpack.c.b16 %v5717, %v5711
    %v5814 = vpack.c.b16 %v5718, %v5712
    %5911 = vmatprep.subr.bf16.mxu0 %v5720
    %5912 = vmatpush1.bf16.msra.mxu0 %v5719
    %5913 = vmatprep.subr.bf16.mxu0 %v5726
    %5914 = vmatpush1.bf16.msra.mxu0 %v5725
    %5915 = vmatprep.subr.bf16.mxu0 %v5732
    %5916 = vmatpush1.bf16.msra.mxu0 %v5731
    %5917 = vmatprep.subr.bf16.mxu0 %v5738
    %5918 = vmatpush1.bf16.msra.mxu0 %v5737
    %5919 = vmatprep.subr.bf16.mxu0 %v5744
    %5920 = vmatpush1.bf16.msra.mxu0 %v5743
    %5921 = vmatprep.subr.bf16.mxu0 %v5750
    %5922 = vmatpush1.bf16.msra.mxu0 %v5749
    %5923 = vmatprep.subr.bf16.mxu0 %v5756
    %5924 = vmatpush1.bf16.msra.mxu0 %v5755
    %5925 = vmatprep.subr.bf16.mxu0 %v5762
    %5926 = vmatpush1.bf16.msra.mxu0 %v5761
    %5927 = vmatprep.subr.bf16.mxu0 %v5768
    %5928 = vmatpush1.bf16.msra.mxu0 %v5767
    %5929 = vmatprep.subr.bf16.mxu0 %v5774
    %5930 = vmatpush1.bf16.msra.mxu0 %v5773
    %5931 = vmatprep.subr.bf16.mxu0 %v5780
    %5932 = vmatpush1.bf16.msra.mxu0 %v5779
    %5933 = vmatprep.subr.bf16.mxu0 %v5786
    %5934 = vmatpush1.bf16.msra.mxu0 %v5785
    %5935 = vmatprep.subr.bf16.mxu0 %v5792
    %5936 = vmatpush1.bf16.msra.mxu0 %v5791
    %5937 = vmatprep.subr.bf16.mxu0 %v5798
    %5938 = vmatpush1.bf16.msra.mxu0 %v5797
    %5939 = vmatprep.subr.bf16.mxu0 %v5804
    %5940 = vmatpush1.bf16.msra.mxu0 %v5803
    %5941 = vmatprep.subr.bf16.mxu0 %v5810
    %5942 = vmatpush1.bf16.msra.mxu0 %v5809
    %5943 = vmatprep.mubr.bf16.mxu0 %v5430
    %5944 = vmatmul.mubr.bf16.gmra.mrb[0].mxu0 %v5429
    %v5945 = vpop.f32.mrb[0].mxu0
    %v5946 = vadd.f32 0.0, %v5945
    %v5947 = vpop.f32.mrb[0].mxu0
    %v5948 = vadd.f32 0.0, %v5947
    %v5949 = vpop.f32.mrb[0].mxu0
    %v5950 = vpop.f32.mrb[0].mxu0
    %5951 = vdwg.mxu0
    %5952 = vmatprep.subr.bf16.mxu0 %v5722
    %5953 = vmatpush1.bf16.msra.mxu0 %v5721
    %5954 = vmatprep.subr.bf16.mxu0 %v5728
    %5955 = vmatpush1.bf16.msra.mxu0 %v5727
    %5956 = vmatprep.subr.bf16.mxu0 %v5734
    %5957 = vmatpush1.bf16.msra.mxu0 %v5733
    %5958 = vmatprep.subr.bf16.mxu0 %v5740
    %5959 = vmatpush1.bf16.msra.mxu0 %v5739
    %5960 = vmatprep.subr.bf16.mxu0 %v5746
    %5961 = vmatpush1.bf16.msra.mxu0 %v5745
    %5962 = vmatprep.subr.bf16.mxu0 %v5752
    %5963 = vmatpush1.bf16.msra.mxu0 %v5751
    %5964 = vmatprep.subr.bf16.mxu0 %v5758
    %5965 = vmatpush1.bf16.msra.mxu0 %v5757
    %5966 = vmatprep.subr.bf16.mxu0 %v5764
    %5967 = vmatpush1.bf16.msra.mxu0 %v5763
    %5968 = vmatprep.subr.bf16.mxu0 %v5770
    %5969 = vmatpush1.bf16.msra.mxu0 %v5769
    %5970 = vmatprep.subr.bf16.mxu0 %v5776
    %5971 = vmatpush1.bf16.msra.mxu0 %v5775
    %5972 = vmatprep.subr.bf16.mxu0 %v5782
    %5973 = vmatpush1.bf16.msra.mxu0 %v5781
    %5974 = vmatprep.subr.bf16.mxu0 %v5788
    %5975 = vmatpush1.bf16.msra.mxu0 %v5787
    %5976 = vmatprep.subr.bf16.mxu0 %v5794
    %5977 = vmatpush1.bf16.msra.mxu0 %v5793
    %5978 = vmatprep.subr.bf16.mxu0 %v5800
    %5979 = vmatpush1.bf16.msra.mxu0 %v5799
    %5980 = vmatprep.subr.bf16.mxu0 %v5806
    %5981 = vmatpush1.bf16.msra.mxu0 %v5805
    %5982 = vmatprep.subr.bf16.mxu0 %v5812
    %5983 = vmatpush1.bf16.msra.mxu0 %v5811
    %5984 = vmatprep.mubr.bf16.mxu0 %v5430
    %5985 = vmatmul.mubr.bf16.gmra.mrb[0].mxu0 %v5429
    %v5986 = vpop.f32.mrb[0].mxu0
    %v5987 = vadd.f32 0.0, %v5986
    %v5988 = vpop.f32.mrb[0].mxu0
    %v5989 = vadd.f32 0.0, %v5988
    %v5990 = vpop.f32.mrb[0].mxu0
    %v5991 = vpop.f32.mrb[0].mxu0
    %5992 = vdwg.mxu0
    %5993 = vmatprep.subr.bf16.mxu0 %v5724
    %5994 = vmatpush1.bf16.msra.mxu0 %v5723
    %5995 = vmatprep.subr.bf16.mxu0 %v5730
    %5996 = vmatpush1.bf16.msra.mxu0 %v5729
    %5997 = vmatprep.subr.bf16.mxu0 %v5736
    %5998 = vmatpush1.bf16.msra.mxu0 %v5735
    %5999 = vmatprep.subr.bf16.mxu0 %v5742
    %6000 = vmatpush1.bf16.msra.mxu0 %v5741
    %6001 = vmatprep.subr.bf16.mxu0 %v5748
    %6002 = vmatpush1.bf16.msra.mxu0 %v5747
    %6003 = vmatprep.subr.bf16.mxu0 %v5754
    %6004 = vmatpush1.bf16.msra.mxu0 %v5753
    %6005 = vmatprep.subr.bf16.mxu0 %v5760
    %6006 = vmatpush1.bf16.msra.mxu0 %v5759
    %6007 = vmatprep.subr.bf16.mxu0 %v5766
    %6008 = vmatpush1.bf16.msra.mxu0 %v5765
    %6009 = vmatprep.subr.bf16.mxu0 %v5772
    %6010 = vmatpush1.bf16.msra.mxu0 %v5771
    %6011 = vmatprep.subr.bf16.mxu0 %v5778
    %6012 = vmatpush1.bf16.msra.mxu0 %v5777
    %6013 = vmatprep.subr.bf16.mxu0 %v5784
    %6014 = vmatpush1.bf16.msra.mxu0 %v5783
    %6015 = vmatprep.subr.bf16.mxu0 %v5790
    %6016 = vmatpush1.bf16.msra.mxu0 %v5789
    %6017 = vmatprep.subr.bf16.mxu0 %v5796
    %6018 = vmatpush1.bf16.msra.mxu0 %v5795
    %6019 = vmatprep.subr.bf16.mxu0 %v5802
    %6020 = vmatpush1.bf16.msra.mxu0 %v5801
    %6021 = vmatprep.subr.bf16.mxu0 %v5808
    %6022 = vmatpush1.bf16.msra.mxu0 %v5807
    %6023 = vmatprep.subr.bf16.mxu0 %v5814
    %6024 = vmatpush1.bf16.msra.mxu0 %v5813
    %6025 = vmatprep.mubr.bf16.mxu0 %v5430
    %6026 = vmatmul.mubr.bf16.gmra.mrb[0].mxu0 %v5429
    %v6027 = vpop.f32.mrb[0].mxu0
    %v6028 = vadd.f32 0.0, %v6027
    %v6029 = vpop.f32.mrb[0].mxu0
    %v6030 = vadd.f32 0.0, %v6029
    %v6031 = vpop.f32.mrb[0].mxu0
    %v6032 = vpop.f32.mrb[0].mxu0
    %6033 = vdwg.mxu0
    %s6034 = smul.u32 0, 6
    %s6035 = smul.addr %s6034, 8
    %s6036 = scalar_lea.vmem [#allocation4], %s6035
    %v6037 = vld [vmem:[%s6036] sm:$0xff]
    %v6038 = vld [vmem:[%s6036 + $0x8] sm:$0xff]
    %v6039 = vld [vmem:[%s6036 + $0x10] sm:$0xff]
    %v6040 = vld [vmem:[%s6036 + $0x18] sm:$0xff]
    %v6041 = vld [vmem:[%s6036 + $0x20] sm:$0xff]
    %v6042 = vld [vmem:[%s6036 + $0x28] sm:$0xff]
    %v6043 = vadd.f32 %v6037, %v5946
    %v6044 = vadd.f32 %v6038, %v5948
    %v6045 = vxor.u32 %v6043, 2147483648
    %v6046 = vxor.u32 %v6044, 2147483648
    %v6047 = vmul.f32 %v6045, 1.442695
    %v6048 = vpow.pop %v6047
    %v6049 = vmul.f32 %v6046, 1.442695
    %v6050 = vpow.pop %v6049
    %v6051 = vadd.f32 %v6048, 1.0
    %v6052 = vadd.f32 %v6050, 1.0
    %v6053 = vrcp.pop %v6051
    %v6054 = vmul.f32 1.0, %v6053
    %v6055 = vrcp.pop %v6052
    %v6056 = vmul.f32 1.0, %v6055
    %v6057 = vadd.f32 %v6039, %v5987
    %v6058 = vadd.f32 %v6040, %v5989
    %v6059 = vxor.u32 %v6057, 2147483648
    %v6060 = vxor.u32 %v6058, 2147483648
    %v6061 = vmul.f32 %v6059, 1.442695
    %v6062 = vpow.pop %v6061
    %v6063 = vmul.f32 %v6060, 1.442695
    %v6064 = vpow.pop %v6063
    %v6065 = vadd.f32 %v6062, 1.0
    %v6066 = vadd.f32 %v6064, 1.0
    %v6067 = vrcp.pop %v6065
    %v6068 = vmul.f32 1.0, %v6067
    %v6069 = vrcp.pop %v6066
    %v6070 = vmul.f32 1.0, %v6069
    %v6071 = vadd.f32 %v6028, %v5403
    %v6072 = vadd.f32 %v6030, %v5407
    %v6073 = vmul.f32 %v6054, %v6071
    %v6074 = vmul.f32 %v6056, %v6072
    %v6075 = vadd.f32 %v6041, %v6073
    %v6076 = vadd.f32 %v6042, %v6074
    %v6077 = vtanh.pop %v6075
    %v6078 = vtanh.pop %v6076
    %v6079 = vsub.f32 1.0, %v6068
    %v6080 = vsub.f32 1.0, %v6070
    %v6081 = vmul.f32 %v6079, %v6077
    %v6082 = vmul.f32 %v6080, %v6078
    %v6083 = vmul.f32 %v6068, %v5425
    %v6084 = vmul.f32 %v6070, %v5426
    %v6085 = vadd.f32 %v6081, %v6083
    %v6086 = vadd.f32 %v6082, %v6084
    %v6087 = vpack.c.bf16 %v6085, %v6085
    %v6088 = vpack.c.bf16 %v6086, %v6086
    %v6091 = vunpack.c.l.b16 %v6087
    %v6092 = vunpack.c.l.b16 %v6088
    %v6093 = vpack.c.b16 %v6092, %v6091
    %6095 = vst [vmem:[%s6] sm:$0xff] %v6093
    %v6096 = vpack.c.bf16 %v5427, %v5427
    %v6097 = vpack.c.bf16 %v5428, %v5428
    %v6194 = vunpack.c.l.b16 %v5302
    %v6195 = vunpack.c.h.b16 %v5302
    %v6196 = vunpack.c.l.b16 %v5303
    %v6197 = vunpack.c.h.b16 %v5303
    %v6198 = vunpack.c.l.b16 %v5304
    %v6199 = vunpack.c.h.b16 %v5304
    %v6200 = vunpack.c.l.b16 %v5305
    %v6201 = vunpack.c.h.b16 %v5305
    %v6202 = vunpack.c.l.b16 %v5306
    %v6203 = vunpack.c.h.b16 %v5306
    %v6204 = vunpack.c.l.b16 %v5307
    %v6205 = vunpack.c.h.b16 %v5307
    %v6206 = vunpack.c.l.b16 %v5308
    %v6207 = vunpack.c.h.b16 %v5308
    %v6208 = vunpack.c.l.b16 %v5309
    %v6209 = vunpack.c.h.b16 %v5309
    %v6210 = vunpack.c.l.b16 %v5310
    %v6211 = vunpack.c.h.b16 %v5310
    %v6212 = vunpack.c.l.b16 %v5311
    %v6213 = vunpack.c.h.b16 %v5311
    %v6214 = vunpack.c.l.b16 %v5312
    %v6215 = vunpack.c.h.b16 %v5312
    %v6216 = vunpack.c.l.b16 %v5313
    %v6217 = vunpack.c.h.b16 %v5313
    %v6218 = vunpack.c.l.b16 %v5314
    %v6219 = vunpack.c.h.b16 %v5314
    %v6220 = vunpack.c.l.b16 %v5315
    %v6221 = vunpack.c.h.b16 %v5315
    %v6222 = vunpack.c.l.b16 %v5316
    %v6223 = vunpack.c.h.b16 %v5316
    %v6224 = vunpack.c.l.b16 %v5317
    %v6225 = vunpack.c.h.b16 %v5317
    %v6226 = vunpack.c.l.b16 %v5318
    %v6227 = vunpack.c.h.b16 %v5318
    %v6228 = vunpack.c.l.b16 %v5319
    %v6229 = vunpack.c.h.b16 %v5319
    %v6230 = vunpack.c.l.b16 %v5320
    %v6231 = vunpack.c.h.b16 %v5320
    %v6232 = vunpack.c.l.b16 %v5321
    %v6233 = vunpack.c.h.b16 %v5321
    %v6234 = vunpack.c.l.b16 %v5322
    %v6235 = vunpack.c.h.b16 %v5322
    %v6236 = vunpack.c.l.b16 %v5323
    %v6237 = vunpack.c.h.b16 %v5323
    %v6238 = vunpack.c.l.b16 %v5324
    %v6239 = vunpack.c.h.b16 %v5324
    %v6240 = vunpack.c.l.b16 %v5325
    %v6241 = vunpack.c.h.b16 %v5325
    %v6242 = vunpack.c.l.b16 %v5326
    %v6243 = vunpack.c.h.b16 %v5326
    %v6244 = vunpack.c.l.b16 %v5327
    %v6245 = vunpack.c.h.b16 %v5327
    %v6246 = vunpack.c.l.b16 %v5328
    %v6247 = vunpack.c.h.b16 %v5328
    %v6248 = vunpack.c.l.b16 %v5329
    %v6249 = vunpack.c.h.b16 %v5329
    %v6250 = vunpack.c.l.b16 %v5330
    %v6251 = vunpack.c.h.b16 %v5330
    %v6252 = vunpack.c.l.b16 %v5331
    %v6253 = vunpack.c.h.b16 %v5331
    %v6254 = vunpack.c.l.b16 %v5332
    %v6255 = vunpack.c.h.b16 %v5332
    %v6256 = vunpack.c.l.b16 %v5333
    %v6257 = vunpack.c.h.b16 %v5333
    %v6258 = vunpack.c.l.b16 %v5334
    %v6259 = vunpack.c.h.b16 %v5334
    %v6260 = vunpack.c.l.b16 %v5335
    %v6261 = vunpack.c.h.b16 %v5335
    %v6262 = vunpack.c.l.b16 %v5336
    %v6263 = vunpack.c.h.b16 %v5336
    %v6264 = vunpack.c.l.b16 %v5337
    %v6265 = vunpack.c.h.b16 %v5337
    %v6266 = vunpack.c.l.b16 %v5338
    %v6267 = vunpack.c.h.b16 %v5338
    %v6268 = vunpack.c.l.b16 %v5339
    %v6269 = vunpack.c.h.b16 %v5339
    %v6270 = vunpack.c.l.b16 %v5340
    %v6271 = vunpack.c.h.b16 %v5340
    %v6272 = vunpack.c.l.b16 %v5341
    %v6273 = vunpack.c.h.b16 %v5341
    %v6274 = vunpack.c.l.b16 %v5342
    %v6275 = vunpack.c.h.b16 %v5342
    %v6276 = vunpack.c.l.b16 %v5343
    %v6277 = vunpack.c.h.b16 %v5343
    %v6278 = vunpack.c.l.b16 %v5344
    %v6279 = vunpack.c.h.b16 %v5344
    %v6280 = vunpack.c.l.b16 %v5345
    %v6281 = vunpack.c.h.b16 %v5345
    %v6282 = vunpack.c.l.b16 %v5346
    %v6283 = vunpack.c.h.b16 %v5346
    %v6284 = vunpack.c.l.b16 %v5347
    %v6285 = vunpack.c.h.b16 %v5347
    %v6286 = vunpack.c.l.b16 %v5348
    %v6287 = vunpack.c.h.b16 %v5348
    %v6288 = vunpack.c.l.b16 %v5349
    %v6289 = vunpack.c.h.b16 %v5349
    %v6290 = vunpack.c.l.b16 %v5350
    %v6291 = vunpack.c.h.b16 %v5350
    %v6292 = vunpack.c.l.b16 %v5351
    %v6293 = vunpack.c.h.b16 %v5351
    %v6294 = vunpack.c.l.b16 %v5352
    %v6295 = vunpack.c.h.b16 %v5352
    %v6296 = vunpack.c.l.b16 %v5353
    %v6297 = vunpack.c.h.b16 %v5353
    %v6298 = vunpack.c.l.b16 %v5354
    %v6299 = vunpack.c.h.b16 %v5354
    %v6300 = vunpack.c.l.b16 %v5355
    %v6301 = vunpack.c.h.b16 %v5355
    %v6302 = vunpack.c.l.b16 %v5356
    %v6303 = vunpack.c.h.b16 %v5356
    %v6304 = vunpack.c.l.b16 %v5357
    %v6305 = vunpack.c.h.b16 %v5357
    %v6306 = vunpack.c.l.b16 %v5358
    %v6307 = vunpack.c.h.b16 %v5358
    %v6308 = vunpack.c.l.b16 %v5359
    %v6309 = vunpack.c.h.b16 %v5359
    %v6310 = vunpack.c.l.b16 %v5360
    %v6311 = vunpack.c.h.b16 %v5360
    %v6312 = vunpack.c.l.b16 %v5361
    %v6313 = vunpack.c.h.b16 %v5361
    %v6314 = vunpack.c.l.b16 %v5362
    %v6315 = vunpack.c.h.b16 %v5362
    %v6316 = vunpack.c.l.b16 %v5363
    %v6317 = vunpack.c.h.b16 %v5363
    %v6318 = vunpack.c.l.b16 %v5364
    %v6319 = vunpack.c.h.b16 %v5364
    %v6320 = vunpack.c.l.b16 %v5365
    %v6321 = vunpack.c.h.b16 %v5365
    %v6322 = vunpack.c.l.b16 %v5366
    %v6323 = vunpack.c.h.b16 %v5366
    %v6324 = vunpack.c.l.b16 %v5367
    %v6325 = vunpack.c.h.b16 %v5367
    %v6326 = vunpack.c.l.b16 %v5368
    %v6327 = vunpack.c.h.b16 %v5368
    %v6328 = vunpack.c.l.b16 %v5369
    %v6329 = vunpack.c.h.b16 %v5369
    %v6330 = vunpack.c.l.b16 %v5370
    %v6331 = vunpack.c.h.b16 %v5370
    %v6332 = vunpack.c.l.b16 %v5371
    %v6333 = vunpack.c.h.b16 %v5371
    %v6334 = vunpack.c.l.b16 %v5372
    %v6335 = vunpack.c.h.b16 %v5372
    %v6336 = vunpack.c.l.b16 %v5373
    %v6337 = vunpack.c.h.b16 %v5373
    %v6338 = vunpack.c.l.b16 %v5374
    %v6339 = vunpack.c.h.b16 %v5374
    %v6340 = vunpack.c.l.b16 %v5375
    %v6341 = vunpack.c.h.b16 %v5375
    %v6342 = vunpack.c.l.b16 %v5376
    %v6343 = vunpack.c.h.b16 %v5376
    %v6344 = vunpack.c.l.b16 %v5377
    %v6345 = vunpack.c.h.b16 %v5377
    %v6346 = vunpack.c.l.b16 %v5378
    %v6347 = vunpack.c.h.b16 %v5378
    %v6348 = vunpack.c.l.b16 %v5379
    %v6349 = vunpack.c.h.b16 %v5379
    %v6350 = vunpack.c.l.b16 %v5380
    %v6351 = vunpack.c.h.b16 %v5380
    %v6352 = vunpack.c.l.b16 %v5381
    %v6353 = vunpack.c.h.b16 %v5381
    %v6354 = vunpack.c.l.b16 %v5382
    %v6355 = vunpack.c.h.b16 %v5382
    %v6356 = vunpack.c.l.b16 %v5383
    %v6357 = vunpack.c.h.b16 %v5383
    %v6358 = vunpack.c.l.b16 %v5384
    %v6359 = vunpack.c.h.b16 %v5384
    %v6360 = vunpack.c.l.b16 %v5385
    %v6361 = vunpack.c.h.b16 %v5385
    %v6362 = vunpack.c.l.b16 %v5386
    %v6363 = vunpack.c.h.b16 %v5386
    %v6364 = vunpack.c.l.b16 %v5387
    %v6365 = vunpack.c.h.b16 %v5387
    %v6366 = vunpack.c.l.b16 %v5388
    %v6367 = vunpack.c.h.b16 %v5388
    %v6368 = vunpack.c.l.b16 %v5389
    %v6369 = vunpack.c.h.b16 %v5389
    %v6370 = vunpack.c.l.b16 %v5390
    %v6371 = vunpack.c.h.b16 %v5390
    %v6372 = vunpack.c.l.b16 %v5391
    %v6373 = vunpack.c.h.b16 %v5391
    %v6374 = vunpack.c.l.b16 %v5392
    %v6375 = vunpack.c.h.b16 %v5392
    %v6376 = vunpack.c.l.b16 %v5393
    %v6377 = vunpack.c.h.b16 %v5393
    %v6378 = vunpack.c.l.b16 %v5394
    %v6379 = vunpack.c.h.b16 %v5394
    %v6380 = vunpack.c.l.b16 %v5395
    %v6381 = vunpack.c.h.b16 %v5395
    %v6382 = vunpack.c.l.b16 %v5396
    %v6383 = vunpack.c.h.b16 %v5396
    %v6384 = vunpack.c.l.b16 %v5397
    %v6385 = vunpack.c.h.b16 %v5397
    %v6386 = vpack.c.b16 %v6200, %v6194
    %v6387 = vpack.c.b16 %v6201, %v6195
    %v6388 = vpack.c.b16 %v6202, %v6196
    %v6389 = vpack.c.b16 %v6203, %v6197
    %v6390 = vpack.c.b16 %v6204, %v6198
    %v6391 = vpack.c.b16 %v6205, %v6199
    %v6392 = vpack.c.b16 %v6212, %v6206
    %v6393 = vpack.c.b16 %v6213, %v6207
    %v6394 = vpack.c.b16 %v6214, %v6208
    %v6395 = vpack.c.b16 %v6215, %v6209
    %v6396 = vpack.c.b16 %v6216, %v6210
    %v6397 = vpack.c.b16 %v6217, %v6211
    %v6398 = vpack.c.b16 %v6224, %v6218
    %v6399 = vpack.c.b16 %v6225, %v6219
    %v6400 = vpack.c.b16 %v6226, %v6220
    %v6401 = vpack.c.b16 %v6227, %v6221
    %v6402 = vpack.c.b16 %v6228, %v6222
    %v6403 = vpack.c.b16 %v6229, %v6223
    %v6404 = vpack.c.b16 %v6236, %v6230
    %v6405 = vpack.c.b16 %v6237, %v6231
    %v6406 = vpack.c.b16 %v6238, %v6232
    %v6407 = vpack.c.b16 %v6239, %v6233
    %v6408 = vpack.c.b16 %v6240, %v6234
    %v6409 = vpack.c.b16 %v6241, %v6235
    %v6410 = vpack.c.b16 %v6248, %v6242
    %v6411 = vpack.c.b16 %v6249, %v6243
    %v6412 = vpack.c.b16 %v6250, %v6244
    %v6413 = vpack.c.b16 %v6251, %v6245
    %v6414 = vpack.c.b16 %v6252, %v6246
    %v6415 = vpack.c.b16 %v6253, %v6247
    %v6416 = vpack.c.b16 %v6260, %v6254
    %v6417 = vpack.c.b16 %v6261, %v6255
    %v6418 = vpack.c.b16 %v6262, %v6256
    %v6419 = vpack.c.b16 %v6263, %v6257
    %v6420 = vpack.c.b16 %v6264, %v6258
    %v6421 = vpack.c.b16 %v6265, %v6259
    %v6422 = vpack.c.b16 %v6272, %v6266
    %v6423 = vpack.c.b16 %v6273, %v6267
    %v6424 = vpack.c.b16 %v6274, %v6268
    %v6425 = vpack.c.b16 %v6275, %v6269
    %v6426 = vpack.c.b16 %v6276, %v6270
    %v6427 = vpack.c.b16 %v6277, %v6271
    %v6428 = vpack.c.b16 %v6284, %v6278
    %v6429 = vpack.c.b16 %v6285, %v6279
    %v6430 = vpack.c.b16 %v6286, %v6280
    %v6431 = vpack.c.b16 %v6287, %v6281
    %v6432 = vpack.c.b16 %v6288, %v6282
    %v6433 = vpack.c.b16 %v6289, %v6283
    %v6434 = vpack.c.b16 %v6296, %v6290
    %v6435 = vpack.c.b16 %v6297, %v6291
    %v6436 = vpack.c.b16 %v6298, %v6292
    %v6437 = vpack.c.b16 %v6299, %v6293
    %v6438 = vpack.c.b16 %v6300, %v6294
    %v6439 = vpack.c.b16 %v6301, %v6295
    %v6440 = vpack.c.b16 %v6308, %v6302
    %v6441 = vpack.c.b16 %v6309, %v6303
    %v6442 = vpack.c.b16 %v6310, %v6304
    %v6443 = vpack.c.b16 %v6311, %v6305
    %v6444 = vpack.c.b16 %v6312, %v6306
    %v6445 = vpack.c.b16 %v6313, %v6307
    %v6446 = vpack.c.b16 %v6320, %v6314
    %v6447 = vpack.c.b16 %v6321, %v6315
    %v6448 = vpack.c.b16 %v6322, %v6316
    %v6449 = vpack.c.b16 %v6323, %v6317
    %v6450 = vpack.c.b16 %v6324, %v6318
    %v6451 = vpack.c.b16 %v6325, %v6319
    %v6452 = vpack.c.b16 %v6332, %v6326
    %v6453 = vpack.c.b16 %v6333, %v6327
    %v6454 = vpack.c.b16 %v6334, %v6328
    %v6455 = vpack.c.b16 %v6335, %v6329
    %v6456 = vpack.c.b16 %v6336, %v6330
    %v6457 = vpack.c.b16 %v6337, %v6331
    %v6458 = vpack.c.b16 %v6344, %v6338
    %v6459 = vpack.c.b16 %v6345, %v6339
    %v6460 = vpack.c.b16 %v6346, %v6340
    %v6461 = vpack.c.b16 %v6347, %v6341
    %v6462 = vpack.c.b16 %v6348, %v6342
    %v6463 = vpack.c.b16 %v6349, %v6343
    %v6464 = vpack.c.b16 %v6356, %v6350
    %v6465 = vpack.c.b16 %v6357, %v6351
    %v6466 = vpack.c.b16 %v6358, %v6352
    %v6467 = vpack.c.b16 %v6359, %v6353
    %v6468 = vpack.c.b16 %v6360, %v6354
    %v6469 = vpack.c.b16 %v6361, %v6355
    %v6470 = vpack.c.b16 %v6368, %v6362
    %v6471 = vpack.c.b16 %v6369, %v6363
    %v6472 = vpack.c.b16 %v6370, %v6364
    %v6473 = vpack.c.b16 %v6371, %v6365
    %v6474 = vpack.c.b16 %v6372, %v6366
    %v6475 = vpack.c.b16 %v6373, %v6367
    %v6476 = vpack.c.b16 %v6380, %v6374
    %v6477 = vpack.c.b16 %v6381, %v6375
    %v6478 = vpack.c.b16 %v6382, %v6376
    %v6479 = vpack.c.b16 %v6383, %v6377
    %v6480 = vpack.c.b16 %v6384, %v6378
    %v6481 = vpack.c.b16 %v6385, %v6379
    %6578 = vmatprep.subr.bf16.mxu0 %v6387
    %6579 = vmatpush1.bf16.msra.mxu0 %v6386
    %6580 = vmatprep.subr.bf16.mxu0 %v6393
    %6581 = vmatpush1.bf16.msra.mxu0 %v6392
    %6582 = vmatprep.subr.bf16.mxu0 %v6399
    %6583 = vmatpush1.bf16.msra.mxu0 %v6398
    %6584 = vmatprep.subr.bf16.mxu0 %v6405
    %6585 = vmatpush1.bf16.msra.mxu0 %v6404
    %6586 = vmatprep.subr.bf16.mxu0 %v6411
    %6587 = vmatpush1.bf16.msra.mxu0 %v6410
    %6588 = vmatprep.subr.bf16.mxu0 %v6417
    %6589 = vmatpush1.bf16.msra.mxu0 %v6416
    %6590 = vmatprep.subr.bf16.mxu0 %v6423
    %6591 = vmatpush1.bf16.msra.mxu0 %v6422
    %6592 = vmatprep.subr.bf16.mxu0 %v6429
    %6593 = vmatpush1.bf16.msra.mxu0 %v6428
    %6594 = vmatprep.subr.bf16.mxu0 %v6435
    %6595 = vmatpush1.bf16.msra.mxu0 %v6434
    %6596 = vmatprep.subr.bf16.mxu0 %v6441
    %6597 = vmatpush1.bf16.msra.mxu0 %v6440
    %6598 = vmatprep.subr.bf16.mxu0 %v6447
    %6599 = vmatpush1.bf16.msra.mxu0 %v6446
    %6600 = vmatprep.subr.bf16.mxu0 %v6453
    %6601 = vmatpush1.bf16.msra.mxu0 %v6452
    %6602 = vmatprep.subr.bf16.mxu0 %v6459
    %6603 = vmatpush1.bf16.msra.mxu0 %v6458
    %6604 = vmatprep.subr.bf16.mxu0 %v6465
    %6605 = vmatpush1.bf16.msra.mxu0 %v6464
    %6606 = vmatprep.subr.bf16.mxu0 %v6471
    %6607 = vmatpush1.bf16.msra.mxu0 %v6470
    %6608 = vmatprep.subr.bf16.mxu0 %v6477
    %6609 = vmatpush1.bf16.msra.mxu0 %v6476
    %6610 = vmatprep.mubr.bf16.mxu0 %v6097
    %6611 = vmatmul.mubr.bf16.gmra.mrb[0].mxu0 %v6096
    %v6612 = vpop.f32.mrb[0].mxu0
    %v6613 = vadd.f32 0.0, %v6612
    %v6614 = vpop.f32.mrb[0].mxu0
    %v6615 = vadd.f32 0.0, %v6614
    %v6616 = vpop.f32.mrb[0].mxu0
    %v6617 = vpop.f32.mrb[0].mxu0
    %6618 = vdwg.mxu0
    %6619 = vmatprep.subr.bf16.mxu0 %v6389
    %6620 = vmatpush1.bf16.msra.mxu0 %v6388
    %6621 = vmatprep.subr.bf16.mxu0 %v6395
    %6622 = vmatpush1.bf16.msra.mxu0 %v6394
    %6623 = vmatprep.subr.bf16.mxu0 %v6401
    %6624 = vmatpush1.bf16.msra.mxu0 %v6400
    %6625 = vmatprep.subr.bf16.mxu0 %v6407
    %6626 = vmatpush1.bf16.msra.mxu0 %v6406
    %6627 = vmatprep.subr.bf16.mxu0 %v6413
    %6628 = vmatpush1.bf16.msra.mxu0 %v6412
    %6629 = vmatprep.subr.bf16.mxu0 %v6419
    %6630 = vmatpush1.bf16.msra.mxu0 %v6418
    %6631 = vmatprep.subr.bf16.mxu0 %v6425
    %6632 = vmatpush1.bf16.msra.mxu0 %v6424
    %6633 = vmatprep.subr.bf16.mxu0 %v6431
    %6634 = vmatpush1.bf16.msra.mxu0 %v6430
    %6635 = vmatprep.subr.bf16.mxu0 %v6437
    %6636 = vmatpush1.bf16.msra.mxu0 %v6436
    %6637 = vmatprep.subr.bf16.mxu0 %v6443
    %6638 = vmatpush1.bf16.msra.mxu0 %v6442
    %6639 = vmatprep.subr.bf16.mxu0 %v6449
    %6640 = vmatpush1.bf16.msra.mxu0 %v6448
    %6641 = vmatprep.subr.bf16.mxu0 %v6455
    %6642 = vmatpush1.bf16.msra.mxu0 %v6454
    %6643 = vmatprep.subr.bf16.mxu0 %v6461
    %6644 = vmatpush1.bf16.msra.mxu0 %v6460
    %6645 = vmatprep.subr.bf16.mxu0 %v6467
    %6646 = vmatpush1.bf16.msra.mxu0 %v6466
    %6647 = vmatprep.subr.bf16.mxu0 %v6473
    %6648 = vmatpush1.bf16.msra.mxu0 %v6472
    %6649 = vmatprep.subr.bf16.mxu0 %v6479
    %6650 = vmatpush1.bf16.msra.mxu0 %v6478
    %6651 = vmatprep.mubr.bf16.mxu0 %v6097
    %6652 = vmatmul.mubr.bf16.gmra.mrb[0].mxu0 %v6096
    %v6653 = vpop.f32.mrb[0].mxu0
    %v6654 = vadd.f32 0.0, %v6653
    %v6655 = vpop.f32.mrb[0].mxu0
    %v6656 = vadd.f32 0.0, %v6655
    %v6657 = vpop.f32.mrb[0].mxu0
    %v6658 = vpop.f32.mrb[0].mxu0
    %6659 = vdwg.mxu0
    %6660 = vmatprep.subr.bf16.mxu0 %v6391
    %6661 = vmatpush1.bf16.msra.mxu0 %v6390
    %6662 = vmatprep.subr.bf16.mxu0 %v6397
    %6663 = vmatpush1.bf16.msra.mxu0 %v6396
    %6664 = vmatprep.subr.bf16.mxu0 %v6403
    %6665 = vmatpush1.bf16.msra.mxu0 %v6402
    %6666 = vmatprep.subr.bf16.mxu0 %v6409
    %6667 = vmatpush1.bf16.msra.mxu0 %v6408
    %6668 = vmatprep.subr.bf16.mxu0 %v6415
    %6669 = vmatpush1.bf16.msra.mxu0 %v6414
    %6670 = vmatprep.subr.bf16.mxu0 %v6421
    %6671 = vmatpush1.bf16.msra.mxu0 %v6420
    %6672 = vmatprep.subr.bf16.mxu0 %v6427
    %6673 = vmatpush1.bf16.msra.mxu0 %v6426
    %6674 = vmatprep.subr.bf16.mxu0 %v6433
    %6675 = vmatpush1.bf16.msra.mxu0 %v6432
    %6676 = vmatprep.subr.bf16.mxu0 %v6439
    %6677 = vmatpush1.bf16.msra.mxu0 %v6438
    %6678 = vmatprep.subr.bf16.mxu0 %v6445
    %6679 = vmatpush1.bf16.msra.mxu0 %v6444
    %6680 = vmatprep.subr.bf16.mxu0 %v6451
    %6681 = vmatpush1.bf16.msra.mxu0 %v6450
    %6682 = vmatprep.subr.bf16.mxu0 %v6457
    %6683 = vmatpush1.bf16.msra.mxu0 %v6456
    %6684 = vmatprep.subr.bf16.mxu0 %v6463
    %6685 = vmatpush1.bf16.msra.mxu0 %v6462
    %6686 = vmatprep.subr.bf16.mxu0 %v6469
    %6687 = vmatpush1.bf16.msra.mxu0 %v6468
    %6688 = vmatprep.subr.bf16.mxu0 %v6475
    %6689 = vmatpush1.bf16.msra.mxu0 %v6474
    %6690 = vmatprep.subr.bf16.mxu0 %v6481
    %6691 = vmatpush1.bf16.msra.mxu0 %v6480
    %6692 = vmatprep.mubr.bf16.mxu0 %v6097
    %6693 = vmatmul.mubr.bf16.gmra.mrb[0].mxu0 %v6096
    %v6694 = vpop.f32.mrb[0].mxu0
    %v6695 = vadd.f32 0.0, %v6694
    %v6696 = vpop.f32.mrb[0].mxu0
    %v6697 = vadd.f32 0.0, %v6696
    %v6698 = vpop.f32.mrb[0].mxu0
    %v6699 = vpop.f32.mrb[0].mxu0
    %6700 = vdwg.mxu0
    %s6701 = smul.u32 7, 6
    %s6702 = smul.addr %s6701, 8
    %s6703 = scalar_lea.vmem [#allocation5], %s6702
    %v6704 = vld [vmem:[%s6703] sm:$0xff]
    %v6705 = vld [vmem:[%s6703 + $0x8] sm:$0xff]
    %v6706 = vld [vmem:[%s6703 + $0x10] sm:$0xff]
    %v6707 = vld [vmem:[%s6703 + $0x18] sm:$0xff]
    %v6708 = vld [vmem:[%s6703 + $0x20] sm:$0xff]
    %v6709 = vld [vmem:[%s6703 + $0x28] sm:$0xff]
    %v6710 = vadd.f32 %v6704, %v6613
    %v6711 = vadd.f32 %v6705, %v6615
    %v6712 = vxor.u32 %v6710, 2147483648
    %v6713 = vxor.u32 %v6711, 2147483648
    %v6714 = vmul.f32 %v6712, 1.442695
    %v6715 = vpow.pop %v6714
    %v6716 = vmul.f32 %v6713, 1.442695
    %v6717 = vpow.pop %v6716
    %v6718 = vadd.f32 %v6715, 1.0
    %v6719 = vadd.f32 %v6717, 1.0
    %v6720 = vrcp.pop %v6718
    %v6721 = vmul.f32 1.0, %v6720
    %v6722 = vrcp.pop %v6719
    %v6723 = vmul.f32 1.0, %v6722
    %v6724 = vadd.f32 %v6706, %v6654
    %v6725 = vadd.f32 %v6707, %v6656
    %v6726 = vxor.u32 %v6724, 2147483648
    %v6727 = vxor.u32 %v6725, 2147483648
    %v6728 = vmul.f32 %v6726, 1.442695
    %v6729 = vpow.pop %v6728
    %v6730 = vmul.f32 %v6727, 1.442695
    %v6731 = vpow.pop %v6730
    %v6732 = vadd.f32 %v6729, 1.0
    %v6733 = vadd.f32 %v6731, 1.0
    %v6734 = vrcp.pop %v6732
    %v6735 = vmul.f32 1.0, %v6734
    %v6736 = vrcp.pop %v6733
    %v6737 = vmul.f32 1.0, %v6736
    %v6738 = vadd.f32 %v6695, %v5416
    %v6739 = vadd.f32 %v6697, %v5420
    %v6740 = vmul.f32 %v6721, %v6738
    %v6741 = vmul.f32 %v6723, %v6739
    %v6742 = vadd.f32 %v6708, %v6740
    %v6743 = vadd.f32 %v6709, %v6741
    %v6744 = vtanh.pop %v6742
    %v6745 = vtanh.pop %v6743
    %v6746 = vsub.f32 1.0, %v6735
    %v6747 = vsub.f32 1.0, %v6737
    %v6748 = vmul.f32 %v6746, %v6744
    %v6749 = vmul.f32 %v6747, %v6745
    %v6750 = vmul.f32 %v6735, %v5427
    %v6751 = vmul.f32 %v6737, %v5428
    %v6752 = vadd.f32 %v6748, %v6750
    %v6753 = vadd.f32 %v6749, %v6751
    %s6754 = sadd.s32 %s5424, 7
    %p6755 = scmp.lt.s32.totalorder %s6754, 8
    %s6756 = scalar_select %p6755, 1, 0
    %v6757 = vstv %s6756
    %vm6758 = vcmp.eq.s32.totalorder %v6757, 1
    %v6759 = vsel %vm6758, %v6752, %v5427
    %v6760 = vsel %vm6758, %v6753, %v5428
    %v6761 = vpack.c.bf16 %v6759, %v6759
    %v6762 = vpack.c.bf16 %v6760, %v6760
    %v6765 = vunpack.c.l.b16 %v6761
    %v6766 = vunpack.c.l.b16 %v6762
    %v6767 = vpack.c.b16 %v6766, %v6765
    %s6769 = scalar_lea.vmem %s118, 56
    %6770 = vst [vmem:[%s6769] sm:$0xff] %v6767
    %6771 = vmatprep.subr.bf16.mxu0 %v5720
    %6772 = vmatpush1.bf16.msra.mxu0 %v5719
    %6773 = vmatprep.subr.bf16.mxu0 %v5726
    %6774 = vmatpush1.bf16.msra.mxu0 %v5725
    %6775 = vmatprep.subr.bf16.mxu0 %v5732
    %6776 = vmatpush1.bf16.msra.mxu0 %v5731
    %6777 = vmatprep.subr.bf16.mxu0 %v5738
    %6778 = vmatpush1.bf16.msra.mxu0 %v5737
    %6779 = vmatprep.subr.bf16.mxu0 %v5744
    %6780 = vmatpush1.bf16.msra.mxu0 %v5743
    %6781 = vmatprep.subr.bf16.mxu0 %v5750
    %6782 = vmatpush1.bf16.msra.mxu0 %v5749
    %6783 = vmatprep.subr.bf16.mxu0 %v5756
    %6784 = vmatpush1.bf16.msra.mxu0 %v5755
    %6785 = vmatprep.subr.bf16.mxu0 %v5762
    %6786 = vmatpush1.bf16.msra.mxu0 %v5761
    %6787 = vmatprep.subr.bf16.mxu0 %v5768
    %6788 = vmatpush1.bf16.msra.mxu0 %v5767
    %6789 = vmatprep.subr.bf16.mxu0 %v5774
    %6790 = vmatpush1.bf16.msra.mxu0 %v5773
    %6791 = vmatprep.subr.bf16.mxu0 %v5780
    %6792 = vmatpush1.bf16.msra.mxu0 %v5779
    %6793 = vmatprep.subr.bf16.mxu0 %v5786
    %6794 = vmatpush1.bf16.msra.mxu0 %v5785
    %6795 = vmatprep.subr.bf16.mxu0 %v5792
    %6796 = vmatpush1.bf16.msra.mxu0 %v5791
    %6797 = vmatprep.subr.bf16.mxu0 %v5798
    %6798 = vmatpush1.bf16.msra.mxu0 %v5797
    %6799 = vmatprep.subr.bf16.mxu0 %v5804
    %6800 = vmatpush1.bf16.msra.mxu0 %v5803
    %6801 = vmatprep.subr.bf16.mxu0 %v5810
    %6802 = vmatpush1.bf16.msra.mxu0 %v5809
    %6803 = vmatprep.mubr.bf16.mxu0 %v6088
    %6804 = vmatmul.mubr.bf16.gmra.mrb[0].mxu0 %v6087
    %v6805 = vpop.f32.mrb[0].mxu0
    %v6806 = vadd.f32 0.0, %v6805
    %v6807 = vpop.f32.mrb[0].mxu0
    %v6808 = vadd.f32 0.0, %v6807
    %v6809 = vpop.f32.mrb[0].mxu0
    %v6810 = vpop.f32.mrb[0].mxu0
    %6811 = vdwg.mxu0
    %6812 = vmatprep.subr.bf16.mxu0 %v5722
    %6813 = vmatpush1.bf16.msra.mxu0 %v5721
    %6814 = vmatprep.subr.bf16.mxu0 %v5728
    %6815 = vmatpush1.bf16.msra.mxu0 %v5727
    %6816 = vmatprep.subr.bf16.mxu0 %v5734
    %6817 = vmatpush1.bf16.msra.mxu0 %v5733
    %6818 = vmatprep.subr.bf16.mxu0 %v5740
    %6819 = vmatpush1.bf16.msra.mxu0 %v5739
    %6820 = vmatprep.subr.bf16.mxu0 %v5746
    %6821 = vmatpush1.bf16.msra.mxu0 %v5745
    %6822 = vmatprep.subr.bf16.mxu0 %v5752
    %6823 = vmatpush1.bf16.msra.mxu0 %v5751
    %6824 = vmatprep.subr.bf16.mxu0 %v5758
    %6825 = vmatpush1.bf16.msra.mxu0 %v5757
    %6826 = vmatprep.subr.bf16.mxu0 %v5764
    %6827 = vmatpush1.bf16.msra.mxu0 %v5763
    %6828 = vmatprep.subr.bf16.mxu0 %v5770
    %6829 = vmatpush1.bf16.msra.mxu0 %v5769
    %6830 = vmatprep.subr.bf16.mxu0 %v5776
    %6831 = vmatpush1.bf16.msra.mxu0 %v5775
    %6832 = vmatprep.subr.bf16.mxu0 %v5782
    %6833 = vmatpush1.bf16.msra.mxu0 %v5781
    %6834 = vmatprep.subr.bf16.mxu0 %v5788
    %6835 = vmatpush1.bf16.msra.mxu0 %v5787
    %6836 = vmatprep.subr.bf16.mxu0 %v5794
    %6837 = vmatpush1.bf16.msra.mxu0 %v5793
    %6838 = vmatprep.subr.bf16.mxu0 %v5800
    %6839 = vmatpush1.bf16.msra.mxu0 %v5799
    %6840 = vmatprep.subr.bf16.mxu0 %v5806
    %6841 = vmatpush1.bf16.msra.mxu0 %v5805
    %6842 = vmatprep.subr.bf16.mxu0 %v5812
    %6843 = vmatpush1.bf16.msra.mxu0 %v5811
    %6844 = vmatprep.mubr.bf16.mxu0 %v6088
    %6845 = vmatmul.mubr.bf16.gmra.mrb[0].mxu0 %v6087
    %v6846 = vpop.f32.mrb[0].mxu0
    %v6847 = vadd.f32 0.0, %v6846
    %v6848 = vpop.f32.mrb[0].mxu0
    %v6849 = vadd.f32 0.0, %v6848
    %v6850 = vpop.f32.mrb[0].mxu0
    %v6851 = vpop.f32.mrb[0].mxu0
    %6852 = vdwg.mxu0
    %6853 = vmatprep.subr.bf16.mxu0 %v5724
    %6854 = vmatpush1.bf16.msra.mxu0 %v5723
    %6855 = vmatprep.subr.bf16.mxu0 %v5730
    %6856 = vmatpush1.bf16.msra.mxu0 %v5729
    %6857 = vmatprep.subr.bf16.mxu0 %v5736
    %6858 = vmatpush1.bf16.msra.mxu0 %v5735
    %6859 = vmatprep.subr.bf16.mxu0 %v5742
    %6860 = vmatpush1.bf16.msra.mxu0 %v5741
    %6861 = vmatprep.subr.bf16.mxu0 %v5748
    %6862 = vmatpush1.bf16.msra.mxu0 %v5747
    %6863 = vmatprep.subr.bf16.mxu0 %v5754
    %6864 = vmatpush1.bf16.msra.mxu0 %v5753
    %6865 = vmatprep.subr.bf16.mxu0 %v5760
    %6866 = vmatpush1.bf16.msra.mxu0 %v5759
    %6867 = vmatprep.subr.bf16.mxu0 %v5766
    %6868 = vmatpush1.bf16.msra.mxu0 %v5765
    %6869 = vmatprep.subr.bf16.mxu0 %v5772
    %6870 = vmatpush1.bf16.msra.mxu0 %v5771
    %6871 = vmatprep.subr.bf16.mxu0 %v5778
    %6872 = vmatpush1.bf16.msra.mxu0 %v5777
    %6873 = vmatprep.subr.bf16.mxu0 %v5784
    %6874 = vmatpush1.bf16.msra.mxu0 %v5783
    %6875 = vmatprep.subr.bf16.mxu0 %v5790
    %6876 = vmatpush1.bf16.msra.mxu0 %v5789
    %6877 = vmatprep.subr.bf16.mxu0 %v5796
    %6878 = vmatpush1.bf16.msra.mxu0 %v5795
    %6879 = vmatprep.subr.bf16.mxu0 %v5802
    %6880 = vmatpush1.bf16.msra.mxu0 %v5801
    %6881 = vmatprep.subr.bf16.mxu0 %v5808
    %6882 = vmatpush1.bf16.msra.mxu0 %v5807
    %6883 = vmatprep.subr.bf16.mxu0 %v5814
    %6884 = vmatpush1.bf16.msra.mxu0 %v5813
    %6885 = vmatprep.mubr.bf16.mxu0 %v6088
    %6886 = vmatmul.mubr.bf16.gmra.mrb[0].mxu0 %v6087
    %v6887 = vpop.f32.mrb[0].mxu0
    %v6888 = vadd.f32 0.0, %v6887
    %v6889 = vpop.f32.mrb[0].mxu0
    %v6890 = vadd.f32 0.0, %v6889
    %v6891 = vpop.f32.mrb[0].mxu0
    %v6892 = vpop.f32.mrb[0].mxu0
    %6893 = vdwg.mxu0
    %s6894 = smul.u32 1, 6
    %s6895 = smul.addr %s6894, 8
    %s6896 = scalar_lea.vmem [#allocation4], %s6895
    %v6897 = vld [vmem:[%s6896] sm:$0xff]
    %v6898 = vld [vmem:[%s6896 + $0x8] sm:$0xff]
    %v6899 = vld [vmem:[%s6896 + $0x10] sm:$0xff]
    %v6900 = vld [vmem:[%s6896 + $0x18] sm:$0xff]
    %v6901 = vld [vmem:[%s6896 + $0x20] sm:$0xff]
    %v6902 = vld [vmem:[%s6896 + $0x28] sm:$0xff]
    %v6903 = vadd.f32 %v6897, %v6806
    %v6904 = vadd.f32 %v6898, %v6808
    %v6905 = vxor.u32 %v6903, 2147483648
    %v6906 = vxor.u32 %v6904, 2147483648
    %v6907 = vmul.f32 %v6905, 1.442695
    %v6908 = vpow.pop %v6907
    %v6909 = vmul.f32 %v6906, 1.442695
    %v6910 = vpow.pop %v6909
    %v6911 = vadd.f32 %v6908, 1.0
    %v6912 = vadd.f32 %v6910, 1.0
    %v6913 = vrcp.pop %v6911
    %v6914 = vmul.f32 1.0, %v6913
    %v6915 = vrcp.pop %v6912
    %v6916 = vmul.f32 1.0, %v6915
    %v6917 = vadd.f32 %v6899, %v6847
    %v6918 = vadd.f32 %v6900, %v6849
    %v6919 = vxor.u32 %v6917, 2147483648
    %v6920 = vxor.u32 %v6918, 2147483648
    %v6921 = vmul.f32 %v6919, 1.442695
    %v6922 = vpow.pop %v6921
    %v6923 = vmul.f32 %v6920, 1.442695
    %v6924 = vpow.pop %v6923
    %v6925 = vadd.f32 %v6922, 1.0
    %v6926 = vadd.f32 %v6924, 1.0
    %v6927 = vrcp.pop %v6925
    %v6928 = vmul.f32 1.0, %v6927
    %v6929 = vrcp.pop %v6926
    %v6930 = vmul.f32 1.0, %v6929
    %v6931 = vadd.f32 %v6888, %v5403
    %v6932 = vadd.f32 %v6890, %v5407
    %v6933 = vmul.f32 %v6914, %v6931
    %v6934 = vmul.f32 %v6916, %v6932
    %v6935 = vadd.f32 %v6901, %v6933
    %v6936 = vadd.f32 %v6902, %v6934
    %v6937 = vtanh.pop %v6935
    %v6938 = vtanh.pop %v6936
    %v6939 = vsub.f32 1.0, %v6928
    %v6940 = vsub.f32 1.0, %v6930
    %v6941 = vmul.f32 %v6939, %v6937
    %v6942 = vmul.f32 %v6940, %v6938
    %v6943 = vmul.f32 %v6928, %v6085
    %v6944 = vmul.f32 %v6930, %v6086
    %v6945 = vadd.f32 %v6941, %v6943
    %v6946 = vadd.f32 %v6942, %v6944
    %v6947 = vpack.c.bf16 %v6945, %v6945
    %v6948 = vpack.c.bf16 %v6946, %v6946
    %v6951 = vunpack.c.l.b16 %v6947
    %v6952 = vunpack.c.l.b16 %v6948
    %v6953 = vpack.c.b16 %v6952, %v6951
    %s6955 = scalar_lea.vmem %s6, 8
    %6956 = vst [vmem:[%s6955] sm:$0xff] %v6953
    %6957 = vmatprep.subr.bf16.mxu0 %v6387
    %6958 = vmatpush1.bf16.msra.mxu0 %v6386
    %6959 = vmatprep.subr.bf16.mxu0 %v6393
    %6960 = vmatpush1.bf16.msra.mxu0 %v6392
    %6961 = vmatprep.subr.bf16.mxu0 %v6399
    %6962 = vmatpush1.bf16.msra.mxu0 %v6398
    %6963 = vmatprep.subr.bf16.mxu0 %v6405
    %6964 = vmatpush1.bf16.msra.mxu0 %v6404
    %6965 = vmatprep.subr.bf16.mxu0 %v6411
    %6966 = vmatpush1.bf16.msra.mxu0 %v6410
    %6967 = vmatprep.subr.bf16.mxu0 %v6417
    %6968 = vmatpush1.bf16.msra.mxu0 %v6416
    %6969 = vmatprep.subr.bf16.mxu0 %v6423
    %6970 = vmatpush1.bf16.msra.mxu0 %v6422
    %6971 = vmatprep.subr.bf16.mxu0 %v6429
    %6972 = vmatpush1.bf16.msra.mxu0 %v6428
    %6973 = vmatprep.subr.bf16.mxu0 %v6435
    %6974 = vmatpush1.bf16.msra.mxu0 %v6434
    %6975 = vmatprep.subr.bf16.mxu0 %v6441
    %6976 = vmatpush1.bf16.msra.mxu0 %v6440
    %6977 = vmatprep.subr.bf16.mxu0 %v6447
    %6978 = vmatpush1.bf16.msra.mxu0 %v6446
    %6979 = vmatprep.subr.bf16.mxu0 %v6453
    %6980 = vmatpush1.bf16.msra.mxu0 %v6452
    %6981 = vmatprep.subr.bf16.mxu0 %v6459
    %6982 = vmatpush1.bf16.msra.mxu0 %v6458
    %6983 = vmatprep.subr.bf16.mxu0 %v6465
    %6984 = vmatpush1.bf16.msra.mxu0 %v6464
    %6985 = vmatprep.subr.bf16.mxu0 %v6471
    %6986 = vmatpush1.bf16.msra.mxu0 %v6470
    %6987 = vmatprep.subr.bf16.mxu0 %v6477
    %6988 = vmatpush1.bf16.msra.mxu0 %v6476
    %6989 = vmatprep.mubr.bf16.mxu0 %v6762
    %6990 = vmatmul.mubr.bf16.gmra.mrb[0].mxu0 %v6761
    %v6991 = vpop.f32.mrb[0].mxu0
    %v6992 = vadd.f32 0.0, %v6991
    %v6993 = vpop.f32.mrb[0].mxu0
    %v6994 = vadd.f32 0.0, %v6993
    %v6995 = vpop.f32.mrb[0].mxu0
    %v6996 = vpop.f32.mrb[0].mxu0
    %6997 = vdwg.mxu0
    %6998 = vmatprep.subr.bf16.mxu0 %v6389
    %6999 = vmatpush1.bf16.msra.mxu0 %v6388
    %7000 = vmatprep.subr.bf16.mxu0 %v6395
    %7001 = vmatpush1.bf16.msra.mxu0 %v6394
    %7002 = vmatprep.subr.bf16.mxu0 %v6401
    %7003 = vmatpush1.bf16.msra.mxu0 %v6400
    %7004 = vmatprep.subr.bf16.mxu0 %v6407
    %7005 = vmatpush1.bf16.msra.mxu0 %v6406
    %7006 = vmatprep.subr.bf16.mxu0 %v6413
    %7007 = vmatpush1.bf16.msra.mxu0 %v6412
    %7008 = vmatprep.subr.bf16.mxu0 %v6419
    %7009 = vmatpush1.bf16.msra.mxu0 %v6418
    %7010 = vmatprep.subr.bf16.mxu0 %v6425
    %7011 = vmatpush1.bf16.msra.mxu0 %v6424
    %7012 = vmatprep.subr.bf16.mxu0 %v6431
    %7013 = vmatpush1.bf16.msra.mxu0 %v6430
    %7014 = vmatprep.subr.bf16.mxu0 %v6437
    %7015 = vmatpush1.bf16.msra.mxu0 %v6436
    %7016 = vmatprep.subr.bf16.mxu0 %v6443
    %7017 = vmatpush1.bf16.msra.mxu0 %v6442
    %7018 = vmatprep.subr.bf16.mxu0 %v6449
    %7019 = vmatpush1.bf16.msra.mxu0 %v6448
    %7020 = vmatprep.subr.bf16.mxu0 %v6455
    %7021 = vmatpush1.bf16.msra.mxu0 %v6454
    %7022 = vmatprep.subr.bf16.mxu0 %v6461
    %7023 = vmatpush1.bf16.msra.mxu0 %v6460
    %7024 = vmatprep.subr.bf16.mxu0 %v6467
    %7025 = vmatpush1.bf16.msra.mxu0 %v6466
    %7026 = vmatprep.subr.bf16.mxu0 %v6473
    %7027 = vmatpush1.bf16.msra.mxu0 %v6472
    %7028 = vmatprep.subr.bf16.mxu0 %v6479
    %7029 = vmatpush1.bf16.msra.mxu0 %v6478
    %7030 = vmatprep.mubr.bf16.mxu0 %v6762
    %7031 = vmatmul.mubr.bf16.gmra.mrb[0].mxu0 %v6761
    %v7032 = vpop.f32.mrb[0].mxu0
    %v7033 = vadd.f32 0.0, %v7032
    %v7034 = vpop.f32.mrb[0].mxu0
    %v7035 = vadd.f32 0.0, %v7034
    %v7036 = vpop.f32.mrb[0].mxu0
    %v7037 = vpop.f32.mrb[0].mxu0
    %7038 = vdwg.mxu0
    %7039 = vmatprep.subr.bf16.mxu0 %v6391
    %7040 = vmatpush1.bf16.msra.mxu0 %v6390
    %7041 = vmatprep.subr.bf16.mxu0 %v6397
    %7042 = vmatpush1.bf16.msra.mxu0 %v6396
    %7043 = vmatprep.subr.bf16.mxu0 %v6403
    %7044 = vmatpush1.bf16.msra.mxu0 %v6402
    %7045 = vmatprep.subr.bf16.mxu0 %v6409
    %7046 = vmatpush1.bf16.msra.mxu0 %v6408
    %7047 = vmatprep.subr.bf16.mxu0 %v6415
    %7048 = vmatpush1.bf16.msra.mxu0 %v6414
    %7049 = vmatprep.subr.bf16.mxu0 %v6421
    %7050 = vmatpush1.bf16.msra.mxu0 %v6420
    %7051 = vmatprep.subr.bf16.mxu0 %v6427
    %7052 = vmatpush1.bf16.msra.mxu0 %v6426
    %7053 = vmatprep.subr.bf16.mxu0 %v6433
    %7054 = vmatpush1.bf16.msra.mxu0 %v6432
    %7055 = vmatprep.subr.bf16.mxu0 %v6439
    %7056 = vmatpush1.bf16.msra.mxu0 %v6438
    %7057 = vmatprep.subr.bf16.mxu0 %v6445
    %7058 = vmatpush1.bf16.msra.mxu0 %v6444
    %7059 = vmatprep.subr.bf16.mxu0 %v6451
    %7060 = vmatpush1.bf16.msra.mxu0 %v6450
    %7061 = vmatprep.subr.bf16.mxu0 %v6457
    %7062 = vmatpush1.bf16.msra.mxu0 %v6456
    %7063 = vmatprep.subr.bf16.mxu0 %v6463
    %7064 = vmatpush1.bf16.msra.mxu0 %v6462
    %7065 = vmatprep.subr.bf16.mxu0 %v6469
    %7066 = vmatpush1.bf16.msra.mxu0 %v6468
    %7067 = vmatprep.subr.bf16.mxu0 %v6475
    %7068 = vmatpush1.bf16.msra.mxu0 %v6474
    %7069 = vmatprep.subr.bf16.mxu0 %v6481
    %7070 = vmatpush1.bf16.msra.mxu0 %v6480
    %7071 = vmatprep.mubr.bf16.mxu0 %v6762
    %7072 = vmatmul.mubr.bf16.gmra.mrb[0].mxu0 %v6761
    %v7073 = vpop.f32.mrb[0].mxu0
    %v7074 = vadd.f32 0.0, %v7073
    %v7075 = vpop.f32.mrb[0].mxu0
    %v7076 = vadd.f32 0.0, %v7075
    %v7077 = vpop.f32.mrb[0].mxu0
    %v7078 = vpop.f32.mrb[0].mxu0
    %7079 = vdwg.mxu0
    %s7080 = smul.u32 6, 6
    %s7081 = smul.addr %s7080, 8
    %s7082 = scalar_lea.vmem [#allocation5], %s7081
    %v7083 = vld [vmem:[%s7082] sm:$0xff]
    %v7084 = vld [vmem:[%s7082 + $0x8] sm:$0xff]
    %v7085 = vld [vmem:[%s7082 + $0x10] sm:$0xff]
    %v7086 = vld [vmem:[%s7082 + $0x18] sm:$0xff]
    %v7087 = vld [vmem:[%s7082 + $0x20] sm:$0xff]
    %v7088 = vld [vmem:[%s7082 + $0x28] sm:$0xff]
    %v7089 = vadd.f32 %v7083, %v6992
    %v7090 = vadd.f32 %v7084, %v6994
    %v7091 = vxor.u32 %v7089, 2147483648
    %v7092 = vxor.u32 %v7090, 2147483648
    %v7093 = vmul.f32 %v7091, 1.442695
    %v7094 = vpow.pop %v7093
    %v7095 = vmul.f32 %v7092, 1.442695
    %v7096 = vpow.pop %v7095
    %v7097 = vadd.f32 %v7094, 1.0
    %v7098 = vadd.f32 %v7096, 1.0
    %v7099 = vrcp.pop %v7097
    %v7100 = vmul.f32 1.0, %v7099
    %v7101 = vrcp.pop %v7098
    %v7102 = vmul.f32 1.0, %v7101
    %v7103 = vadd.f32 %v7085, %v7033
    %v7104 = vadd.f32 %v7086, %v7035
    %v7105 = vxor.u32 %v7103, 2147483648
    %v7106 = vxor.u32 %v7104, 2147483648
    %v7107 = vmul.f32 %v7105, 1.442695
    %v7108 = vpow.pop %v7107
    %v7109 = vmul.f32 %v7106, 1.442695
    %v7110 = vpow.pop %v7109
    %v7111 = vadd.f32 %v7108, 1.0
    %v7112 = vadd.f32 %v7110, 1.0
    %v7113 = vrcp.pop %v7111
    %v7114 = vmul.f32 1.0, %v7113
    %v7115 = vrcp.pop %v7112
    %v7116 = vmul.f32 1.0, %v7115
    %v7117 = vadd.f32 %v7074, %v5416
    %v7118 = vadd.f32 %v7076, %v5420
    %v7119 = vmul.f32 %v7100, %v7117
    %v7120 = vmul.f32 %v7102, %v7118
    %v7121 = vadd.f32 %v7087, %v7119
    %v7122 = vadd.f32 %v7088, %v7120
    %v7123 = vtanh.pop %v7121
    %v7124 = vtanh.pop %v7122
    %v7125 = vsub.f32 1.0, %v7114
    %v7126 = vsub.f32 1.0, %v7116
    %v7127 = vmul.f32 %v7125, %v7123
    %v7128 = vmul.f32 %v7126, %v7124
    %v7129 = vmul.f32 %v7114, %v6759
    %v7130 = vmul.f32 %v7116, %v6760
    %v7131 = vadd.f32 %v7127, %v7129
    %v7132 = vadd.f32 %v7128, %v7130
    %s7133 = sadd.s32 %s5424, 6
    %p7134 = scmp.lt.s32.totalorder %s7133, 8
    %s7135 = scalar_select %p7134, 1, 0
    %v7136 = vstv %s7135
    %vm7137 = vcmp.eq.s32.totalorder %v7136, 1
    %v7138 = vsel %vm7137, %v7131, %v6759
    %v7139 = vsel %vm7137, %v7132, %v6760
    %v7140 = vpack.c.bf16 %v7138, %v7138
    %v7141 = vpack.c.bf16 %v7139, %v7139
    %v7144 = vunpack.c.l.b16 %v7140
    %v7145 = vunpack.c.l.b16 %v7141
    %v7146 = vpack.c.b16 %v7145, %v7144
    %s7148 = scalar_lea.vmem %s118, 48
    %7149 = vst [vmem:[%s7148] sm:$0xff] %v7146
    %7150 = vmatprep.subr.bf16.mxu0 %v5720
    %7151 = vmatpush1.bf16.msra.mxu0 %v5719
    %7152 = vmatprep.subr.bf16.mxu0 %v5726
    %7153 = vmatpush1.bf16.msra.mxu0 %v5725
    %7154 = vmatprep.subr.bf16.mxu0 %v5732
    %7155 = vmatpush1.bf16.msra.mxu0 %v5731
    %7156 = vmatprep.subr.bf16.mxu0 %v5738
    %7157 = vmatpush1.bf16.msra.mxu0 %v5737
    %7158 = vmatprep.subr.bf16.mxu0 %v5744
    %7159 = vmatpush1.bf16.msra.mxu0 %v5743
    %7160 = vmatprep.subr.bf16.mxu0 %v5750
    %7161 = vmatpush1.bf16.msra.mxu0 %v5749
    %7162 = vmatprep.subr.bf16.mxu0 %v5756
    %7163 = vmatpush1.bf16.msra.mxu0 %v5755
    %7164 = vmatprep.subr.bf16.mxu0 %v5762
    %7165 = vmatpush1.bf16.msra.mxu0 %v5761
    %7166 = vmatprep.subr.bf16.mxu0 %v5768
    %7167 = vmatpush1.bf16.msra.mxu0 %v5767
    %7168 = vmatprep.subr.bf16.mxu0 %v5774
    %7169 = vmatpush1.bf16.msra.mxu0 %v5773
    %7170 = vmatprep.subr.bf16.mxu0 %v5780
    %7171 = vmatpush1.bf16.msra.mxu0 %v5779
    %7172 = vmatprep.subr.bf16.mxu0 %v5786
    %7173 = vmatpush1.bf16.msra.mxu0 %v5785
    %7174 = vmatprep.subr.bf16.mxu0 %v5792
    %7175 = vmatpush1.bf16.msra.mxu0 %v5791
    %7176 = vmatprep.subr.bf16.mxu0 %v5798
    %7177 = vmatpush1.bf16.msra.mxu0 %v5797
    %7178 = vmatprep.subr.bf16.mxu0 %v5804
    %7179 = vmatpush1.bf16.msra.mxu0 %v5803
    %7180 = vmatprep.subr.bf16.mxu0 %v5810
    %7181 = vmatpush1.bf16.msra.mxu0 %v5809
    %7182 = vmatprep.mubr.bf16.mxu0 %v6948
    %7183 = vmatmul.mubr.bf16.gmra.mrb[0].mxu0 %v6947
    %v7184 = vpop.f32.mrb[0].mxu0
    %v7185 = vadd.f32 0.0, %v7184
    %v7186 = vpop.f32.mrb[0].mxu0
    %v7187 = vadd.f32 0.0, %v7186
    %v7188 = vpop.f32.mrb[0].mxu0
    %v7189 = vpop.f32.mrb[0].mxu0
    %7190 = vdwg.mxu0
    %7191 = vmatprep.subr.bf16.mxu0 %v5722
    %7192 = vmatpush1.bf16.msra.mxu0 %v5721
    %7193 = vmatprep.subr.bf16.mxu0 %v5728
    %7194 = vmatpush1.bf16.msra.mxu0 %v5727
    %7195 = vmatprep.subr.bf16.mxu0 %v5734
    %7196 = vmatpush1.bf16.msra.mxu0 %v5733
    %7197 = vmatprep.subr.bf16.mxu0 %v5740
    %7198 = vmatpush1.bf16.msra.mxu0 %v5739
    %7199 = vmatprep.subr.bf16.mxu0 %v5746
    %7200 = vmatpush1.bf16.msra.mxu0 %v5745
    %7201 = vmatprep.subr.bf16.mxu0 %v5752
    %7202 = vmatpush1.bf16.msra.mxu0 %v5751
    %7203 = vmatprep.subr.bf16.mxu0 %v5758
    %7204 = vmatpush1.bf16.msra.mxu0 %v5757
    %7205 = vmatprep.subr.bf16.mxu0 %v5764
    %7206 = vmatpush1.bf16.msra.mxu0 %v5763
    %7207 = vmatprep.subr.bf16.mxu0 %v5770
    %7208 = vmatpush1.bf16.msra.mxu0 %v5769
    %7209 = vmatprep.subr.bf16.mxu0 %v5776
    %7210 = vmatpush1.bf16.msra.mxu0 %v5775
    %7211 = vmatprep.subr.bf16.mxu0 %v5782
    %7212 = vmatpush1.bf16.msra.mxu0 %v5781
    %7213 = vmatprep.subr.bf16.mxu0 %v5788
    %7214 = vmatpush1.bf16.msra.mxu0 %v5787
    %7215 = vmatprep.subr.bf16.mxu0 %v5794
    %7216 = vmatpush1.bf16.msra.mxu0 %v5793
    %7217 = vmatprep.subr.bf16.mxu0 %v5800
    %7218 = vmatpush1.bf16.msra.mxu0 %v5799
    %7219 = vmatprep.subr.bf16.mxu0 %v5806
    %7220 = vmatpush1.bf16.msra.mxu0 %v5805
    %7221 = vmatprep.subr.bf16.mxu0 %v5812
    %7222 = vmatpush1.bf16.msra.mxu0 %v5811
    %7223 = vmatprep.mubr.bf16.mxu0 %v6948
    %7224 = vmatmul.mubr.bf16.gmra.mrb[0].mxu0 %v6947
    %v7225 = vpop.f32.mrb[0].mxu0
    %v7226 = vadd.f32 0.0, %v7225
    %v7227 = vpop.f32.mrb[0].mxu0
    %v7228 = vadd.f32 0.0, %v7227
    %v7229 = vpop.f32.mrb[0].mxu0
    %v7230 = vpop.f32.mrb[0].mxu0
    %7231 = vdwg.mxu0
    %7232 = vmatprep.subr.bf16.mxu0 %v5724
    %7233 = vmatpush1.bf16.msra.mxu0 %v5723
    %7234 = vmatprep.subr.bf16.mxu0 %v5730
    %7235 = vmatpush1.bf16.msra.mxu0 %v5729
    %7236 = vmatprep.subr.bf16.mxu0 %v5736
    %7237 = vmatpush1.bf16.msra.mxu0 %v5735
    %7238 = vmatprep.subr.bf16.mxu0 %v5742
    %7239 = vmatpush1.bf16.msra.mxu0 %v5741
    %7240 = vmatprep.subr.bf16.mxu0 %v5748
    %7241 = vmatpush1.bf16.msra.mxu0 %v5747
    %7242 = vmatprep.subr.bf16.mxu0 %v5754
    %7243 = vmatpush1.bf16.msra.mxu0 %v5753
    %7244 = vmatprep.subr.bf16.mxu0 %v5760
    %7245 = vmatpush1.bf16.msra.mxu0 %v5759
    %7246 = vmatprep.subr.bf16.mxu0 %v5766
    %7247 = vmatpush1.bf16.msra.mxu0 %v5765
    %7248 = vmatprep.subr.bf16.mxu0 %v5772
    %7249 = vmatpush1.bf16.msra.mxu0 %v5771
    %7250 = vmatprep.subr.bf16.mxu0 %v5778
    %7251 = vmatpush1.bf16.msra.mxu0 %v5777
    %7252 = vmatprep.subr.bf16.mxu0 %v5784
    %7253 = vmatpush1.bf16.msra.mxu0 %v5783
    %7254 = vmatprep.subr.bf16.mxu0 %v5790
    %7255 = vmatpush1.bf16.msra.mxu0 %v5789
    %7256 = vmatprep.subr.bf16.mxu0 %v5796
    %7257 = vmatpush1.bf16.msra.mxu0 %v5795
    %7258 = vmatprep.subr.bf16.mxu0 %v5802
    %7259 = vmatpush1.bf16.msra.mxu0 %v5801
    %7260 = vmatprep.subr.bf16.mxu0 %v5808
    %7261 = vmatpush1.bf16.msra.mxu0 %v5807
    %7262 = vmatprep.subr.bf16.mxu0 %v5814
    %7263 = vmatpush1.bf16.msra.mxu0 %v5813
    %7264 = vmatprep.mubr.bf16.mxu0 %v6948
    %7265 = vmatmul.mubr.bf16.gmra.mrb[0].mxu0 %v6947
    %v7266 = vpop.f32.mrb[0].mxu0
    %v7267 = vadd.f32 0.0, %v7266
    %v7268 = vpop.f32.mrb[0].mxu0
    %v7269 = vadd.f32 0.0, %v7268
    %v7270 = vpop.f32.mrb[0].mxu0
    %v7271 = vpop.f32.mrb[0].mxu0
    %7272 = vdwg.mxu0
    %s7273 = smul.u32 2, 6
    %s7274 = smul.addr %s7273, 8
    %s7275 = scalar_lea.vmem [#allocation4], %s7274
    %v7276 = vld [vmem:[%s7275] sm:$0xff]
    %v7277 = vld [vmem:[%s7275 + $0x8] sm:$0xff]
    %v7278 = vld [vmem:[%s7275 + $0x10] sm:$0xff]
    %v7279 = vld [vmem:[%s7275 + $0x18] sm:$0xff]
    %v7280 = vld [vmem:[%s7275 + $0x20] sm:$0xff]
    %v7281 = vld [vmem:[%s7275 + $0x28] sm:$0xff]
    %v7282 = vadd.f32 %v7276, %v7185
    %v7283 = vadd.f32 %v7277, %v7187
    %v7284 = vxor.u32 %v7282, 2147483648
    %v7285 = vxor.u32 %v7283, 2147483648
    %v7286 = vmul.f32 %v7284, 1.442695
    %v7287 = vpow.pop %v7286
    %v7288 = vmul.f32 %v7285, 1.442695
    %v7289 = vpow.pop %v7288
    %v7290 = vadd.f32 %v7287, 1.0
    %v7291 = vadd.f32 %v7289, 1.0
    %v7292 = vrcp.pop %v7290
    %v7293 = vmul.f32 1.0, %v7292
    %v7294 = vrcp.pop %v7291
    %v7295 = vmul.f32 1.0, %v7294
    %v7296 = vadd.f32 %v7278, %v7226
    %v7297 = vadd.f32 %v7279, %v7228
    %v7298 = vxor.u32 %v7296, 2147483648
    %v7299 = vxor.u32 %v7297, 2147483648
    %v7300 = vmul.f32 %v7298, 1.442695
    %v7301 = vpow.pop %v7300
    %v7302 = vmul.f32 %v7299, 1.442695
    %v7303 = vpow.pop %v7302
    %v7304 = vadd.f32 %v7301, 1.0
    %v7305 = vadd.f32 %v7303, 1.0
    %v7306 = vrcp.pop %v7304
    %v7307 = vmul.f32 1.0, %v7306
    %v7308 = vrcp.pop %v7305
    %v7309 = vmul.f32 1.0, %v7308
    %v7310 = vadd.f32 %v7267, %v5403
    %v7311 = vadd.f32 %v7269, %v5407
    %v7312 = vmul.f32 %v7293, %v7310
    %v7313 = vmul.f32 %v7295, %v7311
    %v7314 = vadd.f32 %v7280, %v7312
    %v7315 = vadd.f32 %v7281, %v7313
    %v7316 = vtanh.pop %v7314
    %v7317 = vtanh.pop %v7315
    %v7318 = vsub.f32 1.0, %v7307
    %v7319 = vsub.f32 1.0, %v7309
    %v7320 = vmul.f32 %v7318, %v7316
    %v7321 = vmul.f32 %v7319, %v7317
    %v7322 = vmul.f32 %v7307, %v6945
    %v7323 = vmul.f32 %v7309, %v6946
    %v7324 = vadd.f32 %v7320, %v7322
    %v7325 = vadd.f32 %v7321, %v7323
    %v7326 = vpack.c.bf16 %v7324, %v7324
    %v7327 = vpack.c.bf16 %v7325, %v7325
    %v7330 = vunpack.c.l.b16 %v7326
    %v7331 = vunpack.c.l.b16 %v7327
    %v7332 = vpack.c.b16 %v7331, %v7330
    %s7334 = scalar_lea.vmem %s6, 16
    %7335 = vst [vmem:[%s7334] sm:$0xff] %v7332
    %7336 = vmatprep.subr.bf16.mxu0 %v6387
    %7337 = vmatpush1.bf16.msra.mxu0 %v6386
    %7338 = vmatprep.subr.bf16.mxu0 %v6393
    %7339 = vmatpush1.bf16.msra.mxu0 %v6392
    %7340 = vmatprep.subr.bf16.mxu0 %v6399
    %7341 = vmatpush1.bf16.msra.mxu0 %v6398
    %7342 = vmatprep.subr.bf16.mxu0 %v6405
    %7343 = vmatpush1.bf16.msra.mxu0 %v6404
    %7344 = vmatprep.subr.bf16.mxu0 %v6411
    %7345 = vmatpush1.bf16.msra.mxu0 %v6410
    %7346 = vmatprep.subr.bf16.mxu0 %v6417
    %7347 = vmatpush1.bf16.msra.mxu0 %v6416
    %7348 = vmatprep.subr.bf16.mxu0 %v6423
    %7349 = vmatpush1.bf16.msra.mxu0 %v6422
    %7350 = vmatprep.subr.bf16.mxu0 %v6429
    %7351 = vmatpush1.bf16.msra.mxu0 %v6428
    %7352 = vmatprep.subr.bf16.mxu0 %v6435
    %7353 = vmatpush1.bf16.msra.mxu0 %v6434
    %7354 = vmatprep.subr.bf16.mxu0 %v6441
    %7355 = vmatpush1.bf16.msra.mxu0 %v6440
    %7356 = vmatprep.subr.bf16.mxu0 %v6447
    %7357 = vmatpush1.bf16.msra.mxu0 %v6446
    %7358 = vmatprep.subr.bf16.mxu0 %v6453
    %7359 = vmatpush1.bf16.msra.mxu0 %v6452
    %7360 = vmatprep.subr.bf16.mxu0 %v6459
    %7361 = vmatpush1.bf16.msra.mxu0 %v6458
    %7362 = vmatprep.subr.bf16.mxu0 %v6465
    %7363 = vmatpush1.bf16.msra.mxu0 %v6464
    %7364 = vmatprep.subr.bf16.mxu0 %v6471
    %7365 = vmatpush1.bf16.msra.mxu0 %v6470
    %7366 = vmatprep.subr.bf16.mxu0 %v6477
    %7367 = vmatpush1.bf16.msra.mxu0 %v6476
    %7368 = vmatprep.mubr.bf16.mxu0 %v7141
    %7369 = vmatmul.mubr.bf16.gmra.mrb[0].mxu0 %v7140
    %v7370 = vpop.f32.mrb[0].mxu0
    %v7371 = vadd.f32 0.0, %v7370
    %v7372 = vpop.f32.mrb[0].mxu0
    %v7373 = vadd.f32 0.0, %v7372
    %v7374 = vpop.f32.mrb[0].mxu0
    %v7375 = vpop.f32.mrb[0].mxu0
    %7376 = vdwg.mxu0
    %7377 = vmatprep.subr.bf16.mxu0 %v6389
    %7378 = vmatpush1.bf16.msra.mxu0 %v6388
    %7379 = vmatprep.subr.bf16.mxu0 %v6395
    %7380 = vmatpush1.bf16.msra.mxu0 %v6394
    %7381 = vmatprep.subr.bf16.mxu0 %v6401
    %7382 = vmatpush1.bf16.msra.mxu0 %v6400
    %7383 = vmatprep.subr.bf16.mxu0 %v6407
    %7384 = vmatpush1.bf16.msra.mxu0 %v6406
    %7385 = vmatprep.subr.bf16.mxu0 %v6413
    %7386 = vmatpush1.bf16.msra.mxu0 %v6412
    %7387 = vmatprep.subr.bf16.mxu0 %v6419
    %7388 = vmatpush1.bf16.msra.mxu0 %v6418
    %7389 = vmatprep.subr.bf16.mxu0 %v6425
    %7390 = vmatpush1.bf16.msra.mxu0 %v6424
    %7391 = vmatprep.subr.bf16.mxu0 %v6431
    %7392 = vmatpush1.bf16.msra.mxu0 %v6430
    %7393 = vmatprep.subr.bf16.mxu0 %v6437
    %7394 = vmatpush1.bf16.msra.mxu0 %v6436
    %7395 = vmatprep.subr.bf16.mxu0 %v6443
    %7396 = vmatpush1.bf16.msra.mxu0 %v6442
    %7397 = vmatprep.subr.bf16.mxu0 %v6449
    %7398 = vmatpush1.bf16.msra.mxu0 %v6448
    %7399 = vmatprep.subr.bf16.mxu0 %v6455
    %7400 = vmatpush1.bf16.msra.mxu0 %v6454
    %7401 = vmatprep.subr.bf16.mxu0 %v6461
    %7402 = vmatpush1.bf16.msra.mxu0 %v6460
    %7403 = vmatprep.subr.bf16.mxu0 %v6467
    %7404 = vmatpush1.bf16.msra.mxu0 %v6466
    %7405 = vmatprep.subr.bf16.mxu0 %v6473
    %7406 = vmatpush1.bf16.msra.mxu0 %v6472
    %7407 = vmatprep.subr.bf16.mxu0 %v6479
    %7408 = vmatpush1.bf16.msra.mxu0 %v6478
    %7409 = vmatprep.mubr.bf16.mxu0 %v7141
    %7410 = vmatmul.mubr.bf16.gmra.mrb[0].mxu0 %v7140
    %v7411 = vpop.f32.mrb[0].mxu0
    %v7412 = vadd.f32 0.0, %v7411
    %v7413 = vpop.f32.mrb[0].mxu0
    %v7414 = vadd.f32 0.0, %v7413
    %v7415 = vpop.f32.mrb[0].mxu0
    %v7416 = vpop.f32.mrb[0].mxu0
    %7417 = vdwg.mxu0
    %7418 = vmatprep.subr.bf16.mxu0 %v6391
    %7419 = vmatpush1.bf16.msra.mxu0 %v6390
    %7420 = vmatprep.subr.bf16.mxu0 %v6397
    %7421 = vmatpush1.bf16.msra.mxu0 %v6396
    %7422 = vmatprep.subr.bf16.mxu0 %v6403
    %7423 = vmatpush1.bf16.msra.mxu0 %v6402
    %7424 = vmatprep.subr.bf16.mxu0 %v6409
    %7425 = vmatpush1.bf16.msra.mxu0 %v6408
    %7426 = vmatprep.subr.bf16.mxu0 %v6415
    %7427 = vmatpush1.bf16.msra.mxu0 %v6414
    %7428 = vmatprep.subr.bf16.mxu0 %v6421
    %7429 = vmatpush1.bf16.msra.mxu0 %v6420
    %7430 = vmatprep.subr.bf16.mxu0 %v6427
    %7431 = vmatpush1.bf16.msra.mxu0 %v6426
    %7432 = vmatprep.subr.bf16.mxu0 %v6433
    %7433 = vmatpush1.bf16.msra.mxu0 %v6432
    %7434 = vmatprep.subr.bf16.mxu0 %v6439
    %7435 = vmatpush1.bf16.msra.mxu0 %v6438
    %7436 = vmatprep.subr.bf16.mxu0 %v6445
    %7437 = vmatpush1.bf16.msra.mxu0 %v6444
    %7438 = vmatprep.subr.bf16.mxu0 %v6451
    %7439 = vmatpush1.bf16.msra.mxu0 %v6450
    %7440 = vmatprep.subr.bf16.mxu0 %v6457
    %7441 = vmatpush1.bf16.msra.mxu0 %v6456
    %7442 = vmatprep.subr.bf16.mxu0 %v6463
    %7443 = vmatpush1.bf16.msra.mxu0 %v6462
    %7444 = vmatprep.subr.bf16.mxu0 %v6469
    %7445 = vmatpush1.bf16.msra.mxu0 %v6468
    %7446 = vmatprep.subr.bf16.mxu0 %v6475
    %7447 = vmatpush1.bf16.msra.mxu0 %v6474
    %7448 = vmatprep.subr.bf16.mxu0 %v6481
    %7449 = vmatpush1.bf16.msra.mxu0 %v6480
    %7450 = vmatprep.mubr.bf16.mxu0 %v7141
    %7451 = vmatmul.mubr.bf16.gmra.mrb[0].mxu0 %v7140
    %v7452 = vpop.f32.mrb[0].mxu0
    %v7453 = vadd.f32 0.0, %v7452
    %v7454 = vpop.f32.mrb[0].mxu0
    %v7455 = vadd.f32 0.0, %v7454
    %v7456 = vpop.f32.mrb[0].mxu0
    %v7457 = vpop.f32.mrb[0].mxu0
    %7458 = vdwg.mxu0
    %s7459 = smul.u32 5, 6
    %s7460 = smul.addr %s7459, 8
    %s7461 = scalar_lea.vmem [#allocation5], %s7460
    %v7462 = vld [vmem:[%s7461] sm:$0xff]
    %v7463 = vld [vmem:[%s7461 + $0x8] sm:$0xff]
    %v7464 = vld [vmem:[%s7461 + $0x10] sm:$0xff]
    %v7465 = vld [vmem:[%s7461 + $0x18] sm:$0xff]
    %v7466 = vld [vmem:[%s7461 + $0x20] sm:$0xff]
    %v7467 = vld [vmem:[%s7461 + $0x28] sm:$0xff]
    %v7468 = vadd.f32 %v7462, %v7371
    %v7469 = vadd.f32 %v7463, %v7373
    %v7470 = vxor.u32 %v7468, 2147483648
    %v7471 = vxor.u32 %v7469, 2147483648
    %v7472 = vmul.f32 %v7470, 1.442695
    %v7473 = vpow.pop %v7472
    %v7474 = vmul.f32 %v7471, 1.442695
    %v7475 = vpow.pop %v7474
    %v7476 = vadd.f32 %v7473, 1.0
    %v7477 = vadd.f32 %v7475, 1.0
    %v7478 = vrcp.pop %v7476
    %v7479 = vmul.f32 1.0, %v7478
    %v7480 = vrcp.pop %v7477
    %v7481 = vmul.f32 1.0, %v7480
    %v7482 = vadd.f32 %v7464, %v7412
    %v7483 = vadd.f32 %v7465, %v7414
    %v7484 = vxor.u32 %v7482, 2147483648
    %v7485 = vxor.u32 %v7483, 2147483648
    %v7486 = vmul.f32 %v7484, 1.442695
    %v7487 = vpow.pop %v7486
    %v7488 = vmul.f32 %v7485, 1.442695
    %v7489 = vpow.pop %v7488
    %v7490 = vadd.f32 %v7487, 1.0
    %v7491 = vadd.f32 %v7489, 1.0
    %v7492 = vrcp.pop %v7490
    %v7493 = vmul.f32 1.0, %v7492
    %v7494 = vrcp.pop %v7491
    %v7495 = vmul.f32 1.0, %v7494
    %v7496 = vadd.f32 %v7453, %v5416
    %v7497 = vadd.f32 %v7455, %v5420
    %v7498 = vmul.f32 %v7479, %v7496
    %v7499 = vmul.f32 %v7481, %v7497
    %v7500 = vadd.f32 %v7466, %v7498
    %v7501 = vadd.f32 %v7467, %v7499
    %v7502 = vtanh.pop %v7500
    %v7503 = vtanh.pop %v7501
    %v7504 = vsub.f32 1.0, %v7493
    %v7505 = vsub.f32 1.0, %v7495
    %v7506 = vmul.f32 %v7504, %v7502
    %v7507 = vmul.f32 %v7505, %v7503
    %v7508 = vmul.f32 %v7493, %v7138
    %v7509 = vmul.f32 %v7495, %v7139
    %v7510 = vadd.f32 %v7506, %v7508
    %v7511 = vadd.f32 %v7507, %v7509
    %s7512 = sadd.s32 %s5424, 5
    %p7513 = scmp.lt.s32.totalorder %s7512, 8
    %s7514 = scalar_select %p7513, 1, 0
    %v7515 = vstv %s7514
    %vm7516 = vcmp.eq.s32.totalorder %v7515, 1
    %v7517 = vsel %vm7516, %v7510, %v7138
    %v7518 = vsel %vm7516, %v7511, %v7139
    %v7519 = vpack.c.bf16 %v7517, %v7517
    %v7520 = vpack.c.bf16 %v7518, %v7518
    %v7523 = vunpack.c.l.b16 %v7519
    %v7524 = vunpack.c.l.b16 %v7520
    %v7525 = vpack.c.b16 %v7524, %v7523
    %s7527 = scalar_lea.vmem %s118, 40
    %7528 = vst [vmem:[%s7527] sm:$0xff] %v7525
    %7529 = vmatprep.subr.bf16.mxu0 %v5720
    %7530 = vmatpush1.bf16.msra.mxu0 %v5719
    %7531 = vmatprep.subr.bf16.mxu0 %v5726
    %7532 = vmatpush1.bf16.msra.mxu0 %v5725
    %7533 = vmatprep.subr.bf16.mxu0 %v5732
    %7534 = vmatpush1.bf16.msra.mxu0 %v5731
    %7535 = vmatprep.subr.bf16.mxu0 %v5738
    %7536 = vmatpush1.bf16.msra.mxu0 %v5737
    %7537 = vmatprep.subr.bf16.mxu0 %v5744
    %7538 = vmatpush1.bf16.msra.mxu0 %v5743
    %7539 = vmatprep.subr.bf16.mxu0 %v5750
    %7540 = vmatpush1.bf16.msra.mxu0 %v5749
    %7541 = vmatprep.subr.bf16.mxu0 %v5756
    %7542 = vmatpush1.bf16.msra.mxu0 %v5755
    %7543 = vmatprep.subr.bf16.mxu0 %v5762
    %7544 = vmatpush1.bf16.msra.mxu0 %v5761
    %7545 = vmatprep.subr.bf16.mxu0 %v5768
    %7546 = vmatpush1.bf16.msra.mxu0 %v5767
    %7547 = vmatprep.subr.bf16.mxu0 %v5774
    %7548 = vmatpush1.bf16.msra.mxu0 %v5773
    %7549 = vmatprep.subr.bf16.mxu0 %v5780
    %7550 = vmatpush1.bf16.msra.mxu0 %v5779
    %7551 = vmatprep.subr.bf16.mxu0 %v5786
    %7552 = vmatpush1.bf16.msra.mxu0 %v5785
    %7553 = vmatprep.subr.bf16.mxu0 %v5792
    %7554 = vmatpush1.bf16.msra.mxu0 %v5791
    %7555 = vmatprep.subr.bf16.mxu0 %v5798
    %7556 = vmatpush1.bf16.msra.mxu0 %v5797
    %7557 = vmatprep.subr.bf16.mxu0 %v5804
    %7558 = vmatpush1.bf16.msra.mxu0 %v5803
    %7559 = vmatprep.subr.bf16.mxu0 %v5810
    %7560 = vmatpush1.bf16.msra.mxu0 %v5809
    %7561 = vmatprep.mubr.bf16.mxu0 %v7327
    %7562 = vmatmul.mubr.bf16.gmra.mrb[0].mxu0 %v7326
    %v7563 = vpop.f32.mrb[0].mxu0
    %v7564 = vadd.f32 0.0, %v7563
    %v7565 = vpop.f32.mrb[0].mxu0
    %v7566 = vadd.f32 0.0, %v7565
    %v7567 = vpop.f32.mrb[0].mxu0
    %v7568 = vpop.f32.mrb[0].mxu0
    %7569 = vdwg.mxu0
    %7570 = vmatprep.subr.bf16.mxu0 %v5722
    %7571 = vmatpush1.bf16.msra.mxu0 %v5721
    %7572 = vmatprep.subr.bf16.mxu0 %v5728
    %7573 = vmatpush1.bf16.msra.mxu0 %v5727
    %7574 = vmatprep.subr.bf16.mxu0 %v5734
    %7575 = vmatpush1.bf16.msra.mxu0 %v5733
    %7576 = vmatprep.subr.bf16.mxu0 %v5740
    %7577 = vmatpush1.bf16.msra.mxu0 %v5739
    %7578 = vmatprep.subr.bf16.mxu0 %v5746
    %7579 = vmatpush1.bf16.msra.mxu0 %v5745
    %7580 = vmatprep.subr.bf16.mxu0 %v5752
    %7581 = vmatpush1.bf16.msra.mxu0 %v5751
    %7582 = vmatprep.subr.bf16.mxu0 %v5758
    %7583 = vmatpush1.bf16.msra.mxu0 %v5757
    %7584 = vmatprep.subr.bf16.mxu0 %v5764
    %7585 = vmatpush1.bf16.msra.mxu0 %v5763
    %7586 = vmatprep.subr.bf16.mxu0 %v5770
    %7587 = vmatpush1.bf16.msra.mxu0 %v5769
    %7588 = vmatprep.subr.bf16.mxu0 %v5776
    %7589 = vmatpush1.bf16.msra.mxu0 %v5775
    %7590 = vmatprep.subr.bf16.mxu0 %v5782
    %7591 = vmatpush1.bf16.msra.mxu0 %v5781
    %7592 = vmatprep.subr.bf16.mxu0 %v5788
    %7593 = vmatpush1.bf16.msra.mxu0 %v5787
    %7594 = vmatprep.subr.bf16.mxu0 %v5794
    %7595 = vmatpush1.bf16.msra.mxu0 %v5793
    %7596 = vmatprep.subr.bf16.mxu0 %v5800
    %7597 = vmatpush1.bf16.msra.mxu0 %v5799
    %7598 = vmatprep.subr.bf16.mxu0 %v5806
    %7599 = vmatpush1.bf16.msra.mxu0 %v5805
    %7600 = vmatprep.subr.bf16.mxu0 %v5812
    %7601 = vmatpush1.bf16.msra.mxu0 %v5811
    %7602 = vmatprep.mubr.bf16.mxu0 %v7327
    %7603 = vmatmul.mubr.bf16.gmra.mrb[0].mxu0 %v7326
    %v7604 = vpop.f32.mrb[0].mxu0
    %v7605 = vadd.f32 0.0, %v7604
    %v7606 = vpop.f32.mrb[0].mxu0
    %v7607 = vadd.f32 0.0, %v7606
    %v7608 = vpop.f32.mrb[0].mxu0
    %v7609 = vpop.f32.mrb[0].mxu0
    %7610 = vdwg.mxu0
    %7611 = vmatprep.subr.bf16.mxu0 %v5724
    %7612 = vmatpush1.bf16.msra.mxu0 %v5723
    %7613 = vmatprep.subr.bf16.mxu0 %v5730
    %7614 = vmatpush1.bf16.msra.mxu0 %v5729
    %7615 = vmatprep.subr.bf16.mxu0 %v5736
    %7616 = vmatpush1.bf16.msra.mxu0 %v5735
    %7617 = vmatprep.subr.bf16.mxu0 %v5742
    %7618 = vmatpush1.bf16.msra.mxu0 %v5741
    %7619 = vmatprep.subr.bf16.mxu0 %v5748
    %7620 = vmatpush1.bf16.msra.mxu0 %v5747
    %7621 = vmatprep.subr.bf16.mxu0 %v5754
    %7622 = vmatpush1.bf16.msra.mxu0 %v5753
    %7623 = vmatprep.subr.bf16.mxu0 %v5760
    %7624 = vmatpush1.bf16.msra.mxu0 %v5759
    %7625 = vmatprep.subr.bf16.mxu0 %v5766
    %7626 = vmatpush1.bf16.msra.mxu0 %v5765
    %7627 = vmatprep.subr.bf16.mxu0 %v5772
    %7628 = vmatpush1.bf16.msra.mxu0 %v5771
    %7629 = vmatprep.subr.bf16.mxu0 %v5778
    %7630 = vmatpush1.bf16.msra.mxu0 %v5777
    %7631 = vmatprep.subr.bf16.mxu0 %v5784
    %7632 = vmatpush1.bf16.msra.mxu0 %v5783
    %7633 = vmatprep.subr.bf16.mxu0 %v5790
    %7634 = vmatpush1.bf16.msra.mxu0 %v5789
    %7635 = vmatprep.subr.bf16.mxu0 %v5796
    %7636 = vmatpush1.bf16.msra.mxu0 %v5795
    %7637 = vmatprep.subr.bf16.mxu0 %v5802
    %7638 = vmatpush1.bf16.msra.mxu0 %v5801
    %7639 = vmatprep.subr.bf16.mxu0 %v5808
    %7640 = vmatpush1.bf16.msra.mxu0 %v5807
    %7641 = vmatprep.subr.bf16.mxu0 %v5814
    %7642 = vmatpush1.bf16.msra.mxu0 %v5813
    %7643 = vmatprep.mubr.bf16.mxu0 %v7327
    %7644 = vmatmul.mubr.bf16.gmra.mrb[0].mxu0 %v7326
    %v7645 = vpop.f32.mrb[0].mxu0
    %v7646 = vadd.f32 0.0, %v7645
    %v7647 = vpop.f32.mrb[0].mxu0
    %v7648 = vadd.f32 0.0, %v7647
    %v7649 = vpop.f32.mrb[0].mxu0
    %v7650 = vpop.f32.mrb[0].mxu0
    %7651 = vdwg.mxu0
    %s7652 = smul.u32 3, 6
    %s7653 = smul.addr %s7652, 8
    %s7654 = scalar_lea.vmem [#allocation4], %s7653
    %v7655 = vld [vmem:[%s7654] sm:$0xff]
    %v7656 = vld [vmem:[%s7654 + $0x8] sm:$0xff]
    %v7657 = vld [vmem:[%s7654 + $0x10] sm:$0xff]
    %v7658 = vld [vmem:[%s7654 + $0x18] sm:$0xff]
    %v7659 = vld [vmem:[%s7654 + $0x20] sm:$0xff]
    %v7660 = vld [vmem:[%s7654 + $0x28] sm:$0xff]
    %v7661 = vadd.f32 %v7655, %v7564
    %v7662 = vadd.f32 %v7656, %v7566
    %v7663 = vxor.u32 %v7661, 2147483648
    %v7664 = vxor.u32 %v7662, 2147483648
    %v7665 = vmul.f32 %v7663, 1.442695
    %v7666 = vpow.pop %v7665
    %v7667 = vmul.f32 %v7664, 1.442695
    %v7668 = vpow.pop %v7667
    %v7669 = vadd.f32 %v7666, 1.0
    %v7670 = vadd.f32 %v7668, 1.0
    %v7671 = vrcp.pop %v7669
    %v7672 = vmul.f32 1.0, %v7671
    %v7673 = vrcp.pop %v7670
    %v7674 = vmul.f32 1.0, %v7673
    %v7675 = vadd.f32 %v7657, %v7605
    %v7676 = vadd.f32 %v7658, %v7607
    %v7677 = vxor.u32 %v7675, 2147483648
    %v7678 = vxor.u32 %v7676, 2147483648
    %v7679 = vmul.f32 %v7677, 1.442695
    %v7680 = vpow.pop %v7679
    %v7681 = vmul.f32 %v7678, 1.442695
    %v7682 = vpow.pop %v7681
    %v7683 = vadd.f32 %v7680, 1.0
    %v7684 = vadd.f32 %v7682, 1.0
    %v7685 = vrcp.pop %v7683
    %v7686 = vmul.f32 1.0, %v7685
    %v7687 = vrcp.pop %v7684
    %v7688 = vmul.f32 1.0, %v7687
    %v7689 = vadd.f32 %v7646, %v5403
    %v7690 = vadd.f32 %v7648, %v5407
    %v7691 = vmul.f32 %v7672, %v7689
    %v7692 = vmul.f32 %v7674, %v7690
    %v7693 = vadd.f32 %v7659, %v7691
    %v7694 = vadd.f32 %v7660, %v7692
    %v7695 = vtanh.pop %v7693
    %v7696 = vtanh.pop %v7694
    %v7697 = vsub.f32 1.0, %v7686
    %v7698 = vsub.f32 1.0, %v7688
    %v7699 = vmul.f32 %v7697, %v7695
    %v7700 = vmul.f32 %v7698, %v7696
    %v7701 = vmul.f32 %v7686, %v7324
    %v7702 = vmul.f32 %v7688, %v7325
    %v7703 = vadd.f32 %v7699, %v7701
    %v7704 = vadd.f32 %v7700, %v7702
    %v7705 = vpack.c.bf16 %v7703, %v7703
    %v7706 = vpack.c.bf16 %v7704, %v7704
    %v7709 = vunpack.c.l.b16 %v7705
    %v7710 = vunpack.c.l.b16 %v7706
    %v7711 = vpack.c.b16 %v7710, %v7709
    %s7713 = scalar_lea.vmem %s6, 24
    %7714 = vst [vmem:[%s7713] sm:$0xff] %v7711
    %7715 = vmatprep.subr.bf16.mxu0 %v6387
    %7716 = vmatpush1.bf16.msra.mxu0 %v6386
    %7717 = vmatprep.subr.bf16.mxu0 %v6393
    %7718 = vmatpush1.bf16.msra.mxu0 %v6392
    %7719 = vmatprep.subr.bf16.mxu0 %v6399
    %7720 = vmatpush1.bf16.msra.mxu0 %v6398
    %7721 = vmatprep.subr.bf16.mxu0 %v6405
    %7722 = vmatpush1.bf16.msra.mxu0 %v6404
    %7723 = vmatprep.subr.bf16.mxu0 %v6411
    %7724 = vmatpush1.bf16.msra.mxu0 %v6410
    %7725 = vmatprep.subr.bf16.mxu0 %v6417
    %7726 = vmatpush1.bf16.msra.mxu0 %v6416
    %7727 = vmatprep.subr.bf16.mxu0 %v6423
    %7728 = vmatpush1.bf16.msra.mxu0 %v6422
    %7729 = vmatprep.subr.bf16.mxu0 %v6429
    %7730 = vmatpush1.bf16.msra.mxu0 %v6428
    %7731 = vmatprep.subr.bf16.mxu0 %v6435
    %7732 = vmatpush1.bf16.msra.mxu0 %v6434
    %7733 = vmatprep.subr.bf16.mxu0 %v6441
    %7734 = vmatpush1.bf16.msra.mxu0 %v6440
    %7735 = vmatprep.subr.bf16.mxu0 %v6447
    %7736 = vmatpush1.bf16.msra.mxu0 %v6446
    %7737 = vmatprep.subr.bf16.mxu0 %v6453
    %7738 = vmatpush1.bf16.msra.mxu0 %v6452
    %7739 = vmatprep.subr.bf16.mxu0 %v6459
    %7740 = vmatpush1.bf16.msra.mxu0 %v6458
    %7741 = vmatprep.subr.bf16.mxu0 %v6465
    %7742 = vmatpush1.bf16.msra.mxu0 %v6464
    %7743 = vmatprep.subr.bf16.mxu0 %v6471
    %7744 = vmatpush1.bf16.msra.mxu0 %v6470
    %7745 = vmatprep.subr.bf16.mxu0 %v6477
    %7746 = vmatpush1.bf16.msra.mxu0 %v6476
    %7747 = vmatprep.mubr.bf16.mxu0 %v7520
    %7748 = vmatmul.mubr.bf16.gmra.mrb[0].mxu0 %v7519
    %v7749 = vpop.f32.mrb[0].mxu0
    %v7750 = vadd.f32 0.0, %v7749
    %v7751 = vpop.f32.mrb[0].mxu0
    %v7752 = vadd.f32 0.0, %v7751
    %v7753 = vpop.f32.mrb[0].mxu0
    %v7754 = vpop.f32.mrb[0].mxu0
    %7755 = vdwg.mxu0
    %7756 = vmatprep.subr.bf16.mxu0 %v6389
    %7757 = vmatpush1.bf16.msra.mxu0 %v6388
    %7758 = vmatprep.subr.bf16.mxu0 %v6395
    %7759 = vmatpush1.bf16.msra.mxu0 %v6394
    %7760 = vmatprep.subr.bf16.mxu0 %v6401
    %7761 = vmatpush1.bf16.msra.mxu0 %v6400
    %7762 = vmatprep.subr.bf16.mxu0 %v6407
    %7763 = vmatpush1.bf16.msra.mxu0 %v6406
    %7764 = vmatprep.subr.bf16.mxu0 %v6413
    %7765 = vmatpush1.bf16.msra.mxu0 %v6412
    %7766 = vmatprep.subr.bf16.mxu0 %v6419
    %7767 = vmatpush1.bf16.msra.mxu0 %v6418
    %7768 = vmatprep.subr.bf16.mxu0 %v6425
    %7769 = vmatpush1.bf16.msra.mxu0 %v6424
    %7770 = vmatprep.subr.bf16.mxu0 %v6431
    %7771 = vmatpush1.bf16.msra.mxu0 %v6430
    %7772 = vmatprep.subr.bf16.mxu0 %v6437
    %7773 = vmatpush1.bf16.msra.mxu0 %v6436
    %7774 = vmatprep.subr.bf16.mxu0 %v6443
    %7775 = vmatpush1.bf16.msra.mxu0 %v6442
    %7776 = vmatprep.subr.bf16.mxu0 %v6449
    %7777 = vmatpush1.bf16.msra.mxu0 %v6448
    %7778 = vmatprep.subr.bf16.mxu0 %v6455
    %7779 = vmatpush1.bf16.msra.mxu0 %v6454
    %7780 = vmatprep.subr.bf16.mxu0 %v6461
    %7781 = vmatpush1.bf16.msra.mxu0 %v6460
    %7782 = vmatprep.subr.bf16.mxu0 %v6467
    %7783 = vmatpush1.bf16.msra.mxu0 %v6466
    %7784 = vmatprep.subr.bf16.mxu0 %v6473
    %7785 = vmatpush1.bf16.msra.mxu0 %v6472
    %7786 = vmatprep.subr.bf16.mxu0 %v6479
    %7787 = vmatpush1.bf16.msra.mxu0 %v6478
    %7788 = vmatprep.mubr.bf16.mxu0 %v7520
    %7789 = vmatmul.mubr.bf16.gmra.mrb[0].mxu0 %v7519
    %v7790 = vpop.f32.mrb[0].mxu0
    %v7791 = vadd.f32 0.0, %v7790
    %v7792 = vpop.f32.mrb[0].mxu0
    %v7793 = vadd.f32 0.0, %v7792
    %v7794 = vpop.f32.mrb[0].mxu0
    %v7795 = vpop.f32.mrb[0].mxu0
    %7796 = vdwg.mxu0
    %7797 = vmatprep.subr.bf16.mxu0 %v6391
    %7798 = vmatpush1.bf16.msra.mxu0 %v6390
    %7799 = vmatprep.subr.bf16.mxu0 %v6397
    %7800 = vmatpush1.bf16.msra.mxu0 %v6396
    %7801 = vmatprep.subr.bf16.mxu0 %v6403
    %7802 = vmatpush1.bf16.msra.mxu0 %v6402
    %7803 = vmatprep.subr.bf16.mxu0 %v6409
    %7804 = vmatpush1.bf16.msra.mxu0 %v6408
    %7805 = vmatprep.subr.bf16.mxu0 %v6415
    %7806 = vmatpush1.bf16.msra.mxu0 %v6414
    %7807 = vmatprep.subr.bf16.mxu0 %v6421
    %7808 = vmatpush1.bf16.msra.mxu0 %v6420
    %7809 = vmatprep.subr.bf16.mxu0 %v6427
    %7810 = vmatpush1.bf16.msra.mxu0 %v6426
    %7811 = vmatprep.subr.bf16.mxu0 %v6433
    %7812 = vmatpush1.bf16.msra.mxu0 %v6432
    %7813 = vmatprep.subr.bf16.mxu0 %v6439
    %7814 = vmatpush1.bf16.msra.mxu0 %v6438
    %7815 = vmatprep.subr.bf16.mxu0 %v6445
    %7816 = vmatpush1.bf16.msra.mxu0 %v6444
    %7817 = vmatprep.subr.bf16.mxu0 %v6451
    %7818 = vmatpush1.bf16.msra.mxu0 %v6450
    %7819 = vmatprep.subr.bf16.mxu0 %v6457
    %7820 = vmatpush1.bf16.msra.mxu0 %v6456
    %7821 = vmatprep.subr.bf16.mxu0 %v6463
    %7822 = vmatpush1.bf16.msra.mxu0 %v6462
    %7823 = vmatprep.subr.bf16.mxu0 %v6469
    %7824 = vmatpush1.bf16.msra.mxu0 %v6468
    %7825 = vmatprep.subr.bf16.mxu0 %v6475
    %7826 = vmatpush1.bf16.msra.mxu0 %v6474
    %7827 = vmatprep.subr.bf16.mxu0 %v6481
    %7828 = vmatpush1.bf16.msra.mxu0 %v6480
    %7829 = vmatprep.mubr.bf16.mxu0 %v7520
    %7830 = vmatmul.mubr.bf16.gmra.mrb[0].mxu0 %v7519
    %v7831 = vpop.f32.mrb[0].mxu0
    %v7832 = vadd.f32 0.0, %v7831
    %v7833 = vpop.f32.mrb[0].mxu0
    %v7834 = vadd.f32 0.0, %v7833
    %v7835 = vpop.f32.mrb[0].mxu0
    %v7836 = vpop.f32.mrb[0].mxu0
    %7837 = vdwg.mxu0
    %s7838 = smul.u32 4, 6
    %s7839 = smul.addr %s7838, 8
    %s7840 = scalar_lea.vmem [#allocation5], %s7839
    %v7841 = vld [vmem:[%s7840] sm:$0xff]
    %v7842 = vld [vmem:[%s7840 + $0x8] sm:$0xff]
    %v7843 = vld [vmem:[%s7840 + $0x10] sm:$0xff]
    %v7844 = vld [vmem:[%s7840 + $0x18] sm:$0xff]
    %v7845 = vld [vmem:[%s7840 + $0x20] sm:$0xff]
    %v7846 = vld [vmem:[%s7840 + $0x28] sm:$0xff]
    %v7847 = vadd.f32 %v7841, %v7750
    %v7848 = vadd.f32 %v7842, %v7752
    %v7849 = vxor.u32 %v7847, 2147483648
    %v7850 = vxor.u32 %v7848, 2147483648
    %v7851 = vmul.f32 %v7849, 1.442695
    %v7852 = vpow.pop %v7851
    %v7853 = vmul.f32 %v7850, 1.442695
    %v7854 = vpow.pop %v7853
    %v7855 = vadd.f32 %v7852, 1.0
    %v7856 = vadd.f32 %v7854, 1.0
    %v7857 = vrcp.pop %v7855
    %v7858 = vmul.f32 1.0, %v7857
    %v7859 = vrcp.pop %v7856
    %v7860 = vmul.f32 1.0, %v7859
    %v7861 = vadd.f32 %v7843, %v7791
    %v7862 = vadd.f32 %v7844, %v7793
    %v7863 = vxor.u32 %v7861, 2147483648
    %v7864 = vxor.u32 %v7862, 2147483648
    %v7865 = vmul.f32 %v7863, 1.442695
    %v7866 = vpow.pop %v7865
    %v7867 = vmul.f32 %v7864, 1.442695
    %v7868 = vpow.pop %v7867
    %v7869 = vadd.f32 %v7866, 1.0
    %v7870 = vadd.f32 %v7868, 1.0
    %v7871 = vrcp.pop %v7869
    %v7872 = vmul.f32 1.0, %v7871
    %v7873 = vrcp.pop %v7870
    %v7874 = vmul.f32 1.0, %v7873
    %v7875 = vadd.f32 %v7832, %v5416
    %v7876 = vadd.f32 %v7834, %v5420
    %v7877 = vmul.f32 %v7858, %v7875
    %v7878 = vmul.f32 %v7860, %v7876
    %v7879 = vadd.f32 %v7845, %v7877
    %v7880 = vadd.f32 %v7846, %v7878
    %v7881 = vtanh.pop %v7879
    %v7882 = vtanh.pop %v7880
    %v7883 = vsub.f32 1.0, %v7872
    %v7884 = vsub.f32 1.0, %v7874
    %v7885 = vmul.f32 %v7883, %v7881
    %v7886 = vmul.f32 %v7884, %v7882
    %v7887 = vmul.f32 %v7872, %v7517
    %v7888 = vmul.f32 %v7874, %v7518
    %v7889 = vadd.f32 %v7885, %v7887
    %v7890 = vadd.f32 %v7886, %v7888
    %s7891 = sadd.s32 %s5424, 4
    %p7892 = scmp.lt.s32.totalorder %s7891, 8
    %s7893 = scalar_select %p7892, 1, 0
    %v7894 = vstv %s7893
    %vm7895 = vcmp.eq.s32.totalorder %v7894, 1
    %v7896 = vsel %vm7895, %v7889, %v7517
    %v7897 = vsel %vm7895, %v7890, %v7518
    %v7898 = vpack.c.bf16 %v7896, %v7896
    %v7899 = vpack.c.bf16 %v7897, %v7897
    %v7902 = vunpack.c.l.b16 %v7898
    %v7903 = vunpack.c.l.b16 %v7899
    %v7904 = vpack.c.b16 %v7903, %v7902
    %s7906 = scalar_lea.vmem %s118, 32
    %7907 = vst [vmem:[%s7906] sm:$0xff] %v7904
    %7908 = vmatprep.subr.bf16.mxu0 %v5720
    %7909 = vmatpush1.bf16.msra.mxu0 %v5719
    %7910 = vmatprep.subr.bf16.mxu0 %v5726
    %7911 = vmatpush1.bf16.msra.mxu0 %v5725
    %7912 = vmatprep.subr.bf16.mxu0 %v5732
    %7913 = vmatpush1.bf16.msra.mxu0 %v5731
    %7914 = vmatprep.subr.bf16.mxu0 %v5738
    %7915 = vmatpush1.bf16.msra.mxu0 %v5737
    %7916 = vmatprep.subr.bf16.mxu0 %v5744
    %7917 = vmatpush1.bf16.msra.mxu0 %v5743
    %7918 = vmatprep.subr.bf16.mxu0 %v5750
    %7919 = vmatpush1.bf16.msra.mxu0 %v5749
    %7920 = vmatprep.subr.bf16.mxu0 %v5756
    %7921 = vmatpush1.bf16.msra.mxu0 %v5755
    %7922 = vmatprep.subr.bf16.mxu0 %v5762
    %7923 = vmatpush1.bf16.msra.mxu0 %v5761
    %7924 = vmatprep.subr.bf16.mxu0 %v5768
    %7925 = vmatpush1.bf16.msra.mxu0 %v5767
    %7926 = vmatprep.subr.bf16.mxu0 %v5774
    %7927 = vmatpush1.bf16.msra.mxu0 %v5773
    %7928 = vmatprep.subr.bf16.mxu0 %v5780
    %7929 = vmatpush1.bf16.msra.mxu0 %v5779
    %7930 = vmatprep.subr.bf16.mxu0 %v5786
    %7931 = vmatpush1.bf16.msra.mxu0 %v5785
    %7932 = vmatprep.subr.bf16.mxu0 %v5792
    %7933 = vmatpush1.bf16.msra.mxu0 %v5791
    %7934 = vmatprep.subr.bf16.mxu0 %v5798
    %7935 = vmatpush1.bf16.msra.mxu0 %v5797
    %7936 = vmatprep.subr.bf16.mxu0 %v5804
    %7937 = vmatpush1.bf16.msra.mxu0 %v5803
    %7938 = vmatprep.subr.bf16.mxu0 %v5810
    %7939 = vmatpush1.bf16.msra.mxu0 %v5809
    %7940 = vmatprep.mubr.bf16.mxu0 %v7706
    %7941 = vmatmul.mubr.bf16.gmra.mrb[0].mxu0 %v7705
    %v7942 = vpop.f32.mrb[0].mxu0
    %v7943 = vadd.f32 0.0, %v7942
    %v7944 = vpop.f32.mrb[0].mxu0
    %v7945 = vadd.f32 0.0, %v7944
    %v7946 = vpop.f32.mrb[0].mxu0
    %v7947 = vpop.f32.mrb[0].mxu0
    %7948 = vdwg.mxu0
    %7949 = vmatprep.subr.bf16.mxu0 %v5722
    %7950 = vmatpush1.bf16.msra.mxu0 %v5721
    %7951 = vmatprep.subr.bf16.mxu0 %v5728
    %7952 = vmatpush1.bf16.msra.mxu0 %v5727
    %7953 = vmatprep.subr.bf16.mxu0 %v5734
    %7954 = vmatpush1.bf16.msra.mxu0 %v5733
    %7955 = vmatprep.subr.bf16.mxu0 %v5740
    %7956 = vmatpush1.bf16.msra.mxu0 %v5739
    %7957 = vmatprep.subr.bf16.mxu0 %v5746
    %7958 = vmatpush1.bf16.msra.mxu0 %v5745
    %7959 = vmatprep.subr.bf16.mxu0 %v5752
    %7960 = vmatpush1.bf16.msra.mxu0 %v5751
    %7961 = vmatprep.subr.bf16.mxu0 %v5758
    %7962 = vmatpush1.bf16.msra.mxu0 %v5757
    %7963 = vmatprep.subr.bf16.mxu0 %v5764
    %7964 = vmatpush1.bf16.msra.mxu0 %v5763
    %7965 = vmatprep.subr.bf16.mxu0 %v5770
    %7966 = vmatpush1.bf16.msra.mxu0 %v5769
    %7967 = vmatprep.subr.bf16.mxu0 %v5776
    %7968 = vmatpush1.bf16.msra.mxu0 %v5775
    %7969 = vmatprep.subr.bf16.mxu0 %v5782
    %7970 = vmatpush1.bf16.msra.mxu0 %v5781
    %7971 = vmatprep.subr.bf16.mxu0 %v5788
    %7972 = vmatpush1.bf16.msra.mxu0 %v5787
    %7973 = vmatprep.subr.bf16.mxu0 %v5794
    %7974 = vmatpush1.bf16.msra.mxu0 %v5793
    %7975 = vmatprep.subr.bf16.mxu0 %v5800
    %7976 = vmatpush1.bf16.msra.mxu0 %v5799
    %7977 = vmatprep.subr.bf16.mxu0 %v5806
    %7978 = vmatpush1.bf16.msra.mxu0 %v5805
    %7979 = vmatprep.subr.bf16.mxu0 %v5812
    %7980 = vmatpush1.bf16.msra.mxu0 %v5811
    %7981 = vmatprep.mubr.bf16.mxu0 %v7706
    %7982 = vmatmul.mubr.bf16.gmra.mrb[0].mxu0 %v7705
    %v7983 = vpop.f32.mrb[0].mxu0
    %v7984 = vadd.f32 0.0, %v7983
    %v7985 = vpop.f32.mrb[0].mxu0
    %v7986 = vadd.f32 0.0, %v7985
    %v7987 = vpop.f32.mrb[0].mxu0
    %v7988 = vpop.f32.mrb[0].mxu0
    %7989 = vdwg.mxu0
    %7990 = vmatprep.subr.bf16.mxu0 %v5724
    %7991 = vmatpush1.bf16.msra.mxu0 %v5723
    %7992 = vmatprep.subr.bf16.mxu0 %v5730
    %7993 = vmatpush1.bf16.msra.mxu0 %v5729
    %7994 = vmatprep.subr.bf16.mxu0 %v5736
    %7995 = vmatpush1.bf16.msra.mxu0 %v5735
    %7996 = vmatprep.subr.bf16.mxu0 %v5742
    %7997 = vmatpush1.bf16.msra.mxu0 %v5741
    %7998 = vmatprep.subr.bf16.mxu0 %v5748
    %7999 = vmatpush1.bf16.msra.mxu0 %v5747
    %8000 = vmatprep.subr.bf16.mxu0 %v5754
    %8001 = vmatpush1.bf16.msra.mxu0 %v5753
    %8002 = vmatprep.subr.bf16.mxu0 %v5760
    %8003 = vmatpush1.bf16.msra.mxu0 %v5759
    %8004 = vmatprep.subr.bf16.mxu0 %v5766
    %8005 = vmatpush1.bf16.msra.mxu0 %v5765
    %8006 = vmatprep.subr.bf16.mxu0 %v5772
    %8007 = vmatpush1.bf16.msra.mxu0 %v5771
    %8008 = vmatprep.subr.bf16.mxu0 %v5778
    %8009 = vmatpush1.bf16.msra.mxu0 %v5777
    %8010 = vmatprep.subr.bf16.mxu0 %v5784
    %8011 = vmatpush1.bf16.msra.mxu0 %v5783
    %8012 = vmatprep.subr.bf16.mxu0 %v5790
    %8013 = vmatpush1.bf16.msra.mxu0 %v5789
    %8014 = vmatprep.subr.bf16.mxu0 %v5796
    %8015 = vmatpush1.bf16.msra.mxu0 %v5795
    %8016 = vmatprep.subr.bf16.mxu0 %v5802
    %8017 = vmatpush1.bf16.msra.mxu0 %v5801
    %8018 = vmatprep.subr.bf16.mxu0 %v5808
    %8019 = vmatpush1.bf16.msra.mxu0 %v5807
    %8020 = vmatprep.subr.bf16.mxu0 %v5814
    %8021 = vmatpush1.bf16.msra.mxu0 %v5813
    %8022 = vmatprep.mubr.bf16.mxu0 %v7706
    %8023 = vmatmul.mubr.bf16.gmra.mrb[0].mxu0 %v7705
    %v8024 = vpop.f32.mrb[0].mxu0
    %v8025 = vadd.f32 0.0, %v8024
    %v8026 = vpop.f32.mrb[0].mxu0
    %v8027 = vadd.f32 0.0, %v8026
    %v8028 = vpop.f32.mrb[0].mxu0
    %v8029 = vpop.f32.mrb[0].mxu0
    %8030 = vdwg.mxu0
    %s8031 = smul.addr %s7838, 8
    %s8032 = scalar_lea.vmem [#allocation4], %s8031
    %v8033 = vld [vmem:[%s8032] sm:$0xff]
    %v8034 = vld [vmem:[%s8032 + $0x8] sm:$0xff]
    %v8035 = vld [vmem:[%s8032 + $0x10] sm:$0xff]
    %v8036 = vld [vmem:[%s8032 + $0x18] sm:$0xff]
    %v8037 = vld [vmem:[%s8032 + $0x20] sm:$0xff]
    %v8038 = vld [vmem:[%s8032 + $0x28] sm:$0xff]
    %v8039 = vadd.f32 %v8033, %v7943
    %v8040 = vadd.f32 %v8034, %v7945
    %v8041 = vxor.u32 %v8039, 2147483648
    %v8042 = vxor.u32 %v8040, 2147483648
    %v8043 = vmul.f32 %v8041, 1.442695
    %v8044 = vpow.pop %v8043
    %v8045 = vmul.f32 %v8042, 1.442695
    %v8046 = vpow.pop %v8045
    %v8047 = vadd.f32 %v8044, 1.0
    %v8048 = vadd.f32 %v8046, 1.0
    %v8049 = vrcp.pop %v8047
    %v8050 = vmul.f32 1.0, %v8049
    %v8051 = vrcp.pop %v8048
    %v8052 = vmul.f32 1.0, %v8051
    %v8053 = vadd.f32 %v8035, %v7984
    %v8054 = vadd.f32 %v8036, %v7986
    %v8055 = vxor.u32 %v8053, 2147483648
    %v8056 = vxor.u32 %v8054, 2147483648
    %v8057 = vmul.f32 %v8055, 1.442695
    %v8058 = vpow.pop %v8057
    %v8059 = vmul.f32 %v8056, 1.442695
    %v8060 = vpow.pop %v8059
    %v8061 = vadd.f32 %v8058, 1.0
    %v8062 = vadd.f32 %v8060, 1.0
    %v8063 = vrcp.pop %v8061
    %v8064 = vmul.f32 1.0, %v8063
    %v8065 = vrcp.pop %v8062
    %v8066 = vmul.f32 1.0, %v8065
    %v8067 = vadd.f32 %v8025, %v5403
    %v8068 = vadd.f32 %v8027, %v5407
    %v8069 = vmul.f32 %v8050, %v8067
    %v8070 = vmul.f32 %v8052, %v8068
    %v8071 = vadd.f32 %v8037, %v8069
    %v8072 = vadd.f32 %v8038, %v8070
    %v8073 = vtanh.pop %v8071
    %v8074 = vtanh.pop %v8072
    %v8075 = vsub.f32 1.0, %v8064
    %v8076 = vsub.f32 1.0, %v8066
    %v8077 = vmul.f32 %v8075, %v8073
    %v8078 = vmul.f32 %v8076, %v8074
    %v8079 = vmul.f32 %v8064, %v7703
    %v8080 = vmul.f32 %v8066, %v7704
    %v8081 = vadd.f32 %v8077, %v8079
    %v8082 = vadd.f32 %v8078, %v8080
    %v8083 = vpack.c.bf16 %v8081, %v8081
    %v8084 = vpack.c.bf16 %v8082, %v8082
    %v8087 = vunpack.c.l.b16 %v8083
    %v8088 = vunpack.c.l.b16 %v8084
    %v8089 = vpack.c.b16 %v8088, %v8087
    %s8091 = scalar_lea.vmem %s6, 32
    %8092 = vst [vmem:[%s8091] sm:$0xff] %v8089
    %8093 = vmatprep.subr.bf16.mxu0 %v6387
    %8094 = vmatpush1.bf16.msra.mxu0 %v6386
    %8095 = vmatprep.subr.bf16.mxu0 %v6393
    %8096 = vmatpush1.bf16.msra.mxu0 %v6392
    %8097 = vmatprep.subr.bf16.mxu0 %v6399
    %8098 = vmatpush1.bf16.msra.mxu0 %v6398
    %8099 = vmatprep.subr.bf16.mxu0 %v6405
    %8100 = vmatpush1.bf16.msra.mxu0 %v6404
    %8101 = vmatprep.subr.bf16.mxu0 %v6411
    %8102 = vmatpush1.bf16.msra.mxu0 %v6410
    %8103 = vmatprep.subr.bf16.mxu0 %v6417
    %8104 = vmatpush1.bf16.msra.mxu0 %v6416
    %8105 = vmatprep.subr.bf16.mxu0 %v6423
    %8106 = vmatpush1.bf16.msra.mxu0 %v6422
    %8107 = vmatprep.subr.bf16.mxu0 %v6429
    %8108 = vmatpush1.bf16.msra.mxu0 %v6428
    %8109 = vmatprep.subr.bf16.mxu0 %v6435
    %8110 = vmatpush1.bf16.msra.mxu0 %v6434
    %8111 = vmatprep.subr.bf16.mxu0 %v6441
    %8112 = vmatpush1.bf16.msra.mxu0 %v6440
    %8113 = vmatprep.subr.bf16.mxu0 %v6447
    %8114 = vmatpush1.bf16.msra.mxu0 %v6446
    %8115 = vmatprep.subr.bf16.mxu0 %v6453
    %8116 = vmatpush1.bf16.msra.mxu0 %v6452
    %8117 = vmatprep.subr.bf16.mxu0 %v6459
    %8118 = vmatpush1.bf16.msra.mxu0 %v6458
    %8119 = vmatprep.subr.bf16.mxu0 %v6465
    %8120 = vmatpush1.bf16.msra.mxu0 %v6464
    %8121 = vmatprep.subr.bf16.mxu0 %v6471
    %8122 = vmatpush1.bf16.msra.mxu0 %v6470
    %8123 = vmatprep.subr.bf16.mxu0 %v6477
    %8124 = vmatpush1.bf16.msra.mxu0 %v6476
    %8125 = vmatprep.mubr.bf16.mxu0 %v7899
    %8126 = vmatmul.mubr.bf16.gmra.mrb[0].mxu0 %v7898
    %v8127 = vpop.f32.mrb[0].mxu0
    %v8128 = vadd.f32 0.0, %v8127
    %v8129 = vpop.f32.mrb[0].mxu0
    %v8130 = vadd.f32 0.0, %v8129
    %v8131 = vpop.f32.mrb[0].mxu0
    %v8132 = vpop.f32.mrb[0].mxu0
    %8133 = vdwg.mxu0
    %8134 = vmatprep.subr.bf16.mxu0 %v6389
    %8135 = vmatpush1.bf16.msra.mxu0 %v6388
    %8136 = vmatprep.subr.bf16.mxu0 %v6395
    %8137 = vmatpush1.bf16.msra.mxu0 %v6394
    %8138 = vmatprep.subr.bf16.mxu0 %v6401
    %8139 = vmatpush1.bf16.msra.mxu0 %v6400
    %8140 = vmatprep.subr.bf16.mxu0 %v6407
    %8141 = vmatpush1.bf16.msra.mxu0 %v6406
    %8142 = vmatprep.subr.bf16.mxu0 %v6413
    %8143 = vmatpush1.bf16.msra.mxu0 %v6412
    %8144 = vmatprep.subr.bf16.mxu0 %v6419
    %8145 = vmatpush1.bf16.msra.mxu0 %v6418
    %8146 = vmatprep.subr.bf16.mxu0 %v6425
    %8147 = vmatpush1.bf16.msra.mxu0 %v6424
    %8148 = vmatprep.subr.bf16.mxu0 %v6431
    %8149 = vmatpush1.bf16.msra.mxu0 %v6430
    %8150 = vmatprep.subr.bf16.mxu0 %v6437
    %8151 = vmatpush1.bf16.msra.mxu0 %v6436
    %8152 = vmatprep.subr.bf16.mxu0 %v6443
    %8153 = vmatpush1.bf16.msra.mxu0 %v6442
    %8154 = vmatprep.subr.bf16.mxu0 %v6449
    %8155 = vmatpush1.bf16.msra.mxu0 %v6448
    %8156 = vmatprep.subr.bf16.mxu0 %v6455
    %8157 = vmatpush1.bf16.msra.mxu0 %v6454
    %8158 = vmatprep.subr.bf16.mxu0 %v6461
    %8159 = vmatpush1.bf16.msra.mxu0 %v6460
    %8160 = vmatprep.subr.bf16.mxu0 %v6467
    %8161 = vmatpush1.bf16.msra.mxu0 %v6466
    %8162 = vmatprep.subr.bf16.mxu0 %v6473
    %8163 = vmatpush1.bf16.msra.mxu0 %v6472
    %8164 = vmatprep.subr.bf16.mxu0 %v6479
    %8165 = vmatpush1.bf16.msra.mxu0 %v6478
    %8166 = vmatprep.mubr.bf16.mxu0 %v7899
    %8167 = vmatmul.mubr.bf16.gmra.mrb[0].mxu0 %v7898
    %v8168 = vpop.f32.mrb[0].mxu0
    %v8169 = vadd.f32 0.0, %v8168
    %v8170 = vpop.f32.mrb[0].mxu0
    %v8171 = vadd.f32 0.0, %v8170
    %v8172 = vpop.f32.mrb[0].mxu0
    %v8173 = vpop.f32.mrb[0].mxu0
    %8174 = vdwg.mxu0
    %8175 = vmatprep.subr.bf16.mxu0 %v6391
    %8176 = vmatpush1.bf16.msra.mxu0 %v6390
    %8177 = vmatprep.subr.bf16.mxu0 %v6397
    %8178 = vmatpush1.bf16.msra.mxu0 %v6396
    %8179 = vmatprep.subr.bf16.mxu0 %v6403
    %8180 = vmatpush1.bf16.msra.mxu0 %v6402
    %8181 = vmatprep.subr.bf16.mxu0 %v6409
    %8182 = vmatpush1.bf16.msra.mxu0 %v6408
    %8183 = vmatprep.subr.bf16.mxu0 %v6415
    %8184 = vmatpush1.bf16.msra.mxu0 %v6414
    %8185 = vmatprep.subr.bf16.mxu0 %v6421
    %8186 = vmatpush1.bf16.msra.mxu0 %v6420
    %8187 = vmatprep.subr.bf16.mxu0 %v6427
    %8188 = vmatpush1.bf16.msra.mxu0 %v6426
    %8189 = vmatprep.subr.bf16.mxu0 %v6433
    %8190 = vmatpush1.bf16.msra.mxu0 %v6432
    %8191 = vmatprep.subr.bf16.mxu0 %v6439
    %8192 = vmatpush1.bf16.msra.mxu0 %v6438
    %8193 = vmatprep.subr.bf16.mxu0 %v6445
    %8194 = vmatpush1.bf16.msra.mxu0 %v6444
    %8195 = vmatprep.subr.bf16.mxu0 %v6451
    %8196 = vmatpush1.bf16.msra.mxu0 %v6450
    %8197 = vmatprep.subr.bf16.mxu0 %v6457
    %8198 = vmatpush1.bf16.msra.mxu0 %v6456
    %8199 = vmatprep.subr.bf16.mxu0 %v6463
    %8200 = vmatpush1.bf16.msra.mxu0 %v6462
    %8201 = vmatprep.subr.bf16.mxu0 %v6469
    %8202 = vmatpush1.bf16.msra.mxu0 %v6468
    %8203 = vmatprep.subr.bf16.mxu0 %v6475
    %8204 = vmatpush1.bf16.msra.mxu0 %v6474
    %8205 = vmatprep.subr.bf16.mxu0 %v6481
    %8206 = vmatpush1.bf16.msra.mxu0 %v6480
    %8207 = vmatprep.mubr.bf16.mxu0 %v7899
    %8208 = vmatmul.mubr.bf16.gmra.mrb[0].mxu0 %v7898
    %v8209 = vpop.f32.mrb[0].mxu0
    %v8210 = vadd.f32 0.0, %v8209
    %v8211 = vpop.f32.mrb[0].mxu0
    %v8212 = vadd.f32 0.0, %v8211
    %v8213 = vpop.f32.mrb[0].mxu0
    %v8214 = vpop.f32.mrb[0].mxu0
    %8215 = vdwg.mxu0
    %s8216 = smul.addr %s7652, 8
    %s8217 = scalar_lea.vmem [#allocation5], %s8216
    %v8218 = vld [vmem:[%s8217] sm:$0xff]
    %v8219 = vld [vmem:[%s8217 + $0x8] sm:$0xff]
    %v8220 = vld [vmem:[%s8217 + $0x10] sm:$0xff]
    %v8221 = vld [vmem:[%s8217 + $0x18] sm:$0xff]
    %v8222 = vld [vmem:[%s8217 + $0x20] sm:$0xff]
    %v8223 = vld [vmem:[%s8217 + $0x28] sm:$0xff]
    %v8224 = vadd.f32 %v8218, %v8128
    %v8225 = vadd.f32 %v8219, %v8130
    %v8226 = vxor.u32 %v8224, 2147483648
    %v8227 = vxor.u32 %v8225, 2147483648
    %v8228 = vmul.f32 %v8226, 1.442695
    %v8229 = vpow.pop %v8228
    %v8230 = vmul.f32 %v8227, 1.442695
    %v8231 = vpow.pop %v8230
    %v8232 = vadd.f32 %v8229, 1.0
    %v8233 = vadd.f32 %v8231, 1.0
    %v8234 = vrcp.pop %v8232
    %v8235 = vmul.f32 1.0, %v8234
    %v8236 = vrcp.pop %v8233
    %v8237 = vmul.f32 1.0, %v8236
    %v8238 = vadd.f32 %v8220, %v8169
    %v8239 = vadd.f32 %v8221, %v8171
    %v8240 = vxor.u32 %v8238, 2147483648
    %v8241 = vxor.u32 %v8239, 2147483648
    %v8242 = vmul.f32 %v8240, 1.442695
    %v8243 = vpow.pop %v8242
    %v8244 = vmul.f32 %v8241, 1.442695
    %v8245 = vpow.pop %v8244
    %v8246 = vadd.f32 %v8243, 1.0
    %v8247 = vadd.f32 %v8245, 1.0
    %v8248 = vrcp.pop %v8246
    %v8249 = vmul.f32 1.0, %v8248
    %v8250 = vrcp.pop %v8247
    %v8251 = vmul.f32 1.0, %v8250
    %v8252 = vadd.f32 %v8210, %v5416
    %v8253 = vadd.f32 %v8212, %v5420
    %v8254 = vmul.f32 %v8235, %v8252
    %v8255 = vmul.f32 %v8237, %v8253
    %v8256 = vadd.f32 %v8222, %v8254
    %v8257 = vadd.f32 %v8223, %v8255
    %v8258 = vtanh.pop %v8256
    %v8259 = vtanh.pop %v8257
    %v8260 = vsub.f32 1.0, %v8249
    %v8261 = vsub.f32 1.0, %v8251
    %v8262 = vmul.f32 %v8260, %v8258
    %v8263 = vmul.f32 %v8261, %v8259
    %v8264 = vmul.f32 %v8249, %v7896
    %v8265 = vmul.f32 %v8251, %v7897
    %v8266 = vadd.f32 %v8262, %v8264
    %v8267 = vadd.f32 %v8263, %v8265
    %s8268 = sadd.s32 %s5424, 3
    %p8269 = scmp.lt.s32.totalorder %s8268, 8
    %s8270 = scalar_select %p8269, 1, 0
    %v8271 = vstv %s8270
    %vm8272 = vcmp.eq.s32.totalorder %v8271, 1
    %v8273 = vsel %vm8272, %v8266, %v7896
    %v8274 = vsel %vm8272, %v8267, %v7897
    %v8275 = vpack.c.bf16 %v8273, %v8273
    %v8276 = vpack.c.bf16 %v8274, %v8274
    %v8279 = vunpack.c.l.b16 %v8275
    %v8280 = vunpack.c.l.b16 %v8276
    %v8281 = vpack.c.b16 %v8280, %v8279
    %s8283 = scalar_lea.vmem %s118, 24
    %8284 = vst [vmem:[%s8283] sm:$0xff] %v8281
    %8285 = vmatprep.subr.bf16.mxu0 %v5720
    %8286 = vmatpush1.bf16.msra.mxu0 %v5719
    %8287 = vmatprep.subr.bf16.mxu0 %v5726
    %8288 = vmatpush1.bf16.msra.mxu0 %v5725
    %8289 = vmatprep.subr.bf16.mxu0 %v5732
    %8290 = vmatpush1.bf16.msra.mxu0 %v5731
    %8291 = vmatprep.subr.bf16.mxu0 %v5738
    %8292 = vmatpush1.bf16.msra.mxu0 %v5737
    %8293 = vmatprep.subr.bf16.mxu0 %v5744
    %8294 = vmatpush1.bf16.msra.mxu0 %v5743
    %8295 = vmatprep.subr.bf16.mxu0 %v5750
    %8296 = vmatpush1.bf16.msra.mxu0 %v5749
    %8297 = vmatprep.subr.bf16.mxu0 %v5756
    %8298 = vmatpush1.bf16.msra.mxu0 %v5755
    %8299 = vmatprep.subr.bf16.mxu0 %v5762
    %8300 = vmatpush1.bf16.msra.mxu0 %v5761
    %8301 = vmatprep.subr.bf16.mxu0 %v5768
    %8302 = vmatpush1.bf16.msra.mxu0 %v5767
    %8303 = vmatprep.subr.bf16.mxu0 %v5774
    %8304 = vmatpush1.bf16.msra.mxu0 %v5773
    %8305 = vmatprep.subr.bf16.mxu0 %v5780
    %8306 = vmatpush1.bf16.msra.mxu0 %v5779
    %8307 = vmatprep.subr.bf16.mxu0 %v5786
    %8308 = vmatpush1.bf16.msra.mxu0 %v5785
    %8309 = vmatprep.subr.bf16.mxu0 %v5792
    %8310 = vmatpush1.bf16.msra.mxu0 %v5791
    %8311 = vmatprep.subr.bf16.mxu0 %v5798
    %8312 = vmatpush1.bf16.msra.mxu0 %v5797
    %8313 = vmatprep.subr.bf16.mxu0 %v5804
    %8314 = vmatpush1.bf16.msra.mxu0 %v5803
    %8315 = vmatprep.subr.bf16.mxu0 %v5810
    %8316 = vmatpush1.bf16.msra.mxu0 %v5809
    %8317 = vmatprep.mubr.bf16.mxu0 %v8084
    %8318 = vmatmul.mubr.bf16.gmra.mrb[0].mxu0 %v8083
    %v8319 = vpop.f32.mrb[0].mxu0
    %v8320 = vadd.f32 0.0, %v8319
    %v8321 = vpop.f32.mrb[0].mxu0
    %v8322 = vadd.f32 0.0, %v8321
    %v8323 = vpop.f32.mrb[0].mxu0
    %v8324 = vpop.f32.mrb[0].mxu0
    %8325 = vdwg.mxu0
    %8326 = vmatprep.subr.bf16.mxu0 %v5722
    %8327 = vmatpush1.bf16.msra.mxu0 %v5721
    %8328 = vmatprep.subr.bf16.mxu0 %v5728
    %8329 = vmatpush1.bf16.msra.mxu0 %v5727
    %8330 = vmatprep.subr.bf16.mxu0 %v5734
    %8331 = vmatpush1.bf16.msra.mxu0 %v5733
    %8332 = vmatprep.subr.bf16.mxu0 %v5740
    %8333 = vmatpush1.bf16.msra.mxu0 %v5739
    %8334 = vmatprep.subr.bf16.mxu0 %v5746
    %8335 = vmatpush1.bf16.msra.mxu0 %v5745
    %8336 = vmatprep.subr.bf16.mxu0 %v5752
    %8337 = vmatpush1.bf16.msra.mxu0 %v5751
    %8338 = vmatprep.subr.bf16.mxu0 %v5758
    %8339 = vmatpush1.bf16.msra.mxu0 %v5757
    %8340 = vmatprep.subr.bf16.mxu0 %v5764
    %8341 = vmatpush1.bf16.msra.mxu0 %v5763
    %8342 = vmatprep.subr.bf16.mxu0 %v5770
    %8343 = vmatpush1.bf16.msra.mxu0 %v5769
    %8344 = vmatprep.subr.bf16.mxu0 %v5776
    %8345 = vmatpush1.bf16.msra.mxu0 %v5775
    %8346 = vmatprep.subr.bf16.mxu0 %v5782
    %8347 = vmatpush1.bf16.msra.mxu0 %v5781
    %8348 = vmatprep.subr.bf16.mxu0 %v5788
    %8349 = vmatpush1.bf16.msra.mxu0 %v5787
    %8350 = vmatprep.subr.bf16.mxu0 %v5794
    %8351 = vmatpush1.bf16.msra.mxu0 %v5793
    %8352 = vmatprep.subr.bf16.mxu0 %v5800
    %8353 = vmatpush1.bf16.msra.mxu0 %v5799
    %8354 = vmatprep.subr.bf16.mxu0 %v5806
    %8355 = vmatpush1.bf16.msra.mxu0 %v5805
    %8356 = vmatprep.subr.bf16.mxu0 %v5812
    %8357 = vmatpush1.bf16.msra.mxu0 %v5811
    %8358 = vmatprep.mubr.bf16.mxu0 %v8084
    %8359 = vmatmul.mubr.bf16.gmra.mrb[0].mxu0 %v8083
    %v8360 = vpop.f32.mrb[0].mxu0
    %v8361 = vadd.f32 0.0, %v8360
    %v8362 = vpop.f32.mrb[0].mxu0
    %v8363 = vadd.f32 0.0, %v8362
    %v8364 = vpop.f32.mrb[0].mxu0
    %v8365 = vpop.f32.mrb[0].mxu0
    %8366 = vdwg.mxu0
    %8367 = vmatprep.subr.bf16.mxu0 %v5724
    %8368 = vmatpush1.bf16.msra.mxu0 %v5723
    %8369 = vmatprep.subr.bf16.mxu0 %v5730
    %8370 = vmatpush1.bf16.msra.mxu0 %v5729
    %8371 = vmatprep.subr.bf16.mxu0 %v5736
    %8372 = vmatpush1.bf16.msra.mxu0 %v5735
    %8373 = vmatprep.subr.bf16.mxu0 %v5742
    %8374 = vmatpush1.bf16.msra.mxu0 %v5741
    %8375 = vmatprep.subr.bf16.mxu0 %v5748
    %8376 = vmatpush1.bf16.msra.mxu0 %v5747
    %8377 = vmatprep.subr.bf16.mxu0 %v5754
    %8378 = vmatpush1.bf16.msra.mxu0 %v5753
    %8379 = vmatprep.subr.bf16.mxu0 %v5760
    %8380 = vmatpush1.bf16.msra.mxu0 %v5759
    %8381 = vmatprep.subr.bf16.mxu0 %v5766
    %8382 = vmatpush1.bf16.msra.mxu0 %v5765
    %8383 = vmatprep.subr.bf16.mxu0 %v5772
    %8384 = vmatpush1.bf16.msra.mxu0 %v5771
    %8385 = vmatprep.subr.bf16.mxu0 %v5778
    %8386 = vmatpush1.bf16.msra.mxu0 %v5777
    %8387 = vmatprep.subr.bf16.mxu0 %v5784
    %8388 = vmatpush1.bf16.msra.mxu0 %v5783
    %8389 = vmatprep.subr.bf16.mxu0 %v5790
    %8390 = vmatpush1.bf16.msra.mxu0 %v5789
    %8391 = vmatprep.subr.bf16.mxu0 %v5796
    %8392 = vmatpush1.bf16.msra.mxu0 %v5795
    %8393 = vmatprep.subr.bf16.mxu0 %v5802
    %8394 = vmatpush1.bf16.msra.mxu0 %v5801
    %8395 = vmatprep.subr.bf16.mxu0 %v5808
    %8396 = vmatpush1.bf16.msra.mxu0 %v5807
    %8397 = vmatprep.subr.bf16.mxu0 %v5814
    %8398 = vmatpush1.bf16.msra.mxu0 %v5813
    %8399 = vmatprep.mubr.bf16.mxu0 %v8084
    %8400 = vmatmul.mubr.bf16.gmra.mrb[0].mxu0 %v8083
    %v8401 = vpop.f32.mrb[0].mxu0
    %v8402 = vadd.f32 0.0, %v8401
    %v8403 = vpop.f32.mrb[0].mxu0
    %v8404 = vadd.f32 0.0, %v8403
    %v8405 = vpop.f32.mrb[0].mxu0
    %v8406 = vpop.f32.mrb[0].mxu0
    %8407 = vdwg.mxu0
    %s8408 = smul.addr %s7459, 8
    %s8409 = scalar_lea.vmem [#allocation4], %s8408
    %v8410 = vld [vmem:[%s8409] sm:$0xff]
    %v8411 = vld [vmem:[%s8409 + $0x8] sm:$0xff]
    %v8412 = vld [vmem:[%s8409 + $0x10] sm:$0xff]
    %v8413 = vld [vmem:[%s8409 + $0x18] sm:$0xff]
    %v8414 = vld [vmem:[%s8409 + $0x20] sm:$0xff]
    %v8415 = vld [vmem:[%s8409 + $0x28] sm:$0xff]
    %v8416 = vadd.f32 %v8410, %v8320
    %v8417 = vadd.f32 %v8411, %v8322
    %v8418 = vxor.u32 %v8416, 2147483648
    %v8419 = vxor.u32 %v8417, 2147483648
    %v8420 = vmul.f32 %v8418, 1.442695
    %v8421 = vpow.pop %v8420
    %v8422 = vmul.f32 %v8419, 1.442695
    %v8423 = vpow.pop %v8422
    %v8424 = vadd.f32 %v8421, 1.0
    %v8425 = vadd.f32 %v8423, 1.0
    %v8426 = vrcp.pop %v8424
    %v8427 = vmul.f32 1.0, %v8426
    %v8428 = vrcp.pop %v8425
    %v8429 = vmul.f32 1.0, %v8428
    %v8430 = vadd.f32 %v8412, %v8361
    %v8431 = vadd.f32 %v8413, %v8363
    %v8432 = vxor.u32 %v8430, 2147483648
    %v8433 = vxor.u32 %v8431, 2147483648
    %v8434 = vmul.f32 %v8432, 1.442695
    %v8435 = vpow.pop %v8434
    %v8436 = vmul.f32 %v8433, 1.442695
    %v8437 = vpow.pop %v8436
    %v8438 = vadd.f32 %v8435, 1.0
    %v8439 = vadd.f32 %v8437, 1.0
    %v8440 = vrcp.pop %v8438
    %v8441 = vmul.f32 1.0, %v8440
    %v8442 = vrcp.pop %v8439
    %v8443 = vmul.f32 1.0, %v8442
    %v8444 = vadd.f32 %v8402, %v5403
    %v8445 = vadd.f32 %v8404, %v5407
    %v8446 = vmul.f32 %v8427, %v8444
    %v8447 = vmul.f32 %v8429, %v8445
    %v8448 = vadd.f32 %v8414, %v8446
    %v8449 = vadd.f32 %v8415, %v8447
    %v8450 = vtanh.pop %v8448
    %v8451 = vtanh.pop %v8449
    %v8452 = vsub.f32 1.0, %v8441
    %v8453 = vsub.f32 1.0, %v8443
    %v8454 = vmul.f32 %v8452, %v8450
    %v8455 = vmul.f32 %v8453, %v8451
    %v8456 = vmul.f32 %v8441, %v8081
    %v8457 = vmul.f32 %v8443, %v8082
    %v8458 = vadd.f32 %v8454, %v8456
    %v8459 = vadd.f32 %v8455, %v8457
    %v8460 = vpack.c.bf16 %v8458, %v8458
    %v8461 = vpack.c.bf16 %v8459, %v8459
    %v8464 = vunpack.c.l.b16 %v8460
    %v8465 = vunpack.c.l.b16 %v8461
    %v8466 = vpack.c.b16 %v8465, %v8464
    %s8468 = scalar_lea.vmem %s6, 40
    %8469 = vst [vmem:[%s8468] sm:$0xff] %v8466
    %8470 = vmatprep.subr.bf16.mxu0 %v6387
    %8471 = vmatpush1.bf16.msra.mxu0 %v6386
    %8472 = vmatprep.subr.bf16.mxu0 %v6393
    %8473 = vmatpush1.bf16.msra.mxu0 %v6392
    %8474 = vmatprep.subr.bf16.mxu0 %v6399
    %8475 = vmatpush1.bf16.msra.mxu0 %v6398
    %8476 = vmatprep.subr.bf16.mxu0 %v6405
    %8477 = vmatpush1.bf16.msra.mxu0 %v6404
    %8478 = vmatprep.subr.bf16.mxu0 %v6411
    %8479 = vmatpush1.bf16.msra.mxu0 %v6410
    %8480 = vmatprep.subr.bf16.mxu0 %v6417
    %8481 = vmatpush1.bf16.msra.mxu0 %v6416
    %8482 = vmatprep.subr.bf16.mxu0 %v6423
    %8483 = vmatpush1.bf16.msra.mxu0 %v6422
    %8484 = vmatprep.subr.bf16.mxu0 %v6429
    %8485 = vmatpush1.bf16.msra.mxu0 %v6428
    %8486 = vmatprep.subr.bf16.mxu0 %v6435
    %8487 = vmatpush1.bf16.msra.mxu0 %v6434
    %8488 = vmatprep.subr.bf16.mxu0 %v6441
    %8489 = vmatpush1.bf16.msra.mxu0 %v6440
    %8490 = vmatprep.subr.bf16.mxu0 %v6447
    %8491 = vmatpush1.bf16.msra.mxu0 %v6446
    %8492 = vmatprep.subr.bf16.mxu0 %v6453
    %8493 = vmatpush1.bf16.msra.mxu0 %v6452
    %8494 = vmatprep.subr.bf16.mxu0 %v6459
    %8495 = vmatpush1.bf16.msra.mxu0 %v6458
    %8496 = vmatprep.subr.bf16.mxu0 %v6465
    %8497 = vmatpush1.bf16.msra.mxu0 %v6464
    %8498 = vmatprep.subr.bf16.mxu0 %v6471
    %8499 = vmatpush1.bf16.msra.mxu0 %v6470
    %8500 = vmatprep.subr.bf16.mxu0 %v6477
    %8501 = vmatpush1.bf16.msra.mxu0 %v6476
    %8502 = vmatprep.mubr.bf16.mxu0 %v8276
    %8503 = vmatmul.mubr.bf16.gmra.mrb[0].mxu0 %v8275
    %v8504 = vpop.f32.mrb[0].mxu0
    %v8505 = vadd.f32 0.0, %v8504
    %v8506 = vpop.f32.mrb[0].mxu0
    %v8507 = vadd.f32 0.0, %v8506
    %v8508 = vpop.f32.mrb[0].mxu0
    %v8509 = vpop.f32.mrb[0].mxu0
    %8510 = vdwg.mxu0
    %8511 = vmatprep.subr.bf16.mxu0 %v6389
    %8512 = vmatpush1.bf16.msra.mxu0 %v6388
    %8513 = vmatprep.subr.bf16.mxu0 %v6395
    %8514 = vmatpush1.bf16.msra.mxu0 %v6394
    %8515 = vmatprep.subr.bf16.mxu0 %v6401
    %8516 = vmatpush1.bf16.msra.mxu0 %v6400
    %8517 = vmatprep.subr.bf16.mxu0 %v6407
    %8518 = vmatpush1.bf16.msra.mxu0 %v6406
    %8519 = vmatprep.subr.bf16.mxu0 %v6413
    %8520 = vmatpush1.bf16.msra.mxu0 %v6412
    %8521 = vmatprep.subr.bf16.mxu0 %v6419
    %8522 = vmatpush1.bf16.msra.mxu0 %v6418
    %8523 = vmatprep.subr.bf16.mxu0 %v6425
    %8524 = vmatpush1.bf16.msra.mxu0 %v6424
    %8525 = vmatprep.subr.bf16.mxu0 %v6431
    %8526 = vmatpush1.bf16.msra.mxu0 %v6430
    %8527 = vmatprep.subr.bf16.mxu0 %v6437
    %8528 = vmatpush1.bf16.msra.mxu0 %v6436
    %8529 = vmatprep.subr.bf16.mxu0 %v6443
    %8530 = vmatpush1.bf16.msra.mxu0 %v6442
    %8531 = vmatprep.subr.bf16.mxu0 %v6449
    %8532 = vmatpush1.bf16.msra.mxu0 %v6448
    %8533 = vmatprep.subr.bf16.mxu0 %v6455
    %8534 = vmatpush1.bf16.msra.mxu0 %v6454
    %8535 = vmatprep.subr.bf16.mxu0 %v6461
    %8536 = vmatpush1.bf16.msra.mxu0 %v6460
    %8537 = vmatprep.subr.bf16.mxu0 %v6467
    %8538 = vmatpush1.bf16.msra.mxu0 %v6466
    %8539 = vmatprep.subr.bf16.mxu0 %v6473
    %8540 = vmatpush1.bf16.msra.mxu0 %v6472
    %8541 = vmatprep.subr.bf16.mxu0 %v6479
    %8542 = vmatpush1.bf16.msra.mxu0 %v6478
    %8543 = vmatprep.mubr.bf16.mxu0 %v8276
    %8544 = vmatmul.mubr.bf16.gmra.mrb[0].mxu0 %v8275
    %v8545 = vpop.f32.mrb[0].mxu0
    %v8546 = vadd.f32 0.0, %v8545
    %v8547 = vpop.f32.mrb[0].mxu0
    %v8548 = vadd.f32 0.0, %v8547
    %v8549 = vpop.f32.mrb[0].mxu0
    %v8550 = vpop.f32.mrb[0].mxu0
    %8551 = vdwg.mxu0
    %8552 = vmatprep.subr.bf16.mxu0 %v6391
    %8553 = vmatpush1.bf16.msra.mxu0 %v6390
    %8554 = vmatprep.subr.bf16.mxu0 %v6397
    %8555 = vmatpush1.bf16.msra.mxu0 %v6396
    %8556 = vmatprep.subr.bf16.mxu0 %v6403
    %8557 = vmatpush1.bf16.msra.mxu0 %v6402
    %8558 = vmatprep.subr.bf16.mxu0 %v6409
    %8559 = vmatpush1.bf16.msra.mxu0 %v6408
    %8560 = vmatprep.subr.bf16.mxu0 %v6415
    %8561 = vmatpush1.bf16.msra.mxu0 %v6414
    %8562 = vmatprep.subr.bf16.mxu0 %v6421
    %8563 = vmatpush1.bf16.msra.mxu0 %v6420
    %8564 = vmatprep.subr.bf16.mxu0 %v6427
    %8565 = vmatpush1.bf16.msra.mxu0 %v6426
    %8566 = vmatprep.subr.bf16.mxu0 %v6433
    %8567 = vmatpush1.bf16.msra.mxu0 %v6432
    %8568 = vmatprep.subr.bf16.mxu0 %v6439
    %8569 = vmatpush1.bf16.msra.mxu0 %v6438
    %8570 = vmatprep.subr.bf16.mxu0 %v6445
    %8571 = vmatpush1.bf16.msra.mxu0 %v6444
    %8572 = vmatprep.subr.bf16.mxu0 %v6451
    %8573 = vmatpush1.bf16.msra.mxu0 %v6450
    %8574 = vmatprep.subr.bf16.mxu0 %v6457
    %8575 = vmatpush1.bf16.msra.mxu0 %v6456
    %8576 = vmatprep.subr.bf16.mxu0 %v6463
    %8577 = vmatpush1.bf16.msra.mxu0 %v6462
    %8578 = vmatprep.subr.bf16.mxu0 %v6469
    %8579 = vmatpush1.bf16.msra.mxu0 %v6468
    %8580 = vmatprep.subr.bf16.mxu0 %v6475
    %8581 = vmatpush1.bf16.msra.mxu0 %v6474
    %8582 = vmatprep.subr.bf16.mxu0 %v6481
    %8583 = vmatpush1.bf16.msra.mxu0 %v6480
    %8584 = vmatprep.mubr.bf16.mxu0 %v8276
    %8585 = vmatmul.mubr.bf16.gmra.mrb[0].mxu0 %v8275
    %v8586 = vpop.f32.mrb[0].mxu0
    %v8587 = vadd.f32 0.0, %v8586
    %v8588 = vpop.f32.mrb[0].mxu0
    %v8589 = vadd.f32 0.0, %v8588
    %v8590 = vpop.f32.mrb[0].mxu0
    %v8591 = vpop.f32.mrb[0].mxu0
    %8592 = vdwg.mxu0
    %s8593 = smul.addr %s7273, 8
    %s8594 = scalar_lea.vmem [#allocation5], %s8593
    %v8595 = vld [vmem:[%s8594] sm:$0xff]
    %v8596 = vld [vmem:[%s8594 + $0x8] sm:$0xff]
    %v8597 = vld [vmem:[%s8594 + $0x10] sm:$0xff]
    %v8598 = vld [vmem:[%s8594 + $0x18] sm:$0xff]
    %v8599 = vld [vmem:[%s8594 + $0x20] sm:$0xff]
    %v8600 = vld [vmem:[%s8594 + $0x28] sm:$0xff]
    %v8601 = vadd.f32 %v8595, %v8505
    %v8602 = vadd.f32 %v8596, %v8507
    %v8603 = vxor.u32 %v8601, 2147483648
    %v8604 = vxor.u32 %v8602, 2147483648
    %v8605 = vmul.f32 %v8603, 1.442695
    %v8606 = vpow.pop %v8605
    %v8607 = vmul.f32 %v8604, 1.442695
    %v8608 = vpow.pop %v8607
    %v8609 = vadd.f32 %v8606, 1.0
    %v8610 = vadd.f32 %v8608, 1.0
    %v8611 = vrcp.pop %v8609
    %v8612 = vmul.f32 1.0, %v8611
    %v8613 = vrcp.pop %v8610
    %v8614 = vmul.f32 1.0, %v8613
    %v8615 = vadd.f32 %v8597, %v8546
    %v8616 = vadd.f32 %v8598, %v8548
    %v8617 = vxor.u32 %v8615, 2147483648
    %v8618 = vxor.u32 %v8616, 2147483648
    %v8619 = vmul.f32 %v8617, 1.442695
    %v8620 = vpow.pop %v8619
    %v8621 = vmul.f32 %v8618, 1.442695
    %v8622 = vpow.pop %v8621
    %v8623 = vadd.f32 %v8620, 1.0
    %v8624 = vadd.f32 %v8622, 1.0
    %v8625 = vrcp.pop %v8623
    %v8626 = vmul.f32 1.0, %v8625
    %v8627 = vrcp.pop %v8624
    %v8628 = vmul.f32 1.0, %v8627
    %v8629 = vadd.f32 %v8587, %v5416
    %v8630 = vadd.f32 %v8589, %v5420
    %v8631 = vmul.f32 %v8612, %v8629
    %v8632 = vmul.f32 %v8614, %v8630
    %v8633 = vadd.f32 %v8599, %v8631
    %v8634 = vadd.f32 %v8600, %v8632
    %v8635 = vtanh.pop %v8633
    %v8636 = vtanh.pop %v8634
    %v8637 = vsub.f32 1.0, %v8626
    %v8638 = vsub.f32 1.0, %v8628
    %v8639 = vmul.f32 %v8637, %v8635
    %v8640 = vmul.f32 %v8638, %v8636
    %v8641 = vmul.f32 %v8626, %v8273
    %v8642 = vmul.f32 %v8628, %v8274
    %v8643 = vadd.f32 %v8639, %v8641
    %v8644 = vadd.f32 %v8640, %v8642
    %s8645 = sadd.s32 %s5424, 2
    %p8646 = scmp.lt.s32.totalorder %s8645, 8
    %s8647 = scalar_select %p8646, 1, 0
    %v8648 = vstv %s8647
    %vm8649 = vcmp.eq.s32.totalorder %v8648, 1
    %v8650 = vsel %vm8649, %v8643, %v8273
    %v8651 = vsel %vm8649, %v8644, %v8274
    %v8652 = vpack.c.bf16 %v8650, %v8650
    %v8653 = vpack.c.bf16 %v8651, %v8651
    %v8656 = vunpack.c.l.b16 %v8652
    %v8657 = vunpack.c.l.b16 %v8653
    %v8658 = vpack.c.b16 %v8657, %v8656
    %s8660 = scalar_lea.vmem %s118, 16
    %8661 = vst [vmem:[%s8660] sm:$0xff] %v8658
    %8662 = vmatprep.subr.bf16.mxu0 %v5720
    %8663 = vmatpush1.bf16.msra.mxu0 %v5719
    %8664 = vmatprep.subr.bf16.mxu0 %v5726
    %8665 = vmatpush1.bf16.msra.mxu0 %v5725
    %8666 = vmatprep.subr.bf16.mxu0 %v5732
    %8667 = vmatpush1.bf16.msra.mxu0 %v5731
    %8668 = vmatprep.subr.bf16.mxu0 %v5738
    %8669 = vmatpush1.bf16.msra.mxu0 %v5737
    %8670 = vmatprep.subr.bf16.mxu0 %v5744
    %8671 = vmatpush1.bf16.msra.mxu0 %v5743
    %8672 = vmatprep.subr.bf16.mxu0 %v5750
    %8673 = vmatpush1.bf16.msra.mxu0 %v5749
    %8674 = vmatprep.subr.bf16.mxu0 %v5756
    %8675 = vmatpush1.bf16.msra.mxu0 %v5755
    %8676 = vmatprep.subr.bf16.mxu0 %v5762
    %8677 = vmatpush1.bf16.msra.mxu0 %v5761
    %8678 = vmatprep.subr.bf16.mxu0 %v5768
    %8679 = vmatpush1.bf16.msra.mxu0 %v5767
    %8680 = vmatprep.subr.bf16.mxu0 %v5774
    %8681 = vmatpush1.bf16.msra.mxu0 %v5773
    %8682 = vmatprep.subr.bf16.mxu0 %v5780
    %8683 = vmatpush1.bf16.msra.mxu0 %v5779
    %8684 = vmatprep.subr.bf16.mxu0 %v5786
    %8685 = vmatpush1.bf16.msra.mxu0 %v5785
    %8686 = vmatprep.subr.bf16.mxu0 %v5792
    %8687 = vmatpush1.bf16.msra.mxu0 %v5791
    %8688 = vmatprep.subr.bf16.mxu0 %v5798
    %8689 = vmatpush1.bf16.msra.mxu0 %v5797
    %8690 = vmatprep.subr.bf16.mxu0 %v5804
    %8691 = vmatpush1.bf16.msra.mxu0 %v5803
    %8692 = vmatprep.subr.bf16.mxu0 %v5810
    %8693 = vmatpush1.bf16.msra.mxu0 %v5809
    %8694 = vmatprep.mubr.bf16.mxu0 %v8461
    %8695 = vmatmul.mubr.bf16.gmra.mrb[0].mxu0 %v8460
    %v8696 = vpop.f32.mrb[0].mxu0
    %v8697 = vadd.f32 0.0, %v8696
    %v8698 = vpop.f32.mrb[0].mxu0
    %v8699 = vadd.f32 0.0, %v8698
    %v8700 = vpop.f32.mrb[0].mxu0
    %v8701 = vpop.f32.mrb[0].mxu0
    %8702 = vdwg.mxu0
    %8703 = vmatprep.subr.bf16.mxu0 %v5722
    %8704 = vmatpush1.bf16.msra.mxu0 %v5721
    %8705 = vmatprep.subr.bf16.mxu0 %v5728
    %8706 = vmatpush1.bf16.msra.mxu0 %v5727
    %8707 = vmatprep.subr.bf16.mxu0 %v5734
    %8708 = vmatpush1.bf16.msra.mxu0 %v5733
    %8709 = vmatprep.subr.bf16.mxu0 %v5740
    %8710 = vmatpush1.bf16.msra.mxu0 %v5739
    %8711 = vmatprep.subr.bf16.mxu0 %v5746
    %8712 = vmatpush1.bf16.msra.mxu0 %v5745
    %8713 = vmatprep.subr.bf16.mxu0 %v5752
    %8714 = vmatpush1.bf16.msra.mxu0 %v5751
    %8715 = vmatprep.subr.bf16.mxu0 %v5758
    %8716 = vmatpush1.bf16.msra.mxu0 %v5757
    %8717 = vmatprep.subr.bf16.mxu0 %v5764
    %8718 = vmatpush1.bf16.msra.mxu0 %v5763
    %8719 = vmatprep.subr.bf16.mxu0 %v5770
    %8720 = vmatpush1.bf16.msra.mxu0 %v5769
    %8721 = vmatprep.subr.bf16.mxu0 %v5776
    %8722 = vmatpush1.bf16.msra.mxu0 %v5775
    %8723 = vmatprep.subr.bf16.mxu0 %v5782
    %8724 = vmatpush1.bf16.msra.mxu0 %v5781
    %8725 = vmatprep.subr.bf16.mxu0 %v5788
    %8726 = vmatpush1.bf16.msra.mxu0 %v5787
    %8727 = vmatprep.subr.bf16.mxu0 %v5794
    %8728 = vmatpush1.bf16.msra.mxu0 %v5793
    %8729 = vmatprep.subr.bf16.mxu0 %v5800
    %8730 = vmatpush1.bf16.msra.mxu0 %v5799
    %8731 = vmatprep.subr.bf16.mxu0 %v5806
    %8732 = vmatpush1.bf16.msra.mxu0 %v5805
    %8733 = vmatprep.subr.bf16.mxu0 %v5812
    %8734 = vmatpush1.bf16.msra.mxu0 %v5811
    %8735 = vmatprep.mubr.bf16.mxu0 %v8461
    %8736 = vmatmul.mubr.bf16.gmra.mrb[0].mxu0 %v8460
    %v8737 = vpop.f32.mrb[0].mxu0
    %v8738 = vadd.f32 0.0, %v8737
    %v8739 = vpop.f32.mrb[0].mxu0
    %v8740 = vadd.f32 0.0, %v8739
    %v8741 = vpop.f32.mrb[0].mxu0
    %v8742 = vpop.f32.mrb[0].mxu0
    %8743 = vdwg.mxu0
    %8744 = vmatprep.subr.bf16.mxu0 %v5724
    %8745 = vmatpush1.bf16.msra.mxu0 %v5723
    %8746 = vmatprep.subr.bf16.mxu0 %v5730
    %8747 = vmatpush1.bf16.msra.mxu0 %v5729
    %8748 = vmatprep.subr.bf16.mxu0 %v5736
    %8749 = vmatpush1.bf16.msra.mxu0 %v5735
    %8750 = vmatprep.subr.bf16.mxu0 %v5742
    %8751 = vmatpush1.bf16.msra.mxu0 %v5741
    %8752 = vmatprep.subr.bf16.mxu0 %v5748
    %8753 = vmatpush1.bf16.msra.mxu0 %v5747
    %8754 = vmatprep.subr.bf16.mxu0 %v5754
    %8755 = vmatpush1.bf16.msra.mxu0 %v5753
    %8756 = vmatprep.subr.bf16.mxu0 %v5760
    %8757 = vmatpush1.bf16.msra.mxu0 %v5759
    %8758 = vmatprep.subr.bf16.mxu0 %v5766
    %8759 = vmatpush1.bf16.msra.mxu0 %v5765
    %8760 = vmatprep.subr.bf16.mxu0 %v5772
    %8761 = vmatpush1.bf16.msra.mxu0 %v5771
    %8762 = vmatprep.subr.bf16.mxu0 %v5778
    %8763 = vmatpush1.bf16.msra.mxu0 %v5777
    %8764 = vmatprep.subr.bf16.mxu0 %v5784
    %8765 = vmatpush1.bf16.msra.mxu0 %v5783
    %8766 = vmatprep.subr.bf16.mxu0 %v5790
    %8767 = vmatpush1.bf16.msra.mxu0 %v5789
    %8768 = vmatprep.subr.bf16.mxu0 %v5796
    %8769 = vmatpush1.bf16.msra.mxu0 %v5795
    %8770 = vmatprep.subr.bf16.mxu0 %v5802
    %8771 = vmatpush1.bf16.msra.mxu0 %v5801
    %8772 = vmatprep.subr.bf16.mxu0 %v5808
    %8773 = vmatpush1.bf16.msra.mxu0 %v5807
    %8774 = vmatprep.subr.bf16.mxu0 %v5814
    %8775 = vmatpush1.bf16.msra.mxu0 %v5813
    %8776 = vmatprep.mubr.bf16.mxu0 %v8461
    %8777 = vmatmul.mubr.bf16.gmra.mrb[0].mxu0 %v8460
    %v8778 = vpop.f32.mrb[0].mxu0
    %v8779 = vadd.f32 0.0, %v8778
    %v8780 = vpop.f32.mrb[0].mxu0
    %v8781 = vadd.f32 0.0, %v8780
    %v8782 = vpop.f32.mrb[0].mxu0
    %v8783 = vpop.f32.mrb[0].mxu0
    %8784 = vdwg.mxu0
    %s8785 = smul.addr %s7080, 8
    %s8786 = scalar_lea.vmem [#allocation4], %s8785
    %v8787 = vld [vmem:[%s8786] sm:$0xff]
    %v8788 = vld [vmem:[%s8786 + $0x8] sm:$0xff]
    %v8789 = vld [vmem:[%s8786 + $0x10] sm:$0xff]
    %v8790 = vld [vmem:[%s8786 + $0x18] sm:$0xff]
    %v8791 = vld [vmem:[%s8786 + $0x20] sm:$0xff]
    %v8792 = vld [vmem:[%s8786 + $0x28] sm:$0xff]
    %v8793 = vadd.f32 %v8787, %v8697
    %v8794 = vadd.f32 %v8788, %v8699
    %v8795 = vxor.u32 %v8793, 2147483648
    %v8796 = vxor.u32 %v8794, 2147483648
    %v8797 = vmul.f32 %v8795, 1.442695
    %v8798 = vpow.pop %v8797
    %v8799 = vmul.f32 %v8796, 1.442695
    %v8800 = vpow.pop %v8799
    %v8801 = vadd.f32 %v8798, 1.0
    %v8802 = vadd.f32 %v8800, 1.0
    %v8803 = vrcp.pop %v8801
    %v8804 = vmul.f32 1.0, %v8803
    %v8805 = vrcp.pop %v8802
    %v8806 = vmul.f32 1.0, %v8805
    %v8807 = vadd.f32 %v8789, %v8738
    %v8808 = vadd.f32 %v8790, %v8740
    %v8809 = vxor.u32 %v8807, 2147483648
    %v8810 = vxor.u32 %v8808, 2147483648
    %v8811 = vmul.f32 %v8809, 1.442695
    %v8812 = vpow.pop %v8811
    %v8813 = vmul.f32 %v8810, 1.442695
    %v8814 = vpow.pop %v8813
    %v8815 = vadd.f32 %v8812, 1.0
    %v8816 = vadd.f32 %v8814, 1.0
    %v8817 = vrcp.pop %v8815
    %v8818 = vmul.f32 1.0, %v8817
    %v8819 = vrcp.pop %v8816
    %v8820 = vmul.f32 1.0, %v8819
    %v8821 = vadd.f32 %v8779, %v5403
    %v8822 = vadd.f32 %v8781, %v5407
    %v8823 = vmul.f32 %v8804, %v8821
    %v8824 = vmul.f32 %v8806, %v8822
    %v8825 = vadd.f32 %v8791, %v8823
    %v8826 = vadd.f32 %v8792, %v8824
    %v8827 = vtanh.pop %v8825
    %v8828 = vtanh.pop %v8826
    %v8829 = vsub.f32 1.0, %v8818
    %v8830 = vsub.f32 1.0, %v8820
    %v8831 = vmul.f32 %v8829, %v8827
    %v8832 = vmul.f32 %v8830, %v8828
    %v8833 = vmul.f32 %v8818, %v8458
    %v8834 = vmul.f32 %v8820, %v8459
    %v8835 = vadd.f32 %v8831, %v8833
    %v8836 = vadd.f32 %v8832, %v8834
    %v8837 = vpack.c.bf16 %v8835, %v8835
    %v8838 = vpack.c.bf16 %v8836, %v8836
    %v8841 = vunpack.c.l.b16 %v8837
    %v8842 = vunpack.c.l.b16 %v8838
    %v8843 = vpack.c.b16 %v8842, %v8841
    %s8845 = scalar_lea.vmem %s6, 48
    %8846 = vst [vmem:[%s8845] sm:$0xff] %v8843
    %8847 = vmatprep.subr.bf16.mxu0 %v6387
    %8848 = vmatpush1.bf16.msra.mxu0 %v6386
    %8849 = vmatprep.subr.bf16.mxu0 %v6393
    %8850 = vmatpush1.bf16.msra.mxu0 %v6392
    %8851 = vmatprep.subr.bf16.mxu0 %v6399
    %8852 = vmatpush1.bf16.msra.mxu0 %v6398
    %8853 = vmatprep.subr.bf16.mxu0 %v6405
    %8854 = vmatpush1.bf16.msra.mxu0 %v6404
    %8855 = vmatprep.subr.bf16.mxu0 %v6411
    %8856 = vmatpush1.bf16.msra.mxu0 %v6410
    %8857 = vmatprep.subr.bf16.mxu0 %v6417
    %8858 = vmatpush1.bf16.msra.mxu0 %v6416
    %8859 = vmatprep.subr.bf16.mxu0 %v6423
    %8860 = vmatpush1.bf16.msra.mxu0 %v6422
    %8861 = vmatprep.subr.bf16.mxu0 %v6429
    %8862 = vmatpush1.bf16.msra.mxu0 %v6428
    %8863 = vmatprep.subr.bf16.mxu0 %v6435
    %8864 = vmatpush1.bf16.msra.mxu0 %v6434
    %8865 = vmatprep.subr.bf16.mxu0 %v6441
    %8866 = vmatpush1.bf16.msra.mxu0 %v6440
    %8867 = vmatprep.subr.bf16.mxu0 %v6447
    %8868 = vmatpush1.bf16.msra.mxu0 %v6446
    %8869 = vmatprep.subr.bf16.mxu0 %v6453
    %8870 = vmatpush1.bf16.msra.mxu0 %v6452
    %8871 = vmatprep.subr.bf16.mxu0 %v6459
    %8872 = vmatpush1.bf16.msra.mxu0 %v6458
    %8873 = vmatprep.subr.bf16.mxu0 %v6465
    %8874 = vmatpush1.bf16.msra.mxu0 %v6464
    %8875 = vmatprep.subr.bf16.mxu0 %v6471
    %8876 = vmatpush1.bf16.msra.mxu0 %v6470
    %8877 = vmatprep.subr.bf16.mxu0 %v6477
    %8878 = vmatpush1.bf16.msra.mxu0 %v6476
    %8879 = vmatprep.mubr.bf16.mxu0 %v8653
    %8880 = vmatmul.mubr.bf16.gmra.mrb[0].mxu0 %v8652
    %v8881 = vpop.f32.mrb[0].mxu0
    %v8882 = vadd.f32 0.0, %v8881
    %v8883 = vpop.f32.mrb[0].mxu0
    %v8884 = vadd.f32 0.0, %v8883
    %v8885 = vpop.f32.mrb[0].mxu0
    %v8886 = vpop.f32.mrb[0].mxu0
    %8887 = vdwg.mxu0
    %8888 = vmatprep.subr.bf16.mxu0 %v6389
    %8889 = vmatpush1.bf16.msra.mxu0 %v6388
    %8890 = vmatprep.subr.bf16.mxu0 %v6395
    %8891 = vmatpush1.bf16.msra.mxu0 %v6394
    %8892 = vmatprep.subr.bf16.mxu0 %v6401
    %8893 = vmatpush1.bf16.msra.mxu0 %v6400
    %8894 = vmatprep.subr.bf16.mxu0 %v6407
    %8895 = vmatpush1.bf16.msra.mxu0 %v6406
    %8896 = vmatprep.subr.bf16.mxu0 %v6413
    %8897 = vmatpush1.bf16.msra.mxu0 %v6412
    %8898 = vmatprep.subr.bf16.mxu0 %v6419
    %8899 = vmatpush1.bf16.msra.mxu0 %v6418
    %8900 = vmatprep.subr.bf16.mxu0 %v6425
    %8901 = vmatpush1.bf16.msra.mxu0 %v6424
    %8902 = vmatprep.subr.bf16.mxu0 %v6431
    %8903 = vmatpush1.bf16.msra.mxu0 %v6430
    %8904 = vmatprep.subr.bf16.mxu0 %v6437
    %8905 = vmatpush1.bf16.msra.mxu0 %v6436
    %8906 = vmatprep.subr.bf16.mxu0 %v6443
    %8907 = vmatpush1.bf16.msra.mxu0 %v6442
    %8908 = vmatprep.subr.bf16.mxu0 %v6449
    %8909 = vmatpush1.bf16.msra.mxu0 %v6448
    %8910 = vmatprep.subr.bf16.mxu0 %v6455
    %8911 = vmatpush1.bf16.msra.mxu0 %v6454
    %8912 = vmatprep.subr.bf16.mxu0 %v6461
    %8913 = vmatpush1.bf16.msra.mxu0 %v6460
    %8914 = vmatprep.subr.bf16.mxu0 %v6467
    %8915 = vmatpush1.bf16.msra.mxu0 %v6466
    %8916 = vmatprep.subr.bf16.mxu0 %v6473
    %8917 = vmatpush1.bf16.msra.mxu0 %v6472
    %8918 = vmatprep.subr.bf16.mxu0 %v6479
    %8919 = vmatpush1.bf16.msra.mxu0 %v6478
    %8920 = vmatprep.mubr.bf16.mxu0 %v8653
    %8921 = vmatmul.mubr.bf16.gmra.mrb[0].mxu0 %v8652
    %v8922 = vpop.f32.mrb[0].mxu0
    %v8923 = vadd.f32 0.0, %v8922
    %v8924 = vpop.f32.mrb[0].mxu0
    %v8925 = vadd.f32 0.0, %v8924
    %v8926 = vpop.f32.mrb[0].mxu0
    %v8927 = vpop.f32.mrb[0].mxu0
    %8928 = vdwg.mxu0
    %8929 = vmatprep.subr.bf16.mxu0 %v6391
    %8930 = vmatpush1.bf16.msra.mxu0 %v6390
    %8931 = vmatprep.subr.bf16.mxu0 %v6397
    %8932 = vmatpush1.bf16.msra.mxu0 %v6396
    %8933 = vmatprep.subr.bf16.mxu0 %v6403
    %8934 = vmatpush1.bf16.msra.mxu0 %v6402
    %8935 = vmatprep.subr.bf16.mxu0 %v6409
    %8936 = vmatpush1.bf16.msra.mxu0 %v6408
    %8937 = vmatprep.subr.bf16.mxu0 %v6415
    %8938 = vmatpush1.bf16.msra.mxu0 %v6414
    %8939 = vmatprep.subr.bf16.mxu0 %v6421
    %8940 = vmatpush1.bf16.msra.mxu0 %v6420
    %8941 = vmatprep.subr.bf16.mxu0 %v6427
    %8942 = vmatpush1.bf16.msra.mxu0 %v6426
    %8943 = vmatprep.subr.bf16.mxu0 %v6433
    %8944 = vmatpush1.bf16.msra.mxu0 %v6432
    %8945 = vmatprep.subr.bf16.mxu0 %v6439
    %8946 = vmatpush1.bf16.msra.mxu0 %v6438
    %8947 = vmatprep.subr.bf16.mxu0 %v6445
    %8948 = vmatpush1.bf16.msra.mxu0 %v6444
    %8949 = vmatprep.subr.bf16.mxu0 %v6451
    %8950 = vmatpush1.bf16.msra.mxu0 %v6450
    %8951 = vmatprep.subr.bf16.mxu0 %v6457
    %8952 = vmatpush1.bf16.msra.mxu0 %v6456
    %8953 = vmatprep.subr.bf16.mxu0 %v6463
    %8954 = vmatpush1.bf16.msra.mxu0 %v6462
    %8955 = vmatprep.subr.bf16.mxu0 %v6469
    %8956 = vmatpush1.bf16.msra.mxu0 %v6468
    %8957 = vmatprep.subr.bf16.mxu0 %v6475
    %8958 = vmatpush1.bf16.msra.mxu0 %v6474
    %8959 = vmatprep.subr.bf16.mxu0 %v6481
    %8960 = vmatpush1.bf16.msra.mxu0 %v6480
    %8961 = vmatprep.mubr.bf16.mxu0 %v8653
    %8962 = vmatmul.mubr.bf16.gmra.mrb[0].mxu0 %v8652
    %v8963 = vpop.f32.mrb[0].mxu0
    %v8964 = vadd.f32 0.0, %v8963
    %v8965 = vpop.f32.mrb[0].mxu0
    %v8966 = vadd.f32 0.0, %v8965
    %v8967 = vpop.f32.mrb[0].mxu0
    %v8968 = vpop.f32.mrb[0].mxu0
    %8969 = vdwg.mxu0
    %s8970 = smul.addr %s6894, 8
    %s8971 = scalar_lea.vmem [#allocation5], %s8970
    %v8972 = vld [vmem:[%s8971] sm:$0xff]
    %v8973 = vld [vmem:[%s8971 + $0x8] sm:$0xff]
    %v8974 = vld [vmem:[%s8971 + $0x10] sm:$0xff]
    %v8975 = vld [vmem:[%s8971 + $0x18] sm:$0xff]
    %v8976 = vld [vmem:[%s8971 + $0x20] sm:$0xff]
    %v8977 = vld [vmem:[%s8971 + $0x28] sm:$0xff]
    %v8978 = vadd.f32 %v8972, %v8882
    %v8979 = vadd.f32 %v8973, %v8884
    %v8980 = vxor.u32 %v8978, 2147483648
    %v8981 = vxor.u32 %v8979, 2147483648
    %v8982 = vmul.f32 %v8980, 1.442695
    %v8983 = vpow.pop %v8982
    %v8984 = vmul.f32 %v8981, 1.442695
    %v8985 = vpow.pop %v8984
    %v8986 = vadd.f32 %v8983, 1.0
    %v8987 = vadd.f32 %v8985, 1.0
    %v8988 = vrcp.pop %v8986
    %v8989 = vmul.f32 1.0, %v8988
    %v8990 = vrcp.pop %v8987
    %v8991 = vmul.f32 1.0, %v8990
    %v8992 = vadd.f32 %v8974, %v8923
    %v8993 = vadd.f32 %v8975, %v8925
    %v8994 = vxor.u32 %v8992, 2147483648
    %v8995 = vxor.u32 %v8993, 2147483648
    %v8996 = vmul.f32 %v8994, 1.442695
    %v8997 = vpow.pop %v8996
    %v8998 = vmul.f32 %v8995, 1.442695
    %v8999 = vpow.pop %v8998
    %v9000 = vadd.f32 %v8997, 1.0
    %v9001 = vadd.f32 %v8999, 1.0
    %v9002 = vrcp.pop %v9000
    %v9003 = vmul.f32 1.0, %v9002
    %v9004 = vrcp.pop %v9001
    %v9005 = vmul.f32 1.0, %v9004
    %v9006 = vadd.f32 %v8964, %v5416
    %v9007 = vadd.f32 %v8966, %v5420
    %v9008 = vmul.f32 %v8989, %v9006
    %v9009 = vmul.f32 %v8991, %v9007
    %v9010 = vadd.f32 %v8976, %v9008
    %v9011 = vadd.f32 %v8977, %v9009
    %v9012 = vtanh.pop %v9010
    %v9013 = vtanh.pop %v9011
    %v9014 = vsub.f32 1.0, %v9003
    %v9015 = vsub.f32 1.0, %v9005
    %v9016 = vmul.f32 %v9014, %v9012
    %v9017 = vmul.f32 %v9015, %v9013
    %v9018 = vmul.f32 %v9003, %v8650
    %v9019 = vmul.f32 %v9005, %v8651
    %v9020 = vadd.f32 %v9016, %v9018
    %v9021 = vadd.f32 %v9017, %v9019
    %s9022 = sadd.s32 %s5424, 1
    %p9023 = scmp.lt.s32.totalorder %s9022, 8
    %s9024 = scalar_select %p9023, 1, 0
    %v9025 = vstv %s9024
    %vm9026 = vcmp.eq.s32.totalorder %v9025, 1
    %v9027 = vsel %vm9026, %v9020, %v8650
    %v9028 = vsel %vm9026, %v9021, %v8651
    %v9029 = vpack.c.bf16 %v9027, %v9027
    %v9030 = vpack.c.bf16 %v9028, %v9028
    %v9033 = vunpack.c.l.b16 %v9029
    %v9034 = vunpack.c.l.b16 %v9030
    %v9035 = vpack.c.b16 %v9034, %v9033
    %s9037 = scalar_lea.vmem %s118, 8
    %9038 = vst [vmem:[%s9037] sm:$0xff] %v9035
    %9039 = vmatprep.subr.bf16.mxu0 %v5720
    %9040 = vmatpush1.bf16.msra.mxu0 %v5719
    %9041 = vmatprep.subr.bf16.mxu0 %v5726
    %9042 = vmatpush1.bf16.msra.mxu0 %v5725
    %9043 = vmatprep.subr.bf16.mxu0 %v5732
    %9044 = vmatpush1.bf16.msra.mxu0 %v5731
    %9045 = vmatprep.subr.bf16.mxu0 %v5738
    %9046 = vmatpush1.bf16.msra.mxu0 %v5737
    %9047 = vmatprep.subr.bf16.mxu0 %v5744
    %9048 = vmatpush1.bf16.msra.mxu0 %v5743
    %9049 = vmatprep.subr.bf16.mxu0 %v5750
    %9050 = vmatpush1.bf16.msra.mxu0 %v5749
    %9051 = vmatprep.subr.bf16.mxu0 %v5756
    %9052 = vmatpush1.bf16.msra.mxu0 %v5755
    %9053 = vmatprep.subr.bf16.mxu0 %v5762
    %9054 = vmatpush1.bf16.msra.mxu0 %v5761
    %9055 = vmatprep.subr.bf16.mxu0 %v5768
    %9056 = vmatpush1.bf16.msra.mxu0 %v5767
    %9057 = vmatprep.subr.bf16.mxu0 %v5774
    %9058 = vmatpush1.bf16.msra.mxu0 %v5773
    %9059 = vmatprep.subr.bf16.mxu0 %v5780
    %9060 = vmatpush1.bf16.msra.mxu0 %v5779
    %9061 = vmatprep.subr.bf16.mxu0 %v5786
    %9062 = vmatpush1.bf16.msra.mxu0 %v5785
    %9063 = vmatprep.subr.bf16.mxu0 %v5792
    %9064 = vmatpush1.bf16.msra.mxu0 %v5791
    %9065 = vmatprep.subr.bf16.mxu0 %v5798
    %9066 = vmatpush1.bf16.msra.mxu0 %v5797
    %9067 = vmatprep.subr.bf16.mxu0 %v5804
    %9068 = vmatpush1.bf16.msra.mxu0 %v5803
    %9069 = vmatprep.subr.bf16.mxu0 %v5810
    %9070 = vmatpush1.bf16.msra.mxu0 %v5809
    %9071 = vmatprep.mubr.bf16.mxu0 %v8838
    %9072 = vmatmul.mubr.bf16.gmra.mrb[0].mxu0 %v8837
    %v9073 = vpop.f32.mrb[0].mxu0
    %v9074 = vadd.f32 0.0, %v9073
    %v9075 = vpop.f32.mrb[0].mxu0
    %v9076 = vadd.f32 0.0, %v9075
    %v9077 = vpop.f32.mrb[0].mxu0
    %v9078 = vpop.f32.mrb[0].mxu0
    %9079 = vdwg.mxu0
    %9080 = vmatprep.subr.bf16.mxu0 %v5722
    %9081 = vmatpush1.bf16.msra.mxu0 %v5721
    %9082 = vmatprep.subr.bf16.mxu0 %v5728
    %9083 = vmatpush1.bf16.msra.mxu0 %v5727
    %9084 = vmatprep.subr.bf16.mxu0 %v5734
    %9085 = vmatpush1.bf16.msra.mxu0 %v5733
    %9086 = vmatprep.subr.bf16.mxu0 %v5740
    %9087 = vmatpush1.bf16.msra.mxu0 %v5739
    %9088 = vmatprep.subr.bf16.mxu0 %v5746
    %9089 = vmatpush1.bf16.msra.mxu0 %v5745
    %9090 = vmatprep.subr.bf16.mxu0 %v5752
    %9091 = vmatpush1.bf16.msra.mxu0 %v5751
    %9092 = vmatprep.subr.bf16.mxu0 %v5758
    %9093 = vmatpush1.bf16.msra.mxu0 %v5757
    %9094 = vmatprep.subr.bf16.mxu0 %v5764
    %9095 = vmatpush1.bf16.msra.mxu0 %v5763
    %9096 = vmatprep.subr.bf16.mxu0 %v5770
    %9097 = vmatpush1.bf16.msra.mxu0 %v5769
    %9098 = vmatprep.subr.bf16.mxu0 %v5776
    %9099 = vmatpush1.bf16.msra.mxu0 %v5775
    %9100 = vmatprep.subr.bf16.mxu0 %v5782
    %9101 = vmatpush1.bf16.msra.mxu0 %v5781
    %9102 = vmatprep.subr.bf16.mxu0 %v5788
    %9103 = vmatpush1.bf16.msra.mxu0 %v5787
    %9104 = vmatprep.subr.bf16.mxu0 %v5794
    %9105 = vmatpush1.bf16.msra.mxu0 %v5793
    %9106 = vmatprep.subr.bf16.mxu0 %v5800
    %9107 = vmatpush1.bf16.msra.mxu0 %v5799
    %9108 = vmatprep.subr.bf16.mxu0 %v5806
    %9109 = vmatpush1.bf16.msra.mxu0 %v5805
    %9110 = vmatprep.subr.bf16.mxu0 %v5812
    %9111 = vmatpush1.bf16.msra.mxu0 %v5811
    %9112 = vmatprep.mubr.bf16.mxu0 %v8838
    %9113 = vmatmul.mubr.bf16.gmra.mrb[0].mxu0 %v8837
    %v9114 = vpop.f32.mrb[0].mxu0
    %v9115 = vadd.f32 0.0, %v9114
    %v9116 = vpop.f32.mrb[0].mxu0
    %v9117 = vadd.f32 0.0, %v9116
    %v9118 = vpop.f32.mrb[0].mxu0
    %v9119 = vpop.f32.mrb[0].mxu0
    %9120 = vdwg.mxu0
    %9121 = vmatprep.subr.bf16.mxu0 %v5724
    %9122 = vmatpush1.bf16.msra.mxu0 %v5723
    %9123 = vmatprep.subr.bf16.mxu0 %v5730
    %9124 = vmatpush1.bf16.msra.mxu0 %v5729
    %9125 = vmatprep.subr.bf16.mxu0 %v5736
    %9126 = vmatpush1.bf16.msra.mxu0 %v5735
    %9127 = vmatprep.subr.bf16.mxu0 %v5742
    %9128 = vmatpush1.bf16.msra.mxu0 %v5741
    %9129 = vmatprep.subr.bf16.mxu0 %v5748
    %9130 = vmatpush1.bf16.msra.mxu0 %v5747
    %9131 = vmatprep.subr.bf16.mxu0 %v5754
    %9132 = vmatpush1.bf16.msra.mxu0 %v5753
    %9133 = vmatprep.subr.bf16.mxu0 %v5760
    %9134 = vmatpush1.bf16.msra.mxu0 %v5759
    %9135 = vmatprep.subr.bf16.mxu0 %v5766
    %9136 = vmatpush1.bf16.msra.mxu0 %v5765
    %9137 = vmatprep.subr.bf16.mxu0 %v5772
    %9138 = vmatpush1.bf16.msra.mxu0 %v5771
    %9139 = vmatprep.subr.bf16.mxu0 %v5778
    %9140 = vmatpush1.bf16.msra.mxu0 %v5777
    %9141 = vmatprep.subr.bf16.mxu0 %v5784
    %9142 = vmatpush1.bf16.msra.mxu0 %v5783
    %9143 = vmatprep.subr.bf16.mxu0 %v5790
    %9144 = vmatpush1.bf16.msra.mxu0 %v5789
    %9145 = vmatprep.subr.bf16.mxu0 %v5796
    %9146 = vmatpush1.bf16.msra.mxu0 %v5795
    %9147 = vmatprep.subr.bf16.mxu0 %v5802
    %9148 = vmatpush1.bf16.msra.mxu0 %v5801
    %9149 = vmatprep.subr.bf16.mxu0 %v5808
    %9150 = vmatpush1.bf16.msra.mxu0 %v5807
    %9151 = vmatprep.subr.bf16.mxu0 %v5814
    %9152 = vmatpush1.bf16.msra.mxu0 %v5813
    %9153 = vmatprep.mubr.bf16.mxu0 %v8838
    %9154 = vmatmul.mubr.bf16.gmra.mrb[0].mxu0 %v8837
    %v9155 = vpop.f32.mrb[0].mxu0
    %v9156 = vadd.f32 0.0, %v9155
    %v9157 = vpop.f32.mrb[0].mxu0
    %v9158 = vadd.f32 0.0, %v9157
    %v9159 = vpop.f32.mrb[0].mxu0
    %v9160 = vpop.f32.mrb[0].mxu0
    %9161 = vdwg.mxu0
    %s9162 = smul.addr %s6701, 8
    %s9163 = scalar_lea.vmem [#allocation4], %s9162
    %v9164 = vld [vmem:[%s9163] sm:$0xff]
    %v9165 = vld [vmem:[%s9163 + $0x8] sm:$0xff]
    %v9166 = vld [vmem:[%s9163 + $0x10] sm:$0xff]
    %v9167 = vld [vmem:[%s9163 + $0x18] sm:$0xff]
    %v9168 = vld [vmem:[%s9163 + $0x20] sm:$0xff]
    %v9169 = vld [vmem:[%s9163 + $0x28] sm:$0xff]
    %v9170 = vadd.f32 %v9164, %v9074
    %v9171 = vadd.f32 %v9165, %v9076
    %v9172 = vxor.u32 %v9170, 2147483648
    %v9173 = vxor.u32 %v9171, 2147483648
    %v9174 = vmul.f32 %v9172, 1.442695
    %v9175 = vpow.pop %v9174
    %v9176 = vmul.f32 %v9173, 1.442695
    %v9177 = vpow.pop %v9176
    %v9178 = vadd.f32 %v9175, 1.0
    %v9179 = vadd.f32 %v9177, 1.0
    %v9180 = vrcp.pop %v9178
    %v9181 = vmul.f32 1.0, %v9180
    %v9182 = vrcp.pop %v9179
    %v9183 = vmul.f32 1.0, %v9182
    %v9184 = vadd.f32 %v9166, %v9115
    %v9185 = vadd.f32 %v9167, %v9117
    %v9186 = vxor.u32 %v9184, 2147483648
    %v9187 = vxor.u32 %v9185, 2147483648
    %v9188 = vmul.f32 %v9186, 1.442695
    %v9189 = vpow.pop %v9188
    %v9190 = vmul.f32 %v9187, 1.442695
    %v9191 = vpow.pop %v9190
    %v9192 = vadd.f32 %v9189, 1.0
    %v9193 = vadd.f32 %v9191, 1.0
    %v9194 = vrcp.pop %v9192
    %v9195 = vmul.f32 1.0, %v9194
    %v9196 = vrcp.pop %v9193
    %v9197 = vmul.f32 1.0, %v9196
    %v9198 = vadd.f32 %v9156, %v5403
    %v9199 = vadd.f32 %v9158, %v5407
    %v9200 = vmul.f32 %v9181, %v9198
    %v9201 = vmul.f32 %v9183, %v9199
    %v9202 = vadd.f32 %v9168, %v9200
    %v9203 = vadd.f32 %v9169, %v9201
    %v9204 = vtanh.pop %v9202
    %v9205 = vtanh.pop %v9203
    %v9206 = vsub.f32 1.0, %v9195
    %v9207 = vsub.f32 1.0, %v9197
    %v9208 = vmul.f32 %v9206, %v9204
    %v9209 = vmul.f32 %v9207, %v9205
    %v9210 = vmul.f32 %v9195, %v8835
    %v9211 = vmul.f32 %v9197, %v8836
    %v9212 = vadd.f32 %v9208, %v9210
    %v9213 = vadd.f32 %v9209, %v9211
    %v9214 = vpack.c.bf16 %v9212, %v9212
    %v9215 = vpack.c.bf16 %v9213, %v9213
    %v9218 = vunpack.c.l.b16 %v9214
    %v9219 = vunpack.c.l.b16 %v9215
    %v9220 = vpack.c.b16 %v9219, %v9218
    %s9222 = scalar_lea.vmem %s6, 56
    %9223 = vst [vmem:[%s9222] sm:$0xff] %v9220
    %9224 = vmatprep.subr.bf16.mxu0 %v6387
    %9225 = vmatpush1.bf16.msra.mxu0 %v6386
    %9226 = vmatprep.subr.bf16.mxu0 %v6393
    %9227 = vmatpush1.bf16.msra.mxu0 %v6392
    %9228 = vmatprep.subr.bf16.mxu0 %v6399
    %9229 = vmatpush1.bf16.msra.mxu0 %v6398
    %9230 = vmatprep.subr.bf16.mxu0 %v6405
    %9231 = vmatpush1.bf16.msra.mxu0 %v6404
    %9232 = vmatprep.subr.bf16.mxu0 %v6411
    %9233 = vmatpush1.bf16.msra.mxu0 %v6410
    %9234 = vmatprep.subr.bf16.mxu0 %v6417
    %9235 = vmatpush1.bf16.msra.mxu0 %v6416
    %9236 = vmatprep.subr.bf16.mxu0 %v6423
    %9237 = vmatpush1.bf16.msra.mxu0 %v6422
    %9238 = vmatprep.subr.bf16.mxu0 %v6429
    %9239 = vmatpush1.bf16.msra.mxu0 %v6428
    %9240 = vmatprep.subr.bf16.mxu0 %v6435
    %9241 = vmatpush1.bf16.msra.mxu0 %v6434
    %9242 = vmatprep.subr.bf16.mxu0 %v6441
    %9243 = vmatpush1.bf16.msra.mxu0 %v6440
    %9244 = vmatprep.subr.bf16.mxu0 %v6447
    %9245 = vmatpush1.bf16.msra.mxu0 %v6446
    %9246 = vmatprep.subr.bf16.mxu0 %v6453
    %9247 = vmatpush1.bf16.msra.mxu0 %v6452
    %9248 = vmatprep.subr.bf16.mxu0 %v6459
    %9249 = vmatpush1.bf16.msra.mxu0 %v6458
    %9250 = vmatprep.subr.bf16.mxu0 %v6465
    %9251 = vmatpush1.bf16.msra.mxu0 %v6464
    %9252 = vmatprep.subr.bf16.mxu0 %v6471
    %9253 = vmatpush1.bf16.msra.mxu0 %v6470
    %9254 = vmatprep.subr.bf16.mxu0 %v6477
    %9255 = vmatpush1.bf16.msra.mxu0 %v6476
    %9256 = vmatprep.mubr.bf16.mxu0 %v9030
    %9257 = vmatmul.mubr.bf16.gmra.mrb[0].mxu0 %v9029
    %v9258 = vpop.f32.mrb[0].mxu0
    %v9259 = vadd.f32 0.0, %v9258
    %v9260 = vpop.f32.mrb[0].mxu0
    %v9261 = vadd.f32 0.0, %v9260
    %v9262 = vpop.f32.mrb[0].mxu0
    %v9263 = vpop.f32.mrb[0].mxu0
    %9264 = vdwg.mxu0
    %9265 = vmatprep.subr.bf16.mxu0 %v6389
    %9266 = vmatpush1.bf16.msra.mxu0 %v6388
    %9267 = vmatprep.subr.bf16.mxu0 %v6395
    %9268 = vmatpush1.bf16.msra.mxu0 %v6394
    %9269 = vmatprep.subr.bf16.mxu0 %v6401
    %9270 = vmatpush1.bf16.msra.mxu0 %v6400
    %9271 = vmatprep.subr.bf16.mxu0 %v6407
    %9272 = vmatpush1.bf16.msra.mxu0 %v6406
    %9273 = vmatprep.subr.bf16.mxu0 %v6413
    %9274 = vmatpush1.bf16.msra.mxu0 %v6412
    %9275 = vmatprep.subr.bf16.mxu0 %v6419
    %9276 = vmatpush1.bf16.msra.mxu0 %v6418
    %9277 = vmatprep.subr.bf16.mxu0 %v6425
    %9278 = vmatpush1.bf16.msra.mxu0 %v6424
    %9279 = vmatprep.subr.bf16.mxu0 %v6431
    %9280 = vmatpush1.bf16.msra.mxu0 %v6430
    %9281 = vmatprep.subr.bf16.mxu0 %v6437
    %9282 = vmatpush1.bf16.msra.mxu0 %v6436
    %9283 = vmatprep.subr.bf16.mxu0 %v6443
    %9284 = vmatpush1.bf16.msra.mxu0 %v6442
    %9285 = vmatprep.subr.bf16.mxu0 %v6449
    %9286 = vmatpush1.bf16.msra.mxu0 %v6448
    %9287 = vmatprep.subr.bf16.mxu0 %v6455
    %9288 = vmatpush1.bf16.msra.mxu0 %v6454
    %9289 = vmatprep.subr.bf16.mxu0 %v6461
    %9290 = vmatpush1.bf16.msra.mxu0 %v6460
    %9291 = vmatprep.subr.bf16.mxu0 %v6467
    %9292 = vmatpush1.bf16.msra.mxu0 %v6466
    %9293 = vmatprep.subr.bf16.mxu0 %v6473
    %9294 = vmatpush1.bf16.msra.mxu0 %v6472
    %9295 = vmatprep.subr.bf16.mxu0 %v6479
    %9296 = vmatpush1.bf16.msra.mxu0 %v6478
    %9297 = vmatprep.mubr.bf16.mxu0 %v9030
    %9298 = vmatmul.mubr.bf16.gmra.mrb[0].mxu0 %v9029
    %v9299 = vpop.f32.mrb[0].mxu0
    %v9300 = vadd.f32 0.0, %v9299
    %v9301 = vpop.f32.mrb[0].mxu0
    %v9302 = vadd.f32 0.0, %v9301
    %v9303 = vpop.f32.mrb[0].mxu0
    %v9304 = vpop.f32.mrb[0].mxu0
    %9305 = vdwg.mxu0
    %9306 = vmatprep.subr.bf16.mxu0 %v6391
    %9307 = vmatpush1.bf16.msra.mxu0 %v6390
    %9308 = vmatprep.subr.bf16.mxu0 %v6397
    %9309 = vmatpush1.bf16.msra.mxu0 %v6396
    %9310 = vmatprep.subr.bf16.mxu0 %v6403
    %9311 = vmatpush1.bf16.msra.mxu0 %v6402
    %9312 = vmatprep.subr.bf16.mxu0 %v6409
    %9313 = vmatpush1.bf16.msra.mxu0 %v6408
    %9314 = vmatprep.subr.bf16.mxu0 %v6415
    %9315 = vmatpush1.bf16.msra.mxu0 %v6414
    %9316 = vmatprep.subr.bf16.mxu0 %v6421
    %9317 = vmatpush1.bf16.msra.mxu0 %v6420
    %9318 = vmatprep.subr.bf16.mxu0 %v6427
    %9319 = vmatpush1.bf16.msra.mxu0 %v6426
    %9320 = vmatprep.subr.bf16.mxu0 %v6433
    %9321 = vmatpush1.bf16.msra.mxu0 %v6432
    %9322 = vmatprep.subr.bf16.mxu0 %v6439
    %9323 = vmatpush1.bf16.msra.mxu0 %v6438
    %9324 = vmatprep.subr.bf16.mxu0 %v6445
    %9325 = vmatpush1.bf16.msra.mxu0 %v6444
    %9326 = vmatprep.subr.bf16.mxu0 %v6451
    %9327 = vmatpush1.bf16.msra.mxu0 %v6450
    %9328 = vmatprep.subr.bf16.mxu0 %v6457
    %9329 = vmatpush1.bf16.msra.mxu0 %v6456
    %9330 = vmatprep.subr.bf16.mxu0 %v6463
    %9331 = vmatpush1.bf16.msra.mxu0 %v6462
    %9332 = vmatprep.subr.bf16.mxu0 %v6469
    %9333 = vmatpush1.bf16.msra.mxu0 %v6468
    %9334 = vmatprep.subr.bf16.mxu0 %v6475
    %9335 = vmatpush1.bf16.msra.mxu0 %v6474
    %9336 = vmatprep.subr.bf16.mxu0 %v6481
    %9337 = vmatpush1.bf16.msra.mxu0 %v6480
    %9338 = vmatprep.mubr.bf16.mxu0 %v9030
    %9339 = vmatmul.mubr.bf16.gmra.mrb[0].mxu0 %v9029
    %v9340 = vpop.f32.mrb[0].mxu0
    %v9341 = vadd.f32 0.0, %v9340
    %v9342 = vpop.f32.mrb[0].mxu0
    %v9343 = vadd.f32 0.0, %v9342
    %v9344 = vpop.f32.mrb[0].mxu0
    %v9345 = vpop.f32.mrb[0].mxu0
    %9346 = vdwg.mxu0
    %s9347 = smul.addr %s6034, 8
    %s9348 = scalar_lea.vmem [#allocation5], %s9347
    %v9349 = vld [vmem:[%s9348] sm:$0xff]
    %v9350 = vld [vmem:[%s9348 + $0x8] sm:$0xff]
    %v9351 = vld [vmem:[%s9348 + $0x10] sm:$0xff]
    %v9352 = vld [vmem:[%s9348 + $0x18] sm:$0xff]
    %v9353 = vld [vmem:[%s9348 + $0x20] sm:$0xff]
    %v9354 = vld [vmem:[%s9348 + $0x28] sm:$0xff]
    %v9355 = vadd.f32 %v9349, %v9259
    %v9356 = vadd.f32 %v9350, %v9261
    %v9357 = vxor.u32 %v9355, 2147483648
    %v9358 = vxor.u32 %v9356, 2147483648
    %v9359 = vmul.f32 %v9357, 1.442695
    %v9360 = vpow.pop %v9359
    %v9361 = vmul.f32 %v9358, 1.442695
    %v9362 = vpow.pop %v9361
    %v9363 = vadd.f32 %v9360, 1.0
    %v9364 = vadd.f32 %v9362, 1.0
    %v9365 = vrcp.pop %v9363
    %v9366 = vmul.f32 1.0, %v9365
    %v9367 = vrcp.pop %v9364
    %v9368 = vmul.f32 1.0, %v9367
    %v9369 = vadd.f32 %v9351, %v9300
    %v9370 = vadd.f32 %v9352, %v9302
    %v9371 = vxor.u32 %v9369, 2147483648
    %v9372 = vxor.u32 %v9370, 2147483648
    %v9373 = vmul.f32 %v9371, 1.442695
    %v9374 = vpow.pop %v9373
    %v9375 = vmul.f32 %v9372, 1.442695
    %v9376 = vpow.pop %v9375
    %v9377 = vadd.f32 %v9374, 1.0
    %v9378 = vadd.f32 %v9376, 1.0
    %v9379 = vrcp.pop %v9377
    %v9380 = vmul.f32 1.0, %v9379
    %v9381 = vrcp.pop %v9378
    %v9382 = vmul.f32 1.0, %v9381
    %v9383 = vadd.f32 %v9341, %v5416
    %v9384 = vadd.f32 %v9343, %v5420
    %v9385 = vmul.f32 %v9366, %v9383
    %v9386 = vmul.f32 %v9368, %v9384
    %v9387 = vadd.f32 %v9353, %v9385
    %v9388 = vadd.f32 %v9354, %v9386
    %v9389 = vtanh.pop %v9387
    %v9390 = vtanh.pop %v9388
    %v9391 = vsub.f32 1.0, %v9380
    %v9392 = vsub.f32 1.0, %v9382
    %v9393 = vmul.f32 %v9391, %v9389
    %v9394 = vmul.f32 %v9392, %v9390
    %v9395 = vmul.f32 %v9380, %v9027
    %v9396 = vmul.f32 %v9382, %v9028
    %v9397 = vadd.f32 %v9393, %v9395
    %v9398 = vadd.f32 %v9394, %v9396
    %p9399 = scmp.lt.s32.totalorder %s5424, 8
    %s9400 = scalar_select %p9399, 1, 0
    %v9401 = vstv %s9400
    %vm9402 = vcmp.eq.s32.totalorder %v9401, 1
    %v9403 = vsel %vm9402, %v9397, %v9027
    %v9404 = vsel %vm9402, %v9398, %v9028
    %v9405 = vpack.c.bf16 %v9403, %v9403
    %v9406 = vpack.c.bf16 %v9404, %v9404
    %v9409 = vunpack.c.l.b16 %v9405
    %v9410 = vunpack.c.l.b16 %v9406
    %v9411 = vpack.c.b16 %v9410, %v9409
    %9413 = vst [vmem:[%s118] sm:$0xff] %v9411
    %9414 = vst [vmem:[#allocation2] sm:$0xff] %v9212
    %9415 = vst [vmem:[#allocation2 + $0x8] sm:$0xff] %v9213
    %9416 = vst [vmem:[#allocation3] sm:$0xff] %v9403
    %9417 = vst [vmem:[#allocation3 + $0x8] sm:$0xff] %v9404
    %s9418 = ssub.s32 0, 0
    %s9419 = smul.u32 8, %s9418
    %p9420 = scmp.lt.s32.totalorder %s9419, 7
    %s9421 = scalar_select %p9420, %s9419, 7
    %s9422 = smul.addr %s9421, 2
    %s9423 = smul.addr %s9422, 4
    %s9424 = scalar_lea.vmem %s7, %s9423
    // Predicated region
    $region46: #{detection_network_forward.2} parent=1 // pred_check
      _
    $region47: #{detection_network_forward.2} parent=1 // pred_check_branch
      %9426 = sbr.rel (0) target = $region49
    $region48: #{detection_network_forward.2} parent=1 // pred_region
      _
    $region49: #{detection_network_forward.2} parent=1 // pred_fallthru
      _
    // Predicated region
    $region50: #{detection_network_forward.2} parent=1 // pred_check
      _
    $region51: #{detection_network_forward.2} parent=1 // pred_check_branch
      %9428 = sbr.rel (0) target = $region53
    $region52: #{detection_network_forward.2} parent=1 // pred_region
      %s9429 = ssub.s32 0, 0
      %s9430 = smul.u32 8, %s9429
    $region53: #{detection_network_forward.2} parent=1 // pred_fallthru
      _
    // Predicated region
    $region54: #{detection_network_forward.2} parent=1 // pred_check
      _
    $region55: #{detection_network_forward.2} parent=1 // pred_check_branch
      %9432 = sbr.rel (0) target = $region57
    $region56: #{detection_network_forward.2} parent=1 // pred_region
      _
    $region57: #{detection_network_forward.2} parent=1 // pred_fallthru
      _
    // Predicated region
    $region58: #{detection_network_forward.2} parent=1 // pred_check
      _
    $region59: #{detection_network_forward.2} parent=1 // pred_check_branch
      %9434 = sbr.rel (0) target = $region61
    $region60: #{detection_network_forward.2} parent=1 // pred_region
      %s9435 = ssub.s32 0, 0
      %s9436 = smul.u32 8, %s9435
      %p9437 = scmp.lt.s32.totalorder %s9436, 7
      %s9438 = scalar_select %p9437, %s9436, 7
      %s9439 = smul.addr %s9438, 2
      %s9440 = smul.addr %s9439, 4
      %s9441 = scalar_lea.vmem %s7, %s9440
    $region61: #{detection_network_forward.2} parent=1 // pred_fallthru
      _
    %9442 = vsyncpa [#allocation7], 1
    %9443 = vsyncpa [#allocation9], 1
    %9444 = vsyncpa [#allocation12], 1

</llo_original>
